<compile_context>
chip_gen: v5e
topology: v5e:2x2
jax: 0.10.0
libtpu: 0.0.40
codegen_flags: <defaults>
</compile_context>

<pallas_src>
import functools

import jax
import jax.numpy as jnp
from jax.experimental import pallas as pl
from jax.experimental.pallas import tpu as pltpu


def _sab_kernel(x_ref, wqkv_ref, bqkv_ref, wo_ref, bo_ref, wf_ref, bf_ref, out_ref,
                *, num_heads, dim, tokens, block_b, approx_recip):
    f32 = jnp.float32
    cdt = wqkv_ref.dtype                  # compute dtype (bf16 by default, f32 path available)
    head_dim = dim // num_heads
    scale = 1.0 / (dim ** 0.5)            # NOTE: PyTorch scales by sqrt(dim_v), not sqrt(head_dim)
    rows = block_b * tokens

    x = x_ref[...]                        # (rows, D) f32 -- kept full precision for residuals
    xc = x.astype(cdt)

    # Fused q/k/v projection: one MXU matmul with N = 3D, f32 accumulation + f32 bias.
    # Cast the result to the compute dtype ONCE so all downstream matmuls are bf16-native.
    qkv = (jnp.dot(xc, wqkv_ref[...], preferred_element_type=f32)
           + bqkv_ref[...]).astype(cdt)   # (rows, 3D)

    # Attention output (pre-bias), accumulated over heads with fc_o folded in.
    acc = jnp.zeros((rows, dim), f32)

    # Per-head attention, batched over the block_b batch elements of this grid step:
    # one 3-D dot_general per head instead of H*block_b tiny 2-D matmuls.
    # H is small and only one f32 accumulator is carried, so the static unroll keeps vreg
    # pressure bounded; the adjacent `acc += dot(...)` chain lets the MXU result path
    # (MRB on v7x) absorb the accumulation.
    for h in range(num_heads):
        lo = h * head_dim
        qh = qkv[:, lo:lo + head_dim].reshape(block_b, tokens, head_dim)
        kh = qkv[:, dim + lo:dim + lo + head_dim].reshape(block_b, tokens, head_dim)
        vh = qkv[:, 2 * dim + lo:2 * dim + lo + head_dim].reshape(block_b, tokens, head_dim)

        # scores: q @ k^T contracted over head_dim, batched over block_b (no explicit .T).
        s = jnp.einsum("btd,bsd->bts", qh, kh, preferred_element_type=f32) * scale

        # Numerically stable softmax in f32; normalization deferred past the PV matmul
        # and done with the EUP reciprocal (free bundle slot).
        m = jnp.max(s, axis=-1, keepdims=True)
        e = jnp.exp(s - m)
        denom = jnp.sum(e, axis=-1, keepdims=True)
        o_h = jnp.einsum("bts,bsd->btd", e.astype(cdt), vh, preferred_element_type=f32)
        o_h = o_h * pl.reciprocal(denom, approx=approx_recip)

        # Fold head-concat + fc_o: accumulate through a ROW (sublane) slice of Wo
        # instead of lane-concatenating head outputs.
        acc = acc + jnp.dot(o_h.reshape(rows, head_dim).astype(cdt),
                            wo_ref[lo:lo + head_dim, :],
                            preferred_element_type=f32)

    attn = acc + bo_ref[...]
    out1 = x + attn                                                       # residual 1 (ln1 = Identity)
    ff = jnp.dot(out1.astype(cdt), wf_ref[...], preferred_element_type=f32) + bf_ref[...]
    out_ref[...] = (out1 + ff).astype(out_ref.dtype)                      # residual 2 (ln2 = Identity)


def _vmem_capacity_bytes():
    try:
        return int(pltpu.get_tpu_info().vmem_capacity_bytes)
    except Exception:
        return 64 * 1024 * 1024   # conservative default (v7x per-TensorCore VMEM)


def _has_megacore():
    # Only parts with >1 TensorCore per chip benefit from keeping >=2 grid steps; on
    # v5e/v6e the grid is a serial loop, so extra steps are pure per-step overhead.
    try:
        kind = jax.devices()[0].device_kind.lower()
    except Exception:
        return False
    return ("v7" in kind) or ("7x" in kind) or ("v4" in kind)


def sab_forward(x, params, *, num_heads, block_b=None, compute_dtype=jnp.bfloat16):
    B, T, D = x.shape
    assert D % num_heads == 0

    cdt = jnp.dtype(compute_dtype)
    approx_recip = cdt != jnp.dtype(jnp.float32)
    w_item = cdt.itemsize
    x_item = jnp.dtype(x.dtype).itemsize
    min_sublane = 8 if x_item >= 4 else 32 // x_item     # f32 -> 8, bf16 -> 16

    vmem_cap = _vmem_capacity_bytes()
    vmem_budget = int(vmem_cap * 0.75)                   # leave headroom for Mosaic internals

    def footprint(bb):
        rows = bb * T
        x_io = 2 * rows * D * x_item * 2                               # x + out blocks, double-buffered
        weights = 2 * 5 * D * D * w_item + 2 * 8 * 5 * D * 4           # worst case: double-buffered
        temps = (rows * 3 * D * (w_item + 4)                           # qkv (f32 acc + cdt copy)
                 + 3 * rows * D * 4                                    # acc / out1 / ff
                 + 2 * bb * T * T * 4)                                 # per-head scores + exp (f32)
        return x_io + weights + temps

    if block_b is None:
        rows_cap = 1024   # HBM-roofline plateau; also a generous M fill for every MXU generation
        divisors = [d for d in range(1, B + 1) if B % d == 0]
        aligned = [d for d in divisors if (d * T) % min_sublane == 0 or d == B]
        cand = [d for d in aligned
                if d * T <= max(rows_cap, T) and footprint(d) <= vmem_budget]
        block_b = max(cand) if cand else min(aligned)
        if _has_megacore() and B // block_b < 2:
            # v7x: shard the grid across both TensorCores, but never drop below a 256-row
            # M fill (2x256 MXU) to do it.
            for d in sorted(aligned, reverse=True):
                if d < block_b and B // d >= 2 and d * T >= 256:
                    block_b = d
                    break

    assert B % block_b == 0, "block_b must divide the batch size"
    grid_b = B // block_b
    rows = block_b * T
    assert rows % min_sublane == 0 or grid_b == 1, "block rows must be sublane-aligned"

    f32 = jnp.float32
    # x/out stay in the input dtype (f32): exact residuals, lane-dense f32 stores for D>=128.
    x2 = x.reshape(B * T, D)
    wqkv = jnp.concatenate([params["wq"], params["wk"], params["wv"]], axis=1).astype(cdt)
    bqkv = jnp.concatenate([params["bq"], params["bk"], params["bv"]], axis=1).astype(f32)
    wo = params["wo"].astype(cdt)
    bo = params["bo"].astype(f32)
    wf = params["wf"].astype(cdt)
    bf = params["bf"].astype(f32)

    kernel = functools.partial(_sab_kernel, num_heads=num_heads, dim=D, tokens=T,
                               block_b=block_b, approx_recip=approx_recip)

    flops = (2 * B * T * D * 3 * D        # fused q/k/v projection
             + 4 * B * T * T * D          # scores + PV (summed over heads)
             + 2 * B * T * D * D          # fc_o (accumulated per head)
             + 2 * B * T * D * D)         # feed-forward
    transcendentals = B * num_heads * T * T
    bytes_accessed = 2 * B * T * D * x_item + 5 * D * D * w_item + 5 * D * 4
    vmem_limit = int(min(vmem_budget, max(32 * 1024 * 1024, 2 * footprint(block_b))))

    def build(single_buffer_weights):
        # Grid-invariant weights/biases don't need double-buffering; Buffered(1) frees
        # their second VMEM buffer (significant at large D against v7x's 64 MiB).
        wkw = {"pipeline_mode": pl.Buffered(1)} if single_buffer_weights else {}
        in_specs = [
            pl.BlockSpec((rows, D), lambda i: (i, 0)),             # x rows for this grid step
            pl.BlockSpec((D, 3 * D), lambda i: (0, 0), **wkw),     # [Wq|Wk|Wv]
            pl.BlockSpec((1, 3 * D), lambda i: (0, 0), **wkw),     # [bq|bk|bv]
            pl.BlockSpec((D, D), lambda i: (0, 0), **wkw),         # Wo
            pl.BlockSpec((1, D), lambda i: (0, 0), **wkw),         # bo
            pl.BlockSpec((D, D), lambda i: (0, 0), **wkw),         # Wf (MAB feed-forward)
            pl.BlockSpec((1, D), lambda i: (0, 0), **wkw),         # bf
        ]
        return pl.pallas_call(
            kernel,
            out_shape=jax.ShapeDtypeStruct((B * T, D), x.dtype),
            grid=(grid_b,),
            in_specs=in_specs,
            out_specs=pl.BlockSpec((rows, D), lambda i: (i, 0)),
            compiler_params=pltpu.CompilerParams(
                dimension_semantics=("parallel",),
                vmem_limit_bytes=vmem_limit),
            cost_estimate=pl.CostEstimate(flops=flops,
                                          transcendentals=transcendentals,
                                          bytes_accessed=bytes_accessed),
        )

    args = (x2, wqkv, bqkv, wo, bo, wf, bf)
    try:
        out2 = build(True)(*args)       # single-buffered grid-invariant weights
    except Exception:
        out2 = build(False)(*args)      # fall back to default double-buffering

    return out2.reshape(B, T, D)


def init_params(key, dim):
    """Deterministic init matching the PyTorch module's init scheme.

    fc_q/k/v/o: xavier_normal_ (std = sqrt(2/(fan_in+fan_out)) = sqrt(1/D)), zero bias.
    fc (MAB):   kaiming_normal_ fan_out (std = sqrt(2/D)), zero bias.
    Weights stored as (in_dim, out_dim) so kernel/reference compute x @ W + b.
    """
    ks = jax.random.split(key, 5)
    xavier_std = (2.0 / (dim + dim)) ** 0.5
    kaiming_std = (2.0 / dim) ** 0.5
    zeros_b = jnp.zeros((1, dim), jnp.float32)
    return {
        "wq": xavier_std * jax.random.normal(ks[0], (dim, dim), jnp.float32), "bq": zeros_b,
        "wk": xavier_std * jax.random.normal(ks[1], (dim, dim), jnp.float32), "bk": zeros_b,
        "wv": xavier_std * jax.random.normal(ks[2], (dim, dim), jnp.float32), "bv": zeros_b,
        "wo": xavier_std * jax.random.normal(ks[3], (dim, dim), jnp.float32), "bo": zeros_b,
        "wf": kaiming_std * jax.random.normal(ks[4], (dim, dim), jnp.float32), "bf": zeros_b,
    }


def sab_reference(x, params, *, num_heads):
    """Pure-JAX (f32) reference of the PyTorch SAB forward."""
    B, T, D = x.shape
    q = x @ params["wq"] + params["bq"]
    k = x @ params["wk"] + params["bk"]
    v = x @ params["wv"] + params["bv"]
    qh = jnp.concatenate(jnp.split(q, num_heads, axis=-1), axis=0)  # (B*H, T, d)
    kh = jnp.concatenate(jnp.split(k, num_heads, axis=-1), axis=0)
    vh = jnp.concatenate(jnp.split(v, num_heads, axis=-1), axis=0)
    a = jnp.einsum("btd,bsd->bts", qh, kh) / (D ** 0.5)
    a = jax.nn.softmax(a, axis=-1)
    oh = a @ vh
    o = jnp.concatenate(jnp.split(oh, num_heads, axis=0), axis=-1)  # (B, T, D)
    attn = o @ params["wo"] + params["bo"]
    out1 = x + attn
    return out1 + (out1 @ params["wf"] + params["bf"])


if __name__ == "__main__":
    # SAB(dim=128, num_heads=4) applied to a set of 16 tokens, batch 8.
    B, T, D, H = 8, 16, 128, 4

    key = jax.random.PRNGKey(0)
    kx, kp = jax.random.split(key)
    x = jax.random.normal(kx, (B, T, D), jnp.float32)
    params = init_params(kp, D)

    ref = sab_reference(x, params, num_heads=H)

    # Full-precision path (semantics check).
    out_f32 = jax.block_until_ready(
        sab_forward(x, params, num_heads=H, compute_dtype=jnp.float32))
    assert out_f32.shape == (B, T, D)
    err_f32 = float(jnp.max(jnp.abs(out_f32 - ref)) / (jnp.max(jnp.abs(ref)) + 1e-6))
    assert err_f32 < 1e-3, f"f32 path mismatch vs reference (rel err {err_f32})"

    # Default path: bf16 MXU operands, f32 accumulation, f32 residuals.
    out = jax.block_until_ready(sab_forward(x, params, num_heads=H))
    assert out.shape == (B, T, D)
    err_bf16 = float(jnp.max(jnp.abs(out - ref)) / (jnp.max(jnp.abs(ref)) + 1e-6))
    assert err_bf16 < 5e-2, f"bf16 path mismatch vs reference (rel err {err_bf16})"

    print("KERNEL_OK")
</pallas_src>

<mosaic_0001>
module attributes {stable_mosaic.version = 11 : i64} {
  func.func @_sab_kernel(%arg0: i32, %arg1: memref<128x128xf32, #tpu.memory_space<vmem>>, %arg2: memref<128x384xf32, #tpu.memory_space<vmem>>, %arg3: memref<1x384xf32, #tpu.memory_space<vmem>>, %arg4: memref<128x128xf32, #tpu.memory_space<vmem>>, %arg5: memref<1x128xf32, #tpu.memory_space<vmem>>, %arg6: memref<128x128xf32, #tpu.memory_space<vmem>>, %arg7: memref<1x128xf32, #tpu.memory_space<vmem>>, %arg8: memref<128x128xf32, #tpu.memory_space<vmem>>) attributes {dimension_semantics = [#tpu.dimension_semantics<parallel>], iteration_bounds = array<i64: 1>, scalar_prefetch = 0 : i64, scratch_operands = 0 : i64, tpu.core_type = #tpu.core_type<tc>, window_params = [{transform_indices = @transform_0, window_bounds = array<i64: 128, 128>}, {pipeline_mode = #tpu.pipeline_mode<synchronous>, transform_indices = @transform_1, window_bounds = array<i64: 128, 384>}, {pipeline_mode = #tpu.pipeline_mode<synchronous>, transform_indices = @transform_2, window_bounds = array<i64: 1, 384>}, {pipeline_mode = #tpu.pipeline_mode<synchronous>, transform_indices = @transform_3, window_bounds = array<i64: 128, 128>}, {pipeline_mode = #tpu.pipeline_mode<synchronous>, transform_indices = @transform_4, window_bounds = array<i64: 1, 128>}, {pipeline_mode = #tpu.pipeline_mode<synchronous>, transform_indices = @transform_5, window_bounds = array<i64: 128, 128>}, {pipeline_mode = #tpu.pipeline_mode<synchronous>, transform_indices = @transform_6, window_bounds = array<i64: 1, 128>}, {transform_indices = @transform_7, window_bounds = array<i64: 128, 128>}]} {
    %c0 = arith.constant 0 : index
    %c0_0 = arith.constant 0 : index
    %0 = vector.load %arg1[%c0, %c0_0] : memref<128x128xf32, #tpu.memory_space<vmem>>, vector<128x128xf32>
    %c0_1 = arith.constant 0 : index
    %c0_2 = arith.constant 0 : index
    %1 = vector.load %arg2[%c0_1, %c0_2] : memref<128x384xf32, #tpu.memory_space<vmem>>, vector<128x384xf32>
    %cst = arith.constant dense<0.000000e+00> : vector<128x384xf32>
    %2 = tpu.matmul %0, %1, %cst {dimension_numbers = #tpu.dot_dimension_numbers<[1], [0], [0], [1], [0, 0, 1, 1], [], []>} : vector<128x128xf32>, vector<128x384xf32>, vector<128x384xf32> -> vector<128x384xf32>
    %c0_3 = arith.constant 0 : index
    %c0_4 = arith.constant 0 : index
    %3 = vector.load %arg3[%c0_3, %c0_4] : memref<1x384xf32, #tpu.memory_space<vmem>>, vector<1x384xf32>
    %4 = vector.broadcast %3 : vector<1x384xf32> to vector<128x384xf32>
    %5 = arith.addf %2, %4 : vector<128x384xf32>
    %cst_5 = arith.constant 0.000000e+00 : f32
    %6 = vector.broadcast %cst_5 : f32 to vector<128x128xf32>
    %7 = vector.extract_strided_slice %5 {offsets = [0, 0], sizes = [128, 32], strides = [1, 1]} : vector<128x384xf32> to vector<128x32xf32>
    %8 = vector.shape_cast %7 : vector<128x32xf32> to vector<8x16x32xf32>
    %9 = vector.extract_strided_slice %5 {offsets = [0, 128], sizes = [128, 32], strides = [1, 1]} : vector<128x384xf32> to vector<128x32xf32>
    %10 = vector.shape_cast %9 : vector<128x32xf32> to vector<8x16x32xf32>
    %11 = vector.extract_strided_slice %5 {offsets = [0, 256], sizes = [128, 32], strides = [1, 1]} : vector<128x384xf32> to vector<128x32xf32>
    %12 = vector.shape_cast %11 : vector<128x32xf32> to vector<8x16x32xf32>
    "tpu.trace_start"() <{level = 10 : i32, message = "btd,bsd->bts"}> : () -> ()
    %cst_6 = arith.constant dense<0.000000e+00> : vector<8x16x16xf32>
    %13 = tpu.matmul %8, %10, %cst_6 {dimension_numbers = #tpu.dot_dimension_numbers<[2], [2], [1], [1], [0, 0, 0, 1, 1, 1], [0], [0]>} : vector<8x16x32xf32>, vector<8x16x32xf32>, vector<8x16x16xf32> -> vector<8x16x16xf32>
    "tpu.trace_stop"() : () -> ()
    %cst_7 = arith.constant 0.0883883461 : f32
    %14 = vector.broadcast %cst_7 : f32 to vector<8x16x16xf32>
    %15 = arith.mulf %13, %14 : vector<8x16x16xf32>
    %cst_8 = arith.constant dense<0xFF800000> : vector<8x16xf32>
    %16 = vector.multi_reduction <maximumf>, %15, %cst_8 [2] : vector<8x16x16xf32> to vector<8x16xf32>
    %17 = vector.shape_cast %16 : vector<8x16xf32> to vector<8x16x1xf32>
    %18 = vector.broadcast %17 : vector<8x16x1xf32> to vector<8x16x16xf32>
    %19 = arith.subf %15, %18 : vector<8x16x16xf32>
    %20 = math.exp %19 : vector<8x16x16xf32>
    %cst_9 = arith.constant dense<0.000000e+00> : vector<8x16xf32>
    %21 = vector.multi_reduction <add>, %20, %cst_9 [2] : vector<8x16x16xf32> to vector<8x16xf32>
    %22 = vector.shape_cast %21 : vector<8x16xf32> to vector<8x16x1xf32>
    "tpu.trace_start"() <{level = 10 : i32, message = "bts,bsd->btd"}> : () -> ()
    %cst_10 = arith.constant dense<0.000000e+00> : vector<8x16x32xf32>
    %23 = tpu.matmul %20, %12, %cst_10 {dimension_numbers = #tpu.dot_dimension_numbers<[2], [1], [1], [2], [0, 0, 0, 1, 1, 2], [0], [0]>} : vector<8x16x16xf32>, vector<8x16x32xf32>, vector<8x16x32xf32> -> vector<8x16x32xf32>
    "tpu.trace_stop"() : () -> ()
    %24 = tpu.reciprocal %22 : vector<8x16x1xf32> -> vector<8x16x1xf32>
    %25 = vector.broadcast %24 : vector<8x16x1xf32> to vector<8x16x32xf32>
    %26 = arith.mulf %23, %25 : vector<8x16x32xf32>
    %27 = vector.shape_cast %26 : vector<8x16x32xf32> to vector<128x32xf32>
    %c0_11 = arith.constant 0 : index
    %c0_12 = arith.constant 0 : index
    %28 = vector.load %arg4[%c0_11, %c0_12] : memref<128x128xf32, #tpu.memory_space<vmem>>, vector<32x128xf32>
    %cst_13 = arith.constant dense<0.000000e+00> : vector<128x128xf32>
    %29 = tpu.matmul %27, %28, %cst_13 {dimension_numbers = #tpu.dot_dimension_numbers<[1], [0], [0], [1], [0, 0, 1, 1], [], []>} : vector<128x32xf32>, vector<32x128xf32>, vector<128x128xf32> -> vector<128x128xf32>
    %30 = arith.addf %6, %29 : vector<128x128xf32>
    %31 = vector.extract_strided_slice %5 {offsets = [0, 32], sizes = [128, 32], strides = [1, 1]} : vector<128x384xf32> to vector<128x32xf32>
    %32 = vector.shape_cast %31 : vector<128x32xf32> to vector<8x16x32xf32>
    %33 = vector.extract_strided_slice %5 {offsets = [0, 160], sizes = [128, 32], strides = [1, 1]} : vector<128x384xf32> to vector<128x32xf32>
    %34 = vector.shape_cast %33 : vector<128x32xf32> to vector<8x16x32xf32>
    %35 = vector.extract_strided_slice %5 {offsets = [0, 288], sizes = [128, 32], strides = [1, 1]} : vector<128x384xf32> to vector<128x32xf32>
    %36 = vector.shape_cast %35 : vector<128x32xf32> to vector<8x16x32xf32>
    "tpu.trace_start"() <{level = 10 : i32, message = "btd,bsd->bts"}> : () -> ()
    %cst_14 = arith.constant dense<0.000000e+00> : vector<8x16x16xf32>
    %37 = tpu.matmul %32, %34, %cst_14 {dimension_numbers = #tpu.dot_dimension_numbers<[2], [2], [1], [1], [0, 0, 0, 1, 1, 1], [0], [0]>} : vector<8x16x32xf32>, vector<8x16x32xf32>, vector<8x16x16xf32> -> vector<8x16x16xf32>
    "tpu.trace_stop"() : () -> ()
    %cst_15 = arith.constant 0.0883883461 : f32
    %38 = vector.broadcast %cst_15 : f32 to vector<8x16x16xf32>
    %39 = arith.mulf %37, %38 : vector<8x16x16xf32>
    %cst_16 = arith.constant dense<0xFF800000> : vector<8x16xf32>
    %40 = vector.multi_reduction <maximumf>, %39, %cst_16 [2] : vector<8x16x16xf32> to vector<8x16xf32>
    %41 = vector.shape_cast %40 : vector<8x16xf32> to vector<8x16x1xf32>
    %42 = vector.broadcast %41 : vector<8x16x1xf32> to vector<8x16x16xf32>
    %43 = arith.subf %39, %42 : vector<8x16x16xf32>
    %44 = math.exp %43 : vector<8x16x16xf32>
    %cst_17 = arith.constant dense<0.000000e+00> : vector<8x16xf32>
    %45 = vector.multi_reduction <add>, %44, %cst_17 [2] : vector<8x16x16xf32> to vector<8x16xf32>
    %46 = vector.shape_cast %45 : vector<8x16xf32> to vector<8x16x1xf32>
    "tpu.trace_start"() <{level = 10 : i32, message = "bts,bsd->btd"}> : () -> ()
    %cst_18 = arith.constant dense<0.000000e+00> : vector<8x16x32xf32>
    %47 = tpu.matmul %44, %36, %cst_18 {dimension_numbers = #tpu.dot_dimension_numbers<[2], [1], [1], [2], [0, 0, 0, 1, 1, 2], [0], [0]>} : vector<8x16x16xf32>, vector<8x16x32xf32>, vector<8x16x32xf32> -> vector<8x16x32xf32>
    "tpu.trace_stop"() : () -> ()
    %48 = tpu.reciprocal %46 : vector<8x16x1xf32> -> vector<8x16x1xf32>
    %49 = vector.broadcast %48 : vector<8x16x1xf32> to vector<8x16x32xf32>
    %50 = arith.mulf %47, %49 : vector<8x16x32xf32>
    %51 = vector.shape_cast %50 : vector<8x16x32xf32> to vector<128x32xf32>
    %c32 = arith.constant 32 : index
    %c0_19 = arith.constant 0 : index
    %52 = vector.load %arg4[%c32, %c0_19] : memref<128x128xf32, #tpu.memory_space<vmem>>, vector<32x128xf32>
    %cst_20 = arith.constant dense<0.000000e+00> : vector<128x128xf32>
    %53 = tpu.matmul %51, %52, %cst_20 {dimension_numbers = #tpu.dot_dimension_numbers<[1], [0], [0], [1], [0, 0, 1, 1], [], []>} : vector<128x32xf32>, vector<32x128xf32>, vector<128x128xf32> -> vector<128x128xf32>
    %54 = arith.addf %30, %53 : vector<128x128xf32>
    %55 = vector.extract_strided_slice %5 {offsets = [0, 64], sizes = [128, 32], strides = [1, 1]} : vector<128x384xf32> to vector<128x32xf32>
    %56 = vector.shape_cast %55 : vector<128x32xf32> to vector<8x16x32xf32>
    %57 = vector.extract_strided_slice %5 {offsets = [0, 192], sizes = [128, 32], strides = [1, 1]} : vector<128x384xf32> to vector<128x32xf32>
    %58 = vector.shape_cast %57 : vector<128x32xf32> to vector<8x16x32xf32>
    %59 = vector.extract_strided_slice %5 {offsets = [0, 320], sizes = [128, 32], strides = [1, 1]} : vector<128x384xf32> to vector<128x32xf32>
    %60 = vector.shape_cast %59 : vector<128x32xf32> to vector<8x16x32xf32>
    "tpu.trace_start"() <{level = 10 : i32, message = "btd,bsd->bts"}> : () -> ()
    %cst_21 = arith.constant dense<0.000000e+00> : vector<8x16x16xf32>
    %61 = tpu.matmul %56, %58, %cst_21 {dimension_numbers = #tpu.dot_dimension_numbers<[2], [2], [1], [1], [0, 0, 0, 1, 1, 1], [0], [0]>} : vector<8x16x32xf32>, vector<8x16x32xf32>, vector<8x16x16xf32> -> vector<8x16x16xf32>
    "tpu.trace_stop"() : () -> ()
    %cst_22 = arith.constant 0.0883883461 : f32
    %62 = vector.broadcast %cst_22 : f32 to vector<8x16x16xf32>
    %63 = arith.mulf %61, %62 : vector<8x16x16xf32>
    %cst_23 = arith.constant dense<0xFF800000> : vector<8x16xf32>
    %64 = vector.multi_reduction <maximumf>, %63, %cst_23 [2] : vector<8x16x16xf32> to vector<8x16xf32>
    %65 = vector.shape_cast %64 : vector<8x16xf32> to vector<8x16x1xf32>
    %66 = vector.broadcast %65 : vector<8x16x1xf32> to vector<8x16x16xf32>
    %67 = arith.subf %63, %66 : vector<8x16x16xf32>
    %68 = math.exp %67 : vector<8x16x16xf32>
    %cst_24 = arith.constant dense<0.000000e+00> : vector<8x16xf32>
    %69 = vector.multi_reduction <add>, %68, %cst_24 [2] : vector<8x16x16xf32> to vector<8x16xf32>
    %70 = vector.shape_cast %69 : vector<8x16xf32> to vector<8x16x1xf32>
    "tpu.trace_start"() <{level = 10 : i32, message = "bts,bsd->btd"}> : () -> ()
    %cst_25 = arith.constant dense<0.000000e+00> : vector<8x16x32xf32>
    %71 = tpu.matmul %68, %60, %cst_25 {dimension_numbers = #tpu.dot_dimension_numbers<[2], [1], [1], [2], [0, 0, 0, 1, 1, 2], [0], [0]>} : vector<8x16x16xf32>, vector<8x16x32xf32>, vector<8x16x32xf32> -> vector<8x16x32xf32>
    "tpu.trace_stop"() : () -> ()
    %72 = tpu.reciprocal %70 : vector<8x16x1xf32> -> vector<8x16x1xf32>
    %73 = vector.broadcast %72 : vector<8x16x1xf32> to vector<8x16x32xf32>
    %74 = arith.mulf %71, %73 : vector<8x16x32xf32>
    %75 = vector.shape_cast %74 : vector<8x16x32xf32> to vector<128x32xf32>
    %c64 = arith.constant 64 : index
    %c0_26 = arith.constant 0 : index
    %76 = vector.load %arg4[%c64, %c0_26] : memref<128x128xf32, #tpu.memory_space<vmem>>, vector<32x128xf32>
    %cst_27 = arith.constant dense<0.000000e+00> : vector<128x128xf32>
    %77 = tpu.matmul %75, %76, %cst_27 {dimension_numbers = #tpu.dot_dimension_numbers<[1], [0], [0], [1], [0, 0, 1, 1], [], []>} : vector<128x32xf32>, vector<32x128xf32>, vector<128x128xf32> -> vector<128x128xf32>
    %78 = arith.addf %54, %77 : vector<128x128xf32>
    %79 = vector.extract_strided_slice %5 {offsets = [0, 96], sizes = [128, 32], strides = [1, 1]} : vector<128x384xf32> to vector<128x32xf32>
    %80 = vector.shape_cast %79 : vector<128x32xf32> to vector<8x16x32xf32>
    %81 = vector.extract_strided_slice %5 {offsets = [0, 224], sizes = [128, 32], strides = [1, 1]} : vector<128x384xf32> to vector<128x32xf32>
    %82 = vector.shape_cast %81 : vector<128x32xf32> to vector<8x16x32xf32>
    %83 = vector.extract_strided_slice %5 {offsets = [0, 352], sizes = [128, 32], strides = [1, 1]} : vector<128x384xf32> to vector<128x32xf32>
    %84 = vector.shape_cast %83 : vector<128x32xf32> to vector<8x16x32xf32>
    "tpu.trace_start"() <{level = 10 : i32, message = "btd,bsd->bts"}> : () -> ()
    %cst_28 = arith.constant dense<0.000000e+00> : vector<8x16x16xf32>
    %85 = tpu.matmul %80, %82, %cst_28 {dimension_numbers = #tpu.dot_dimension_numbers<[2], [2], [1], [1], [0, 0, 0, 1, 1, 1], [0], [0]>} : vector<8x16x32xf32>, vector<8x16x32xf32>, vector<8x16x16xf32> -> vector<8x16x16xf32>
    "tpu.trace_stop"() : () -> ()
    %cst_29 = arith.constant 0.0883883461 : f32
    %86 = vector.broadcast %cst_29 : f32 to vector<8x16x16xf32>
    %87 = arith.mulf %85, %86 : vector<8x16x16xf32>
    %cst_30 = arith.constant dense<0xFF800000> : vector<8x16xf32>
    %88 = vector.multi_reduction <maximumf>, %87, %cst_30 [2] : vector<8x16x16xf32> to vector<8x16xf32>
    %89 = vector.shape_cast %88 : vector<8x16xf32> to vector<8x16x1xf32>
    %90 = vector.broadcast %89 : vector<8x16x1xf32> to vector<8x16x16xf32>
    %91 = arith.subf %87, %90 : vector<8x16x16xf32>
    %92 = math.exp %91 : vector<8x16x16xf32>
    %cst_31 = arith.constant dense<0.000000e+00> : vector<8x16xf32>
    %93 = vector.multi_reduction <add>, %92, %cst_31 [2] : vector<8x16x16xf32> to vector<8x16xf32>
    %94 = vector.shape_cast %93 : vector<8x16xf32> to vector<8x16x1xf32>
    "tpu.trace_start"() <{level = 10 : i32, message = "bts,bsd->btd"}> : () -> ()
    %cst_32 = arith.constant dense<0.000000e+00> : vector<8x16x32xf32>
    %95 = tpu.matmul %92, %84, %cst_32 {dimension_numbers = #tpu.dot_dimension_numbers<[2], [1], [1], [2], [0, 0, 0, 1, 1, 2], [0], [0]>} : vector<8x16x16xf32>, vector<8x16x32xf32>, vector<8x16x32xf32> -> vector<8x16x32xf32>
    "tpu.trace_stop"() : () -> ()
    %96 = tpu.reciprocal %94 : vector<8x16x1xf32> -> vector<8x16x1xf32>
    %97 = vector.broadcast %96 : vector<8x16x1xf32> to vector<8x16x32xf32>
    %98 = arith.mulf %95, %97 : vector<8x16x32xf32>
    %99 = vector.shape_cast %98 : vector<8x16x32xf32> to vector<128x32xf32>
    %c96 = arith.constant 96 : index
    %c0_33 = arith.constant 0 : index
    %100 = vector.load %arg4[%c96, %c0_33] : memref<128x128xf32, #tpu.memory_space<vmem>>, vector<32x128xf32>
    %cst_34 = arith.constant dense<0.000000e+00> : vector<128x128xf32>
    %101 = tpu.matmul %99, %100, %cst_34 {dimension_numbers = #tpu.dot_dimension_numbers<[1], [0], [0], [1], [0, 0, 1, 1], [], []>} : vector<128x32xf32>, vector<32x128xf32>, vector<128x128xf32> -> vector<128x128xf32>
    %102 = arith.addf %78, %101 : vector<128x128xf32>
    %c0_35 = arith.constant 0 : index
    %c0_36 = arith.constant 0 : index
    %103 = vector.load %arg5[%c0_35, %c0_36] : memref<1x128xf32, #tpu.memory_space<vmem>>, vector<1x128xf32>
    %104 = vector.broadcast %103 : vector<1x128xf32> to vector<128x128xf32>
    %105 = arith.addf %102, %104 : vector<128x128xf32>
    %106 = arith.addf %0, %105 : vector<128x128xf32>
    %c0_37 = arith.constant 0 : index
    %c0_38 = arith.constant 0 : index
    %107 = vector.load %arg6[%c0_37, %c0_38] : memref<128x128xf32, #tpu.memory_space<vmem>>, vector<128x128xf32>
    %cst_39 = arith.constant dense<0.000000e+00> : vector<128x128xf32>
    %108 = tpu.matmul %106, %107, %cst_39 {dimension_numbers = #tpu.dot_dimension_numbers<[1], [0], [0], [1], [0, 0, 1, 1], [], []>} : vector<128x128xf32>, vector<128x128xf32>, vector<128x128xf32> -> vector<128x128xf32>
    %c0_40 = arith.constant 0 : index
    %c0_41 = arith.constant 0 : index
    %109 = vector.load %arg7[%c0_40, %c0_41] : memref<1x128xf32, #tpu.memory_space<vmem>>, vector<1x128xf32>
    %110 = vector.broadcast %109 : vector<1x128xf32> to vector<128x128xf32>
    %111 = arith.addf %108, %110 : vector<128x128xf32>
    %112 = arith.addf %106, %111 : vector<128x128xf32>
    %c0_42 = arith.constant 0 : index
    %c0_43 = arith.constant 0 : index
    %113 = vector.load %arg8[%c0_42, %c0_43] : memref<128x128xf32, #tpu.memory_space<vmem>>, vector<128x128xf32>
    tpu.vector_store %arg8[%c0_42, %c0_43], %112 {strides = array<i32>} : memref<128x128xf32, #tpu.memory_space<vmem>>, vector<128x128xf32>,
    return
  }
  func.func @transform_0(%arg0: i32) -> (i32, i32) {
    %c0_i32 = arith.constant 0 : i32
    %c0_i32_0 = arith.constant 0 : i32
    return %arg0, %c0_i32 : i32, i32
  }
  func.func @transform_1(%arg0: i32) -> (i32, i32) {
    %c0_i32 = arith.constant 0 : i32
    %c0_i32_0 = arith.constant 0 : i32
    %c0_i32_1 = arith.constant 0 : i32
    return %c0_i32, %c0_i32_0 : i32, i32
  }
  func.func @transform_2(%arg0: i32) -> (i32, i32) {
    %c0_i32 = arith.constant 0 : i32
    %c0_i32_0 = arith.constant 0 : i32
    %c0_i32_1 = arith.constant 0 : i32
    return %c0_i32, %c0_i32_0 : i32, i32
  }
  func.func @transform_3(%arg0: i32) -> (i32, i32) {
    %c0_i32 = arith.constant 0 : i32
    %c0_i32_0 = arith.constant 0 : i32
    %c0_i32_1 = arith.constant 0 : i32
    return %c0_i32, %c0_i32_0 : i32, i32
  }
  func.func @transform_4(%arg0: i32) -> (i32, i32) {
    %c0_i32 = arith.constant 0 : i32
    %c0_i32_0 = arith.constant 0 : i32
    %c0_i32_1 = arith.constant 0 : i32
    return %c0_i32, %c0_i32_0 : i32, i32
  }
  func.func @transform_5(%arg0: i32) -> (i32, i32) {
    %c0_i32 = arith.constant 0 : i32
    %c0_i32_0 = arith.constant 0 : i32
    %c0_i32_1 = arith.constant 0 : i32
    return %c0_i32, %c0_i32_0 : i32, i32
  }
  func.func @transform_6(%arg0: i32) -> (i32, i32) {
    %c0_i32 = arith.constant 0 : i32
    %c0_i32_0 = arith.constant 0 : i32
    %c0_i32_1 = arith.constant 0 : i32
    return %c0_i32, %c0_i32_0 : i32, i32
  }
  func.func @transform_7(%arg0: i32) -> (i32, i32) {
    %c0_i32 = arith.constant 0 : i32
    %c0_i32_0 = arith.constant 0 : i32
    return %arg0, %c0_i32 : i32, i32
  }
}

module attributes {stable_mosaic.version = 11 : i64} {
  func.func @_sab_kernel(%arg0: i32, %arg1: memref<128x128xf32, #tpu.memory_space<vmem>>, %arg2: memref<128x384xf32, #tpu.memory_space<vmem>>, %arg3: memref<1x384xf32, #tpu.memory_space<vmem>>, %arg4: memref<128x128xf32, #tpu.memory_space<vmem>>, %arg5: memref<1x128xf32, #tpu.memory_space<vmem>>, %arg6: memref<128x128xf32, #tpu.memory_space<vmem>>, %arg7: memref<1x128xf32, #tpu.memory_space<vmem>>, %arg8: memref<128x128xf32, #tpu.memory_space<vmem>>) attributes {dimension_semantics = [#tpu.dimension_semantics<parallel>], iteration_bounds = array<i64: 1>, scalar_prefetch = 0 : i64, scratch_operands = 0 : i64, tpu.core_type = #tpu.core_type<tc>, window_params = [{transform_indices = @transform_0, window_bounds = array<i64: 128, 128>}, {pipeline_mode = #tpu.pipeline_mode<synchronous>, transform_indices = @transform_1, window_bounds = array<i64: 128, 384>}, {pipeline_mode = #tpu.pipeline_mode<synchronous>, transform_indices = @transform_2, window_bounds = array<i64: 1, 384>}, {pipeline_mode = #tpu.pipeline_mode<synchronous>, transform_indices = @transform_3, window_bounds = array<i64: 128, 128>}, {pipeline_mode = #tpu.pipeline_mode<synchronous>, transform_indices = @transform_4, window_bounds = array<i64: 1, 128>}, {pipeline_mode = #tpu.pipeline_mode<synchronous>, transform_indices = @transform_5, window_bounds = array<i64: 128, 128>}, {pipeline_mode = #tpu.pipeline_mode<synchronous>, transform_indices = @transform_6, window_bounds = array<i64: 1, 128>}, {transform_indices = @transform_7, window_bounds = array<i64: 128, 128>}]} {
    %c0 = arith.constant 0 : index
    %c0_0 = arith.constant 0 : index
    %0 = vector.load %arg1[%c0, %c0_0] : memref<128x128xf32, #tpu.memory_space<vmem>>, vector<128x128xf32>
    %c0_1 = arith.constant 0 : index
    %c0_2 = arith.constant 0 : index
    %1 = vector.load %arg2[%c0_1, %c0_2] : memref<128x384xf32, #tpu.memory_space<vmem>>, vector<128x384xf32>
    %cst = arith.constant dense<0.000000e+00> : vector<128x384xf32>
    %2 = tpu.matmul %0, %1, %cst {dimension_numbers = #tpu.dot_dimension_numbers<[1], [0], [0], [1], [0, 0, 1, 1], [], []>} : vector<128x128xf32>, vector<128x384xf32>, vector<128x384xf32> -> vector<128x384xf32>
    %c0_3 = arith.constant 0 : index
    %c0_4 = arith.constant 0 : index
    %3 = vector.load %arg3[%c0_3, %c0_4] : memref<1x384xf32, #tpu.memory_space<vmem>>, vector<1x384xf32>
    %4 = vector.broadcast %3 : vector<1x384xf32> to vector<128x384xf32>
    %5 = arith.addf %2, %4 : vector<128x384xf32>
    %cst_5 = arith.constant 0.000000e+00 : f32
    %6 = vector.broadcast %cst_5 : f32 to vector<128x128xf32>
    %7 = vector.extract_strided_slice %5 {offsets = [0, 0], sizes = [128, 32], strides = [1, 1]} : vector<128x384xf32> to vector<128x32xf32>
    %8 = vector.shape_cast %7 : vector<128x32xf32> to vector<8x16x32xf32>
    %9 = vector.extract_strided_slice %5 {offsets = [0, 128], sizes = [128, 32], strides = [1, 1]} : vector<128x384xf32> to vector<128x32xf32>
    %10 = vector.shape_cast %9 : vector<128x32xf32> to vector<8x16x32xf32>
    %11 = vector.extract_strided_slice %5 {offsets = [0, 256], sizes = [128, 32], strides = [1, 1]} : vector<128x384xf32> to vector<128x32xf32>
    %12 = vector.shape_cast %11 : vector<128x32xf32> to vector<8x16x32xf32>
    "tpu.trace_start"() <{level = 10 : i32, message = "btd,bsd->bts"}> : () -> ()
    %cst_6 = arith.constant dense<0.000000e+00> : vector<8x16x16xf32>
    %13 = tpu.matmul %8, %10, %cst_6 {dimension_numbers = #tpu.dot_dimension_numbers<[2], [2], [1], [1], [0, 0, 0, 1, 1, 1], [0], [0]>} : vector<8x16x32xf32>, vector<8x16x32xf32>, vector<8x16x16xf32> -> vector<8x16x16xf32>
    "tpu.trace_stop"() : () -> ()
    %cst_7 = arith.constant 0.0883883461 : f32
    %14 = vector.broadcast %cst_7 : f32 to vector<8x16x16xf32>
    %15 = arith.mulf %13, %14 : vector<8x16x16xf32>
    %cst_8 = arith.constant dense<0xFF800000> : vector<8x16xf32>
    %16 = vector.multi_reduction <maximumf>, %15, %cst_8 [2] : vector<8x16x16xf32> to vector<8x16xf32>
    %17 = vector.shape_cast %16 : vector<8x16xf32> to vector<8x16x1xf32>
    %18 = vector.broadcast %17 : vector<8x16x1xf32> to vector<8x16x16xf32>
    %19 = arith.subf %15, %18 : vector<8x16x16xf32>
    %20 = math.exp %19 : vector<8x16x16xf32>
    %cst_9 = arith.constant dense<0.000000e+00> : vector<8x16xf32>
    %21 = vector.multi_reduction <add>, %20, %cst_9 [2] : vector<8x16x16xf32> to vector<8x16xf32>
    %22 = vector.shape_cast %21 : vector<8x16xf32> to vector<8x16x1xf32>
    "tpu.trace_start"() <{level = 10 : i32, message = "bts,bsd->btd"}> : () -> ()
    %cst_10 = arith.constant dense<0.000000e+00> : vector<8x16x32xf32>
    %23 = tpu.matmul %20, %12, %cst_10 {dimension_numbers = #tpu.dot_dimension_numbers<[2], [1], [1], [2], [0, 0, 0, 1, 1, 2], [0], [0]>} : vector<8x16x16xf32>, vector<8x16x32xf32>, vector<8x16x32xf32> -> vector<8x16x32xf32>
    "tpu.trace_stop"() : () -> ()
    %24 = tpu.reciprocal %22 : vector<8x16x1xf32> -> vector<8x16x1xf32>
    %25 = vector.broadcast %24 : vector<8x16x1xf32> to vector<8x16x32xf32>
    %26 = arith.mulf %23, %25 : vector<8x16x32xf32>
    %27 = vector.shape_cast %26 : vector<8x16x32xf32> to vector<128x32xf32>
    %c0_11 = arith.constant 0 : index
    %c0_12 = arith.constant 0 : index
    %28 = vector.load %arg4[%c0_11, %c0_12] : memref<128x128xf32, #tpu.memory_space<vmem>>, vector<32x128xf32>
    %cst_13 = arith.constant dense<0.000000e+00> : vector<128x128xf32>
    %29 = tpu.matmul %27, %28, %cst_13 {dimension_numbers = #tpu.dot_dimension_numbers<[1], [0], [0], [1], [0, 0, 1, 1], [], []>} : vector<128x32xf32>, vector<32x128xf32>, vector<128x128xf32> -> vector<128x128xf32>
    %30 = arith.addf %6, %29 : vector<128x128xf32>
    %31 = vector.extract_strided_slice %5 {offsets = [0, 32], sizes = [128, 32], strides = [1, 1]} : vector<128x384xf32> to vector<128x32xf32>
    %32 = vector.shape_cast %31 : vector<128x32xf32> to vector<8x16x32xf32>
    %33 = vector.extract_strided_slice %5 {offsets = [0, 160], sizes = [128, 32], strides = [1, 1]} : vector<128x384xf32> to vector<128x32xf32>
    %34 = vector.shape_cast %33 : vector<128x32xf32> to vector<8x16x32xf32>
    %35 = vector.extract_strided_slice %5 {offsets = [0, 288], sizes = [128, 32], strides = [1, 1]} : vector<128x384xf32> to vector<128x32xf32>
    %36 = vector.shape_cast %35 : vector<128x32xf32> to vector<8x16x32xf32>
    "tpu.trace_start"() <{level = 10 : i32, message = "btd,bsd->bts"}> : () -> ()
    %cst_14 = arith.constant dense<0.000000e+00> : vector<8x16x16xf32>
    %37 = tpu.matmul %32, %34, %cst_14 {dimension_numbers = #tpu.dot_dimension_numbers<[2], [2], [1], [1], [0, 0, 0, 1, 1, 1], [0], [0]>} : vector<8x16x32xf32>, vector<8x16x32xf32>, vector<8x16x16xf32> -> vector<8x16x16xf32>
    "tpu.trace_stop"() : () -> ()
    %cst_15 = arith.constant 0.0883883461 : f32
    %38 = vector.broadcast %cst_15 : f32 to vector<8x16x16xf32>
    %39 = arith.mulf %37, %38 : vector<8x16x16xf32>
    %cst_16 = arith.constant dense<0xFF800000> : vector<8x16xf32>
    %40 = vector.multi_reduction <maximumf>, %39, %cst_16 [2] : vector<8x16x16xf32> to vector<8x16xf32>
    %41 = vector.shape_cast %40 : vector<8x16xf32> to vector<8x16x1xf32>
    %42 = vector.broadcast %41 : vector<8x16x1xf32> to vector<8x16x16xf32>
    %43 = arith.subf %39, %42 : vector<8x16x16xf32>
    %44 = math.exp %43 : vector<8x16x16xf32>
    %cst_17 = arith.constant dense<0.000000e+00> : vector<8x16xf32>
    %45 = vector.multi_reduction <add>, %44, %cst_17 [2] : vector<8x16x16xf32> to vector<8x16xf32>
    %46 = vector.shape_cast %45 : vector<8x16xf32> to vector<8x16x1xf32>
    "tpu.trace_start"() <{level = 10 : i32, message = "bts,bsd->btd"}> : () -> ()
    %cst_18 = arith.constant dense<0.000000e+00> : vector<8x16x32xf32>
    %47 = tpu.matmul %44, %36, %cst_18 {dimension_numbers = #tpu.dot_dimension_numbers<[2], [1], [1], [2], [0, 0, 0, 1, 1, 2], [0], [0]>} : vector<8x16x16xf32>, vector<8x16x32xf32>, vector<8x16x32xf32> -> vector<8x16x32xf32>
    "tpu.trace_stop"() : () -> ()
    %48 = tpu.reciprocal %46 : vector<8x16x1xf32> -> vector<8x16x1xf32>
    %49 = vector.broadcast %48 : vector<8x16x1xf32> to vector<8x16x32xf32>
    %50 = arith.mulf %47, %49 : vector<8x16x32xf32>
    %51 = vector.shape_cast %50 : vector<8x16x32xf32> to vector<128x32xf32>
    %c32 = arith.constant 32 : index
    %c0_19 = arith.constant 0 : index
    %52 = vector.load %arg4[%c32, %c0_19] : memref<128x128xf32, #tpu.memory_space<vmem>>, vector<32x128xf32>
    %cst_20 = arith.constant dense<0.000000e+00> : vector<128x128xf32>
    %53 = tpu.matmul %51, %52, %cst_20 {dimension_numbers = #tpu.dot_dimension_numbers<[1], [0], [0], [1], [0, 0, 1, 1], [], []>} : vector<128x32xf32>, vector<32x128xf32>, vector<128x128xf32> -> vector<128x128xf32>
    %54 = arith.addf %30, %53 : vector<128x128xf32>
    %55 = vector.extract_strided_slice %5 {offsets = [0, 64], sizes = [128, 32], strides = [1, 1]} : vector<128x384xf32> to vector<128x32xf32>
    %56 = vector.shape_cast %55 : vector<128x32xf32> to vector<8x16x32xf32>
    %57 = vector.extract_strided_slice %5 {offsets = [0, 192], sizes = [128, 32], strides = [1, 1]} : vector<128x384xf32> to vector<128x32xf32>
    %58 = vector.shape_cast %57 : vector<128x32xf32> to vector<8x16x32xf32>
    %59 = vector.extract_strided_slice %5 {offsets = [0, 320], sizes = [128, 32], strides = [1, 1]} : vector<128x384xf32> to vector<128x32xf32>
    %60 = vector.shape_cast %59 : vector<128x32xf32> to vector<8x16x32xf32>
    "tpu.trace_start"() <{level = 10 : i32, message = "btd,bsd->bts"}> : () -> ()
    %cst_21 = arith.constant dense<0.000000e+00> : vector<8x16x16xf32>
    %61 = tpu.matmul %56, %58, %cst_21 {dimension_numbers = #tpu.dot_dimension_numbers<[2], [2], [1], [1], [0, 0, 0, 1, 1, 1], [0], [0]>} : vector<8x16x32xf32>, vector<8x16x32xf32>, vector<8x16x16xf32> -> vector<8x16x16xf32>
    "tpu.trace_stop"() : () -> ()
    %cst_22 = arith.constant 0.0883883461 : f32
    %62 = vector.broadcast %cst_22 : f32 to vector<8x16x16xf32>
    %63 = arith.mulf %61, %62 : vector<8x16x16xf32>
    %cst_23 = arith.constant dense<0xFF800000> : vector<8x16xf32>
    %64 = vector.multi_reduction <maximumf>, %63, %cst_23 [2] : vector<8x16x16xf32> to vector<8x16xf32>
    %65 = vector.shape_cast %64 : vector<8x16xf32> to vector<8x16x1xf32>
    %66 = vector.broadcast %65 : vector<8x16x1xf32> to vector<8x16x16xf32>
    %67 = arith.subf %63, %66 : vector<8x16x16xf32>
    %68 = math.exp %67 : vector<8x16x16xf32>
    %cst_24 = arith.constant dense<0.000000e+00> : vector<8x16xf32>
    %69 = vector.multi_reduction <add>, %68, %cst_24 [2] : vector<8x16x16xf32> to vector<8x16xf32>
    %70 = vector.shape_cast %69 : vector<8x16xf32> to vector<8x16x1xf32>
    "tpu.trace_start"() <{level = 10 : i32, message = "bts,bsd->btd"}> : () -> ()
    %cst_25 = arith.constant dense<0.000000e+00> : vector<8x16x32xf32>
    %71 = tpu.matmul %68, %60, %cst_25 {dimension_numbers = #tpu.dot_dimension_numbers<[2], [1], [1], [2], [0, 0, 0, 1, 1, 2], [0], [0]>} : vector<8x16x16xf32>, vector<8x16x32xf32>, vector<8x16x32xf32> -> vector<8x16x32xf32>
    "tpu.trace_stop"() : () -> ()
    %72 = tpu.reciprocal %70 : vector<8x16x1xf32> -> vector<8x16x1xf32>
    %73 = vector.broadcast %72 : vector<8x16x1xf32> to vector<8x16x32xf32>
    %74 = arith.mulf %71, %73 : vector<8x16x32xf32>
    %75 = vector.shape_cast %74 : vector<8x16x32xf32> to vector<128x32xf32>
    %c64 = arith.constant 64 : index
    %c0_26 = arith.constant 0 : index
    %76 = vector.load %arg4[%c64, %c0_26] : memref<128x128xf32, #tpu.memory_space<vmem>>, vector<32x128xf32>
    %cst_27 = arith.constant dense<0.000000e+00> : vector<128x128xf32>
    %77 = tpu.matmul %75, %76, %cst_27 {dimension_numbers = #tpu.dot_dimension_numbers<[1], [0], [0], [1], [0, 0, 1, 1], [], []>} : vector<128x32xf32>, vector<32x128xf32>, vector<128x128xf32> -> vector<128x128xf32>
    %78 = arith.addf %54, %77 : vector<128x128xf32>
    %79 = vector.extract_strided_slice %5 {offsets = [0, 96], sizes = [128, 32], strides = [1, 1]} : vector<128x384xf32> to vector<128x32xf32>
    %80 = vector.shape_cast %79 : vector<128x32xf32> to vector<8x16x32xf32>
    %81 = vector.extract_strided_slice %5 {offsets = [0, 224], sizes = [128, 32], strides = [1, 1]} : vector<128x384xf32> to vector<128x32xf32>
    %82 = vector.shape_cast %81 : vector<128x32xf32> to vector<8x16x32xf32>
    %83 = vector.extract_strided_slice %5 {offsets = [0, 352], sizes = [128, 32], strides = [1, 1]} : vector<128x384xf32> to vector<128x32xf32>
    %84 = vector.shape_cast %83 : vector<128x32xf32> to vector<8x16x32xf32>
    "tpu.trace_start"() <{level = 10 : i32, message = "btd,bsd->bts"}> : () -> ()
    %cst_28 = arith.constant dense<0.000000e+00> : vector<8x16x16xf32>
    %85 = tpu.matmul %80, %82, %cst_28 {dimension_numbers = #tpu.dot_dimension_numbers<[2], [2], [1], [1], [0, 0, 0, 1, 1, 1], [0], [0]>} : vector<8x16x32xf32>, vector<8x16x32xf32>, vector<8x16x16xf32> -> vector<8x16x16xf32>
    "tpu.trace_stop"() : () -> ()
    %cst_29 = arith.constant 0.0883883461 : f32
    %86 = vector.broadcast %cst_29 : f32 to vector<8x16x16xf32>
    %87 = arith.mulf %85, %86 : vector<8x16x16xf32>
    %cst_30 = arith.constant dense<0xFF800000> : vector<8x16xf32>
    %88 = vector.multi_reduction <maximumf>, %87, %cst_30 [2] : vector<8x16x16xf32> to vector<8x16xf32>
    %89 = vector.shape_cast %88 : vector<8x16xf32> to vector<8x16x1xf32>
    %90 = vector.broadcast %89 : vector<8x16x1xf32> to vector<8x16x16xf32>
    %91 = arith.subf %87, %90 : vector<8x16x16xf32>
    %92 = math.exp %91 : vector<8x16x16xf32>
    %cst_31 = arith.constant dense<0.000000e+00> : vector<8x16xf32>
    %93 = vector.multi_reduction <add>, %92, %cst_31 [2] : vector<8x16x16xf32> to vector<8x16xf32>
    %94 = vector.shape_cast %93 : vector<8x16xf32> to vector<8x16x1xf32>
    "tpu.trace_start"() <{level = 10 : i32, message = "bts,bsd->btd"}> : () -> ()
    %cst_32 = arith.constant dense<0.000000e+00> : vector<8x16x32xf32>
    %95 = tpu.matmul %92, %84, %cst_32 {dimension_numbers = #tpu.dot_dimension_numbers<[2], [1], [1], [2], [0, 0, 0, 1, 1, 2], [0], [0]>} : vector<8x16x16xf32>, vector<8x16x32xf32>, vector<8x16x32xf32> -> vector<8x16x32xf32>
    "tpu.trace_stop"() : () -> ()
    %96 = tpu.reciprocal %94 : vector<8x16x1xf32> -> vector<8x16x1xf32>
    %97 = vector.broadcast %96 : vector<8x16x1xf32> to vector<8x16x32xf32>
    %98 = arith.mulf %95, %97 : vector<8x16x32xf32>
    %99 = vector.shape_cast %98 : vector<8x16x32xf32> to vector<128x32xf32>
    %c96 = arith.constant 96 : index
    %c0_33 = arith.constant 0 : index
    %100 = vector.load %arg4[%c96, %c0_33] : memref<128x128xf32, #tpu.memory_space<vmem>>, vector<32x128xf32>
    %cst_34 = arith.constant dense<0.000000e+00> : vector<128x128xf32>
    %101 = tpu.matmul %99, %100, %cst_34 {dimension_numbers = #tpu.dot_dimension_numbers<[1], [0], [0], [1], [0, 0, 1, 1], [], []>} : vector<128x32xf32>, vector<32x128xf32>, vector<128x128xf32> -> vector<128x128xf32>
    %102 = arith.addf %78, %101 : vector<128x128xf32>
    %c0_35 = arith.constant 0 : index
    %c0_36 = arith.constant 0 : index
    %103 = vector.load %arg5[%c0_35, %c0_36] : memref<1x128xf32, #tpu.memory_space<vmem>>, vector<1x128xf32>
    %104 = vector.broadcast %103 : vector<1x128xf32> to vector<128x128xf32>
    %105 = arith.addf %102, %104 : vector<128x128xf32>
    %106 = arith.addf %0, %105 : vector<128x128xf32>
    %c0_37 = arith.constant 0 : index
    %c0_38 = arith.constant 0 : index
    %107 = vector.load %arg6[%c0_37, %c0_38] : memref<128x128xf32, #tpu.memory_space<vmem>>, vector<128x128xf32>
    %cst_39 = arith.constant dense<0.000000e+00> : vector<128x128xf32>
    %108 = tpu.matmul %106, %107, %cst_39 {dimension_numbers = #tpu.dot_dimension_numbers<[1], [0], [0], [1], [0, 0, 1, 1], [], []>} : vector<128x128xf32>, vector<128x128xf32>, vector<128x128xf32> -> vector<128x128xf32>
    %c0_40 = arith.constant 0 : index
    %c0_41 = arith.constant 0 : index
    %109 = vector.load %arg7[%c0_40, %c0_41] : memref<1x128xf32, #tpu.memory_space<vmem>>, vector<1x128xf32>
    %110 = vector.broadcast %109 : vector<1x128xf32> to vector<128x128xf32>
    %111 = arith.addf %108, %110 : vector<128x128xf32>
    %112 = arith.addf %106, %111 : vector<128x128xf32>
    %c0_42 = arith.constant 0 : index
    %c0_43 = arith.constant 0 : index
    %113 = vector.load %arg8[%c0_42, %c0_43] : memref<128x128xf32, #tpu.memory_space<vmem>>, vector<128x128xf32>
    tpu.vector_store %arg8[%c0_42, %c0_43], %112 {strides = array<i32>} : memref<128x128xf32, #tpu.memory_space<vmem>>, vector<128x128xf32>,
    return
  }
  func.func @transform_0(%arg0: i32) -> (i32, i32) {
    %c0_i32 = arith.constant 0 : i32
    %c0_i32_0 = arith.constant 0 : i32
    return %arg0, %c0_i32 : i32, i32
  }
  func.func @transform_1(%arg0: i32) -> (i32, i32) {
    %c0_i32 = arith.constant 0 : i32
    %c0_i32_0 = arith.constant 0 : i32
    %c0_i32_1 = arith.constant 0 : i32
    return %c0_i32, %c0_i32_0 : i32, i32
  }
  func.func @transform_2(%arg0: i32) -> (i32, i32) {
    %c0_i32 = arith.constant 0 : i32
    %c0_i32_0 = arith.constant 0 : i32
    %c0_i32_1 = arith.constant 0 : i32
    return %c0_i32, %c0_i32_0 : i32, i32
  }
  func.func @transform_3(%arg0: i32) -> (i32, i32) {
    %c0_i32 = arith.constant 0 : i32
    %c0_i32_0 = arith.constant 0 : i32
    %c0_i32_1 = arith.constant 0 : i32
    return %c0_i32, %c0_i32_0 : i32, i32
  }
  func.func @transform_4(%arg0: i32) -> (i32, i32) {
    %c0_i32 = arith.constant 0 : i32
    %c0_i32_0 = arith.constant 0 : i32
    %c0_i32_1 = arith.constant 0 : i32
    return %c0_i32, %c0_i32_0 : i32, i32
  }
  func.func @transform_5(%arg0: i32) -> (i32, i32) {
    %c0_i32 = arith.constant 0 : i32
    %c0_i32_0 = arith.constant 0 : i32
    %c0_i32_1 = arith.constant 0 : i32
    return %c0_i32, %c0_i32_0 : i32, i32
  }
  func.func @transform_6(%arg0: i32) -> (i32, i32) {
    %c0_i32 = arith.constant 0 : i32
    %c0_i32_0 = arith.constant 0 : i32
    %c0_i32_1 = arith.constant 0 : i32
    return %c0_i32, %c0_i32_0 : i32, i32
  }
  func.func @transform_7(%arg0: i32) -> (i32, i32) {
    %c0_i32 = arith.constant 0 : i32
    %c0_i32_0 = arith.constant 0 : i32
    return %arg0, %c0_i32 : i32, i32
  }
}

</mosaic_0001>

<llo_original>
// kernel: tpu_custom_call.1
$region0: #{tpu_custom_call.1}
  #allocation0 [shape = 'u32[]', space=smem, size = 0x4, offset = 0x4, fixed_abs, tag = 'smem constant byte address 0x4 - core index']
  #allocation1 [shape = 'u32[72,128]{1,0:T(1,128)}', space=vmem, size = 0x9000, scoped, tag = 'internal scratch']
  %s0 = inlined_call_operand.hbm [shape: f32[128,128], index: 0, kind: input, shape index: {}]
  %s1 = inlined_call_operand.hbm [shape: f32[128,384], index: 1, kind: input, shape index: {}]
  %s2 = inlined_call_operand.hbm [shape: f32[1,384], index: 2, kind: input, shape index: {}]
  %s3 = inlined_call_operand.hbm [shape: f32[128,128], index: 3, kind: input, shape index: {}]
  %s4 = inlined_call_operand.vmem [shape: f32[1,128], index: 4, kind: input, shape index: {}]
  %s5 = inlined_call_operand.hbm [shape: f32[128,128], index: 5, kind: input, shape index: {}]
  %s6 = inlined_call_operand.vmem [shape: f32[1,128], index: 6, kind: input, shape index: {}]
  %s7 = inlined_call_operand.hbm [shape: f32[128,128], index: 7, kind: output, shape index: {}]
  %s8 = sld [smem:[#allocation0]]
  $region58: #{tpu_custom_call.1} parent=0
    _
  %s10 = ssub.s32 1, %s8
  %s11 = scalar_select 0, %s10, %s8
  $region1: #{tpu_custom_call.1} parent=0
    #allocation2 [shape = 'u8[65536]{0}', space=vmem, size = 0x10000, scoped, tag = 'input window, operand 0, single buffered']
    #allocation3 [shape = 's32[1]{0}', space=sflag, size = 0x4, scoped, tag = 'scoped memory for tpu_custom_call.1']
    #allocation4 [shape = 's32[1]{0}', space=sflag, size = 0x4, scoped, tag = 'scoped memory for tpu_custom_call.1']
    #allocation5 [shape = 'u8[196608]{0}', space=vmem, size = 0x30000, scoped, tag = 'input window, operand 1, single buffered']
    #allocation6 [shape = 's32[1]{0}', space=sflag, size = 0x4, scoped, tag = 'scoped memory for tpu_custom_call.1']
    #allocation7 [shape = 'u8[1536]{0}', space=vmem, size = 0x800, scoped, tag = 'input window, operand 2, single buffered']
    #allocation8 [shape = 'u8[65536]{0}', space=vmem, size = 0x10000, scoped, tag = 'input window, operand 3, single buffered']
    #allocation9 [shape = 's32[1]{0}', space=sflag, size = 0x4, scoped, tag = 'scoped memory for tpu_custom_call.1']
    #allocation10 [shape = 'u8[65536]{0}', space=vmem, size = 0x10000, scoped, tag = 'input window, operand 5, single buffered']
    #allocation11 [shape = 'u8[65536]{0}', space=vmem, size = 0x10000, scoped, tag = 'output window, operand 0, single buffered']
    %12 = vsyncpa [#allocation3], 0
    %13 = vsyncpa [#allocation6], 0
    %14 = vsyncpa [#allocation9], 0
    %15 = vsyncpa [#allocation4], 0
    // Predicated region
    $region2: #{tpu_custom_call.1} parent=1 // pred_check
      _
    $region3: #{tpu_custom_call.1} parent=1 // pred_check_branch
      %17 = sbr.rel (0) target = $region5
    $region4: #{tpu_custom_call.1} parent=1 // pred_region
      %19 = vsyncadd [#allocation3], 0
      %s20 = sshll.u32 %s0, 4
      %s21 = int_to_ptr.hbm [resolvable:$true] %s20
      %s22 = sshll.u32 [#allocation2], 4
      %s23 = int_to_ptr.vmem [resolvable:$true] %s22
      %28 = dma.hbm_to_vmem [thread:$0]  %s21, 2048, %s23, [#allocation3], 128, 128, 8
    $region5: #{tpu_custom_call.1} parent=1 // pred_fallthru
      _
    // Predicated region
    $region6: #{tpu_custom_call.1} parent=1 // pred_check
      _
    $region7: #{tpu_custom_call.1} parent=1 // pred_check_branch
      %30 = sbr.rel (0) target = $region9
    $region8: #{tpu_custom_call.1} parent=1 // pred_region
      %32 = vsyncadd [#allocation6], 0
      %s33 = sshll.u32 %s1, 4
      %s34 = int_to_ptr.hbm [resolvable:$true] %s33
      %s35 = sshll.u32 [#allocation5], 4
      %s36 = int_to_ptr.vmem [resolvable:$true] %s35
      %41 = dma.hbm_to_vmem [thread:$0]  %s34, 6144, %s36, [#allocation6], 384, 384, 24
    $region9: #{tpu_custom_call.1} parent=1 // pred_fallthru
      _
    // Predicated region
    $region10: #{tpu_custom_call.1} parent=1 // pred_check
      _
    $region11: #{tpu_custom_call.1} parent=1 // pred_check_branch
      %43 = sbr.rel (0) target = $region13
    $region12: #{tpu_custom_call.1} parent=1 // pred_region
      %45 = vsyncadd [#allocation6], 0
      %s47 = sshll.u32 %s2, 4
      %s48 = int_to_ptr.hbm [resolvable:$true] %s47
      %s49 = sshll.u32 [#allocation7], 4
      %s50 = int_to_ptr.vmem [resolvable:$true] %s49
      %52 = dma.hbm_to_vmem [thread:$0]  %s48, 48, %s50, [#allocation6]
    $region13: #{tpu_custom_call.1} parent=1 // pred_fallthru
      _
    // Predicated region
    $region14: #{tpu_custom_call.1} parent=1 // pred_check
      _
    $region15: #{tpu_custom_call.1} parent=1 // pred_check_branch
      %54 = sbr.rel (0) target = $region17
    $region16: #{tpu_custom_call.1} parent=1 // pred_region
      %56 = vsyncadd [#allocation9], 0
      %s57 = sshll.u32 %s3, 4
      %s58 = int_to_ptr.hbm [resolvable:$true] %s57
      %s59 = sshll.u32 [#allocation8], 4
      %s60 = int_to_ptr.vmem [resolvable:$true] %s59
      %65 = dma.hbm_to_vmem [thread:$0]  %s58, 2048, %s60, [#allocation9], 128, 128, 8
    $region17: #{tpu_custom_call.1} parent=1 // pred_fallthru
      _
    // Predicated region
    $region18: #{tpu_custom_call.1} parent=1 // pred_check
      _
    $region19: #{tpu_custom_call.1} parent=1 // pred_check_branch
      %67 = sbr.rel (0) target = $region21
    $region20: #{tpu_custom_call.1} parent=1 // pred_region
      _
    $region21: #{tpu_custom_call.1} parent=1 // pred_fallthru
      _
    // Predicated region
    $region22: #{tpu_custom_call.1} parent=1 // pred_check
      _
    $region23: #{tpu_custom_call.1} parent=1 // pred_check_branch
      %69 = sbr.rel (0) target = $region25
    $region24: #{tpu_custom_call.1} parent=1 // pred_region
      %71 = vsyncadd [#allocation9], 0
      %s72 = sshll.u32 %s5, 4
      %s73 = int_to_ptr.hbm [resolvable:$true] %s72
      %s74 = sshll.u32 [#allocation10], 4
      %s75 = int_to_ptr.vmem [resolvable:$true] %s74
      %80 = dma.hbm_to_vmem [thread:$0]  %s73, 2048, %s75, [#allocation9], 128, 128, 8
    $region25: #{tpu_custom_call.1} parent=1 // pred_fallthru
      _
    // Predicated region
    $region26: #{tpu_custom_call.1} parent=1 // pred_check
      _
    $region27: #{tpu_custom_call.1} parent=1 // pred_check_branch
      %82 = sbr.rel (0) target = $region29
    $region28: #{tpu_custom_call.1} parent=1 // pred_region
      _
    $region29: #{tpu_custom_call.1} parent=1 // pred_fallthru
      _
    // Predicated region
    $region30: #{tpu_custom_call.1} parent=1 // pred_check
      _
    $region31: #{tpu_custom_call.1} parent=1 // pred_check_branch
      %84 = sbr.rel (0) target = $region33
    $region32: #{tpu_custom_call.1} parent=1 // pred_region
      %86 = dma.done [#allocation3], 2048
    $region33: #{tpu_custom_call.1} parent=1 // pred_fallthru
      _
    // Predicated region
    $region34: #{tpu_custom_call.1} parent=1 // pred_check
      _
    $region35: #{tpu_custom_call.1} parent=1 // pred_check_branch
      %88 = sbr.rel (0) target = $region37
    $region36: #{tpu_custom_call.1} parent=1 // pred_region
      %90 = dma.done [#allocation6], 6144
    $region37: #{tpu_custom_call.1} parent=1 // pred_fallthru
      _
    // Predicated region
    $region38: #{tpu_custom_call.1} parent=1 // pred_check
      _
    $region39: #{tpu_custom_call.1} parent=1 // pred_check_branch
      %92 = sbr.rel (0) target = $region41
    $region40: #{tpu_custom_call.1} parent=1 // pred_region
      %94 = dma.done [#allocation6], 48
    $region41: #{tpu_custom_call.1} parent=1 // pred_fallthru
      _
    // Predicated region
    $region42: #{tpu_custom_call.1} parent=1 // pred_check
      _
    $region43: #{tpu_custom_call.1} parent=1 // pred_check_branch
      %96 = sbr.rel (0) target = $region45
    $region44: #{tpu_custom_call.1} parent=1 // pred_region
      %98 = dma.done [#allocation9], 2048
    $region45: #{tpu_custom_call.1} parent=1 // pred_fallthru
      _
    // Predicated region
    $region46: #{tpu_custom_call.1} parent=1 // pred_check
      _
    $region47: #{tpu_custom_call.1} parent=1 // pred_check_branch
      %100 = sbr.rel (0) target = $region49
    $region48: #{tpu_custom_call.1} parent=1 // pred_region
      %102 = dma.done [#allocation9], 2048
    $region49: #{tpu_custom_call.1} parent=1 // pred_fallthru
      _
    %v103 = vld [vmem:[#allocation2] sm:$0xff]
    %v104 = vld [vmem:[#allocation2 + $0x8] sm:$0xff]
    %v105 = vld [vmem:[#allocation2 + $0x10] sm:$0xff]
    %v106 = vld [vmem:[#allocation2 + $0x18] sm:$0xff]
    %v107 = vld [vmem:[#allocation2 + $0x20] sm:$0xff]
    %v108 = vld [vmem:[#allocation2 + $0x28] sm:$0xff]
    %v109 = vld [vmem:[#allocation2 + $0x30] sm:$0xff]
    %v110 = vld [vmem:[#allocation2 + $0x38] sm:$0xff]
    %v111 = vld [vmem:[#allocation2 + $0x40] sm:$0xff]
    %v112 = vld [vmem:[#allocation2 + $0x48] sm:$0xff]
    %v113 = vld [vmem:[#allocation2 + $0x50] sm:$0xff]
    %v114 = vld [vmem:[#allocation2 + $0x58] sm:$0xff]
    %v115 = vld [vmem:[#allocation2 + $0x60] sm:$0xff]
    %v116 = vld [vmem:[#allocation2 + $0x68] sm:$0xff]
    %v117 = vld [vmem:[#allocation2 + $0x70] sm:$0xff]
    %v118 = vld [vmem:[#allocation2 + $0x78] sm:$0xff]
    %v119 = vld [vmem:[#allocation5] sm:$0xff]
    %v120 = vld [vmem:[#allocation5 + $0x8] sm:$0xff]
    %v121 = vld [vmem:[#allocation5 + $0x10] sm:$0xff]
    %v122 = vld [vmem:[#allocation5 + $0x18] sm:$0xff]
    %v123 = vld [vmem:[#allocation5 + $0x20] sm:$0xff]
    %v124 = vld [vmem:[#allocation5 + $0x28] sm:$0xff]
    %v125 = vld [vmem:[#allocation5 + $0x30] sm:$0xff]
    %v126 = vld [vmem:[#allocation5 + $0x38] sm:$0xff]
    %v127 = vld [vmem:[#allocation5 + $0x40] sm:$0xff]
    %v128 = vld [vmem:[#allocation5 + $0x48] sm:$0xff]
    %v129 = vld [vmem:[#allocation5 + $0x50] sm:$0xff]
    %v130 = vld [vmem:[#allocation5 + $0x58] sm:$0xff]
    %v131 = vld [vmem:[#allocation5 + $0x60] sm:$0xff]
    %v132 = vld [vmem:[#allocation5 + $0x68] sm:$0xff]
    %v133 = vld [vmem:[#allocation5 + $0x70] sm:$0xff]
    %v134 = vld [vmem:[#allocation5 + $0x78] sm:$0xff]
    %v135 = vld [vmem:[#allocation5 + $0x80] sm:$0xff]
    %v136 = vld [vmem:[#allocation5 + $0x88] sm:$0xff]
    %v137 = vld [vmem:[#allocation5 + $0x90] sm:$0xff]
    %v138 = vld [vmem:[#allocation5 + $0x98] sm:$0xff]
    %v139 = vld [vmem:[#allocation5 + $0xa0] sm:$0xff]
    %v140 = vld [vmem:[#allocation5 + $0xa8] sm:$0xff]
    %v141 = vld [vmem:[#allocation5 + $0xb0] sm:$0xff]
    %v142 = vld [vmem:[#allocation5 + $0xb8] sm:$0xff]
    %v143 = vld [vmem:[#allocation5 + $0xc0] sm:$0xff]
    %v144 = vld [vmem:[#allocation5 + $0xc8] sm:$0xff]
    %v145 = vld [vmem:[#allocation5 + $0xd0] sm:$0xff]
    %v146 = vld [vmem:[#allocation5 + $0xd8] sm:$0xff]
    %v147 = vld [vmem:[#allocation5 + $0xe0] sm:$0xff]
    %v148 = vld [vmem:[#allocation5 + $0xe8] sm:$0xff]
    %v149 = vld [vmem:[#allocation5 + $0xf0] sm:$0xff]
    %v150 = vld [vmem:[#allocation5 + $0xf8] sm:$0xff]
    %v151 = vld [vmem:[#allocation5 + $0x100] sm:$0xff]
    %v152 = vld [vmem:[#allocation5 + $0x108] sm:$0xff]
    %v153 = vld [vmem:[#allocation5 + $0x110] sm:$0xff]
    %v154 = vld [vmem:[#allocation5 + $0x118] sm:$0xff]
    %v155 = vld [vmem:[#allocation5 + $0x120] sm:$0xff]
    %v156 = vld [vmem:[#allocation5 + $0x128] sm:$0xff]
    %v157 = vld [vmem:[#allocation5 + $0x130] sm:$0xff]
    %v158 = vld [vmem:[#allocation5 + $0x138] sm:$0xff]
    %v159 = vld [vmem:[#allocation5 + $0x140] sm:$0xff]
    %v160 = vld [vmem:[#allocation5 + $0x148] sm:$0xff]
    %v161 = vld [vmem:[#allocation5 + $0x150] sm:$0xff]
    %v162 = vld [vmem:[#allocation5 + $0x158] sm:$0xff]
    %v163 = vld [vmem:[#allocation5 + $0x160] sm:$0xff]
    %v164 = vld [vmem:[#allocation5 + $0x168] sm:$0xff]
    %v165 = vld [vmem:[#allocation5 + $0x170] sm:$0xff]
    %v166 = vld [vmem:[#allocation5 + $0x178] sm:$0xff]
    %v167 = vld [vmem:[#allocation7] sm:$0x7]
    %v169 = vperm.slane %v167, 0
    %v170 = vperm.slane %v167, 1
    %v171 = vperm.slane %v167, 2
    %175 = vmatpush.msra.mxu0 %v164
    %176 = vmatpush.msra.mxu0 %v161
    %177 = vmatpush.msra.mxu0 %v158
    %178 = vmatpush.msra.mxu0 %v155
    %179 = vmatpush.msra.mxu0 %v152
    %180 = vmatpush.msra.mxu0 %v149
    %181 = vmatpush.msra.mxu0 %v146
    %182 = vmatpush.msra.mxu0 %v143
    %183 = vmatpush.msra.mxu0 %v140
    %184 = vmatpush.msra.mxu0 %v137
    %185 = vmatpush.msra.mxu0 %v134
    %186 = vmatpush.msra.mxu0 %v131
    %187 = vmatpush.msra.mxu0 %v128
    %188 = vmatpush.msra.mxu0 %v125
    %189 = vmatpush.msra.mxu0 %v122
    %190 = vmatpush.msra.mxu0 %v119
    %191 = vmatmul.f32.gmra.mxu0 %v103
    %v192 = vpop.f32.mrf.mxu0
    %v193 = vadd.f32 %v169, %v192
    %194 = vmatmul.f32.gmra.mxu0 %v104
    %v195 = vpop.f32.mrf.mxu0
    %v196 = vadd.f32 %v169, %v195
    %197 = vmatmul.f32.gmra.mxu0 %v105
    %v198 = vpop.f32.mrf.mxu0
    %v199 = vadd.f32 %v169, %v198
    %200 = vmatmul.f32.gmra.mxu0 %v106
    %v201 = vpop.f32.mrf.mxu0
    %v202 = vadd.f32 %v169, %v201
    %203 = vmatmul.f32.gmra.mxu0 %v107
    %v204 = vpop.f32.mrf.mxu0
    %v205 = vadd.f32 %v169, %v204
    %206 = vmatmul.f32.gmra.mxu0 %v108
    %v207 = vpop.f32.mrf.mxu0
    %v208 = vadd.f32 %v169, %v207
    %209 = vmatmul.f32.gmra.mxu0 %v109
    %v210 = vpop.f32.mrf.mxu0
    %v211 = vadd.f32 %v169, %v210
    %212 = vmatmul.f32.gmra.mxu0 %v110
    %v213 = vpop.f32.mrf.mxu0
    %v214 = vadd.f32 %v169, %v213
    %215 = vmatmul.f32.gmra.mxu0 %v111
    %v216 = vpop.f32.mrf.mxu0
    %v217 = vadd.f32 %v169, %v216
    %218 = vmatmul.f32.gmra.mxu0 %v112
    %v219 = vpop.f32.mrf.mxu0
    %v220 = vadd.f32 %v169, %v219
    %221 = vmatmul.f32.gmra.mxu0 %v113
    %v222 = vpop.f32.mrf.mxu0
    %v223 = vadd.f32 %v169, %v222
    %224 = vmatmul.f32.gmra.mxu0 %v114
    %v225 = vpop.f32.mrf.mxu0
    %v226 = vadd.f32 %v169, %v225
    %227 = vmatmul.f32.gmra.mxu0 %v115
    %v228 = vpop.f32.mrf.mxu0
    %v229 = vadd.f32 %v169, %v228
    %230 = vmatmul.f32.gmra.mxu0 %v116
    %v231 = vpop.f32.mrf.mxu0
    %v232 = vadd.f32 %v169, %v231
    %233 = vmatmul.f32.gmra.mxu0 %v117
    %v234 = vpop.f32.mrf.mxu0
    %v235 = vadd.f32 %v169, %v234
    %236 = vmatmul.f32.gmra.mxu0 %v118
    %v237 = vpop.f32.mrf.mxu0
    %v238 = vadd.f32 %v169, %v237
    %239 = vdwg.mxu0
    %240 = vmatpush.msra.mxu0 %v165
    %241 = vmatpush.msra.mxu0 %v162
    %242 = vmatpush.msra.mxu0 %v159
    %243 = vmatpush.msra.mxu0 %v156
    %244 = vmatpush.msra.mxu0 %v153
    %245 = vmatpush.msra.mxu0 %v150
    %246 = vmatpush.msra.mxu0 %v147
    %247 = vmatpush.msra.mxu0 %v144
    %248 = vmatpush.msra.mxu0 %v141
    %249 = vmatpush.msra.mxu0 %v138
    %250 = vmatpush.msra.mxu0 %v135
    %251 = vmatpush.msra.mxu0 %v132
    %252 = vmatpush.msra.mxu0 %v129
    %253 = vmatpush.msra.mxu0 %v126
    %254 = vmatpush.msra.mxu0 %v123
    %255 = vmatpush.msra.mxu0 %v120
    %256 = vmatmul.f32.gmra.mxu0 %v103
    %v257 = vpop.f32.mrf.mxu0
    %v258 = vadd.f32 %v170, %v257
    %259 = vmatmul.f32.gmra.mxu0 %v104
    %v260 = vpop.f32.mrf.mxu0
    %v261 = vadd.f32 %v170, %v260
    %262 = vmatmul.f32.gmra.mxu0 %v105
    %v263 = vpop.f32.mrf.mxu0
    %v264 = vadd.f32 %v170, %v263
    %265 = vmatmul.f32.gmra.mxu0 %v106
    %v266 = vpop.f32.mrf.mxu0
    %v267 = vadd.f32 %v170, %v266
    %268 = vmatmul.f32.gmra.mxu0 %v107
    %v269 = vpop.f32.mrf.mxu0
    %v270 = vadd.f32 %v170, %v269
    %271 = vmatmul.f32.gmra.mxu0 %v108
    %v272 = vpop.f32.mrf.mxu0
    %v273 = vadd.f32 %v170, %v272
    %274 = vmatmul.f32.gmra.mxu0 %v109
    %v275 = vpop.f32.mrf.mxu0
    %v276 = vadd.f32 %v170, %v275
    %277 = vmatmul.f32.gmra.mxu0 %v110
    %v278 = vpop.f32.mrf.mxu0
    %v279 = vadd.f32 %v170, %v278
    %280 = vmatmul.f32.gmra.mxu0 %v111
    %v281 = vpop.f32.mrf.mxu0
    %v282 = vadd.f32 %v170, %v281
    %283 = vmatmul.f32.gmra.mxu0 %v112
    %v284 = vpop.f32.mrf.mxu0
    %v285 = vadd.f32 %v170, %v284
    %286 = vmatmul.f32.gmra.mxu0 %v113
    %v287 = vpop.f32.mrf.mxu0
    %v288 = vadd.f32 %v170, %v287
    %289 = vmatmul.f32.gmra.mxu0 %v114
    %v290 = vpop.f32.mrf.mxu0
    %v291 = vadd.f32 %v170, %v290
    %292 = vmatmul.f32.gmra.mxu0 %v115
    %v293 = vpop.f32.mrf.mxu0
    %v294 = vadd.f32 %v170, %v293
    %295 = vmatmul.f32.gmra.mxu0 %v116
    %v296 = vpop.f32.mrf.mxu0
    %v297 = vadd.f32 %v170, %v296
    %298 = vmatmul.f32.gmra.mxu0 %v117
    %v299 = vpop.f32.mrf.mxu0
    %v300 = vadd.f32 %v170, %v299
    %301 = vmatmul.f32.gmra.mxu0 %v118
    %v302 = vpop.f32.mrf.mxu0
    %v303 = vadd.f32 %v170, %v302
    %304 = vdwg.mxu0
    %305 = vmatpush.msra.mxu0 %v166
    %306 = vmatpush.msra.mxu0 %v163
    %307 = vmatpush.msra.mxu0 %v160
    %308 = vmatpush.msra.mxu0 %v157
    %309 = vmatpush.msra.mxu0 %v154
    %310 = vmatpush.msra.mxu0 %v151
    %311 = vmatpush.msra.mxu0 %v148
    %312 = vmatpush.msra.mxu0 %v145
    %313 = vmatpush.msra.mxu0 %v142
    %314 = vmatpush.msra.mxu0 %v139
    %315 = vmatpush.msra.mxu0 %v136
    %316 = vmatpush.msra.mxu0 %v133
    %317 = vmatpush.msra.mxu0 %v130
    %318 = vmatpush.msra.mxu0 %v127
    %319 = vmatpush.msra.mxu0 %v124
    %320 = vmatpush.msra.mxu0 %v121
    %321 = vmatmul.f32.gmra.mxu0 %v103
    %v322 = vpop.f32.mrf.mxu0
    %v323 = vadd.f32 %v171, %v322
    %324 = vmatmul.f32.gmra.mxu0 %v104
    %v325 = vpop.f32.mrf.mxu0
    %v326 = vadd.f32 %v171, %v325
    %327 = vmatmul.f32.gmra.mxu0 %v105
    %v328 = vpop.f32.mrf.mxu0
    %v329 = vadd.f32 %v171, %v328
    %330 = vmatmul.f32.gmra.mxu0 %v106
    %v331 = vpop.f32.mrf.mxu0
    %v332 = vadd.f32 %v171, %v331
    %333 = vmatmul.f32.gmra.mxu0 %v107
    %v334 = vpop.f32.mrf.mxu0
    %v335 = vadd.f32 %v171, %v334
    %336 = vmatmul.f32.gmra.mxu0 %v108
    %v337 = vpop.f32.mrf.mxu0
    %v338 = vadd.f32 %v171, %v337
    %339 = vmatmul.f32.gmra.mxu0 %v109
    %v340 = vpop.f32.mrf.mxu0
    %v341 = vadd.f32 %v171, %v340
    %342 = vmatmul.f32.gmra.mxu0 %v110
    %v343 = vpop.f32.mrf.mxu0
    %v344 = vadd.f32 %v171, %v343
    %345 = vmatmul.f32.gmra.mxu0 %v111
    %v346 = vpop.f32.mrf.mxu0
    %v347 = vadd.f32 %v171, %v346
    %348 = vmatmul.f32.gmra.mxu0 %v112
    %v349 = vpop.f32.mrf.mxu0
    %v350 = vadd.f32 %v171, %v349
    %351 = vmatmul.f32.gmra.mxu0 %v113
    %v352 = vpop.f32.mrf.mxu0
    %v353 = vadd.f32 %v171, %v352
    %354 = vmatmul.f32.gmra.mxu0 %v114
    %v355 = vpop.f32.mrf.mxu0
    %v356 = vadd.f32 %v171, %v355
    %357 = vmatmul.f32.gmra.mxu0 %v115
    %v358 = vpop.f32.mrf.mxu0
    %v359 = vadd.f32 %v171, %v358
    %360 = vmatmul.f32.gmra.mxu0 %v116
    %v361 = vpop.f32.mrf.mxu0
    %v362 = vadd.f32 %v171, %v361
    %363 = vmatmul.f32.gmra.mxu0 %v117
    %v364 = vpop.f32.mrf.mxu0
    %v365 = vadd.f32 %v171, %v364
    %366 = vmatmul.f32.gmra.mxu0 %v118
    %v367 = vpop.f32.mrf.mxu0
    %v368 = vadd.f32 %v171, %v367
    %369 = vdwg.mxu0
    %vm370 = vcmask 261120
    %v372 = vsel %vm370, %v193, 0
    %v375 = vsel %vm370, %v196, 0
    %v378 = vsel %vm370, %v258, 0
    %v381 = vsel %vm370, %v261, 0
    %383 = vmatpush.xpose.msra.mxu0 0.0
    %384 = vmatpush.xpose.msra.mxu0 0.0
    %385 = vmatpush.xpose.msra.mxu0 0.0
    %386 = vmatpush.xpose.msra.mxu0 0.0
    %387 = vmatpush.xpose.msra.mxu0 0.0
    %388 = vmatpush.xpose.msra.mxu0 0.0
    %389 = vmatpush.xpose.msra.mxu0 0.0
    %390 = vmatpush.xpose.msra.mxu0 0.0
    %391 = vmatpush.xpose.msra.mxu0 0.0
    %392 = vmatpush.xpose.msra.mxu0 0.0
    %393 = vmatpush.xpose.msra.mxu0 0.0
    %394 = vmatpush.xpose.msra.mxu0 0.0
    %395 = vmatpush.xpose.msra.mxu0 0.0
    %396 = vmatpush.xpose.msra.mxu0 0.0
    %397 = vmatpush.xpose.msra.mxu0 %v381
    %398 = vmatpush.xpose.msra.mxu0 %v378
    %399 = vmatmul.f32.gmra.mxu0 %v372
    %v400 = vpop.f32.mrf.mxu0
    %v401 = vadd.f32 0.0, %v400
    %402 = vmatmul.f32.gmra.mxu0 %v375
    %v403 = vpop.f32.mrf.mxu0
    %v404 = vadd.f32 0.0, %v403
    %405 = vdwg.mxu0
    %v407 = vsel %vm370, %v199, 0
    %v410 = vsel %vm370, %v202, 0
    %v413 = vsel %vm370, %v264, 0
    %v416 = vsel %vm370, %v267, 0
    %418 = vmatpush.xpose.msra.mxu0 0.0
    %419 = vmatpush.xpose.msra.mxu0 0.0
    %420 = vmatpush.xpose.msra.mxu0 0.0
    %421 = vmatpush.xpose.msra.mxu0 0.0
    %422 = vmatpush.xpose.msra.mxu0 0.0
    %423 = vmatpush.xpose.msra.mxu0 0.0
    %424 = vmatpush.xpose.msra.mxu0 0.0
    %425 = vmatpush.xpose.msra.mxu0 0.0
    %426 = vmatpush.xpose.msra.mxu0 0.0
    %427 = vmatpush.xpose.msra.mxu0 0.0
    %428 = vmatpush.xpose.msra.mxu0 0.0
    %429 = vmatpush.xpose.msra.mxu0 0.0
    %430 = vmatpush.xpose.msra.mxu0 0.0
    %431 = vmatpush.xpose.msra.mxu0 0.0
    %432 = vmatpush.xpose.msra.mxu0 %v416
    %433 = vmatpush.xpose.msra.mxu0 %v413
    %434 = vmatmul.f32.gmra.mxu0 %v407
    %v435 = vpop.f32.mrf.mxu0
    %v436 = vadd.f32 0.0, %v435
    %437 = vmatmul.f32.gmra.mxu0 %v410
    %v438 = vpop.f32.mrf.mxu0
    %v439 = vadd.f32 0.0, %v438
    %440 = vdwg.mxu0
    %v442 = vsel %vm370, %v205, 0
    %v445 = vsel %vm370, %v208, 0
    %v448 = vsel %vm370, %v270, 0
    %v451 = vsel %vm370, %v273, 0
    %453 = vmatpush.xpose.msra.mxu0 0.0
    %454 = vmatpush.xpose.msra.mxu0 0.0
    %455 = vmatpush.xpose.msra.mxu0 0.0
    %456 = vmatpush.xpose.msra.mxu0 0.0
    %457 = vmatpush.xpose.msra.mxu0 0.0
    %458 = vmatpush.xpose.msra.mxu0 0.0
    %459 = vmatpush.xpose.msra.mxu0 0.0
    %460 = vmatpush.xpose.msra.mxu0 0.0
    %461 = vmatpush.xpose.msra.mxu0 0.0
    %462 = vmatpush.xpose.msra.mxu0 0.0
    %463 = vmatpush.xpose.msra.mxu0 0.0
    %464 = vmatpush.xpose.msra.mxu0 0.0
    %465 = vmatpush.xpose.msra.mxu0 0.0
    %466 = vmatpush.xpose.msra.mxu0 0.0
    %467 = vmatpush.xpose.msra.mxu0 %v451
    %468 = vmatpush.xpose.msra.mxu0 %v448
    %469 = vmatmul.f32.gmra.mxu0 %v442
    %v470 = vpop.f32.mrf.mxu0
    %v471 = vadd.f32 0.0, %v470
    %472 = vmatmul.f32.gmra.mxu0 %v445
    %v473 = vpop.f32.mrf.mxu0
    %v474 = vadd.f32 0.0, %v473
    %475 = vdwg.mxu0
    %v477 = vsel %vm370, %v211, 0
    %v480 = vsel %vm370, %v214, 0
    %v483 = vsel %vm370, %v276, 0
    %v486 = vsel %vm370, %v279, 0
    %488 = vmatpush.xpose.msra.mxu0 0.0
    %489 = vmatpush.xpose.msra.mxu0 0.0
    %490 = vmatpush.xpose.msra.mxu0 0.0
    %491 = vmatpush.xpose.msra.mxu0 0.0
    %492 = vmatpush.xpose.msra.mxu0 0.0
    %493 = vmatpush.xpose.msra.mxu0 0.0
    %494 = vmatpush.xpose.msra.mxu0 0.0
    %495 = vmatpush.xpose.msra.mxu0 0.0
    %496 = vmatpush.xpose.msra.mxu0 0.0
    %497 = vmatpush.xpose.msra.mxu0 0.0
    %498 = vmatpush.xpose.msra.mxu0 0.0
    %499 = vmatpush.xpose.msra.mxu0 0.0
    %500 = vmatpush.xpose.msra.mxu0 0.0
    %501 = vmatpush.xpose.msra.mxu0 0.0
    %502 = vmatpush.xpose.msra.mxu0 %v486
    %503 = vmatpush.xpose.msra.mxu0 %v483
    %504 = vmatmul.f32.gmra.mxu0 %v477
    %v505 = vpop.f32.mrf.mxu0
    %v506 = vadd.f32 0.0, %v505
    %507 = vmatmul.f32.gmra.mxu0 %v480
    %v508 = vpop.f32.mrf.mxu0
    %v509 = vadd.f32 0.0, %v508
    %510 = vdwg.mxu0
    %v512 = vsel %vm370, %v217, 0
    %v515 = vsel %vm370, %v220, 0
    %v518 = vsel %vm370, %v282, 0
    %v521 = vsel %vm370, %v285, 0
    %523 = vmatpush.xpose.msra.mxu0 0.0
    %524 = vmatpush.xpose.msra.mxu0 0.0
    %525 = vmatpush.xpose.msra.mxu0 0.0
    %526 = vmatpush.xpose.msra.mxu0 0.0
    %527 = vmatpush.xpose.msra.mxu0 0.0
    %528 = vmatpush.xpose.msra.mxu0 0.0
    %529 = vmatpush.xpose.msra.mxu0 0.0
    %530 = vmatpush.xpose.msra.mxu0 0.0
    %531 = vmatpush.xpose.msra.mxu0 0.0
    %532 = vmatpush.xpose.msra.mxu0 0.0
    %533 = vmatpush.xpose.msra.mxu0 0.0
    %534 = vmatpush.xpose.msra.mxu0 0.0
    %535 = vmatpush.xpose.msra.mxu0 0.0
    %536 = vmatpush.xpose.msra.mxu0 0.0
    %537 = vmatpush.xpose.msra.mxu0 %v521
    %538 = vmatpush.xpose.msra.mxu0 %v518
    %539 = vmatmul.f32.gmra.mxu0 %v512
    %v540 = vpop.f32.mrf.mxu0
    %v541 = vadd.f32 0.0, %v540
    %542 = vmatmul.f32.gmra.mxu0 %v515
    %v543 = vpop.f32.mrf.mxu0
    %v544 = vadd.f32 0.0, %v543
    %545 = vdwg.mxu0
    %v547 = vsel %vm370, %v223, 0
    %v550 = vsel %vm370, %v226, 0
    %v553 = vsel %vm370, %v288, 0
    %v556 = vsel %vm370, %v291, 0
    %558 = vmatpush.xpose.msra.mxu0 0.0
    %559 = vmatpush.xpose.msra.mxu0 0.0
    %560 = vmatpush.xpose.msra.mxu0 0.0
    %561 = vmatpush.xpose.msra.mxu0 0.0
    %562 = vmatpush.xpose.msra.mxu0 0.0
    %563 = vmatpush.xpose.msra.mxu0 0.0
    %564 = vmatpush.xpose.msra.mxu0 0.0
    %565 = vmatpush.xpose.msra.mxu0 0.0
    %566 = vmatpush.xpose.msra.mxu0 0.0
    %567 = vmatpush.xpose.msra.mxu0 0.0
    %568 = vmatpush.xpose.msra.mxu0 0.0
    %569 = vmatpush.xpose.msra.mxu0 0.0
    %570 = vmatpush.xpose.msra.mxu0 0.0
    %571 = vmatpush.xpose.msra.mxu0 0.0
    %572 = vmatpush.xpose.msra.mxu0 %v556
    %573 = vmatpush.xpose.msra.mxu0 %v553
    %574 = vmatmul.f32.gmra.mxu0 %v547
    %v575 = vpop.f32.mrf.mxu0
    %v576 = vadd.f32 0.0, %v575
    %577 = vmatmul.f32.gmra.mxu0 %v550
    %v578 = vpop.f32.mrf.mxu0
    %v579 = vadd.f32 0.0, %v578
    %580 = vdwg.mxu0
    %v582 = vsel %vm370, %v229, 0
    %v585 = vsel %vm370, %v232, 0
    %v588 = vsel %vm370, %v294, 0
    %v591 = vsel %vm370, %v297, 0
    %593 = vmatpush.xpose.msra.mxu0 0.0
    %594 = vmatpush.xpose.msra.mxu0 0.0
    %595 = vmatpush.xpose.msra.mxu0 0.0
    %596 = vmatpush.xpose.msra.mxu0 0.0
    %597 = vmatpush.xpose.msra.mxu0 0.0
    %598 = vmatpush.xpose.msra.mxu0 0.0
    %599 = vmatpush.xpose.msra.mxu0 0.0
    %600 = vmatpush.xpose.msra.mxu0 0.0
    %601 = vmatpush.xpose.msra.mxu0 0.0
    %602 = vmatpush.xpose.msra.mxu0 0.0
    %603 = vmatpush.xpose.msra.mxu0 0.0
    %604 = vmatpush.xpose.msra.mxu0 0.0
    %605 = vmatpush.xpose.msra.mxu0 0.0
    %606 = vmatpush.xpose.msra.mxu0 0.0
    %607 = vmatpush.xpose.msra.mxu0 %v591
    %608 = vmatpush.xpose.msra.mxu0 %v588
    %609 = vmatmul.f32.gmra.mxu0 %v582
    %v610 = vpop.f32.mrf.mxu0
    %v611 = vadd.f32 0.0, %v610
    %612 = vmatmul.f32.gmra.mxu0 %v585
    %v613 = vpop.f32.mrf.mxu0
    %v614 = vadd.f32 0.0, %v613
    %615 = vdwg.mxu0
    %v617 = vsel %vm370, %v235, 0
    %v620 = vsel %vm370, %v238, 0
    %v623 = vsel %vm370, %v300, 0
    %v626 = vsel %vm370, %v303, 0
    %628 = vmatpush.xpose.msra.mxu0 0.0
    %629 = vmatpush.xpose.msra.mxu0 0.0
    %630 = vmatpush.xpose.msra.mxu0 0.0
    %631 = vmatpush.xpose.msra.mxu0 0.0
    %632 = vmatpush.xpose.msra.mxu0 0.0
    %633 = vmatpush.xpose.msra.mxu0 0.0
    %634 = vmatpush.xpose.msra.mxu0 0.0
    %635 = vmatpush.xpose.msra.mxu0 0.0
    %636 = vmatpush.xpose.msra.mxu0 0.0
    %637 = vmatpush.xpose.msra.mxu0 0.0
    %638 = vmatpush.xpose.msra.mxu0 0.0
    %639 = vmatpush.xpose.msra.mxu0 0.0
    %640 = vmatpush.xpose.msra.mxu0 0.0
    %641 = vmatpush.xpose.msra.mxu0 0.0
    %642 = vmatpush.xpose.msra.mxu0 %v626
    %643 = vmatpush.xpose.msra.mxu0 %v623
    %644 = vmatmul.f32.gmra.mxu0 %v617
    %v645 = vpop.f32.mrf.mxu0
    %v646 = vadd.f32 0.0, %v645
    %647 = vmatmul.f32.gmra.mxu0 %v620
    %v648 = vpop.f32.mrf.mxu0
    %v649 = vadd.f32 0.0, %v648
    %650 = vdwg.mxu0
    %v651 = vmul.f32 %v401, 0.088388346
    %v652 = vmul.f32 %v404, 0.088388346
    %v653 = vmul.f32 %v436, 0.088388346
    %v654 = vmul.f32 %v439, 0.088388346
    %v655 = vmul.f32 %v471, 0.088388346
    %v656 = vmul.f32 %v474, 0.088388346
    %v657 = vmul.f32 %v506, 0.088388346
    %v658 = vmul.f32 %v509, 0.088388346
    %v659 = vmul.f32 %v541, 0.088388346
    %v660 = vmul.f32 %v544, 0.088388346
    %v661 = vmul.f32 %v576, 0.088388346
    %v662 = vmul.f32 %v579, 0.088388346
    %v663 = vmul.f32 %v611, 0.088388346
    %v664 = vmul.f32 %v614, 0.088388346
    %v665 = vmul.f32 %v646, 0.088388346
    %v666 = vmul.f32 %v649, 0.088388346
    %vm667 = vcmask 130048
    %v668 = vsel %vm667, %v651, -inf
    %669 = vmax.xlane.f32.xlu0 %v668
    %v670 = vpop.xlane.xlu0 %669
    %v671 = vsel %vm667, %v652, -inf
    %672 = vmax.xlane.f32.xlu0 %v671
    %v673 = vpop.xlane.xlu0 %672
    %v674 = vsel %vm667, %v653, -inf
    %675 = vmax.xlane.f32.xlu0 %v674
    %v676 = vpop.xlane.xlu0 %675
    %v677 = vsel %vm667, %v654, -inf
    %678 = vmax.xlane.f32.xlu0 %v677
    %v679 = vpop.xlane.xlu0 %678
    %v680 = vsel %vm667, %v655, -inf
    %681 = vmax.xlane.f32.xlu0 %v680
    %v682 = vpop.xlane.xlu0 %681
    %v683 = vsel %vm667, %v656, -inf
    %684 = vmax.xlane.f32.xlu0 %v683
    %v685 = vpop.xlane.xlu0 %684
    %v686 = vsel %vm667, %v657, -inf
    %687 = vmax.xlane.f32.xlu0 %v686
    %v688 = vpop.xlane.xlu0 %687
    %v689 = vsel %vm667, %v658, -inf
    %690 = vmax.xlane.f32.xlu0 %v689
    %v691 = vpop.xlane.xlu0 %690
    %v692 = vsel %vm667, %v659, -inf
    %693 = vmax.xlane.f32.xlu0 %v692
    %v694 = vpop.xlane.xlu0 %693
    %v695 = vsel %vm667, %v660, -inf
    %696 = vmax.xlane.f32.xlu0 %v695
    %v697 = vpop.xlane.xlu0 %696
    %v698 = vsel %vm667, %v661, -inf
    %699 = vmax.xlane.f32.xlu0 %v698
    %v700 = vpop.xlane.xlu0 %699
    %v701 = vsel %vm667, %v662, -inf
    %702 = vmax.xlane.f32.xlu0 %v701
    %v703 = vpop.xlane.xlu0 %702
    %v704 = vsel %vm667, %v663, -inf
    %705 = vmax.xlane.f32.xlu0 %v704
    %v706 = vpop.xlane.xlu0 %705
    %v707 = vsel %vm667, %v664, -inf
    %708 = vmax.xlane.f32.xlu0 %v707
    %v709 = vpop.xlane.xlu0 %708
    %v710 = vsel %vm667, %v665, -inf
    %711 = vmax.xlane.f32.xlu0 %v710
    %v712 = vpop.xlane.xlu0 %711
    %v713 = vsel %vm667, %v666, -inf
    %714 = vmax.xlane.f32.xlu0 %v713
    %v715 = vpop.xlane.xlu0 %714
    %v716 = vsub.f32 %v651, %v670
    %v717 = vsub.f32 %v652, %v673
    %v718 = vsub.f32 %v653, %v676
    %v719 = vsub.f32 %v654, %v679
    %v720 = vsub.f32 %v655, %v682
    %v721 = vsub.f32 %v656, %v685
    %v722 = vsub.f32 %v657, %v688
    %v723 = vsub.f32 %v658, %v691
    %v724 = vsub.f32 %v659, %v694
    %v725 = vsub.f32 %v660, %v697
    %v726 = vsub.f32 %v661, %v700
    %v727 = vsub.f32 %v662, %v703
    %v728 = vsub.f32 %v663, %v706
    %v729 = vsub.f32 %v664, %v709
    %v730 = vsub.f32 %v665, %v712
    %v731 = vsub.f32 %v666, %v715
    %v732 = vmul.f32 %v716, 1.442695
    %v733 = vpow.pop %v732
    %v734 = vmul.f32 %v717, 1.442695
    %v735 = vpow.pop %v734
    %v736 = vmul.f32 %v718, 1.442695
    %v737 = vpow.pop %v736
    %v738 = vmul.f32 %v719, 1.442695
    %v739 = vpow.pop %v738
    %v740 = vmul.f32 %v720, 1.442695
    %v741 = vpow.pop %v740
    %v742 = vmul.f32 %v721, 1.442695
    %v743 = vpow.pop %v742
    %v744 = vmul.f32 %v722, 1.442695
    %v745 = vpow.pop %v744
    %v746 = vmul.f32 %v723, 1.442695
    %v747 = vpow.pop %v746
    %v748 = vmul.f32 %v724, 1.442695
    %v749 = vpow.pop %v748
    %v750 = vmul.f32 %v725, 1.442695
    %v751 = vpow.pop %v750
    %v752 = vmul.f32 %v726, 1.442695
    %v753 = vpow.pop %v752
    %v754 = vmul.f32 %v727, 1.442695
    %v755 = vpow.pop %v754
    %v756 = vmul.f32 %v728, 1.442695
    %v757 = vpow.pop %v756
    %v758 = vmul.f32 %v729, 1.442695
    %v759 = vpow.pop %v758
    %v760 = vmul.f32 %v730, 1.442695
    %v761 = vpow.pop %v760
    %v762 = vmul.f32 %v731, 1.442695
    %v763 = vpow.pop %v762
    %v764 = vsel %vm667, %v733, 0.0
    %765 = vadd.xlane.f32.xlu0 %v764
    %v766 = vpop.xlane.xlu0 %765
    %v767 = vsel %vm667, %v735, 0.0
    %768 = vadd.xlane.f32.xlu0 %v767
    %v769 = vpop.xlane.xlu0 %768
    %v770 = vsel %vm667, %v737, 0.0
    %771 = vadd.xlane.f32.xlu0 %v770
    %v772 = vpop.xlane.xlu0 %771
    %v773 = vsel %vm667, %v739, 0.0
    %774 = vadd.xlane.f32.xlu0 %v773
    %v775 = vpop.xlane.xlu0 %774
    %v776 = vsel %vm667, %v741, 0.0
    %777 = vadd.xlane.f32.xlu0 %v776
    %v778 = vpop.xlane.xlu0 %777
    %v779 = vsel %vm667, %v743, 0.0
    %780 = vadd.xlane.f32.xlu0 %v779
    %v781 = vpop.xlane.xlu0 %780
    %v782 = vsel %vm667, %v745, 0.0
    %783 = vadd.xlane.f32.xlu0 %v782
    %v784 = vpop.xlane.xlu0 %783
    %v785 = vsel %vm667, %v747, 0.0
    %786 = vadd.xlane.f32.xlu0 %v785
    %v787 = vpop.xlane.xlu0 %786
    %v788 = vsel %vm667, %v749, 0.0
    %789 = vadd.xlane.f32.xlu0 %v788
    %v790 = vpop.xlane.xlu0 %789
    %v791 = vsel %vm667, %v751, 0.0
    %792 = vadd.xlane.f32.xlu0 %v791
    %v793 = vpop.xlane.xlu0 %792
    %v794 = vsel %vm667, %v753, 0.0
    %795 = vadd.xlane.f32.xlu0 %v794
    %v796 = vpop.xlane.xlu0 %795
    %v797 = vsel %vm667, %v755, 0.0
    %798 = vadd.xlane.f32.xlu0 %v797
    %v799 = vpop.xlane.xlu0 %798
    %v800 = vsel %vm667, %v757, 0.0
    %801 = vadd.xlane.f32.xlu0 %v800
    %v802 = vpop.xlane.xlu0 %801
    %v803 = vsel %vm667, %v759, 0.0
    %804 = vadd.xlane.f32.xlu0 %v803
    %v805 = vpop.xlane.xlu0 %804
    %v806 = vsel %vm667, %v761, 0.0
    %807 = vadd.xlane.f32.xlu0 %v806
    %v808 = vpop.xlane.xlu0 %807
    %v809 = vsel %vm667, %v763, 0.0
    %810 = vadd.xlane.f32.xlu0 %v809
    %v811 = vpop.xlane.xlu0 %810
    %v813 = vsel %vm667, %v733, 0
    %v816 = vsel %vm667, %v735, 0
    %818 = vmatpush.msra.mxu0 0.0
    %819 = vmatpush.msra.mxu0 0.0
    %820 = vmatpush.msra.mxu0 0.0
    %821 = vmatpush.msra.mxu0 0.0
    %822 = vmatpush.msra.mxu0 0.0
    %823 = vmatpush.msra.mxu0 0.0
    %824 = vmatpush.msra.mxu0 0.0
    %825 = vmatpush.msra.mxu0 0.0
    %826 = vmatpush.msra.mxu0 0.0
    %827 = vmatpush.msra.mxu0 0.0
    %828 = vmatpush.msra.mxu0 0.0
    %829 = vmatpush.msra.mxu0 0.0
    %830 = vmatpush.msra.mxu0 0.0
    %831 = vmatpush.msra.mxu0 0.0
    %832 = vmatpush.msra.mxu0 %v326
    %833 = vmatpush.msra.mxu0 %v323
    %834 = vmatmul.f32.gmra.mxu0 %v813
    %v835 = vpop.f32.mrf.mxu0
    %v836 = vadd.f32 0.0, %v835
    %837 = vmatmul.f32.gmra.mxu0 %v816
    %v838 = vpop.f32.mrf.mxu0
    %v839 = vadd.f32 0.0, %v838
    %840 = vdwg.mxu0
    %v842 = vsel %vm667, %v737, 0
    %v845 = vsel %vm667, %v739, 0
    %847 = vmatpush.msra.mxu0 0.0
    %848 = vmatpush.msra.mxu0 0.0
    %849 = vmatpush.msra.mxu0 0.0
    %850 = vmatpush.msra.mxu0 0.0
    %851 = vmatpush.msra.mxu0 0.0
    %852 = vmatpush.msra.mxu0 0.0
    %853 = vmatpush.msra.mxu0 0.0
    %854 = vmatpush.msra.mxu0 0.0
    %855 = vmatpush.msra.mxu0 0.0
    %856 = vmatpush.msra.mxu0 0.0
    %857 = vmatpush.msra.mxu0 0.0
    %858 = vmatpush.msra.mxu0 0.0
    %859 = vmatpush.msra.mxu0 0.0
    %860 = vmatpush.msra.mxu0 0.0
    %861 = vmatpush.msra.mxu0 %v332
    %862 = vmatpush.msra.mxu0 %v329
    %863 = vmatmul.f32.gmra.mxu0 %v842
    %v864 = vpop.f32.mrf.mxu0
    %v865 = vadd.f32 0.0, %v864
    %866 = vmatmul.f32.gmra.mxu0 %v845
    %v867 = vpop.f32.mrf.mxu0
    %v868 = vadd.f32 0.0, %v867
    %869 = vdwg.mxu0
    %v871 = vsel %vm667, %v741, 0
    %v874 = vsel %vm667, %v743, 0
    %876 = vmatpush.msra.mxu0 0.0
    %877 = vmatpush.msra.mxu0 0.0
    %878 = vmatpush.msra.mxu0 0.0
    %879 = vmatpush.msra.mxu0 0.0
    %880 = vmatpush.msra.mxu0 0.0
    %881 = vmatpush.msra.mxu0 0.0
    %882 = vmatpush.msra.mxu0 0.0
    %883 = vmatpush.msra.mxu0 0.0
    %884 = vmatpush.msra.mxu0 0.0
    %885 = vmatpush.msra.mxu0 0.0
    %886 = vmatpush.msra.mxu0 0.0
    %887 = vmatpush.msra.mxu0 0.0
    %888 = vmatpush.msra.mxu0 0.0
    %889 = vmatpush.msra.mxu0 0.0
    %890 = vmatpush.msra.mxu0 %v338
    %891 = vmatpush.msra.mxu0 %v335
    %892 = vmatmul.f32.gmra.mxu0 %v871
    %v893 = vpop.f32.mrf.mxu0
    %v894 = vadd.f32 0.0, %v893
    %895 = vmatmul.f32.gmra.mxu0 %v874
    %v896 = vpop.f32.mrf.mxu0
    %v897 = vadd.f32 0.0, %v896
    %898 = vdwg.mxu0
    %v900 = vsel %vm667, %v745, 0
    %v903 = vsel %vm667, %v747, 0
    %905 = vmatpush.msra.mxu0 0.0
    %906 = vmatpush.msra.mxu0 0.0
    %907 = vmatpush.msra.mxu0 0.0
    %908 = vmatpush.msra.mxu0 0.0
    %909 = vmatpush.msra.mxu0 0.0
    %910 = vmatpush.msra.mxu0 0.0
    %911 = vmatpush.msra.mxu0 0.0
    %912 = vmatpush.msra.mxu0 0.0
    %913 = vmatpush.msra.mxu0 0.0
    %914 = vmatpush.msra.mxu0 0.0
    %915 = vmatpush.msra.mxu0 0.0
    %916 = vmatpush.msra.mxu0 0.0
    %917 = vmatpush.msra.mxu0 0.0
    %918 = vmatpush.msra.mxu0 0.0
    %919 = vmatpush.msra.mxu0 %v344
    %920 = vmatpush.msra.mxu0 %v341
    %921 = vmatmul.f32.gmra.mxu0 %v900
    %v922 = vpop.f32.mrf.mxu0
    %v923 = vadd.f32 0.0, %v922
    %924 = vmatmul.f32.gmra.mxu0 %v903
    %v925 = vpop.f32.mrf.mxu0
    %v926 = vadd.f32 0.0, %v925
    %927 = vdwg.mxu0
    %v929 = vsel %vm667, %v749, 0
    %v932 = vsel %vm667, %v751, 0
    %934 = vmatpush.msra.mxu0 0.0
    %935 = vmatpush.msra.mxu0 0.0
    %936 = vmatpush.msra.mxu0 0.0
    %937 = vmatpush.msra.mxu0 0.0
    %938 = vmatpush.msra.mxu0 0.0
    %939 = vmatpush.msra.mxu0 0.0
    %940 = vmatpush.msra.mxu0 0.0
    %941 = vmatpush.msra.mxu0 0.0
    %942 = vmatpush.msra.mxu0 0.0
    %943 = vmatpush.msra.mxu0 0.0
    %944 = vmatpush.msra.mxu0 0.0
    %945 = vmatpush.msra.mxu0 0.0
    %946 = vmatpush.msra.mxu0 0.0
    %947 = vmatpush.msra.mxu0 0.0
    %948 = vmatpush.msra.mxu0 %v350
    %949 = vmatpush.msra.mxu0 %v347
    %950 = vmatmul.f32.gmra.mxu0 %v929
    %v951 = vpop.f32.mrf.mxu0
    %v952 = vadd.f32 0.0, %v951
    %953 = vmatmul.f32.gmra.mxu0 %v932
    %v954 = vpop.f32.mrf.mxu0
    %v955 = vadd.f32 0.0, %v954
    %956 = vdwg.mxu0
    %v958 = vsel %vm667, %v753, 0
    %v961 = vsel %vm667, %v755, 0
    %963 = vmatpush.msra.mxu0 0.0
    %964 = vmatpush.msra.mxu0 0.0
    %965 = vmatpush.msra.mxu0 0.0
    %966 = vmatpush.msra.mxu0 0.0
    %967 = vmatpush.msra.mxu0 0.0
    %968 = vmatpush.msra.mxu0 0.0
    %969 = vmatpush.msra.mxu0 0.0
    %970 = vmatpush.msra.mxu0 0.0
    %971 = vmatpush.msra.mxu0 0.0
    %972 = vmatpush.msra.mxu0 0.0
    %973 = vmatpush.msra.mxu0 0.0
    %974 = vmatpush.msra.mxu0 0.0
    %975 = vmatpush.msra.mxu0 0.0
    %976 = vmatpush.msra.mxu0 0.0
    %977 = vmatpush.msra.mxu0 %v356
    %978 = vmatpush.msra.mxu0 %v353
    %979 = vmatmul.f32.gmra.mxu0 %v958
    %v980 = vpop.f32.mrf.mxu0
    %v981 = vadd.f32 0.0, %v980
    %982 = vmatmul.f32.gmra.mxu0 %v961
    %v983 = vpop.f32.mrf.mxu0
    %v984 = vadd.f32 0.0, %v983
    %985 = vdwg.mxu0
    %v987 = vsel %vm667, %v757, 0
    %v990 = vsel %vm667, %v759, 0
    %992 = vmatpush.msra.mxu0 0.0
    %993 = vmatpush.msra.mxu0 0.0
    %994 = vmatpush.msra.mxu0 0.0
    %995 = vmatpush.msra.mxu0 0.0
    %996 = vmatpush.msra.mxu0 0.0
    %997 = vmatpush.msra.mxu0 0.0
    %998 = vmatpush.msra.mxu0 0.0
    %999 = vmatpush.msra.mxu0 0.0
    %1000 = vmatpush.msra.mxu0 0.0
    %1001 = vmatpush.msra.mxu0 0.0
    %1002 = vmatpush.msra.mxu0 0.0
    %1003 = vmatpush.msra.mxu0 0.0
    %1004 = vmatpush.msra.mxu0 0.0
    %1005 = vmatpush.msra.mxu0 0.0
    %1006 = vmatpush.msra.mxu0 %v362
    %1007 = vmatpush.msra.mxu0 %v359
    %1008 = vmatmul.f32.gmra.mxu0 %v987
    %v1009 = vpop.f32.mrf.mxu0
    %v1010 = vadd.f32 0.0, %v1009
    %1011 = vmatmul.f32.gmra.mxu0 %v990
    %v1012 = vpop.f32.mrf.mxu0
    %v1013 = vadd.f32 0.0, %v1012
    %1014 = vdwg.mxu0
    %v1016 = vsel %vm667, %v761, 0
    %v1019 = vsel %vm667, %v763, 0
    %1021 = vmatpush.msra.mxu0 0.0
    %1022 = vmatpush.msra.mxu0 0.0
    %1023 = vmatpush.msra.mxu0 0.0
    %1024 = vmatpush.msra.mxu0 0.0
    %1025 = vmatpush.msra.mxu0 0.0
    %1026 = vmatpush.msra.mxu0 0.0
    %1027 = vmatpush.msra.mxu0 0.0
    %1028 = vmatpush.msra.mxu0 0.0
    %1029 = vmatpush.msra.mxu0 0.0
    %1030 = vmatpush.msra.mxu0 0.0
    %1031 = vmatpush.msra.mxu0 0.0
    %1032 = vmatpush.msra.mxu0 0.0
    %1033 = vmatpush.msra.mxu0 0.0
    %1034 = vmatpush.msra.mxu0 0.0
    %1035 = vmatpush.msra.mxu0 %v368
    %1036 = vmatpush.msra.mxu0 %v365
    %1037 = vmatmul.f32.gmra.mxu0 %v1016
    %v1038 = vpop.f32.mrf.mxu0
    %v1039 = vadd.f32 0.0, %v1038
    %1040 = vmatmul.f32.gmra.mxu0 %v1019
    %v1041 = vpop.f32.mrf.mxu0
    %v1042 = vadd.f32 0.0, %v1041
    %1043 = vdwg.mxu0
    %v1044 = vrcp.pop %v766
    %v1045 = vmul.f32 %v766, %v1044
    %v1046 = vsub.f32 1.0, %v1045
    %v1047 = vmul.f32 %v1044, %v1046
    %v1048 = vadd.f32 %v1044, %v1047
    %vm1049 = vweird.f32 %v766
    %vm1050 = vweird.f32 %v1044
    %vm1051 = vmor %vm1049, %vm1050
    %v1052 = vsel %vm1051, %v1044, %v1048
    %v1053 = vand.u32 2147483647, %v766
    %vm1054 = vcmp.eq.f32.partialorder %v1053, 8.507059e+37
    %v1055 = vand.u32 %v766, 2147483648
    %v1056 = vor.u32 1.1754944e-38, %v1055
    %v1057 = vsel %vm1054, %v1056, %v1052
    %v1058 = vrcp.pop %v769
    %v1059 = vmul.f32 %v769, %v1058
    %v1060 = vsub.f32 1.0, %v1059
    %v1061 = vmul.f32 %v1058, %v1060
    %v1062 = vadd.f32 %v1058, %v1061
    %vm1063 = vweird.f32 %v769
    %vm1064 = vweird.f32 %v1058
    %vm1065 = vmor %vm1063, %vm1064
    %v1066 = vsel %vm1065, %v1058, %v1062
    %v1067 = vand.u32 2147483647, %v769
    %vm1068 = vcmp.eq.f32.partialorder %v1067, 8.507059e+37
    %v1069 = vand.u32 %v769, 2147483648
    %v1070 = vor.u32 1.1754944e-38, %v1069
    %v1071 = vsel %vm1068, %v1070, %v1066
    %v1072 = vrcp.pop %v772
    %v1073 = vmul.f32 %v772, %v1072
    %v1074 = vsub.f32 1.0, %v1073
    %v1075 = vmul.f32 %v1072, %v1074
    %v1076 = vadd.f32 %v1072, %v1075
    %vm1077 = vweird.f32 %v772
    %vm1078 = vweird.f32 %v1072
    %vm1079 = vmor %vm1077, %vm1078
    %v1080 = vsel %vm1079, %v1072, %v1076
    %v1081 = vand.u32 2147483647, %v772
    %vm1082 = vcmp.eq.f32.partialorder %v1081, 8.507059e+37
    %v1083 = vand.u32 %v772, 2147483648
    %v1084 = vor.u32 1.1754944e-38, %v1083
    %v1085 = vsel %vm1082, %v1084, %v1080
    %v1086 = vrcp.pop %v775
    %v1087 = vmul.f32 %v775, %v1086
    %v1088 = vsub.f32 1.0, %v1087
    %v1089 = vmul.f32 %v1086, %v1088
    %v1090 = vadd.f32 %v1086, %v1089
    %vm1091 = vweird.f32 %v775
    %vm1092 = vweird.f32 %v1086
    %vm1093 = vmor %vm1091, %vm1092
    %v1094 = vsel %vm1093, %v1086, %v1090
    %v1095 = vand.u32 2147483647, %v775
    %vm1096 = vcmp.eq.f32.partialorder %v1095, 8.507059e+37
    %v1097 = vand.u32 %v775, 2147483648
    %v1098 = vor.u32 1.1754944e-38, %v1097
    %v1099 = vsel %vm1096, %v1098, %v1094
    %v1100 = vrcp.pop %v778
    %v1101 = vmul.f32 %v778, %v1100
    %v1102 = vsub.f32 1.0, %v1101
    %v1103 = vmul.f32 %v1100, %v1102
    %v1104 = vadd.f32 %v1100, %v1103
    %vm1105 = vweird.f32 %v778
    %vm1106 = vweird.f32 %v1100
    %vm1107 = vmor %vm1105, %vm1106
    %v1108 = vsel %vm1107, %v1100, %v1104
    %v1109 = vand.u32 2147483647, %v778
    %vm1110 = vcmp.eq.f32.partialorder %v1109, 8.507059e+37
    %v1111 = vand.u32 %v778, 2147483648
    %v1112 = vor.u32 1.1754944e-38, %v1111
    %v1113 = vsel %vm1110, %v1112, %v1108
    %v1114 = vrcp.pop %v781
    %v1115 = vmul.f32 %v781, %v1114
    %v1116 = vsub.f32 1.0, %v1115
    %v1117 = vmul.f32 %v1114, %v1116
    %v1118 = vadd.f32 %v1114, %v1117
    %vm1119 = vweird.f32 %v781
    %vm1120 = vweird.f32 %v1114
    %vm1121 = vmor %vm1119, %vm1120
    %v1122 = vsel %vm1121, %v1114, %v1118
    %v1123 = vand.u32 2147483647, %v781
    %vm1124 = vcmp.eq.f32.partialorder %v1123, 8.507059e+37
    %v1125 = vand.u32 %v781, 2147483648
    %v1126 = vor.u32 1.1754944e-38, %v1125
    %v1127 = vsel %vm1124, %v1126, %v1122
    %v1128 = vrcp.pop %v784
    %v1129 = vmul.f32 %v784, %v1128
    %v1130 = vsub.f32 1.0, %v1129
    %v1131 = vmul.f32 %v1128, %v1130
    %v1132 = vadd.f32 %v1128, %v1131
    %vm1133 = vweird.f32 %v784
    %vm1134 = vweird.f32 %v1128
    %vm1135 = vmor %vm1133, %vm1134
    %v1136 = vsel %vm1135, %v1128, %v1132
    %v1137 = vand.u32 2147483647, %v784
    %vm1138 = vcmp.eq.f32.partialorder %v1137, 8.507059e+37
    %v1139 = vand.u32 %v784, 2147483648
    %v1140 = vor.u32 1.1754944e-38, %v1139
    %v1141 = vsel %vm1138, %v1140, %v1136
    %v1142 = vrcp.pop %v787
    %v1143 = vmul.f32 %v787, %v1142
    %v1144 = vsub.f32 1.0, %v1143
    %v1145 = vmul.f32 %v1142, %v1144
    %v1146 = vadd.f32 %v1142, %v1145
    %vm1147 = vweird.f32 %v787
    %vm1148 = vweird.f32 %v1142
    %vm1149 = vmor %vm1147, %vm1148
    %v1150 = vsel %vm1149, %v1142, %v1146
    %v1151 = vand.u32 2147483647, %v787
    %vm1152 = vcmp.eq.f32.partialorder %v1151, 8.507059e+37
    %v1153 = vand.u32 %v787, 2147483648
    %v1154 = vor.u32 1.1754944e-38, %v1153
    %v1155 = vsel %vm1152, %v1154, %v1150
    %v1156 = vrcp.pop %v790
    %v1157 = vmul.f32 %v790, %v1156
    %v1158 = vsub.f32 1.0, %v1157
    %v1159 = vmul.f32 %v1156, %v1158
    %v1160 = vadd.f32 %v1156, %v1159
    %vm1161 = vweird.f32 %v790
    %vm1162 = vweird.f32 %v1156
    %vm1163 = vmor %vm1161, %vm1162
    %v1164 = vsel %vm1163, %v1156, %v1160
    %v1165 = vand.u32 2147483647, %v790
    %vm1166 = vcmp.eq.f32.partialorder %v1165, 8.507059e+37
    %v1167 = vand.u32 %v790, 2147483648
    %v1168 = vor.u32 1.1754944e-38, %v1167
    %v1169 = vsel %vm1166, %v1168, %v1164
    %v1170 = vrcp.pop %v793
    %v1171 = vmul.f32 %v793, %v1170
    %v1172 = vsub.f32 1.0, %v1171
    %v1173 = vmul.f32 %v1170, %v1172
    %v1174 = vadd.f32 %v1170, %v1173
    %vm1175 = vweird.f32 %v793
    %vm1176 = vweird.f32 %v1170
    %vm1177 = vmor %vm1175, %vm1176
    %v1178 = vsel %vm1177, %v1170, %v1174
    %v1179 = vand.u32 2147483647, %v793
    %vm1180 = vcmp.eq.f32.partialorder %v1179, 8.507059e+37
    %v1181 = vand.u32 %v793, 2147483648
    %v1182 = vor.u32 1.1754944e-38, %v1181
    %v1183 = vsel %vm1180, %v1182, %v1178
    %v1184 = vrcp.pop %v796
    %v1185 = vmul.f32 %v796, %v1184
    %v1186 = vsub.f32 1.0, %v1185
    %v1187 = vmul.f32 %v1184, %v1186
    %v1188 = vadd.f32 %v1184, %v1187
    %vm1189 = vweird.f32 %v796
    %vm1190 = vweird.f32 %v1184
    %vm1191 = vmor %vm1189, %vm1190
    %v1192 = vsel %vm1191, %v1184, %v1188
    %v1193 = vand.u32 2147483647, %v796
    %vm1194 = vcmp.eq.f32.partialorder %v1193, 8.507059e+37
    %v1195 = vand.u32 %v796, 2147483648
    %v1196 = vor.u32 1.1754944e-38, %v1195
    %v1197 = vsel %vm1194, %v1196, %v1192
    %v1198 = vrcp.pop %v799
    %v1199 = vmul.f32 %v799, %v1198
    %v1200 = vsub.f32 1.0, %v1199
    %v1201 = vmul.f32 %v1198, %v1200
    %v1202 = vadd.f32 %v1198, %v1201
    %vm1203 = vweird.f32 %v799
    %vm1204 = vweird.f32 %v1198
    %vm1205 = vmor %vm1203, %vm1204
    %v1206 = vsel %vm1205, %v1198, %v1202
    %v1207 = vand.u32 2147483647, %v799
    %vm1208 = vcmp.eq.f32.partialorder %v1207, 8.507059e+37
    %v1209 = vand.u32 %v799, 2147483648
    %v1210 = vor.u32 1.1754944e-38, %v1209
    %v1211 = vsel %vm1208, %v1210, %v1206
    %v1212 = vrcp.pop %v802
    %v1213 = vmul.f32 %v802, %v1212
    %v1214 = vsub.f32 1.0, %v1213
    %v1215 = vmul.f32 %v1212, %v1214
    %v1216 = vadd.f32 %v1212, %v1215
    %vm1217 = vweird.f32 %v802
    %vm1218 = vweird.f32 %v1212
    %vm1219 = vmor %vm1217, %vm1218
    %v1220 = vsel %vm1219, %v1212, %v1216
    %v1221 = vand.u32 2147483647, %v802
    %vm1222 = vcmp.eq.f32.partialorder %v1221, 8.507059e+37
    %v1223 = vand.u32 %v802, 2147483648
    %v1224 = vor.u32 1.1754944e-38, %v1223
    %v1225 = vsel %vm1222, %v1224, %v1220
    %v1226 = vrcp.pop %v805
    %v1227 = vmul.f32 %v805, %v1226
    %v1228 = vsub.f32 1.0, %v1227
    %v1229 = vmul.f32 %v1226, %v1228
    %v1230 = vadd.f32 %v1226, %v1229
    %vm1231 = vweird.f32 %v805
    %vm1232 = vweird.f32 %v1226
    %vm1233 = vmor %vm1231, %vm1232
    %v1234 = vsel %vm1233, %v1226, %v1230
    %v1235 = vand.u32 2147483647, %v805
    %vm1236 = vcmp.eq.f32.partialorder %v1235, 8.507059e+37
    %v1237 = vand.u32 %v805, 2147483648
    %v1238 = vor.u32 1.1754944e-38, %v1237
    %v1239 = vsel %vm1236, %v1238, %v1234
    %v1240 = vrcp.pop %v808
    %v1241 = vmul.f32 %v808, %v1240
    %v1242 = vsub.f32 1.0, %v1241
    %v1243 = vmul.f32 %v1240, %v1242
    %v1244 = vadd.f32 %v1240, %v1243
    %vm1245 = vweird.f32 %v808
    %vm1246 = vweird.f32 %v1240
    %vm1247 = vmor %vm1245, %vm1246
    %v1248 = vsel %vm1247, %v1240, %v1244
    %v1249 = vand.u32 2147483647, %v808
    %vm1250 = vcmp.eq.f32.partialorder %v1249, 8.507059e+37
    %v1251 = vand.u32 %v808, 2147483648
    %v1252 = vor.u32 1.1754944e-38, %v1251
    %v1253 = vsel %vm1250, %v1252, %v1248
    %v1254 = vrcp.pop %v811
    %v1255 = vmul.f32 %v811, %v1254
    %v1256 = vsub.f32 1.0, %v1255
    %v1257 = vmul.f32 %v1254, %v1256
    %v1258 = vadd.f32 %v1254, %v1257
    %vm1259 = vweird.f32 %v811
    %vm1260 = vweird.f32 %v1254
    %vm1261 = vmor %vm1259, %vm1260
    %v1262 = vsel %vm1261, %v1254, %v1258
    %v1263 = vand.u32 2147483647, %v811
    %vm1264 = vcmp.eq.f32.partialorder %v1263, 8.507059e+37
    %v1265 = vand.u32 %v811, 2147483648
    %v1266 = vor.u32 1.1754944e-38, %v1265
    %v1267 = vsel %vm1264, %v1266, %v1262
    %v1268 = vmul.f32 %v836, %v1057
    %v1269 = vmul.f32 %v839, %v1071
    %v1270 = vmul.f32 %v865, %v1085
    %v1271 = vmul.f32 %v868, %v1099
    %v1272 = vmul.f32 %v894, %v1113
    %v1273 = vmul.f32 %v897, %v1127
    %v1274 = vmul.f32 %v923, %v1141
    %v1275 = vmul.f32 %v926, %v1155
    %v1276 = vmul.f32 %v952, %v1169
    %v1277 = vmul.f32 %v955, %v1183
    %v1278 = vmul.f32 %v981, %v1197
    %v1279 = vmul.f32 %v984, %v1211
    %v1280 = vmul.f32 %v1010, %v1225
    %v1281 = vmul.f32 %v1013, %v1239
    %v1282 = vmul.f32 %v1039, %v1253
    %v1283 = vmul.f32 %v1042, %v1267
    %v1284 = vld [vmem:[#allocation8] sm:$0xff]
    %v1285 = vld [vmem:[#allocation8 + $0x8] sm:$0xff]
    %v1286 = vld [vmem:[#allocation8 + $0x10] sm:$0xff]
    %v1287 = vld [vmem:[#allocation8 + $0x18] sm:$0xff]
    %1288 = vrot.lane.b32.xlu0 %v193, 96
    %v1289 = vpop.permute.xlu0 %1288
    %1290 = vrot.lane.b32.xlu0 %v196, 96
    %v1291 = vpop.permute.xlu0 %1290
    %1292 = vrot.lane.b32.xlu0 %v258, 96
    %v1293 = vpop.permute.xlu0 %1292
    %1294 = vrot.lane.b32.xlu0 %v261, 96
    %v1295 = vpop.permute.xlu0 %1294
    %v1296 = vsel %vm370, %v1289, 0
    %v1298 = vsel %vm370, %v1291, 0
    %v1300 = vsel %vm370, %v1293, 0
    %v1302 = vsel %vm370, %v1295, 0
    %1304 = vmatpush.xpose.msra.mxu0 0.0
    %1305 = vmatpush.xpose.msra.mxu0 0.0
    %1306 = vmatpush.xpose.msra.mxu0 0.0
    %1307 = vmatpush.xpose.msra.mxu0 0.0
    %1308 = vmatpush.xpose.msra.mxu0 0.0
    %1309 = vmatpush.xpose.msra.mxu0 0.0
    %1310 = vmatpush.xpose.msra.mxu0 0.0
    %1311 = vmatpush.xpose.msra.mxu0 0.0
    %1312 = vmatpush.xpose.msra.mxu0 0.0
    %1313 = vmatpush.xpose.msra.mxu0 0.0
    %1314 = vmatpush.xpose.msra.mxu0 0.0
    %1315 = vmatpush.xpose.msra.mxu0 0.0
    %1316 = vmatpush.xpose.msra.mxu0 0.0
    %1317 = vmatpush.xpose.msra.mxu0 0.0
    %1318 = vmatpush.xpose.msra.mxu0 %v1302
    %1319 = vmatpush.xpose.msra.mxu0 %v1300
    %1320 = vmatmul.f32.gmra.mxu0 %v1296
    %v1321 = vpop.f32.mrf.mxu0
    %v1322 = vadd.f32 0.0, %v1321
    %1323 = vmatmul.f32.gmra.mxu0 %v1298
    %v1324 = vpop.f32.mrf.mxu0
    %v1325 = vadd.f32 0.0, %v1324
    %1326 = vdwg.mxu0
    %1327 = vrot.lane.b32.xlu0 %v199, 96
    %v1328 = vpop.permute.xlu0 %1327
    %1329 = vrot.lane.b32.xlu0 %v202, 96
    %v1330 = vpop.permute.xlu0 %1329
    %1331 = vrot.lane.b32.xlu0 %v264, 96
    %v1332 = vpop.permute.xlu0 %1331
    %1333 = vrot.lane.b32.xlu0 %v267, 96
    %v1334 = vpop.permute.xlu0 %1333
    %v1335 = vsel %vm370, %v1328, 0
    %v1337 = vsel %vm370, %v1330, 0
    %v1339 = vsel %vm370, %v1332, 0
    %v1341 = vsel %vm370, %v1334, 0
    %1343 = vmatpush.xpose.msra.mxu0 0.0
    %1344 = vmatpush.xpose.msra.mxu0 0.0
    %1345 = vmatpush.xpose.msra.mxu0 0.0
    %1346 = vmatpush.xpose.msra.mxu0 0.0
    %1347 = vmatpush.xpose.msra.mxu0 0.0
    %1348 = vmatpush.xpose.msra.mxu0 0.0
    %1349 = vmatpush.xpose.msra.mxu0 0.0
    %1350 = vmatpush.xpose.msra.mxu0 0.0
    %1351 = vmatpush.xpose.msra.mxu0 0.0
    %1352 = vmatpush.xpose.msra.mxu0 0.0
    %1353 = vmatpush.xpose.msra.mxu0 0.0
    %1354 = vmatpush.xpose.msra.mxu0 0.0
    %1355 = vmatpush.xpose.msra.mxu0 0.0
    %1356 = vmatpush.xpose.msra.mxu0 0.0
    %1357 = vmatpush.xpose.msra.mxu0 %v1341
    %1358 = vmatpush.xpose.msra.mxu0 %v1339
    %1359 = vmatmul.f32.gmra.mxu0 %v1335
    %v1360 = vpop.f32.mrf.mxu0
    %v1361 = vadd.f32 0.0, %v1360
    %1362 = vmatmul.f32.gmra.mxu0 %v1337
    %v1363 = vpop.f32.mrf.mxu0
    %v1364 = vadd.f32 0.0, %v1363
    %1365 = vdwg.mxu0
    %1366 = vrot.lane.b32.xlu0 %v205, 96
    %v1367 = vpop.permute.xlu0 %1366
    %1368 = vrot.lane.b32.xlu0 %v208, 96
    %v1369 = vpop.permute.xlu0 %1368
    %1370 = vrot.lane.b32.xlu0 %v270, 96
    %v1371 = vpop.permute.xlu0 %1370
    %1372 = vrot.lane.b32.xlu0 %v273, 96
    %v1373 = vpop.permute.xlu0 %1372
    %v1374 = vsel %vm370, %v1367, 0
    %v1376 = vsel %vm370, %v1369, 0
    %v1378 = vsel %vm370, %v1371, 0
    %v1380 = vsel %vm370, %v1373, 0
    %1382 = vmatpush.xpose.msra.mxu0 0.0
    %1383 = vmatpush.xpose.msra.mxu0 0.0
    %1384 = vmatpush.xpose.msra.mxu0 0.0
    %1385 = vmatpush.xpose.msra.mxu0 0.0
    %1386 = vmatpush.xpose.msra.mxu0 0.0
    %1387 = vmatpush.xpose.msra.mxu0 0.0
    %1388 = vmatpush.xpose.msra.mxu0 0.0
    %1389 = vmatpush.xpose.msra.mxu0 0.0
    %1390 = vmatpush.xpose.msra.mxu0 0.0
    %1391 = vmatpush.xpose.msra.mxu0 0.0
    %1392 = vmatpush.xpose.msra.mxu0 0.0
    %1393 = vmatpush.xpose.msra.mxu0 0.0
    %1394 = vmatpush.xpose.msra.mxu0 0.0
    %1395 = vmatpush.xpose.msra.mxu0 0.0
    %1396 = vmatpush.xpose.msra.mxu0 %v1380
    %1397 = vmatpush.xpose.msra.mxu0 %v1378
    %1398 = vmatmul.f32.gmra.mxu0 %v1374
    %v1399 = vpop.f32.mrf.mxu0
    %v1400 = vadd.f32 0.0, %v1399
    %1401 = vmatmul.f32.gmra.mxu0 %v1376
    %v1402 = vpop.f32.mrf.mxu0
    %v1403 = vadd.f32 0.0, %v1402
    %1404 = vdwg.mxu0
    %1405 = vrot.lane.b32.xlu0 %v211, 96
    %v1406 = vpop.permute.xlu0 %1405
    %1407 = vrot.lane.b32.xlu0 %v214, 96
    %v1408 = vpop.permute.xlu0 %1407
    %1409 = vrot.lane.b32.xlu0 %v276, 96
    %v1410 = vpop.permute.xlu0 %1409
    %1411 = vrot.lane.b32.xlu0 %v279, 96
    %v1412 = vpop.permute.xlu0 %1411
    %v1413 = vsel %vm370, %v1406, 0
    %v1415 = vsel %vm370, %v1408, 0
    %v1417 = vsel %vm370, %v1410, 0
    %v1419 = vsel %vm370, %v1412, 0
    %1421 = vmatpush.xpose.msra.mxu0 0.0
    %1422 = vmatpush.xpose.msra.mxu0 0.0
    %1423 = vmatpush.xpose.msra.mxu0 0.0
    %1424 = vmatpush.xpose.msra.mxu0 0.0
    %1425 = vmatpush.xpose.msra.mxu0 0.0
    %1426 = vmatpush.xpose.msra.mxu0 0.0
    %1427 = vmatpush.xpose.msra.mxu0 0.0
    %1428 = vmatpush.xpose.msra.mxu0 0.0
    %1429 = vmatpush.xpose.msra.mxu0 0.0
    %1430 = vmatpush.xpose.msra.mxu0 0.0
    %1431 = vmatpush.xpose.msra.mxu0 0.0
    %1432 = vmatpush.xpose.msra.mxu0 0.0
    %1433 = vmatpush.xpose.msra.mxu0 0.0
    %1434 = vmatpush.xpose.msra.mxu0 0.0
    %1435 = vmatpush.xpose.msra.mxu0 %v1419
    %1436 = vmatpush.xpose.msra.mxu0 %v1417
    %1437 = vmatmul.f32.gmra.mxu0 %v1413
    %v1438 = vpop.f32.mrf.mxu0
    %v1439 = vadd.f32 0.0, %v1438
    %1440 = vmatmul.f32.gmra.mxu0 %v1415
    %v1441 = vpop.f32.mrf.mxu0
    %v1442 = vadd.f32 0.0, %v1441
    %1443 = vdwg.mxu0
    %1444 = vrot.lane.b32.xlu0 %v217, 96
    %v1445 = vpop.permute.xlu0 %1444
    %1446 = vrot.lane.b32.xlu0 %v220, 96
    %v1447 = vpop.permute.xlu0 %1446
    %1448 = vrot.lane.b32.xlu0 %v282, 96
    %v1449 = vpop.permute.xlu0 %1448
    %1450 = vrot.lane.b32.xlu0 %v285, 96
    %v1451 = vpop.permute.xlu0 %1450
    %v1452 = vsel %vm370, %v1445, 0
    %v1454 = vsel %vm370, %v1447, 0
    %v1456 = vsel %vm370, %v1449, 0
    %v1458 = vsel %vm370, %v1451, 0
    %1460 = vmatpush.xpose.msra.mxu0 0.0
    %1461 = vmatpush.xpose.msra.mxu0 0.0
    %1462 = vmatpush.xpose.msra.mxu0 0.0
    %1463 = vmatpush.xpose.msra.mxu0 0.0
    %1464 = vmatpush.xpose.msra.mxu0 0.0
    %1465 = vmatpush.xpose.msra.mxu0 0.0
    %1466 = vmatpush.xpose.msra.mxu0 0.0
    %1467 = vmatpush.xpose.msra.mxu0 0.0
    %1468 = vmatpush.xpose.msra.mxu0 0.0
    %1469 = vmatpush.xpose.msra.mxu0 0.0
    %1470 = vmatpush.xpose.msra.mxu0 0.0
    %1471 = vmatpush.xpose.msra.mxu0 0.0
    %1472 = vmatpush.xpose.msra.mxu0 0.0
    %1473 = vmatpush.xpose.msra.mxu0 0.0
    %1474 = vmatpush.xpose.msra.mxu0 %v1458
    %1475 = vmatpush.xpose.msra.mxu0 %v1456
    %1476 = vmatmul.f32.gmra.mxu0 %v1452
    %v1477 = vpop.f32.mrf.mxu0
    %v1478 = vadd.f32 0.0, %v1477
    %1479 = vmatmul.f32.gmra.mxu0 %v1454
    %v1480 = vpop.f32.mrf.mxu0
    %v1481 = vadd.f32 0.0, %v1480
    %1482 = vdwg.mxu0
    %1483 = vrot.lane.b32.xlu0 %v223, 96
    %v1484 = vpop.permute.xlu0 %1483
    %1485 = vrot.lane.b32.xlu0 %v226, 96
    %v1486 = vpop.permute.xlu0 %1485
    %1487 = vrot.lane.b32.xlu0 %v288, 96
    %v1488 = vpop.permute.xlu0 %1487
    %1489 = vrot.lane.b32.xlu0 %v291, 96
    %v1490 = vpop.permute.xlu0 %1489
    %v1491 = vsel %vm370, %v1484, 0
    %v1493 = vsel %vm370, %v1486, 0
    %v1495 = vsel %vm370, %v1488, 0
    %v1497 = vsel %vm370, %v1490, 0
    %1499 = vmatpush.xpose.msra.mxu0 0.0
    %1500 = vmatpush.xpose.msra.mxu0 0.0
    %1501 = vmatpush.xpose.msra.mxu0 0.0
    %1502 = vmatpush.xpose.msra.mxu0 0.0
    %1503 = vmatpush.xpose.msra.mxu0 0.0
    %1504 = vmatpush.xpose.msra.mxu0 0.0
    %1505 = vmatpush.xpose.msra.mxu0 0.0
    %1506 = vmatpush.xpose.msra.mxu0 0.0
    %1507 = vmatpush.xpose.msra.mxu0 0.0
    %1508 = vmatpush.xpose.msra.mxu0 0.0
    %1509 = vmatpush.xpose.msra.mxu0 0.0
    %1510 = vmatpush.xpose.msra.mxu0 0.0
    %1511 = vmatpush.xpose.msra.mxu0 0.0
    %1512 = vmatpush.xpose.msra.mxu0 0.0
    %1513 = vmatpush.xpose.msra.mxu0 %v1497
    %1514 = vmatpush.xpose.msra.mxu0 %v1495
    %1515 = vmatmul.f32.gmra.mxu0 %v1491
    %v1516 = vpop.f32.mrf.mxu0
    %v1517 = vadd.f32 0.0, %v1516
    %1518 = vmatmul.f32.gmra.mxu0 %v1493
    %v1519 = vpop.f32.mrf.mxu0
    %v1520 = vadd.f32 0.0, %v1519
    %1521 = vdwg.mxu0
    %1522 = vrot.lane.b32.xlu0 %v229, 96
    %v1523 = vpop.permute.xlu0 %1522
    %1524 = vrot.lane.b32.xlu0 %v232, 96
    %v1525 = vpop.permute.xlu0 %1524
    %1526 = vrot.lane.b32.xlu0 %v294, 96
    %v1527 = vpop.permute.xlu0 %1526
    %1528 = vrot.lane.b32.xlu0 %v297, 96
    %v1529 = vpop.permute.xlu0 %1528
    %v1530 = vsel %vm370, %v1523, 0
    %v1532 = vsel %vm370, %v1525, 0
    %v1534 = vsel %vm370, %v1527, 0
    %v1536 = vsel %vm370, %v1529, 0
    %1538 = vmatpush.xpose.msra.mxu0 0.0
    %1539 = vmatpush.xpose.msra.mxu0 0.0
    %1540 = vmatpush.xpose.msra.mxu0 0.0
    %1541 = vmatpush.xpose.msra.mxu0 0.0
    %1542 = vmatpush.xpose.msra.mxu0 0.0
    %1543 = vmatpush.xpose.msra.mxu0 0.0
    %1544 = vmatpush.xpose.msra.mxu0 0.0
    %1545 = vmatpush.xpose.msra.mxu0 0.0
    %1546 = vmatpush.xpose.msra.mxu0 0.0
    %1547 = vmatpush.xpose.msra.mxu0 0.0
    %1548 = vmatpush.xpose.msra.mxu0 0.0
    %1549 = vmatpush.xpose.msra.mxu0 0.0
    %1550 = vmatpush.xpose.msra.mxu0 0.0
    %1551 = vmatpush.xpose.msra.mxu0 0.0
    %1552 = vmatpush.xpose.msra.mxu0 %v1536
    %1553 = vmatpush.xpose.msra.mxu0 %v1534
    %1554 = vmatmul.f32.gmra.mxu0 %v1530
    %v1555 = vpop.f32.mrf.mxu0
    %v1556 = vadd.f32 0.0, %v1555
    %1557 = vmatmul.f32.gmra.mxu0 %v1532
    %v1558 = vpop.f32.mrf.mxu0
    %v1559 = vadd.f32 0.0, %v1558
    %1560 = vdwg.mxu0
    %1561 = vrot.lane.b32.xlu0 %v235, 96
    %v1562 = vpop.permute.xlu0 %1561
    %1563 = vrot.lane.b32.xlu0 %v238, 96
    %v1564 = vpop.permute.xlu0 %1563
    %1565 = vrot.lane.b32.xlu0 %v300, 96
    %v1566 = vpop.permute.xlu0 %1565
    %1567 = vrot.lane.b32.xlu0 %v303, 96
    %v1568 = vpop.permute.xlu0 %1567
    %v1569 = vsel %vm370, %v1562, 0
    %v1571 = vsel %vm370, %v1564, 0
    %v1573 = vsel %vm370, %v1566, 0
    %v1575 = vsel %vm370, %v1568, 0
    %1577 = vmatpush.xpose.msra.mxu0 0.0
    %1578 = vmatpush.xpose.msra.mxu0 0.0
    %1579 = vmatpush.xpose.msra.mxu0 0.0
    %1580 = vmatpush.xpose.msra.mxu0 0.0
    %1581 = vmatpush.xpose.msra.mxu0 0.0
    %1582 = vmatpush.xpose.msra.mxu0 0.0
    %1583 = vmatpush.xpose.msra.mxu0 0.0
    %1584 = vmatpush.xpose.msra.mxu0 0.0
    %1585 = vmatpush.xpose.msra.mxu0 0.0
    %1586 = vmatpush.xpose.msra.mxu0 0.0
    %1587 = vmatpush.xpose.msra.mxu0 0.0
    %1588 = vmatpush.xpose.msra.mxu0 0.0
    %1589 = vmatpush.xpose.msra.mxu0 0.0
    %1590 = vmatpush.xpose.msra.mxu0 0.0
    %1591 = vmatpush.xpose.msra.mxu0 %v1575
    %1592 = vmatpush.xpose.msra.mxu0 %v1573
    %1593 = vmatmul.f32.gmra.mxu0 %v1569
    %v1594 = vpop.f32.mrf.mxu0
    %v1595 = vadd.f32 0.0, %v1594
    %1596 = vmatmul.f32.gmra.mxu0 %v1571
    %v1597 = vpop.f32.mrf.mxu0
    %v1598 = vadd.f32 0.0, %v1597
    %1599 = vdwg.mxu0
    %v1600 = vmul.f32 %v1322, 0.088388346
    %v1601 = vmul.f32 %v1325, 0.088388346
    %v1602 = vmul.f32 %v1361, 0.088388346
    %v1603 = vmul.f32 %v1364, 0.088388346
    %v1604 = vmul.f32 %v1400, 0.088388346
    %v1605 = vmul.f32 %v1403, 0.088388346
    %v1606 = vmul.f32 %v1439, 0.088388346
    %v1607 = vmul.f32 %v1442, 0.088388346
    %v1608 = vmul.f32 %v1478, 0.088388346
    %v1609 = vmul.f32 %v1481, 0.088388346
    %v1610 = vmul.f32 %v1517, 0.088388346
    %v1611 = vmul.f32 %v1520, 0.088388346
    %v1612 = vmul.f32 %v1556, 0.088388346
    %v1613 = vmul.f32 %v1559, 0.088388346
    %v1614 = vmul.f32 %v1595, 0.088388346
    %v1615 = vmul.f32 %v1598, 0.088388346
    %v1616 = vsel %vm667, %v1600, -inf
    %1617 = vmax.xlane.f32.xlu0 %v1616
    %v1618 = vpop.xlane.xlu0 %1617
    %v1619 = vsel %vm667, %v1601, -inf
    %1620 = vmax.xlane.f32.xlu0 %v1619
    %v1621 = vpop.xlane.xlu0 %1620
    %v1622 = vsel %vm667, %v1602, -inf
    %1623 = vmax.xlane.f32.xlu0 %v1622
    %v1624 = vpop.xlane.xlu0 %1623
    %v1625 = vsel %vm667, %v1603, -inf
    %1626 = vmax.xlane.f32.xlu0 %v1625
    %v1627 = vpop.xlane.xlu0 %1626
    %v1628 = vsel %vm667, %v1604, -inf
    %1629 = vmax.xlane.f32.xlu0 %v1628
    %v1630 = vpop.xlane.xlu0 %1629
    %v1631 = vsel %vm667, %v1605, -inf
    %1632 = vmax.xlane.f32.xlu0 %v1631
    %v1633 = vpop.xlane.xlu0 %1632
    %v1634 = vsel %vm667, %v1606, -inf
    %1635 = vmax.xlane.f32.xlu0 %v1634
    %v1636 = vpop.xlane.xlu0 %1635
    %v1637 = vsel %vm667, %v1607, -inf
    %1638 = vmax.xlane.f32.xlu0 %v1637
    %v1639 = vpop.xlane.xlu0 %1638
    %v1640 = vsel %vm667, %v1608, -inf
    %1641 = vmax.xlane.f32.xlu0 %v1640
    %v1642 = vpop.xlane.xlu0 %1641
    %v1643 = vsel %vm667, %v1609, -inf
    %1644 = vmax.xlane.f32.xlu0 %v1643
    %v1645 = vpop.xlane.xlu0 %1644
    %v1646 = vsel %vm667, %v1610, -inf
    %1647 = vmax.xlane.f32.xlu0 %v1646
    %v1648 = vpop.xlane.xlu0 %1647
    %v1649 = vsel %vm667, %v1611, -inf
    %1650 = vmax.xlane.f32.xlu0 %v1649
    %v1651 = vpop.xlane.xlu0 %1650
    %v1652 = vsel %vm667, %v1612, -inf
    %1653 = vmax.xlane.f32.xlu0 %v1652
    %v1654 = vpop.xlane.xlu0 %1653
    %v1655 = vsel %vm667, %v1613, -inf
    %1656 = vmax.xlane.f32.xlu0 %v1655
    %v1657 = vpop.xlane.xlu0 %1656
    %v1658 = vsel %vm667, %v1614, -inf
    %1659 = vmax.xlane.f32.xlu0 %v1658
    %v1660 = vpop.xlane.xlu0 %1659
    %v1661 = vsel %vm667, %v1615, -inf
    %1662 = vmax.xlane.f32.xlu0 %v1661
    %v1663 = vpop.xlane.xlu0 %1662
    %v1664 = vsub.f32 %v1600, %v1618
    %v1665 = vsub.f32 %v1601, %v1621
    %v1666 = vsub.f32 %v1602, %v1624
    %v1667 = vsub.f32 %v1603, %v1627
    %v1668 = vsub.f32 %v1604, %v1630
    %v1669 = vsub.f32 %v1605, %v1633
    %v1670 = vsub.f32 %v1606, %v1636
    %v1671 = vsub.f32 %v1607, %v1639
    %v1672 = vsub.f32 %v1608, %v1642
    %v1673 = vsub.f32 %v1609, %v1645
    %v1674 = vsub.f32 %v1610, %v1648
    %v1675 = vsub.f32 %v1611, %v1651
    %v1676 = vsub.f32 %v1612, %v1654
    %v1677 = vsub.f32 %v1613, %v1657
    %v1678 = vsub.f32 %v1614, %v1660
    %v1679 = vsub.f32 %v1615, %v1663
    %v1680 = vmul.f32 %v1664, 1.442695
    %v1681 = vpow.pop %v1680
    %v1682 = vmul.f32 %v1665, 1.442695
    %v1683 = vpow.pop %v1682
    %v1684 = vmul.f32 %v1666, 1.442695
    %v1685 = vpow.pop %v1684
    %v1686 = vmul.f32 %v1667, 1.442695
    %v1687 = vpow.pop %v1686
    %v1688 = vmul.f32 %v1668, 1.442695
    %v1689 = vpow.pop %v1688
    %v1690 = vmul.f32 %v1669, 1.442695
    %v1691 = vpow.pop %v1690
    %v1692 = vmul.f32 %v1670, 1.442695
    %v1693 = vpow.pop %v1692
    %v1694 = vmul.f32 %v1671, 1.442695
    %v1695 = vpow.pop %v1694
    %v1696 = vmul.f32 %v1672, 1.442695
    %v1697 = vpow.pop %v1696
    %v1698 = vmul.f32 %v1673, 1.442695
    %v1699 = vpow.pop %v1698
    %v1700 = vmul.f32 %v1674, 1.442695
    %v1701 = vpow.pop %v1700
    %v1702 = vmul.f32 %v1675, 1.442695
    %v1703 = vpow.pop %v1702
    %v1704 = vmul.f32 %v1676, 1.442695
    %v1705 = vpow.pop %v1704
    %v1706 = vmul.f32 %v1677, 1.442695
    %v1707 = vpow.pop %v1706
    %v1708 = vmul.f32 %v1678, 1.442695
    %v1709 = vpow.pop %v1708
    %v1710 = vmul.f32 %v1679, 1.442695
    %v1711 = vpow.pop %v1710
    %v1712 = vsel %vm667, %v1681, 0.0
    %1713 = vadd.xlane.f32.xlu0 %v1712
    %v1714 = vpop.xlane.xlu0 %1713
    %v1715 = vsel %vm667, %v1683, 0.0
    %1716 = vadd.xlane.f32.xlu0 %v1715
    %v1717 = vpop.xlane.xlu0 %1716
    %v1718 = vsel %vm667, %v1685, 0.0
    %1719 = vadd.xlane.f32.xlu0 %v1718
    %v1720 = vpop.xlane.xlu0 %1719
    %v1721 = vsel %vm667, %v1687, 0.0
    %1722 = vadd.xlane.f32.xlu0 %v1721
    %v1723 = vpop.xlane.xlu0 %1722
    %v1724 = vsel %vm667, %v1689, 0.0
    %1725 = vadd.xlane.f32.xlu0 %v1724
    %v1726 = vpop.xlane.xlu0 %1725
    %v1727 = vsel %vm667, %v1691, 0.0
    %1728 = vadd.xlane.f32.xlu0 %v1727
    %v1729 = vpop.xlane.xlu0 %1728
    %v1730 = vsel %vm667, %v1693, 0.0
    %1731 = vadd.xlane.f32.xlu0 %v1730
    %v1732 = vpop.xlane.xlu0 %1731
    %v1733 = vsel %vm667, %v1695, 0.0
    %1734 = vadd.xlane.f32.xlu0 %v1733
    %v1735 = vpop.xlane.xlu0 %1734
    %v1736 = vsel %vm667, %v1697, 0.0
    %1737 = vadd.xlane.f32.xlu0 %v1736
    %v1738 = vpop.xlane.xlu0 %1737
    %v1739 = vsel %vm667, %v1699, 0.0
    %1740 = vadd.xlane.f32.xlu0 %v1739
    %v1741 = vpop.xlane.xlu0 %1740
    %v1742 = vsel %vm667, %v1701, 0.0
    %1743 = vadd.xlane.f32.xlu0 %v1742
    %v1744 = vpop.xlane.xlu0 %1743
    %v1745 = vsel %vm667, %v1703, 0.0
    %1746 = vadd.xlane.f32.xlu0 %v1745
    %v1747 = vpop.xlane.xlu0 %1746
    %v1748 = vsel %vm667, %v1705, 0.0
    %1749 = vadd.xlane.f32.xlu0 %v1748
    %v1750 = vpop.xlane.xlu0 %1749
    %v1751 = vsel %vm667, %v1707, 0.0
    %1752 = vadd.xlane.f32.xlu0 %v1751
    %v1753 = vpop.xlane.xlu0 %1752
    %v1754 = vsel %vm667, %v1709, 0.0
    %1755 = vadd.xlane.f32.xlu0 %v1754
    %v1756 = vpop.xlane.xlu0 %1755
    %v1757 = vsel %vm667, %v1711, 0.0
    %1758 = vadd.xlane.f32.xlu0 %v1757
    %v1759 = vpop.xlane.xlu0 %1758
    %1762 = vrot.lane.b32.xlu0 %v323, 96
    %v1763 = vpop.permute.xlu0 %1762
    %1764 = vrot.lane.b32.xlu0 %v326, 96
    %v1765 = vpop.permute.xlu0 %1764
    %v1769 = vsel %vm667, %v1681, 0
    %v1772 = vsel %vm667, %v1683, 0
    %1774 = vmatpush.msra.mxu0 0.0
    %1775 = vmatpush.msra.mxu0 0.0
    %1776 = vmatpush.msra.mxu0 0.0
    %1777 = vmatpush.msra.mxu0 0.0
    %1778 = vmatpush.msra.mxu0 0.0
    %1779 = vmatpush.msra.mxu0 0.0
    %1780 = vmatpush.msra.mxu0 0.0
    %1781 = vmatpush.msra.mxu0 0.0
    %1782 = vmatpush.msra.mxu0 0.0
    %1783 = vmatpush.msra.mxu0 0.0
    %1784 = vmatpush.msra.mxu0 0.0
    %1785 = vmatpush.msra.mxu0 0.0
    %1786 = vmatpush.msra.mxu0 0.0
    %1787 = vmatpush.msra.mxu0 0.0
    %1788 = vmatpush.msra.mxu0 %v1765
    %1789 = vmatpush.msra.mxu0 %v1763
    %1790 = vmatmul.f32.gmra.mxu0 %v1769
    %v1791 = vpop.f32.mrf.mxu0
    %v1792 = vadd.f32 0.0, %v1791
    %1793 = vmatmul.f32.gmra.mxu0 %v1772
    %v1794 = vpop.f32.mrf.mxu0
    %v1795 = vadd.f32 0.0, %v1794
    %1796 = vdwg.mxu0
    %1799 = vrot.lane.b32.xlu0 %v329, 96
    %v1800 = vpop.permute.xlu0 %1799
    %1801 = vrot.lane.b32.xlu0 %v332, 96
    %v1802 = vpop.permute.xlu0 %1801
    %v1806 = vsel %vm667, %v1685, 0
    %v1809 = vsel %vm667, %v1687, 0
    %1811 = vmatpush.msra.mxu0 0.0
    %1812 = vmatpush.msra.mxu0 0.0
    %1813 = vmatpush.msra.mxu0 0.0
    %1814 = vmatpush.msra.mxu0 0.0
    %1815 = vmatpush.msra.mxu0 0.0
    %1816 = vmatpush.msra.mxu0 0.0
    %1817 = vmatpush.msra.mxu0 0.0
    %1818 = vmatpush.msra.mxu0 0.0
    %1819 = vmatpush.msra.mxu0 0.0
    %1820 = vmatpush.msra.mxu0 0.0
    %1821 = vmatpush.msra.mxu0 0.0
    %1822 = vmatpush.msra.mxu0 0.0
    %1823 = vmatpush.msra.mxu0 0.0
    %1824 = vmatpush.msra.mxu0 0.0
    %1825 = vmatpush.msra.mxu0 %v1802
    %1826 = vmatpush.msra.mxu0 %v1800
    %1827 = vmatmul.f32.gmra.mxu0 %v1806
    %v1828 = vpop.f32.mrf.mxu0
    %v1829 = vadd.f32 0.0, %v1828
    %1830 = vmatmul.f32.gmra.mxu0 %v1809
    %v1831 = vpop.f32.mrf.mxu0
    %v1832 = vadd.f32 0.0, %v1831
    %1833 = vdwg.mxu0
    %1836 = vrot.lane.b32.xlu0 %v335, 96
    %v1837 = vpop.permute.xlu0 %1836
    %1838 = vrot.lane.b32.xlu0 %v338, 96
    %v1839 = vpop.permute.xlu0 %1838
    %v1843 = vsel %vm667, %v1689, 0
    %v1846 = vsel %vm667, %v1691, 0
    %1848 = vmatpush.msra.mxu0 0.0
    %1849 = vmatpush.msra.mxu0 0.0
    %1850 = vmatpush.msra.mxu0 0.0
    %1851 = vmatpush.msra.mxu0 0.0
    %1852 = vmatpush.msra.mxu0 0.0
    %1853 = vmatpush.msra.mxu0 0.0
    %1854 = vmatpush.msra.mxu0 0.0
    %1855 = vmatpush.msra.mxu0 0.0
    %1856 = vmatpush.msra.mxu0 0.0
    %1857 = vmatpush.msra.mxu0 0.0
    %1858 = vmatpush.msra.mxu0 0.0
    %1859 = vmatpush.msra.mxu0 0.0
    %1860 = vmatpush.msra.mxu0 0.0
    %1861 = vmatpush.msra.mxu0 0.0
    %1862 = vmatpush.msra.mxu0 %v1839
    %1863 = vmatpush.msra.mxu0 %v1837
    %1864 = vmatmul.f32.gmra.mxu0 %v1843
    %v1865 = vpop.f32.mrf.mxu0
    %v1866 = vadd.f32 0.0, %v1865
    %1867 = vmatmul.f32.gmra.mxu0 %v1846
    %v1868 = vpop.f32.mrf.mxu0
    %v1869 = vadd.f32 0.0, %v1868
    %1870 = vdwg.mxu0
    %1873 = vrot.lane.b32.xlu0 %v341, 96
    %v1874 = vpop.permute.xlu0 %1873
    %1875 = vrot.lane.b32.xlu0 %v344, 96
    %v1876 = vpop.permute.xlu0 %1875
    %v1880 = vsel %vm667, %v1693, 0
    %v1883 = vsel %vm667, %v1695, 0
    %1885 = vmatpush.msra.mxu0 0.0
    %1886 = vmatpush.msra.mxu0 0.0
    %1887 = vmatpush.msra.mxu0 0.0
    %1888 = vmatpush.msra.mxu0 0.0
    %1889 = vmatpush.msra.mxu0 0.0
    %1890 = vmatpush.msra.mxu0 0.0
    %1891 = vmatpush.msra.mxu0 0.0
    %1892 = vmatpush.msra.mxu0 0.0
    %1893 = vmatpush.msra.mxu0 0.0
    %1894 = vmatpush.msra.mxu0 0.0
    %1895 = vmatpush.msra.mxu0 0.0
    %1896 = vmatpush.msra.mxu0 0.0
    %1897 = vmatpush.msra.mxu0 0.0
    %1898 = vmatpush.msra.mxu0 0.0
    %1899 = vmatpush.msra.mxu0 %v1876
    %1900 = vmatpush.msra.mxu0 %v1874
    %1901 = vmatmul.f32.gmra.mxu0 %v1880
    %v1902 = vpop.f32.mrf.mxu0
    %v1903 = vadd.f32 0.0, %v1902
    %1904 = vmatmul.f32.gmra.mxu0 %v1883
    %v1905 = vpop.f32.mrf.mxu0
    %v1906 = vadd.f32 0.0, %v1905
    %1907 = vdwg.mxu0
    %1910 = vrot.lane.b32.xlu0 %v347, 96
    %v1911 = vpop.permute.xlu0 %1910
    %1912 = vrot.lane.b32.xlu0 %v350, 96
    %v1913 = vpop.permute.xlu0 %1912
    %v1917 = vsel %vm667, %v1697, 0
    %v1920 = vsel %vm667, %v1699, 0
    %1922 = vmatpush.msra.mxu0 0.0
    %1923 = vmatpush.msra.mxu0 0.0
    %1924 = vmatpush.msra.mxu0 0.0
    %1925 = vmatpush.msra.mxu0 0.0
    %1926 = vmatpush.msra.mxu0 0.0
    %1927 = vmatpush.msra.mxu0 0.0
    %1928 = vmatpush.msra.mxu0 0.0
    %1929 = vmatpush.msra.mxu0 0.0
    %1930 = vmatpush.msra.mxu0 0.0
    %1931 = vmatpush.msra.mxu0 0.0
    %1932 = vmatpush.msra.mxu0 0.0
    %1933 = vmatpush.msra.mxu0 0.0
    %1934 = vmatpush.msra.mxu0 0.0
    %1935 = vmatpush.msra.mxu0 0.0
    %1936 = vmatpush.msra.mxu0 %v1913
    %1937 = vmatpush.msra.mxu0 %v1911
    %1938 = vmatmul.f32.gmra.mxu0 %v1917
    %v1939 = vpop.f32.mrf.mxu0
    %v1940 = vadd.f32 0.0, %v1939
    %1941 = vmatmul.f32.gmra.mxu0 %v1920
    %v1942 = vpop.f32.mrf.mxu0
    %v1943 = vadd.f32 0.0, %v1942
    %1944 = vdwg.mxu0
    %1947 = vrot.lane.b32.xlu0 %v353, 96
    %v1948 = vpop.permute.xlu0 %1947
    %1949 = vrot.lane.b32.xlu0 %v356, 96
    %v1950 = vpop.permute.xlu0 %1949
    %v1954 = vsel %vm667, %v1701, 0
    %v1957 = vsel %vm667, %v1703, 0
    %1959 = vmatpush.msra.mxu0 0.0
    %1960 = vmatpush.msra.mxu0 0.0
    %1961 = vmatpush.msra.mxu0 0.0
    %1962 = vmatpush.msra.mxu0 0.0
    %1963 = vmatpush.msra.mxu0 0.0
    %1964 = vmatpush.msra.mxu0 0.0
    %1965 = vmatpush.msra.mxu0 0.0
    %1966 = vmatpush.msra.mxu0 0.0
    %1967 = vmatpush.msra.mxu0 0.0
    %1968 = vmatpush.msra.mxu0 0.0
    %1969 = vmatpush.msra.mxu0 0.0
    %1970 = vmatpush.msra.mxu0 0.0
    %1971 = vmatpush.msra.mxu0 0.0
    %1972 = vmatpush.msra.mxu0 0.0
    %1973 = vmatpush.msra.mxu0 %v1950
    %1974 = vmatpush.msra.mxu0 %v1948
    %1975 = vmatmul.f32.gmra.mxu0 %v1954
    %v1976 = vpop.f32.mrf.mxu0
    %v1977 = vadd.f32 0.0, %v1976
    %1978 = vmatmul.f32.gmra.mxu0 %v1957
    %v1979 = vpop.f32.mrf.mxu0
    %v1980 = vadd.f32 0.0, %v1979
    %1981 = vdwg.mxu0
    %1984 = vrot.lane.b32.xlu0 %v359, 96
    %v1985 = vpop.permute.xlu0 %1984
    %1986 = vrot.lane.b32.xlu0 %v362, 96
    %v1987 = vpop.permute.xlu0 %1986
    %v1991 = vsel %vm667, %v1705, 0
    %v1994 = vsel %vm667, %v1707, 0
    %1996 = vmatpush.msra.mxu0 0.0
    %1997 = vmatpush.msra.mxu0 0.0
    %1998 = vmatpush.msra.mxu0 0.0
    %1999 = vmatpush.msra.mxu0 0.0
    %2000 = vmatpush.msra.mxu0 0.0
    %2001 = vmatpush.msra.mxu0 0.0
    %2002 = vmatpush.msra.mxu0 0.0
    %2003 = vmatpush.msra.mxu0 0.0
    %2004 = vmatpush.msra.mxu0 0.0
    %2005 = vmatpush.msra.mxu0 0.0
    %2006 = vmatpush.msra.mxu0 0.0
    %2007 = vmatpush.msra.mxu0 0.0
    %2008 = vmatpush.msra.mxu0 0.0
    %2009 = vmatpush.msra.mxu0 0.0
    %2010 = vmatpush.msra.mxu0 %v1987
    %2011 = vmatpush.msra.mxu0 %v1985
    %2012 = vmatmul.f32.gmra.mxu0 %v1991
    %v2013 = vpop.f32.mrf.mxu0
    %v2014 = vadd.f32 0.0, %v2013
    %2015 = vmatmul.f32.gmra.mxu0 %v1994
    %v2016 = vpop.f32.mrf.mxu0
    %v2017 = vadd.f32 0.0, %v2016
    %2018 = vdwg.mxu0
    %2021 = vrot.lane.b32.xlu0 %v365, 96
    %v2022 = vpop.permute.xlu0 %2021
    %2023 = vrot.lane.b32.xlu0 %v368, 96
    %v2024 = vpop.permute.xlu0 %2023
    %v2028 = vsel %vm667, %v1709, 0
    %v2031 = vsel %vm667, %v1711, 0
    %2033 = vmatpush.msra.mxu0 0.0
    %2034 = vmatpush.msra.mxu0 0.0
    %2035 = vmatpush.msra.mxu0 0.0
    %2036 = vmatpush.msra.mxu0 0.0
    %2037 = vmatpush.msra.mxu0 0.0
    %2038 = vmatpush.msra.mxu0 0.0
    %2039 = vmatpush.msra.mxu0 0.0
    %2040 = vmatpush.msra.mxu0 0.0
    %2041 = vmatpush.msra.mxu0 0.0
    %2042 = vmatpush.msra.mxu0 0.0
    %2043 = vmatpush.msra.mxu0 0.0
    %2044 = vmatpush.msra.mxu0 0.0
    %2045 = vmatpush.msra.mxu0 0.0
    %2046 = vmatpush.msra.mxu0 0.0
    %2047 = vmatpush.msra.mxu0 %v2024
    %2048 = vmatpush.msra.mxu0 %v2022
    %2049 = vmatmul.f32.gmra.mxu0 %v2028
    %v2050 = vpop.f32.mrf.mxu0
    %v2051 = vadd.f32 0.0, %v2050
    %2052 = vmatmul.f32.gmra.mxu0 %v2031
    %v2053 = vpop.f32.mrf.mxu0
    %v2054 = vadd.f32 0.0, %v2053
    %2055 = vdwg.mxu0
    %v2056 = vrcp.pop %v1714
    %v2057 = vmul.f32 %v1714, %v2056
    %v2058 = vsub.f32 1.0, %v2057
    %v2059 = vmul.f32 %v2056, %v2058
    %v2060 = vadd.f32 %v2056, %v2059
    %vm2061 = vweird.f32 %v1714
    %vm2062 = vweird.f32 %v2056
    %vm2063 = vmor %vm2061, %vm2062
    %v2064 = vsel %vm2063, %v2056, %v2060
    %v2065 = vand.u32 2147483647, %v1714
    %vm2066 = vcmp.eq.f32.partialorder %v2065, 8.507059e+37
    %v2067 = vand.u32 %v1714, 2147483648
    %v2068 = vor.u32 1.1754944e-38, %v2067
    %v2069 = vsel %vm2066, %v2068, %v2064
    %v2070 = vrcp.pop %v1717
    %v2071 = vmul.f32 %v1717, %v2070
    %v2072 = vsub.f32 1.0, %v2071
    %v2073 = vmul.f32 %v2070, %v2072
    %v2074 = vadd.f32 %v2070, %v2073
    %vm2075 = vweird.f32 %v1717
    %vm2076 = vweird.f32 %v2070
    %vm2077 = vmor %vm2075, %vm2076
    %v2078 = vsel %vm2077, %v2070, %v2074
    %v2079 = vand.u32 2147483647, %v1717
    %vm2080 = vcmp.eq.f32.partialorder %v2079, 8.507059e+37
    %v2081 = vand.u32 %v1717, 2147483648
    %v2082 = vor.u32 1.1754944e-38, %v2081
    %v2083 = vsel %vm2080, %v2082, %v2078
    %v2084 = vrcp.pop %v1720
    %v2085 = vmul.f32 %v1720, %v2084
    %v2086 = vsub.f32 1.0, %v2085
    %v2087 = vmul.f32 %v2084, %v2086
    %v2088 = vadd.f32 %v2084, %v2087
    %vm2089 = vweird.f32 %v1720
    %vm2090 = vweird.f32 %v2084
    %vm2091 = vmor %vm2089, %vm2090
    %v2092 = vsel %vm2091, %v2084, %v2088
    %v2093 = vand.u32 2147483647, %v1720
    %vm2094 = vcmp.eq.f32.partialorder %v2093, 8.507059e+37
    %v2095 = vand.u32 %v1720, 2147483648
    %v2096 = vor.u32 1.1754944e-38, %v2095
    %v2097 = vsel %vm2094, %v2096, %v2092
    %v2098 = vrcp.pop %v1723
    %v2099 = vmul.f32 %v1723, %v2098
    %v2100 = vsub.f32 1.0, %v2099
    %v2101 = vmul.f32 %v2098, %v2100
    %v2102 = vadd.f32 %v2098, %v2101
    %vm2103 = vweird.f32 %v1723
    %vm2104 = vweird.f32 %v2098
    %vm2105 = vmor %vm2103, %vm2104
    %v2106 = vsel %vm2105, %v2098, %v2102
    %v2107 = vand.u32 2147483647, %v1723
    %vm2108 = vcmp.eq.f32.partialorder %v2107, 8.507059e+37
    %v2109 = vand.u32 %v1723, 2147483648
    %v2110 = vor.u32 1.1754944e-38, %v2109
    %v2111 = vsel %vm2108, %v2110, %v2106
    %v2112 = vrcp.pop %v1726
    %v2113 = vmul.f32 %v1726, %v2112
    %v2114 = vsub.f32 1.0, %v2113
    %v2115 = vmul.f32 %v2112, %v2114
    %v2116 = vadd.f32 %v2112, %v2115
    %vm2117 = vweird.f32 %v1726
    %vm2118 = vweird.f32 %v2112
    %vm2119 = vmor %vm2117, %vm2118
    %v2120 = vsel %vm2119, %v2112, %v2116
    %v2121 = vand.u32 2147483647, %v1726
    %vm2122 = vcmp.eq.f32.partialorder %v2121, 8.507059e+37
    %v2123 = vand.u32 %v1726, 2147483648
    %v2124 = vor.u32 1.1754944e-38, %v2123
    %v2125 = vsel %vm2122, %v2124, %v2120
    %v2126 = vrcp.pop %v1729
    %v2127 = vmul.f32 %v1729, %v2126
    %v2128 = vsub.f32 1.0, %v2127
    %v2129 = vmul.f32 %v2126, %v2128
    %v2130 = vadd.f32 %v2126, %v2129
    %vm2131 = vweird.f32 %v1729
    %vm2132 = vweird.f32 %v2126
    %vm2133 = vmor %vm2131, %vm2132
    %v2134 = vsel %vm2133, %v2126, %v2130
    %v2135 = vand.u32 2147483647, %v1729
    %vm2136 = vcmp.eq.f32.partialorder %v2135, 8.507059e+37
    %v2137 = vand.u32 %v1729, 2147483648
    %v2138 = vor.u32 1.1754944e-38, %v2137
    %v2139 = vsel %vm2136, %v2138, %v2134
    %v2140 = vrcp.pop %v1732
    %v2141 = vmul.f32 %v1732, %v2140
    %v2142 = vsub.f32 1.0, %v2141
    %v2143 = vmul.f32 %v2140, %v2142
    %v2144 = vadd.f32 %v2140, %v2143
    %vm2145 = vweird.f32 %v1732
    %vm2146 = vweird.f32 %v2140
    %vm2147 = vmor %vm2145, %vm2146
    %v2148 = vsel %vm2147, %v2140, %v2144
    %v2149 = vand.u32 2147483647, %v1732
    %vm2150 = vcmp.eq.f32.partialorder %v2149, 8.507059e+37
    %v2151 = vand.u32 %v1732, 2147483648
    %v2152 = vor.u32 1.1754944e-38, %v2151
    %v2153 = vsel %vm2150, %v2152, %v2148
    %v2154 = vrcp.pop %v1735
    %v2155 = vmul.f32 %v1735, %v2154
    %v2156 = vsub.f32 1.0, %v2155
    %v2157 = vmul.f32 %v2154, %v2156
    %v2158 = vadd.f32 %v2154, %v2157
    %vm2159 = vweird.f32 %v1735
    %vm2160 = vweird.f32 %v2154
    %vm2161 = vmor %vm2159, %vm2160
    %v2162 = vsel %vm2161, %v2154, %v2158
    %v2163 = vand.u32 2147483647, %v1735
    %vm2164 = vcmp.eq.f32.partialorder %v2163, 8.507059e+37
    %v2165 = vand.u32 %v1735, 2147483648
    %v2166 = vor.u32 1.1754944e-38, %v2165
    %v2167 = vsel %vm2164, %v2166, %v2162
    %v2168 = vrcp.pop %v1738
    %v2169 = vmul.f32 %v1738, %v2168
    %v2170 = vsub.f32 1.0, %v2169
    %v2171 = vmul.f32 %v2168, %v2170
    %v2172 = vadd.f32 %v2168, %v2171
    %vm2173 = vweird.f32 %v1738
    %vm2174 = vweird.f32 %v2168
    %vm2175 = vmor %vm2173, %vm2174
    %v2176 = vsel %vm2175, %v2168, %v2172
    %v2177 = vand.u32 2147483647, %v1738
    %vm2178 = vcmp.eq.f32.partialorder %v2177, 8.507059e+37
    %v2179 = vand.u32 %v1738, 2147483648
    %v2180 = vor.u32 1.1754944e-38, %v2179
    %v2181 = vsel %vm2178, %v2180, %v2176
    %v2182 = vrcp.pop %v1741
    %v2183 = vmul.f32 %v1741, %v2182
    %v2184 = vsub.f32 1.0, %v2183
    %v2185 = vmul.f32 %v2182, %v2184
    %v2186 = vadd.f32 %v2182, %v2185
    %vm2187 = vweird.f32 %v1741
    %vm2188 = vweird.f32 %v2182
    %vm2189 = vmor %vm2187, %vm2188
    %v2190 = vsel %vm2189, %v2182, %v2186
    %v2191 = vand.u32 2147483647, %v1741
    %vm2192 = vcmp.eq.f32.partialorder %v2191, 8.507059e+37
    %v2193 = vand.u32 %v1741, 2147483648
    %v2194 = vor.u32 1.1754944e-38, %v2193
    %v2195 = vsel %vm2192, %v2194, %v2190
    %v2196 = vrcp.pop %v1744
    %v2197 = vmul.f32 %v1744, %v2196
    %v2198 = vsub.f32 1.0, %v2197
    %v2199 = vmul.f32 %v2196, %v2198
    %v2200 = vadd.f32 %v2196, %v2199
    %vm2201 = vweird.f32 %v1744
    %vm2202 = vweird.f32 %v2196
    %vm2203 = vmor %vm2201, %vm2202
    %v2204 = vsel %vm2203, %v2196, %v2200
    %v2205 = vand.u32 2147483647, %v1744
    %vm2206 = vcmp.eq.f32.partialorder %v2205, 8.507059e+37
    %v2207 = vand.u32 %v1744, 2147483648
    %v2208 = vor.u32 1.1754944e-38, %v2207
    %v2209 = vsel %vm2206, %v2208, %v2204
    %v2210 = vrcp.pop %v1747
    %v2211 = vmul.f32 %v1747, %v2210
    %v2212 = vsub.f32 1.0, %v2211
    %v2213 = vmul.f32 %v2210, %v2212
    %v2214 = vadd.f32 %v2210, %v2213
    %vm2215 = vweird.f32 %v1747
    %vm2216 = vweird.f32 %v2210
    %vm2217 = vmor %vm2215, %vm2216
    %v2218 = vsel %vm2217, %v2210, %v2214
    %v2219 = vand.u32 2147483647, %v1747
    %vm2220 = vcmp.eq.f32.partialorder %v2219, 8.507059e+37
    %v2221 = vand.u32 %v1747, 2147483648
    %v2222 = vor.u32 1.1754944e-38, %v2221
    %v2223 = vsel %vm2220, %v2222, %v2218
    %v2224 = vrcp.pop %v1750
    %v2225 = vmul.f32 %v1750, %v2224
    %v2226 = vsub.f32 1.0, %v2225
    %v2227 = vmul.f32 %v2224, %v2226
    %v2228 = vadd.f32 %v2224, %v2227
    %vm2229 = vweird.f32 %v1750
    %vm2230 = vweird.f32 %v2224
    %vm2231 = vmor %vm2229, %vm2230
    %v2232 = vsel %vm2231, %v2224, %v2228
    %v2233 = vand.u32 2147483647, %v1750
    %vm2234 = vcmp.eq.f32.partialorder %v2233, 8.507059e+37
    %v2235 = vand.u32 %v1750, 2147483648
    %v2236 = vor.u32 1.1754944e-38, %v2235
    %v2237 = vsel %vm2234, %v2236, %v2232
    %v2238 = vrcp.pop %v1753
    %v2239 = vmul.f32 %v1753, %v2238
    %v2240 = vsub.f32 1.0, %v2239
    %v2241 = vmul.f32 %v2238, %v2240
    %v2242 = vadd.f32 %v2238, %v2241
    %vm2243 = vweird.f32 %v1753
    %vm2244 = vweird.f32 %v2238
    %vm2245 = vmor %vm2243, %vm2244
    %v2246 = vsel %vm2245, %v2238, %v2242
    %v2247 = vand.u32 2147483647, %v1753
    %vm2248 = vcmp.eq.f32.partialorder %v2247, 8.507059e+37
    %v2249 = vand.u32 %v1753, 2147483648
    %v2250 = vor.u32 1.1754944e-38, %v2249
    %v2251 = vsel %vm2248, %v2250, %v2246
    %v2252 = vrcp.pop %v1756
    %v2253 = vmul.f32 %v1756, %v2252
    %v2254 = vsub.f32 1.0, %v2253
    %v2255 = vmul.f32 %v2252, %v2254
    %v2256 = vadd.f32 %v2252, %v2255
    %vm2257 = vweird.f32 %v1756
    %vm2258 = vweird.f32 %v2252
    %vm2259 = vmor %vm2257, %vm2258
    %v2260 = vsel %vm2259, %v2252, %v2256
    %v2261 = vand.u32 2147483647, %v1756
    %vm2262 = vcmp.eq.f32.partialorder %v2261, 8.507059e+37
    %v2263 = vand.u32 %v1756, 2147483648
    %v2264 = vor.u32 1.1754944e-38, %v2263
    %v2265 = vsel %vm2262, %v2264, %v2260
    %v2266 = vrcp.pop %v1759
    %v2267 = vmul.f32 %v1759, %v2266
    %v2268 = vsub.f32 1.0, %v2267
    %v2269 = vmul.f32 %v2266, %v2268
    %v2270 = vadd.f32 %v2266, %v2269
    %vm2271 = vweird.f32 %v1759
    %vm2272 = vweird.f32 %v2266
    %vm2273 = vmor %vm2271, %vm2272
    %v2274 = vsel %vm2273, %v2266, %v2270
    %v2275 = vand.u32 2147483647, %v1759
    %vm2276 = vcmp.eq.f32.partialorder %v2275, 8.507059e+37
    %v2277 = vand.u32 %v1759, 2147483648
    %v2278 = vor.u32 1.1754944e-38, %v2277
    %v2279 = vsel %vm2276, %v2278, %v2274
    %v2280 = vmul.f32 %v1792, %v2069
    %v2281 = vmul.f32 %v1795, %v2083
    %v2282 = vmul.f32 %v1829, %v2097
    %v2283 = vmul.f32 %v1832, %v2111
    %v2284 = vmul.f32 %v1866, %v2125
    %v2285 = vmul.f32 %v1869, %v2139
    %v2286 = vmul.f32 %v1903, %v2153
    %v2287 = vmul.f32 %v1906, %v2167
    %v2288 = vmul.f32 %v1940, %v2181
    %v2289 = vmul.f32 %v1943, %v2195
    %v2290 = vmul.f32 %v1977, %v2209
    %v2291 = vmul.f32 %v1980, %v2223
    %v2292 = vmul.f32 %v2014, %v2237
    %v2293 = vmul.f32 %v2017, %v2251
    %v2294 = vmul.f32 %v2051, %v2265
    %v2295 = vmul.f32 %v2054, %v2279
    %v2296 = vld [vmem:[#allocation8 + $0x20] sm:$0xff]
    %v2297 = vld [vmem:[#allocation8 + $0x28] sm:$0xff]
    %v2298 = vld [vmem:[#allocation8 + $0x30] sm:$0xff]
    %v2299 = vld [vmem:[#allocation8 + $0x38] sm:$0xff]
    %v2301 = vsel %vm370, %v2280, 0
    %v2304 = vsel %vm370, %v2281, 0
    %v2307 = vsel %vm370, %v2282, 0
    %v2310 = vsel %vm370, %v2283, 0
    %v2313 = vsel %vm370, %v2284, 0
    %v2316 = vsel %vm370, %v2285, 0
    %v2319 = vsel %vm370, %v2286, 0
    %v2322 = vsel %vm370, %v2287, 0
    %v2325 = vsel %vm370, %v2288, 0
    %v2328 = vsel %vm370, %v2289, 0
    %v2331 = vsel %vm370, %v2290, 0
    %v2334 = vsel %vm370, %v2291, 0
    %v2337 = vsel %vm370, %v2292, 0
    %v2340 = vsel %vm370, %v2293, 0
    %v2343 = vsel %vm370, %v2294, 0
    %v2346 = vsel %vm370, %v2295, 0
    %2348 = vmatpush.msra.mxu0 0.0
    %2349 = vmatpush.msra.mxu0 0.0
    %2350 = vmatpush.msra.mxu0 0.0
    %2351 = vmatpush.msra.mxu0 0.0
    %2352 = vmatpush.msra.mxu0 0.0
    %2353 = vmatpush.msra.mxu0 0.0
    %2354 = vmatpush.msra.mxu0 0.0
    %2355 = vmatpush.msra.mxu0 0.0
    %2356 = vmatpush.msra.mxu0 0.0
    %2357 = vmatpush.msra.mxu0 0.0
    %2358 = vmatpush.msra.mxu0 0.0
    %2359 = vmatpush.msra.mxu0 0.0
    %2360 = vmatpush.msra.mxu0 %v2299
    %2361 = vmatpush.msra.mxu0 %v2298
    %2362 = vmatpush.msra.mxu0 %v2297
    %2363 = vmatpush.msra.mxu0 %v2296
    %2364 = vmatmul.f32.gmra.mxu0 %v2301
    %v2365 = vpop.f32.mrf.mxu0
    %v2366 = vadd.f32 0.0, %v2365
    %2367 = vmatmul.f32.gmra.mxu0 %v2304
    %v2368 = vpop.f32.mrf.mxu0
    %v2369 = vadd.f32 0.0, %v2368
    %2370 = vmatmul.f32.gmra.mxu0 %v2307
    %v2371 = vpop.f32.mrf.mxu0
    %v2372 = vadd.f32 0.0, %v2371
    %2373 = vmatmul.f32.gmra.mxu0 %v2310
    %v2374 = vpop.f32.mrf.mxu0
    %v2375 = vadd.f32 0.0, %v2374
    %2376 = vmatmul.f32.gmra.mxu0 %v2313
    %v2377 = vpop.f32.mrf.mxu0
    %v2378 = vadd.f32 0.0, %v2377
    %2379 = vmatmul.f32.gmra.mxu0 %v2316
    %v2380 = vpop.f32.mrf.mxu0
    %v2381 = vadd.f32 0.0, %v2380
    %2382 = vmatmul.f32.gmra.mxu0 %v2319
    %v2383 = vpop.f32.mrf.mxu0
    %v2384 = vadd.f32 0.0, %v2383
    %2385 = vmatmul.f32.gmra.mxu0 %v2322
    %v2386 = vpop.f32.mrf.mxu0
    %v2387 = vadd.f32 0.0, %v2386
    %2388 = vmatmul.f32.gmra.mxu0 %v2325
    %v2389 = vpop.f32.mrf.mxu0
    %v2390 = vadd.f32 0.0, %v2389
    %2391 = vmatmul.f32.gmra.mxu0 %v2328
    %v2392 = vpop.f32.mrf.mxu0
    %v2393 = vadd.f32 0.0, %v2392
    %2394 = vmatmul.f32.gmra.mxu0 %v2331
    %v2395 = vpop.f32.mrf.mxu0
    %v2396 = vadd.f32 0.0, %v2395
    %2397 = vmatmul.f32.gmra.mxu0 %v2334
    %v2398 = vpop.f32.mrf.mxu0
    %v2399 = vadd.f32 0.0, %v2398
    %2400 = vmatmul.f32.gmra.mxu0 %v2337
    %v2401 = vpop.f32.mrf.mxu0
    %v2402 = vadd.f32 0.0, %v2401
    %2403 = vmatmul.f32.gmra.mxu0 %v2340
    %v2404 = vpop.f32.mrf.mxu0
    %v2405 = vadd.f32 0.0, %v2404
    %2406 = vmatmul.f32.gmra.mxu0 %v2343
    %v2407 = vpop.f32.mrf.mxu0
    %v2408 = vadd.f32 0.0, %v2407
    %2409 = vmatmul.f32.gmra.mxu0 %v2346
    %v2410 = vpop.f32.mrf.mxu0
    %v2411 = vadd.f32 0.0, %v2410
    %2412 = vdwg.mxu0
    %v2414 = vsel %vm370, %v1268, 0
    %v2417 = vsel %vm370, %v1269, 0
    %v2420 = vsel %vm370, %v1270, 0
    %v2423 = vsel %vm370, %v1271, 0
    %v2426 = vsel %vm370, %v1272, 0
    %v2429 = vsel %vm370, %v1273, 0
    %v2432 = vsel %vm370, %v1274, 0
    %v2435 = vsel %vm370, %v1275, 0
    %v2438 = vsel %vm370, %v1276, 0
    %v2441 = vsel %vm370, %v1277, 0
    %v2444 = vsel %vm370, %v1278, 0
    %v2447 = vsel %vm370, %v1279, 0
    %v2450 = vsel %vm370, %v1280, 0
    %v2453 = vsel %vm370, %v1281, 0
    %v2456 = vsel %vm370, %v1282, 0
    %v2459 = vsel %vm370, %v1283, 0
    %2461 = vmatpush.msra.mxu0 0.0
    %2462 = vmatpush.msra.mxu0 0.0
    %2463 = vmatpush.msra.mxu0 0.0
    %2464 = vmatpush.msra.mxu0 0.0
    %2465 = vmatpush.msra.mxu0 0.0
    %2466 = vmatpush.msra.mxu0 0.0
    %2467 = vmatpush.msra.mxu0 0.0
    %2468 = vmatpush.msra.mxu0 0.0
    %2469 = vmatpush.msra.mxu0 0.0
    %2470 = vmatpush.msra.mxu0 0.0
    %2471 = vmatpush.msra.mxu0 0.0
    %2472 = vmatpush.msra.mxu0 0.0
    %2473 = vmatpush.msra.mxu0 %v1287
    %2474 = vmatpush.msra.mxu0 %v1286
    %2475 = vmatpush.msra.mxu0 %v1285
    %2476 = vmatpush.msra.mxu0 %v1284
    %2477 = vmatmul.f32.gmra.mxu0 %v2414
    %v2478 = vpop.f32.mrf.mxu0
    %v2479 = vadd.f32 %v2366, %v2478
    %2480 = vmatmul.f32.gmra.mxu0 %v2417
    %v2481 = vpop.f32.mrf.mxu0
    %v2482 = vadd.f32 %v2369, %v2481
    %2483 = vmatmul.f32.gmra.mxu0 %v2420
    %v2484 = vpop.f32.mrf.mxu0
    %v2485 = vadd.f32 %v2372, %v2484
    %2486 = vmatmul.f32.gmra.mxu0 %v2423
    %v2487 = vpop.f32.mrf.mxu0
    %v2488 = vadd.f32 %v2375, %v2487
    %2489 = vmatmul.f32.gmra.mxu0 %v2426
    %v2490 = vpop.f32.mrf.mxu0
    %v2491 = vadd.f32 %v2378, %v2490
    %2492 = vmatmul.f32.gmra.mxu0 %v2429
    %v2493 = vpop.f32.mrf.mxu0
    %v2494 = vadd.f32 %v2381, %v2493
    %2495 = vmatmul.f32.gmra.mxu0 %v2432
    %v2496 = vpop.f32.mrf.mxu0
    %v2497 = vadd.f32 %v2384, %v2496
    %2498 = vmatmul.f32.gmra.mxu0 %v2435
    %v2499 = vpop.f32.mrf.mxu0
    %v2500 = vadd.f32 %v2387, %v2499
    %2501 = vmatmul.f32.gmra.mxu0 %v2438
    %v2502 = vpop.f32.mrf.mxu0
    %v2503 = vadd.f32 %v2390, %v2502
    %2504 = vmatmul.f32.gmra.mxu0 %v2441
    %v2505 = vpop.f32.mrf.mxu0
    %v2506 = vadd.f32 %v2393, %v2505
    %2507 = vmatmul.f32.gmra.mxu0 %v2444
    %v2508 = vpop.f32.mrf.mxu0
    %v2509 = vadd.f32 %v2396, %v2508
    %2510 = vmatmul.f32.gmra.mxu0 %v2447
    %v2511 = vpop.f32.mrf.mxu0
    %v2512 = vadd.f32 %v2399, %v2511
    %2513 = vmatmul.f32.gmra.mxu0 %v2450
    %v2514 = vpop.f32.mrf.mxu0
    %v2515 = vadd.f32 %v2402, %v2514
    %2516 = vmatmul.f32.gmra.mxu0 %v2453
    %v2517 = vpop.f32.mrf.mxu0
    %v2518 = vadd.f32 %v2405, %v2517
    %2519 = vmatmul.f32.gmra.mxu0 %v2456
    %v2520 = vpop.f32.mrf.mxu0
    %v2521 = vadd.f32 %v2408, %v2520
    %2522 = vmatmul.f32.gmra.mxu0 %v2459
    %v2523 = vpop.f32.mrf.mxu0
    %v2524 = vadd.f32 %v2411, %v2523
    %2525 = vdwg.mxu0
    %2526 = vrot.lane.b32.xlu0 %v193, 64
    %v2527 = vpop.permute.xlu0 %2526
    %2528 = vrot.lane.b32.xlu0 %v196, 64
    %v2529 = vpop.permute.xlu0 %2528
    %2530 = vrot.lane.b32.xlu0 %v258, 64
    %v2531 = vpop.permute.xlu0 %2530
    %2532 = vrot.lane.b32.xlu0 %v261, 64
    %v2533 = vpop.permute.xlu0 %2532
    %v2534 = vsel %vm370, %v2527, 0
    %v2536 = vsel %vm370, %v2529, 0
    %v2538 = vsel %vm370, %v2531, 0
    %v2540 = vsel %vm370, %v2533, 0
    %2542 = vmatpush.xpose.msra.mxu0 0.0
    %2543 = vmatpush.xpose.msra.mxu0 0.0
    %2544 = vmatpush.xpose.msra.mxu0 0.0
    %2545 = vmatpush.xpose.msra.mxu0 0.0
    %2546 = vmatpush.xpose.msra.mxu0 0.0
    %2547 = vmatpush.xpose.msra.mxu0 0.0
    %2548 = vmatpush.xpose.msra.mxu0 0.0
    %2549 = vmatpush.xpose.msra.mxu0 0.0
    %2550 = vmatpush.xpose.msra.mxu0 0.0
    %2551 = vmatpush.xpose.msra.mxu0 0.0
    %2552 = vmatpush.xpose.msra.mxu0 0.0
    %2553 = vmatpush.xpose.msra.mxu0 0.0
    %2554 = vmatpush.xpose.msra.mxu0 0.0
    %2555 = vmatpush.xpose.msra.mxu0 0.0
    %2556 = vmatpush.xpose.msra.mxu0 %v2540
    %2557 = vmatpush.xpose.msra.mxu0 %v2538
    %2558 = vmatmul.f32.gmra.mxu0 %v2534
    %v2559 = vpop.f32.mrf.mxu0
    %v2560 = vadd.f32 0.0, %v2559
    %2561 = vmatmul.f32.gmra.mxu0 %v2536
    %v2562 = vpop.f32.mrf.mxu0
    %v2563 = vadd.f32 0.0, %v2562
    %2564 = vdwg.mxu0
    %2565 = vrot.lane.b32.xlu0 %v199, 64
    %v2566 = vpop.permute.xlu0 %2565
    %2567 = vrot.lane.b32.xlu0 %v202, 64
    %v2568 = vpop.permute.xlu0 %2567
    %2569 = vrot.lane.b32.xlu0 %v264, 64
    %v2570 = vpop.permute.xlu0 %2569
    %2571 = vrot.lane.b32.xlu0 %v267, 64
    %v2572 = vpop.permute.xlu0 %2571
    %v2573 = vsel %vm370, %v2566, 0
    %v2575 = vsel %vm370, %v2568, 0
    %v2577 = vsel %vm370, %v2570, 0
    %v2579 = vsel %vm370, %v2572, 0
    %2581 = vmatpush.xpose.msra.mxu0 0.0
    %2582 = vmatpush.xpose.msra.mxu0 0.0
    %2583 = vmatpush.xpose.msra.mxu0 0.0
    %2584 = vmatpush.xpose.msra.mxu0 0.0
    %2585 = vmatpush.xpose.msra.mxu0 0.0
    %2586 = vmatpush.xpose.msra.mxu0 0.0
    %2587 = vmatpush.xpose.msra.mxu0 0.0
    %2588 = vmatpush.xpose.msra.mxu0 0.0
    %2589 = vmatpush.xpose.msra.mxu0 0.0
    %2590 = vmatpush.xpose.msra.mxu0 0.0
    %2591 = vmatpush.xpose.msra.mxu0 0.0
    %2592 = vmatpush.xpose.msra.mxu0 0.0
    %2593 = vmatpush.xpose.msra.mxu0 0.0
    %2594 = vmatpush.xpose.msra.mxu0 0.0
    %2595 = vmatpush.xpose.msra.mxu0 %v2579
    %2596 = vmatpush.xpose.msra.mxu0 %v2577
    %2597 = vmatmul.f32.gmra.mxu0 %v2573
    %v2598 = vpop.f32.mrf.mxu0
    %v2599 = vadd.f32 0.0, %v2598
    %2600 = vmatmul.f32.gmra.mxu0 %v2575
    %v2601 = vpop.f32.mrf.mxu0
    %v2602 = vadd.f32 0.0, %v2601
    %2603 = vdwg.mxu0
    %2604 = vrot.lane.b32.xlu0 %v205, 64
    %v2605 = vpop.permute.xlu0 %2604
    %2606 = vrot.lane.b32.xlu0 %v208, 64
    %v2607 = vpop.permute.xlu0 %2606
    %2608 = vrot.lane.b32.xlu0 %v270, 64
    %v2609 = vpop.permute.xlu0 %2608
    %2610 = vrot.lane.b32.xlu0 %v273, 64
    %v2611 = vpop.permute.xlu0 %2610
    %v2612 = vsel %vm370, %v2605, 0
    %v2614 = vsel %vm370, %v2607, 0
    %v2616 = vsel %vm370, %v2609, 0
    %v2618 = vsel %vm370, %v2611, 0
    %2620 = vmatpush.xpose.msra.mxu0 0.0
    %2621 = vmatpush.xpose.msra.mxu0 0.0
    %2622 = vmatpush.xpose.msra.mxu0 0.0
    %2623 = vmatpush.xpose.msra.mxu0 0.0
    %2624 = vmatpush.xpose.msra.mxu0 0.0
    %2625 = vmatpush.xpose.msra.mxu0 0.0
    %2626 = vmatpush.xpose.msra.mxu0 0.0
    %2627 = vmatpush.xpose.msra.mxu0 0.0
    %2628 = vmatpush.xpose.msra.mxu0 0.0
    %2629 = vmatpush.xpose.msra.mxu0 0.0
    %2630 = vmatpush.xpose.msra.mxu0 0.0
    %2631 = vmatpush.xpose.msra.mxu0 0.0
    %2632 = vmatpush.xpose.msra.mxu0 0.0
    %2633 = vmatpush.xpose.msra.mxu0 0.0
    %2634 = vmatpush.xpose.msra.mxu0 %v2618
    %2635 = vmatpush.xpose.msra.mxu0 %v2616
    %2636 = vmatmul.f32.gmra.mxu0 %v2612
    %v2637 = vpop.f32.mrf.mxu0
    %v2638 = vadd.f32 0.0, %v2637
    %2639 = vmatmul.f32.gmra.mxu0 %v2614
    %v2640 = vpop.f32.mrf.mxu0
    %v2641 = vadd.f32 0.0, %v2640
    %2642 = vdwg.mxu0
    %2643 = vrot.lane.b32.xlu0 %v211, 64
    %v2644 = vpop.permute.xlu0 %2643
    %2645 = vrot.lane.b32.xlu0 %v214, 64
    %v2646 = vpop.permute.xlu0 %2645
    %2647 = vrot.lane.b32.xlu0 %v276, 64
    %v2648 = vpop.permute.xlu0 %2647
    %2649 = vrot.lane.b32.xlu0 %v279, 64
    %v2650 = vpop.permute.xlu0 %2649
    %v2651 = vsel %vm370, %v2644, 0
    %v2653 = vsel %vm370, %v2646, 0
    %v2655 = vsel %vm370, %v2648, 0
    %v2657 = vsel %vm370, %v2650, 0
    %2659 = vmatpush.xpose.msra.mxu0 0.0
    %2660 = vmatpush.xpose.msra.mxu0 0.0
    %2661 = vmatpush.xpose.msra.mxu0 0.0
    %2662 = vmatpush.xpose.msra.mxu0 0.0
    %2663 = vmatpush.xpose.msra.mxu0 0.0
    %2664 = vmatpush.xpose.msra.mxu0 0.0
    %2665 = vmatpush.xpose.msra.mxu0 0.0
    %2666 = vmatpush.xpose.msra.mxu0 0.0
    %2667 = vmatpush.xpose.msra.mxu0 0.0
    %2668 = vmatpush.xpose.msra.mxu0 0.0
    %2669 = vmatpush.xpose.msra.mxu0 0.0
    %2670 = vmatpush.xpose.msra.mxu0 0.0
    %2671 = vmatpush.xpose.msra.mxu0 0.0
    %2672 = vmatpush.xpose.msra.mxu0 0.0
    %2673 = vmatpush.xpose.msra.mxu0 %v2657
    %2674 = vmatpush.xpose.msra.mxu0 %v2655
    %2675 = vmatmul.f32.gmra.mxu0 %v2651
    %v2676 = vpop.f32.mrf.mxu0
    %v2677 = vadd.f32 0.0, %v2676
    %2678 = vmatmul.f32.gmra.mxu0 %v2653
    %v2679 = vpop.f32.mrf.mxu0
    %v2680 = vadd.f32 0.0, %v2679
    %2681 = vdwg.mxu0
    %2682 = vrot.lane.b32.xlu0 %v217, 64
    %v2683 = vpop.permute.xlu0 %2682
    %2684 = vrot.lane.b32.xlu0 %v220, 64
    %v2685 = vpop.permute.xlu0 %2684
    %2686 = vrot.lane.b32.xlu0 %v282, 64
    %v2687 = vpop.permute.xlu0 %2686
    %2688 = vrot.lane.b32.xlu0 %v285, 64
    %v2689 = vpop.permute.xlu0 %2688
    %v2690 = vsel %vm370, %v2683, 0
    %v2692 = vsel %vm370, %v2685, 0
    %v2694 = vsel %vm370, %v2687, 0
    %v2696 = vsel %vm370, %v2689, 0
    %2698 = vmatpush.xpose.msra.mxu0 0.0
    %2699 = vmatpush.xpose.msra.mxu0 0.0
    %2700 = vmatpush.xpose.msra.mxu0 0.0
    %2701 = vmatpush.xpose.msra.mxu0 0.0
    %2702 = vmatpush.xpose.msra.mxu0 0.0
    %2703 = vmatpush.xpose.msra.mxu0 0.0
    %2704 = vmatpush.xpose.msra.mxu0 0.0
    %2705 = vmatpush.xpose.msra.mxu0 0.0
    %2706 = vmatpush.xpose.msra.mxu0 0.0
    %2707 = vmatpush.xpose.msra.mxu0 0.0
    %2708 = vmatpush.xpose.msra.mxu0 0.0
    %2709 = vmatpush.xpose.msra.mxu0 0.0
    %2710 = vmatpush.xpose.msra.mxu0 0.0
    %2711 = vmatpush.xpose.msra.mxu0 0.0
    %2712 = vmatpush.xpose.msra.mxu0 %v2696
    %2713 = vmatpush.xpose.msra.mxu0 %v2694
    %2714 = vmatmul.f32.gmra.mxu0 %v2690
    %v2715 = vpop.f32.mrf.mxu0
    %v2716 = vadd.f32 0.0, %v2715
    %2717 = vmatmul.f32.gmra.mxu0 %v2692
    %v2718 = vpop.f32.mrf.mxu0
    %v2719 = vadd.f32 0.0, %v2718
    %2720 = vdwg.mxu0
    %2721 = vrot.lane.b32.xlu0 %v223, 64
    %v2722 = vpop.permute.xlu0 %2721
    %2723 = vrot.lane.b32.xlu0 %v226, 64
    %v2724 = vpop.permute.xlu0 %2723
    %2725 = vrot.lane.b32.xlu0 %v288, 64
    %v2726 = vpop.permute.xlu0 %2725
    %2727 = vrot.lane.b32.xlu0 %v291, 64
    %v2728 = vpop.permute.xlu0 %2727
    %v2729 = vsel %vm370, %v2722, 0
    %v2731 = vsel %vm370, %v2724, 0
    %v2733 = vsel %vm370, %v2726, 0
    %v2735 = vsel %vm370, %v2728, 0
    %2737 = vmatpush.xpose.msra.mxu0 0.0
    %2738 = vmatpush.xpose.msra.mxu0 0.0
    %2739 = vmatpush.xpose.msra.mxu0 0.0
    %2740 = vmatpush.xpose.msra.mxu0 0.0
    %2741 = vmatpush.xpose.msra.mxu0 0.0
    %2742 = vmatpush.xpose.msra.mxu0 0.0
    %2743 = vmatpush.xpose.msra.mxu0 0.0
    %2744 = vmatpush.xpose.msra.mxu0 0.0
    %2745 = vmatpush.xpose.msra.mxu0 0.0
    %2746 = vmatpush.xpose.msra.mxu0 0.0
    %2747 = vmatpush.xpose.msra.mxu0 0.0
    %2748 = vmatpush.xpose.msra.mxu0 0.0
    %2749 = vmatpush.xpose.msra.mxu0 0.0
    %2750 = vmatpush.xpose.msra.mxu0 0.0
    %2751 = vmatpush.xpose.msra.mxu0 %v2735
    %2752 = vmatpush.xpose.msra.mxu0 %v2733
    %2753 = vmatmul.f32.gmra.mxu0 %v2729
    %v2754 = vpop.f32.mrf.mxu0
    %v2755 = vadd.f32 0.0, %v2754
    %2756 = vmatmul.f32.gmra.mxu0 %v2731
    %v2757 = vpop.f32.mrf.mxu0
    %v2758 = vadd.f32 0.0, %v2757
    %2759 = vdwg.mxu0
    %2760 = vrot.lane.b32.xlu0 %v229, 64
    %v2761 = vpop.permute.xlu0 %2760
    %2762 = vrot.lane.b32.xlu0 %v232, 64
    %v2763 = vpop.permute.xlu0 %2762
    %2764 = vrot.lane.b32.xlu0 %v294, 64
    %v2765 = vpop.permute.xlu0 %2764
    %2766 = vrot.lane.b32.xlu0 %v297, 64
    %v2767 = vpop.permute.xlu0 %2766
    %v2768 = vsel %vm370, %v2761, 0
    %v2770 = vsel %vm370, %v2763, 0
    %v2772 = vsel %vm370, %v2765, 0
    %v2774 = vsel %vm370, %v2767, 0
    %2776 = vmatpush.xpose.msra.mxu0 0.0
    %2777 = vmatpush.xpose.msra.mxu0 0.0
    %2778 = vmatpush.xpose.msra.mxu0 0.0
    %2779 = vmatpush.xpose.msra.mxu0 0.0
    %2780 = vmatpush.xpose.msra.mxu0 0.0
    %2781 = vmatpush.xpose.msra.mxu0 0.0
    %2782 = vmatpush.xpose.msra.mxu0 0.0
    %2783 = vmatpush.xpose.msra.mxu0 0.0
    %2784 = vmatpush.xpose.msra.mxu0 0.0
    %2785 = vmatpush.xpose.msra.mxu0 0.0
    %2786 = vmatpush.xpose.msra.mxu0 0.0
    %2787 = vmatpush.xpose.msra.mxu0 0.0
    %2788 = vmatpush.xpose.msra.mxu0 0.0
    %2789 = vmatpush.xpose.msra.mxu0 0.0
    %2790 = vmatpush.xpose.msra.mxu0 %v2774
    %2791 = vmatpush.xpose.msra.mxu0 %v2772
    %2792 = vmatmul.f32.gmra.mxu0 %v2768
    %v2793 = vpop.f32.mrf.mxu0
    %v2794 = vadd.f32 0.0, %v2793
    %2795 = vmatmul.f32.gmra.mxu0 %v2770
    %v2796 = vpop.f32.mrf.mxu0
    %v2797 = vadd.f32 0.0, %v2796
    %2798 = vdwg.mxu0
    %2799 = vrot.lane.b32.xlu0 %v235, 64
    %v2800 = vpop.permute.xlu0 %2799
    %2801 = vrot.lane.b32.xlu0 %v238, 64
    %v2802 = vpop.permute.xlu0 %2801
    %2803 = vrot.lane.b32.xlu0 %v300, 64
    %v2804 = vpop.permute.xlu0 %2803
    %2805 = vrot.lane.b32.xlu0 %v303, 64
    %v2806 = vpop.permute.xlu0 %2805
    %v2807 = vsel %vm370, %v2800, 0
    %v2809 = vsel %vm370, %v2802, 0
    %v2811 = vsel %vm370, %v2804, 0
    %v2813 = vsel %vm370, %v2806, 0
    %2815 = vmatpush.xpose.msra.mxu0 0.0
    %2816 = vmatpush.xpose.msra.mxu0 0.0
    %2817 = vmatpush.xpose.msra.mxu0 0.0
    %2818 = vmatpush.xpose.msra.mxu0 0.0
    %2819 = vmatpush.xpose.msra.mxu0 0.0
    %2820 = vmatpush.xpose.msra.mxu0 0.0
    %2821 = vmatpush.xpose.msra.mxu0 0.0
    %2822 = vmatpush.xpose.msra.mxu0 0.0
    %2823 = vmatpush.xpose.msra.mxu0 0.0
    %2824 = vmatpush.xpose.msra.mxu0 0.0
    %2825 = vmatpush.xpose.msra.mxu0 0.0
    %2826 = vmatpush.xpose.msra.mxu0 0.0
    %2827 = vmatpush.xpose.msra.mxu0 0.0
    %2828 = vmatpush.xpose.msra.mxu0 0.0
    %2829 = vmatpush.xpose.msra.mxu0 %v2813
    %2830 = vmatpush.xpose.msra.mxu0 %v2811
    %2831 = vmatmul.f32.gmra.mxu0 %v2807
    %v2832 = vpop.f32.mrf.mxu0
    %v2833 = vadd.f32 0.0, %v2832
    %2834 = vmatmul.f32.gmra.mxu0 %v2809
    %v2835 = vpop.f32.mrf.mxu0
    %v2836 = vadd.f32 0.0, %v2835
    %2837 = vdwg.mxu0
    %v2838 = vmul.f32 %v2560, 0.088388346
    %v2839 = vmul.f32 %v2563, 0.088388346
    %v2840 = vmul.f32 %v2599, 0.088388346
    %v2841 = vmul.f32 %v2602, 0.088388346
    %v2842 = vmul.f32 %v2638, 0.088388346
    %v2843 = vmul.f32 %v2641, 0.088388346
    %v2844 = vmul.f32 %v2677, 0.088388346
    %v2845 = vmul.f32 %v2680, 0.088388346
    %v2846 = vmul.f32 %v2716, 0.088388346
    %v2847 = vmul.f32 %v2719, 0.088388346
    %v2848 = vmul.f32 %v2755, 0.088388346
    %v2849 = vmul.f32 %v2758, 0.088388346
    %v2850 = vmul.f32 %v2794, 0.088388346
    %v2851 = vmul.f32 %v2797, 0.088388346
    %v2852 = vmul.f32 %v2833, 0.088388346
    %v2853 = vmul.f32 %v2836, 0.088388346
    %v2854 = vsel %vm667, %v2838, -inf
    %2855 = vmax.xlane.f32.xlu0 %v2854
    %v2856 = vpop.xlane.xlu0 %2855
    %v2857 = vsel %vm667, %v2839, -inf
    %2858 = vmax.xlane.f32.xlu0 %v2857
    %v2859 = vpop.xlane.xlu0 %2858
    %v2860 = vsel %vm667, %v2840, -inf
    %2861 = vmax.xlane.f32.xlu0 %v2860
    %v2862 = vpop.xlane.xlu0 %2861
    %v2863 = vsel %vm667, %v2841, -inf
    %2864 = vmax.xlane.f32.xlu0 %v2863
    %v2865 = vpop.xlane.xlu0 %2864
    %v2866 = vsel %vm667, %v2842, -inf
    %2867 = vmax.xlane.f32.xlu0 %v2866
    %v2868 = vpop.xlane.xlu0 %2867
    %v2869 = vsel %vm667, %v2843, -inf
    %2870 = vmax.xlane.f32.xlu0 %v2869
    %v2871 = vpop.xlane.xlu0 %2870
    %v2872 = vsel %vm667, %v2844, -inf
    %2873 = vmax.xlane.f32.xlu0 %v2872
    %v2874 = vpop.xlane.xlu0 %2873
    %v2875 = vsel %vm667, %v2845, -inf
    %2876 = vmax.xlane.f32.xlu0 %v2875
    %v2877 = vpop.xlane.xlu0 %2876
    %v2878 = vsel %vm667, %v2846, -inf
    %2879 = vmax.xlane.f32.xlu0 %v2878
    %v2880 = vpop.xlane.xlu0 %2879
    %v2881 = vsel %vm667, %v2847, -inf
    %2882 = vmax.xlane.f32.xlu0 %v2881
    %v2883 = vpop.xlane.xlu0 %2882
    %v2884 = vsel %vm667, %v2848, -inf
    %2885 = vmax.xlane.f32.xlu0 %v2884
    %v2886 = vpop.xlane.xlu0 %2885
    %v2887 = vsel %vm667, %v2849, -inf
    %2888 = vmax.xlane.f32.xlu0 %v2887
    %v2889 = vpop.xlane.xlu0 %2888
    %v2890 = vsel %vm667, %v2850, -inf
    %2891 = vmax.xlane.f32.xlu0 %v2890
    %v2892 = vpop.xlane.xlu0 %2891
    %v2893 = vsel %vm667, %v2851, -inf
    %2894 = vmax.xlane.f32.xlu0 %v2893
    %v2895 = vpop.xlane.xlu0 %2894
    %v2896 = vsel %vm667, %v2852, -inf
    %2897 = vmax.xlane.f32.xlu0 %v2896
    %v2898 = vpop.xlane.xlu0 %2897
    %v2899 = vsel %vm667, %v2853, -inf
    %2900 = vmax.xlane.f32.xlu0 %v2899
    %v2901 = vpop.xlane.xlu0 %2900
    %v2902 = vsub.f32 %v2838, %v2856
    %v2903 = vsub.f32 %v2839, %v2859
    %v2904 = vsub.f32 %v2840, %v2862
    %v2905 = vsub.f32 %v2841, %v2865
    %v2906 = vsub.f32 %v2842, %v2868
    %v2907 = vsub.f32 %v2843, %v2871
    %v2908 = vsub.f32 %v2844, %v2874
    %v2909 = vsub.f32 %v2845, %v2877
    %v2910 = vsub.f32 %v2846, %v2880
    %v2911 = vsub.f32 %v2847, %v2883
    %v2912 = vsub.f32 %v2848, %v2886
    %v2913 = vsub.f32 %v2849, %v2889
    %v2914 = vsub.f32 %v2850, %v2892
    %v2915 = vsub.f32 %v2851, %v2895
    %v2916 = vsub.f32 %v2852, %v2898
    %v2917 = vsub.f32 %v2853, %v2901
    %v2918 = vmul.f32 %v2902, 1.442695
    %v2919 = vpow.pop %v2918
    %v2920 = vmul.f32 %v2903, 1.442695
    %v2921 = vpow.pop %v2920
    %v2922 = vmul.f32 %v2904, 1.442695
    %v2923 = vpow.pop %v2922
    %v2924 = vmul.f32 %v2905, 1.442695
    %v2925 = vpow.pop %v2924
    %v2926 = vmul.f32 %v2906, 1.442695
    %v2927 = vpow.pop %v2926
    %v2928 = vmul.f32 %v2907, 1.442695
    %v2929 = vpow.pop %v2928
    %v2930 = vmul.f32 %v2908, 1.442695
    %v2931 = vpow.pop %v2930
    %v2932 = vmul.f32 %v2909, 1.442695
    %v2933 = vpow.pop %v2932
    %v2934 = vmul.f32 %v2910, 1.442695
    %v2935 = vpow.pop %v2934
    %v2936 = vmul.f32 %v2911, 1.442695
    %v2937 = vpow.pop %v2936
    %v2938 = vmul.f32 %v2912, 1.442695
    %v2939 = vpow.pop %v2938
    %v2940 = vmul.f32 %v2913, 1.442695
    %v2941 = vpow.pop %v2940
    %v2942 = vmul.f32 %v2914, 1.442695
    %v2943 = vpow.pop %v2942
    %v2944 = vmul.f32 %v2915, 1.442695
    %v2945 = vpow.pop %v2944
    %v2946 = vmul.f32 %v2916, 1.442695
    %v2947 = vpow.pop %v2946
    %v2948 = vmul.f32 %v2917, 1.442695
    %v2949 = vpow.pop %v2948
    %v2950 = vsel %vm667, %v2919, 0.0
    %2951 = vadd.xlane.f32.xlu0 %v2950
    %v2952 = vpop.xlane.xlu0 %2951
    %v2953 = vsel %vm667, %v2921, 0.0
    %2954 = vadd.xlane.f32.xlu0 %v2953
    %v2955 = vpop.xlane.xlu0 %2954
    %v2956 = vsel %vm667, %v2923, 0.0
    %2957 = vadd.xlane.f32.xlu0 %v2956
    %v2958 = vpop.xlane.xlu0 %2957
    %v2959 = vsel %vm667, %v2925, 0.0
    %2960 = vadd.xlane.f32.xlu0 %v2959
    %v2961 = vpop.xlane.xlu0 %2960
    %v2962 = vsel %vm667, %v2927, 0.0
    %2963 = vadd.xlane.f32.xlu0 %v2962
    %v2964 = vpop.xlane.xlu0 %2963
    %v2965 = vsel %vm667, %v2929, 0.0
    %2966 = vadd.xlane.f32.xlu0 %v2965
    %v2967 = vpop.xlane.xlu0 %2966
    %v2968 = vsel %vm667, %v2931, 0.0
    %2969 = vadd.xlane.f32.xlu0 %v2968
    %v2970 = vpop.xlane.xlu0 %2969
    %v2971 = vsel %vm667, %v2933, 0.0
    %2972 = vadd.xlane.f32.xlu0 %v2971
    %v2973 = vpop.xlane.xlu0 %2972
    %v2974 = vsel %vm667, %v2935, 0.0
    %2975 = vadd.xlane.f32.xlu0 %v2974
    %v2976 = vpop.xlane.xlu0 %2975
    %v2977 = vsel %vm667, %v2937, 0.0
    %2978 = vadd.xlane.f32.xlu0 %v2977
    %v2979 = vpop.xlane.xlu0 %2978
    %v2980 = vsel %vm667, %v2939, 0.0
    %2981 = vadd.xlane.f32.xlu0 %v2980
    %v2982 = vpop.xlane.xlu0 %2981
    %v2983 = vsel %vm667, %v2941, 0.0
    %2984 = vadd.xlane.f32.xlu0 %v2983
    %v2985 = vpop.xlane.xlu0 %2984
    %v2986 = vsel %vm667, %v2943, 0.0
    %2987 = vadd.xlane.f32.xlu0 %v2986
    %v2988 = vpop.xlane.xlu0 %2987
    %v2989 = vsel %vm667, %v2945, 0.0
    %2990 = vadd.xlane.f32.xlu0 %v2989
    %v2991 = vpop.xlane.xlu0 %2990
    %v2992 = vsel %vm667, %v2947, 0.0
    %2993 = vadd.xlane.f32.xlu0 %v2992
    %v2994 = vpop.xlane.xlu0 %2993
    %v2995 = vsel %vm667, %v2949, 0.0
    %2996 = vadd.xlane.f32.xlu0 %v2995
    %v2997 = vpop.xlane.xlu0 %2996
    %2998 = vrot.lane.b32.xlu0 %v323, 64
    %v2999 = vpop.permute.xlu0 %2998
    %3000 = vrot.lane.b32.xlu0 %v326, 64
    %v3001 = vpop.permute.xlu0 %3000
    %v3005 = vsel %vm667, %v2919, 0
    %v3008 = vsel %vm667, %v2921, 0
    %3010 = vmatpush.msra.mxu0 0.0
    %3011 = vmatpush.msra.mxu0 0.0
    %3012 = vmatpush.msra.mxu0 0.0
    %3013 = vmatpush.msra.mxu0 0.0
    %3014 = vmatpush.msra.mxu0 0.0
    %3015 = vmatpush.msra.mxu0 0.0
    %3016 = vmatpush.msra.mxu0 0.0
    %3017 = vmatpush.msra.mxu0 0.0
    %3018 = vmatpush.msra.mxu0 0.0
    %3019 = vmatpush.msra.mxu0 0.0
    %3020 = vmatpush.msra.mxu0 0.0
    %3021 = vmatpush.msra.mxu0 0.0
    %3022 = vmatpush.msra.mxu0 0.0
    %3023 = vmatpush.msra.mxu0 0.0
    %3024 = vmatpush.msra.mxu0 %v3001
    %3025 = vmatpush.msra.mxu0 %v2999
    %3026 = vmatmul.f32.gmra.mxu0 %v3005
    %v3027 = vpop.f32.mrf.mxu0
    %v3028 = vadd.f32 0.0, %v3027
    %3029 = vmatmul.f32.gmra.mxu0 %v3008
    %v3030 = vpop.f32.mrf.mxu0
    %v3031 = vadd.f32 0.0, %v3030
    %3032 = vdwg.mxu0
    %3033 = vrot.lane.b32.xlu0 %v329, 64
    %v3034 = vpop.permute.xlu0 %3033
    %3035 = vrot.lane.b32.xlu0 %v332, 64
    %v3036 = vpop.permute.xlu0 %3035
    %v3040 = vsel %vm667, %v2923, 0
    %v3043 = vsel %vm667, %v2925, 0
    %3045 = vmatpush.msra.mxu0 0.0
    %3046 = vmatpush.msra.mxu0 0.0
    %3047 = vmatpush.msra.mxu0 0.0
    %3048 = vmatpush.msra.mxu0 0.0
    %3049 = vmatpush.msra.mxu0 0.0
    %3050 = vmatpush.msra.mxu0 0.0
    %3051 = vmatpush.msra.mxu0 0.0
    %3052 = vmatpush.msra.mxu0 0.0
    %3053 = vmatpush.msra.mxu0 0.0
    %3054 = vmatpush.msra.mxu0 0.0
    %3055 = vmatpush.msra.mxu0 0.0
    %3056 = vmatpush.msra.mxu0 0.0
    %3057 = vmatpush.msra.mxu0 0.0
    %3058 = vmatpush.msra.mxu0 0.0
    %3059 = vmatpush.msra.mxu0 %v3036
    %3060 = vmatpush.msra.mxu0 %v3034
    %3061 = vmatmul.f32.gmra.mxu0 %v3040
    %v3062 = vpop.f32.mrf.mxu0
    %v3063 = vadd.f32 0.0, %v3062
    %3064 = vmatmul.f32.gmra.mxu0 %v3043
    %v3065 = vpop.f32.mrf.mxu0
    %v3066 = vadd.f32 0.0, %v3065
    %3067 = vdwg.mxu0
    %3068 = vrot.lane.b32.xlu0 %v335, 64
    %v3069 = vpop.permute.xlu0 %3068
    %3070 = vrot.lane.b32.xlu0 %v338, 64
    %v3071 = vpop.permute.xlu0 %3070
    %v3075 = vsel %vm667, %v2927, 0
    %v3078 = vsel %vm667, %v2929, 0
    %3080 = vmatpush.msra.mxu0 0.0
    %3081 = vmatpush.msra.mxu0 0.0
    %3082 = vmatpush.msra.mxu0 0.0
    %3083 = vmatpush.msra.mxu0 0.0
    %3084 = vmatpush.msra.mxu0 0.0
    %3085 = vmatpush.msra.mxu0 0.0
    %3086 = vmatpush.msra.mxu0 0.0
    %3087 = vmatpush.msra.mxu0 0.0
    %3088 = vmatpush.msra.mxu0 0.0
    %3089 = vmatpush.msra.mxu0 0.0
    %3090 = vmatpush.msra.mxu0 0.0
    %3091 = vmatpush.msra.mxu0 0.0
    %3092 = vmatpush.msra.mxu0 0.0
    %3093 = vmatpush.msra.mxu0 0.0
    %3094 = vmatpush.msra.mxu0 %v3071
    %3095 = vmatpush.msra.mxu0 %v3069
    %3096 = vmatmul.f32.gmra.mxu0 %v3075
    %v3097 = vpop.f32.mrf.mxu0
    %v3098 = vadd.f32 0.0, %v3097
    %3099 = vmatmul.f32.gmra.mxu0 %v3078
    %v3100 = vpop.f32.mrf.mxu0
    %v3101 = vadd.f32 0.0, %v3100
    %3102 = vdwg.mxu0
    %3103 = vrot.lane.b32.xlu0 %v341, 64
    %v3104 = vpop.permute.xlu0 %3103
    %3105 = vrot.lane.b32.xlu0 %v344, 64
    %v3106 = vpop.permute.xlu0 %3105
    %v3110 = vsel %vm667, %v2931, 0
    %v3113 = vsel %vm667, %v2933, 0
    %3115 = vmatpush.msra.mxu0 0.0
    %3116 = vmatpush.msra.mxu0 0.0
    %3117 = vmatpush.msra.mxu0 0.0
    %3118 = vmatpush.msra.mxu0 0.0
    %3119 = vmatpush.msra.mxu0 0.0
    %3120 = vmatpush.msra.mxu0 0.0
    %3121 = vmatpush.msra.mxu0 0.0
    %3122 = vmatpush.msra.mxu0 0.0
    %3123 = vmatpush.msra.mxu0 0.0
    %3124 = vmatpush.msra.mxu0 0.0
    %3125 = vmatpush.msra.mxu0 0.0
    %3126 = vmatpush.msra.mxu0 0.0
    %3127 = vmatpush.msra.mxu0 0.0
    %3128 = vmatpush.msra.mxu0 0.0
    %3129 = vmatpush.msra.mxu0 %v3106
    %3130 = vmatpush.msra.mxu0 %v3104
    %3131 = vmatmul.f32.gmra.mxu0 %v3110
    %v3132 = vpop.f32.mrf.mxu0
    %v3133 = vadd.f32 0.0, %v3132
    %3134 = vmatmul.f32.gmra.mxu0 %v3113
    %v3135 = vpop.f32.mrf.mxu0
    %v3136 = vadd.f32 0.0, %v3135
    %3137 = vdwg.mxu0
    %3138 = vrot.lane.b32.xlu0 %v347, 64
    %v3139 = vpop.permute.xlu0 %3138
    %3140 = vrot.lane.b32.xlu0 %v350, 64
    %v3141 = vpop.permute.xlu0 %3140
    %v3145 = vsel %vm667, %v2935, 0
    %v3148 = vsel %vm667, %v2937, 0
    %3150 = vmatpush.msra.mxu0 0.0
    %3151 = vmatpush.msra.mxu0 0.0
    %3152 = vmatpush.msra.mxu0 0.0
    %3153 = vmatpush.msra.mxu0 0.0
    %3154 = vmatpush.msra.mxu0 0.0
    %3155 = vmatpush.msra.mxu0 0.0
    %3156 = vmatpush.msra.mxu0 0.0
    %3157 = vmatpush.msra.mxu0 0.0
    %3158 = vmatpush.msra.mxu0 0.0
    %3159 = vmatpush.msra.mxu0 0.0
    %3160 = vmatpush.msra.mxu0 0.0
    %3161 = vmatpush.msra.mxu0 0.0
    %3162 = vmatpush.msra.mxu0 0.0
    %3163 = vmatpush.msra.mxu0 0.0
    %3164 = vmatpush.msra.mxu0 %v3141
    %3165 = vmatpush.msra.mxu0 %v3139
    %3166 = vmatmul.f32.gmra.mxu0 %v3145
    %v3167 = vpop.f32.mrf.mxu0
    %v3168 = vadd.f32 0.0, %v3167
    %3169 = vmatmul.f32.gmra.mxu0 %v3148
    %v3170 = vpop.f32.mrf.mxu0
    %v3171 = vadd.f32 0.0, %v3170
    %3172 = vdwg.mxu0
    %3173 = vrot.lane.b32.xlu0 %v353, 64
    %v3174 = vpop.permute.xlu0 %3173
    %3175 = vrot.lane.b32.xlu0 %v356, 64
    %v3176 = vpop.permute.xlu0 %3175
    %v3180 = vsel %vm667, %v2939, 0
    %v3183 = vsel %vm667, %v2941, 0
    %3185 = vmatpush.msra.mxu0 0.0
    %3186 = vmatpush.msra.mxu0 0.0
    %3187 = vmatpush.msra.mxu0 0.0
    %3188 = vmatpush.msra.mxu0 0.0
    %3189 = vmatpush.msra.mxu0 0.0
    %3190 = vmatpush.msra.mxu0 0.0
    %3191 = vmatpush.msra.mxu0 0.0
    %3192 = vmatpush.msra.mxu0 0.0
    %3193 = vmatpush.msra.mxu0 0.0
    %3194 = vmatpush.msra.mxu0 0.0
    %3195 = vmatpush.msra.mxu0 0.0
    %3196 = vmatpush.msra.mxu0 0.0
    %3197 = vmatpush.msra.mxu0 0.0
    %3198 = vmatpush.msra.mxu0 0.0
    %3199 = vmatpush.msra.mxu0 %v3176
    %3200 = vmatpush.msra.mxu0 %v3174
    %3201 = vmatmul.f32.gmra.mxu0 %v3180
    %v3202 = vpop.f32.mrf.mxu0
    %v3203 = vadd.f32 0.0, %v3202
    %3204 = vmatmul.f32.gmra.mxu0 %v3183
    %v3205 = vpop.f32.mrf.mxu0
    %v3206 = vadd.f32 0.0, %v3205
    %3207 = vdwg.mxu0
    %3208 = vrot.lane.b32.xlu0 %v359, 64
    %v3209 = vpop.permute.xlu0 %3208
    %3210 = vrot.lane.b32.xlu0 %v362, 64
    %v3211 = vpop.permute.xlu0 %3210
    %v3215 = vsel %vm667, %v2943, 0
    %v3218 = vsel %vm667, %v2945, 0
    %3220 = vmatpush.msra.mxu0 0.0
    %3221 = vmatpush.msra.mxu0 0.0
    %3222 = vmatpush.msra.mxu0 0.0
    %3223 = vmatpush.msra.mxu0 0.0
    %3224 = vmatpush.msra.mxu0 0.0
    %3225 = vmatpush.msra.mxu0 0.0
    %3226 = vmatpush.msra.mxu0 0.0
    %3227 = vmatpush.msra.mxu0 0.0
    %3228 = vmatpush.msra.mxu0 0.0
    %3229 = vmatpush.msra.mxu0 0.0
    %3230 = vmatpush.msra.mxu0 0.0
    %3231 = vmatpush.msra.mxu0 0.0
    %3232 = vmatpush.msra.mxu0 0.0
    %3233 = vmatpush.msra.mxu0 0.0
    %3234 = vmatpush.msra.mxu0 %v3211
    %3235 = vmatpush.msra.mxu0 %v3209
    %3236 = vmatmul.f32.gmra.mxu0 %v3215
    %v3237 = vpop.f32.mrf.mxu0
    %v3238 = vadd.f32 0.0, %v3237
    %3239 = vmatmul.f32.gmra.mxu0 %v3218
    %v3240 = vpop.f32.mrf.mxu0
    %v3241 = vadd.f32 0.0, %v3240
    %3242 = vdwg.mxu0
    %3243 = vrot.lane.b32.xlu0 %v365, 64
    %v3244 = vpop.permute.xlu0 %3243
    %3245 = vrot.lane.b32.xlu0 %v368, 64
    %v3246 = vpop.permute.xlu0 %3245
    %v3250 = vsel %vm667, %v2947, 0
    %v3253 = vsel %vm667, %v2949, 0
    %3255 = vmatpush.msra.mxu0 0.0
    %3256 = vmatpush.msra.mxu0 0.0
    %3257 = vmatpush.msra.mxu0 0.0
    %3258 = vmatpush.msra.mxu0 0.0
    %3259 = vmatpush.msra.mxu0 0.0
    %3260 = vmatpush.msra.mxu0 0.0
    %3261 = vmatpush.msra.mxu0 0.0
    %3262 = vmatpush.msra.mxu0 0.0
    %3263 = vmatpush.msra.mxu0 0.0
    %3264 = vmatpush.msra.mxu0 0.0
    %3265 = vmatpush.msra.mxu0 0.0
    %3266 = vmatpush.msra.mxu0 0.0
    %3267 = vmatpush.msra.mxu0 0.0
    %3268 = vmatpush.msra.mxu0 0.0
    %3269 = vmatpush.msra.mxu0 %v3246
    %3270 = vmatpush.msra.mxu0 %v3244
    %3271 = vmatmul.f32.gmra.mxu0 %v3250
    %v3272 = vpop.f32.mrf.mxu0
    %v3273 = vadd.f32 0.0, %v3272
    %3274 = vmatmul.f32.gmra.mxu0 %v3253
    %v3275 = vpop.f32.mrf.mxu0
    %v3276 = vadd.f32 0.0, %v3275
    %3277 = vdwg.mxu0
    %v3278 = vrcp.pop %v2952
    %v3279 = vmul.f32 %v2952, %v3278
    %v3280 = vsub.f32 1.0, %v3279
    %v3281 = vmul.f32 %v3278, %v3280
    %v3282 = vadd.f32 %v3278, %v3281
    %vm3283 = vweird.f32 %v2952
    %vm3284 = vweird.f32 %v3278
    %vm3285 = vmor %vm3283, %vm3284
    %v3286 = vsel %vm3285, %v3278, %v3282
    %v3287 = vand.u32 2147483647, %v2952
    %vm3288 = vcmp.eq.f32.partialorder %v3287, 8.507059e+37
    %v3289 = vand.u32 %v2952, 2147483648
    %v3290 = vor.u32 1.1754944e-38, %v3289
    %v3291 = vsel %vm3288, %v3290, %v3286
    %v3292 = vrcp.pop %v2955
    %v3293 = vmul.f32 %v2955, %v3292
    %v3294 = vsub.f32 1.0, %v3293
    %v3295 = vmul.f32 %v3292, %v3294
    %v3296 = vadd.f32 %v3292, %v3295
    %vm3297 = vweird.f32 %v2955
    %vm3298 = vweird.f32 %v3292
    %vm3299 = vmor %vm3297, %vm3298
    %v3300 = vsel %vm3299, %v3292, %v3296
    %v3301 = vand.u32 2147483647, %v2955
    %vm3302 = vcmp.eq.f32.partialorder %v3301, 8.507059e+37
    %v3303 = vand.u32 %v2955, 2147483648
    %v3304 = vor.u32 1.1754944e-38, %v3303
    %v3305 = vsel %vm3302, %v3304, %v3300
    %v3306 = vrcp.pop %v2958
    %v3307 = vmul.f32 %v2958, %v3306
    %v3308 = vsub.f32 1.0, %v3307
    %v3309 = vmul.f32 %v3306, %v3308
    %v3310 = vadd.f32 %v3306, %v3309
    %vm3311 = vweird.f32 %v2958
    %vm3312 = vweird.f32 %v3306
    %vm3313 = vmor %vm3311, %vm3312
    %v3314 = vsel %vm3313, %v3306, %v3310
    %v3315 = vand.u32 2147483647, %v2958
    %vm3316 = vcmp.eq.f32.partialorder %v3315, 8.507059e+37
    %v3317 = vand.u32 %v2958, 2147483648
    %v3318 = vor.u32 1.1754944e-38, %v3317
    %v3319 = vsel %vm3316, %v3318, %v3314
    %v3320 = vrcp.pop %v2961
    %v3321 = vmul.f32 %v2961, %v3320
    %v3322 = vsub.f32 1.0, %v3321
    %v3323 = vmul.f32 %v3320, %v3322
    %v3324 = vadd.f32 %v3320, %v3323
    %vm3325 = vweird.f32 %v2961
    %vm3326 = vweird.f32 %v3320
    %vm3327 = vmor %vm3325, %vm3326
    %v3328 = vsel %vm3327, %v3320, %v3324
    %v3329 = vand.u32 2147483647, %v2961
    %vm3330 = vcmp.eq.f32.partialorder %v3329, 8.507059e+37
    %v3331 = vand.u32 %v2961, 2147483648
    %v3332 = vor.u32 1.1754944e-38, %v3331
    %v3333 = vsel %vm3330, %v3332, %v3328
    %v3334 = vrcp.pop %v2964
    %v3335 = vmul.f32 %v2964, %v3334
    %v3336 = vsub.f32 1.0, %v3335
    %v3337 = vmul.f32 %v3334, %v3336
    %v3338 = vadd.f32 %v3334, %v3337
    %vm3339 = vweird.f32 %v2964
    %vm3340 = vweird.f32 %v3334
    %vm3341 = vmor %vm3339, %vm3340
    %v3342 = vsel %vm3341, %v3334, %v3338
    %v3343 = vand.u32 2147483647, %v2964
    %vm3344 = vcmp.eq.f32.partialorder %v3343, 8.507059e+37
    %v3345 = vand.u32 %v2964, 2147483648
    %v3346 = vor.u32 1.1754944e-38, %v3345
    %v3347 = vsel %vm3344, %v3346, %v3342
    %v3348 = vrcp.pop %v2967
    %v3349 = vmul.f32 %v2967, %v3348
    %v3350 = vsub.f32 1.0, %v3349
    %v3351 = vmul.f32 %v3348, %v3350
    %v3352 = vadd.f32 %v3348, %v3351
    %vm3353 = vweird.f32 %v2967
    %vm3354 = vweird.f32 %v3348
    %vm3355 = vmor %vm3353, %vm3354
    %v3356 = vsel %vm3355, %v3348, %v3352
    %v3357 = vand.u32 2147483647, %v2967
    %vm3358 = vcmp.eq.f32.partialorder %v3357, 8.507059e+37
    %v3359 = vand.u32 %v2967, 2147483648
    %v3360 = vor.u32 1.1754944e-38, %v3359
    %v3361 = vsel %vm3358, %v3360, %v3356
    %v3362 = vrcp.pop %v2970
    %v3363 = vmul.f32 %v2970, %v3362
    %v3364 = vsub.f32 1.0, %v3363
    %v3365 = vmul.f32 %v3362, %v3364
    %v3366 = vadd.f32 %v3362, %v3365
    %vm3367 = vweird.f32 %v2970
    %vm3368 = vweird.f32 %v3362
    %vm3369 = vmor %vm3367, %vm3368
    %v3370 = vsel %vm3369, %v3362, %v3366
    %v3371 = vand.u32 2147483647, %v2970
    %vm3372 = vcmp.eq.f32.partialorder %v3371, 8.507059e+37
    %v3373 = vand.u32 %v2970, 2147483648
    %v3374 = vor.u32 1.1754944e-38, %v3373
    %v3375 = vsel %vm3372, %v3374, %v3370
    %v3376 = vrcp.pop %v2973
    %v3377 = vmul.f32 %v2973, %v3376
    %v3378 = vsub.f32 1.0, %v3377
    %v3379 = vmul.f32 %v3376, %v3378
    %v3380 = vadd.f32 %v3376, %v3379
    %vm3381 = vweird.f32 %v2973
    %vm3382 = vweird.f32 %v3376
    %vm3383 = vmor %vm3381, %vm3382
    %v3384 = vsel %vm3383, %v3376, %v3380
    %v3385 = vand.u32 2147483647, %v2973
    %vm3386 = vcmp.eq.f32.partialorder %v3385, 8.507059e+37
    %v3387 = vand.u32 %v2973, 2147483648
    %v3388 = vor.u32 1.1754944e-38, %v3387
    %v3389 = vsel %vm3386, %v3388, %v3384
    %v3390 = vrcp.pop %v2976
    %v3391 = vmul.f32 %v2976, %v3390
    %v3392 = vsub.f32 1.0, %v3391
    %v3393 = vmul.f32 %v3390, %v3392
    %v3394 = vadd.f32 %v3390, %v3393
    %vm3395 = vweird.f32 %v2976
    %vm3396 = vweird.f32 %v3390
    %vm3397 = vmor %vm3395, %vm3396
    %v3398 = vsel %vm3397, %v3390, %v3394
    %v3399 = vand.u32 2147483647, %v2976
    %vm3400 = vcmp.eq.f32.partialorder %v3399, 8.507059e+37
    %v3401 = vand.u32 %v2976, 2147483648
    %v3402 = vor.u32 1.1754944e-38, %v3401
    %v3403 = vsel %vm3400, %v3402, %v3398
    %v3404 = vrcp.pop %v2979
    %v3405 = vmul.f32 %v2979, %v3404
    %v3406 = vsub.f32 1.0, %v3405
    %v3407 = vmul.f32 %v3404, %v3406
    %v3408 = vadd.f32 %v3404, %v3407
    %vm3409 = vweird.f32 %v2979
    %vm3410 = vweird.f32 %v3404
    %vm3411 = vmor %vm3409, %vm3410
    %v3412 = vsel %vm3411, %v3404, %v3408
    %v3413 = vand.u32 2147483647, %v2979
    %vm3414 = vcmp.eq.f32.partialorder %v3413, 8.507059e+37
    %v3415 = vand.u32 %v2979, 2147483648
    %v3416 = vor.u32 1.1754944e-38, %v3415
    %v3417 = vsel %vm3414, %v3416, %v3412
    %v3418 = vrcp.pop %v2982
    %v3419 = vmul.f32 %v2982, %v3418
    %v3420 = vsub.f32 1.0, %v3419
    %v3421 = vmul.f32 %v3418, %v3420
    %v3422 = vadd.f32 %v3418, %v3421
    %vm3423 = vweird.f32 %v2982
    %vm3424 = vweird.f32 %v3418
    %vm3425 = vmor %vm3423, %vm3424
    %v3426 = vsel %vm3425, %v3418, %v3422
    %v3427 = vand.u32 2147483647, %v2982
    %vm3428 = vcmp.eq.f32.partialorder %v3427, 8.507059e+37
    %v3429 = vand.u32 %v2982, 2147483648
    %v3430 = vor.u32 1.1754944e-38, %v3429
    %v3431 = vsel %vm3428, %v3430, %v3426
    %v3432 = vrcp.pop %v2985
    %v3433 = vmul.f32 %v2985, %v3432
    %v3434 = vsub.f32 1.0, %v3433
    %v3435 = vmul.f32 %v3432, %v3434
    %v3436 = vadd.f32 %v3432, %v3435
    %vm3437 = vweird.f32 %v2985
    %vm3438 = vweird.f32 %v3432
    %vm3439 = vmor %vm3437, %vm3438
    %v3440 = vsel %vm3439, %v3432, %v3436
    %v3441 = vand.u32 2147483647, %v2985
    %vm3442 = vcmp.eq.f32.partialorder %v3441, 8.507059e+37
    %v3443 = vand.u32 %v2985, 2147483648
    %v3444 = vor.u32 1.1754944e-38, %v3443
    %v3445 = vsel %vm3442, %v3444, %v3440
    %v3446 = vrcp.pop %v2988
    %v3447 = vmul.f32 %v2988, %v3446
    %v3448 = vsub.f32 1.0, %v3447
    %v3449 = vmul.f32 %v3446, %v3448
    %v3450 = vadd.f32 %v3446, %v3449
    %vm3451 = vweird.f32 %v2988
    %vm3452 = vweird.f32 %v3446
    %vm3453 = vmor %vm3451, %vm3452
    %v3454 = vsel %vm3453, %v3446, %v3450
    %v3455 = vand.u32 2147483647, %v2988
    %vm3456 = vcmp.eq.f32.partialorder %v3455, 8.507059e+37
    %v3457 = vand.u32 %v2988, 2147483648
    %v3458 = vor.u32 1.1754944e-38, %v3457
    %v3459 = vsel %vm3456, %v3458, %v3454
    %v3460 = vrcp.pop %v2991
    %v3461 = vmul.f32 %v2991, %v3460
    %v3462 = vsub.f32 1.0, %v3461
    %v3463 = vmul.f32 %v3460, %v3462
    %v3464 = vadd.f32 %v3460, %v3463
    %vm3465 = vweird.f32 %v2991
    %vm3466 = vweird.f32 %v3460
    %vm3467 = vmor %vm3465, %vm3466
    %v3468 = vsel %vm3467, %v3460, %v3464
    %v3469 = vand.u32 2147483647, %v2991
    %vm3470 = vcmp.eq.f32.partialorder %v3469, 8.507059e+37
    %v3471 = vand.u32 %v2991, 2147483648
    %v3472 = vor.u32 1.1754944e-38, %v3471
    %v3473 = vsel %vm3470, %v3472, %v3468
    %v3474 = vrcp.pop %v2994
    %v3475 = vmul.f32 %v2994, %v3474
    %v3476 = vsub.f32 1.0, %v3475
    %v3477 = vmul.f32 %v3474, %v3476
    %v3478 = vadd.f32 %v3474, %v3477
    %vm3479 = vweird.f32 %v2994
    %vm3480 = vweird.f32 %v3474
    %vm3481 = vmor %vm3479, %vm3480
    %v3482 = vsel %vm3481, %v3474, %v3478
    %v3483 = vand.u32 2147483647, %v2994
    %vm3484 = vcmp.eq.f32.partialorder %v3483, 8.507059e+37
    %v3485 = vand.u32 %v2994, 2147483648
    %v3486 = vor.u32 1.1754944e-38, %v3485
    %v3487 = vsel %vm3484, %v3486, %v3482
    %v3488 = vrcp.pop %v2997
    %v3489 = vmul.f32 %v2997, %v3488
    %v3490 = vsub.f32 1.0, %v3489
    %v3491 = vmul.f32 %v3488, %v3490
    %v3492 = vadd.f32 %v3488, %v3491
    %vm3493 = vweird.f32 %v2997
    %vm3494 = vweird.f32 %v3488
    %vm3495 = vmor %vm3493, %vm3494
    %v3496 = vsel %vm3495, %v3488, %v3492
    %v3497 = vand.u32 2147483647, %v2997
    %vm3498 = vcmp.eq.f32.partialorder %v3497, 8.507059e+37
    %v3499 = vand.u32 %v2997, 2147483648
    %v3500 = vor.u32 1.1754944e-38, %v3499
    %v3501 = vsel %vm3498, %v3500, %v3496
    %v3502 = vmul.f32 %v3028, %v3291
    %v3503 = vmul.f32 %v3031, %v3305
    %v3504 = vmul.f32 %v3063, %v3319
    %v3505 = vmul.f32 %v3066, %v3333
    %v3506 = vmul.f32 %v3098, %v3347
    %v3507 = vmul.f32 %v3101, %v3361
    %v3508 = vmul.f32 %v3133, %v3375
    %v3509 = vmul.f32 %v3136, %v3389
    %v3510 = vmul.f32 %v3168, %v3403
    %v3511 = vmul.f32 %v3171, %v3417
    %v3512 = vmul.f32 %v3203, %v3431
    %v3513 = vmul.f32 %v3206, %v3445
    %v3514 = vmul.f32 %v3238, %v3459
    %v3515 = vmul.f32 %v3241, %v3473
    %v3516 = vmul.f32 %v3273, %v3487
    %v3517 = vmul.f32 %v3276, %v3501
    %v3518 = vld [vmem:[#allocation8 + $0x40] sm:$0xff]
    %v3519 = vld [vmem:[#allocation8 + $0x48] sm:$0xff]
    %v3520 = vld [vmem:[#allocation8 + $0x50] sm:$0xff]
    %v3521 = vld [vmem:[#allocation8 + $0x58] sm:$0xff]
    %v3523 = vsel %vm370, %v3502, 0
    %v3526 = vsel %vm370, %v3503, 0
    %v3529 = vsel %vm370, %v3504, 0
    %v3532 = vsel %vm370, %v3505, 0
    %v3535 = vsel %vm370, %v3506, 0
    %v3538 = vsel %vm370, %v3507, 0
    %v3541 = vsel %vm370, %v3508, 0
    %v3544 = vsel %vm370, %v3509, 0
    %v3547 = vsel %vm370, %v3510, 0
    %v3550 = vsel %vm370, %v3511, 0
    %v3553 = vsel %vm370, %v3512, 0
    %v3556 = vsel %vm370, %v3513, 0
    %v3559 = vsel %vm370, %v3514, 0
    %v3562 = vsel %vm370, %v3515, 0
    %v3565 = vsel %vm370, %v3516, 0
    %v3568 = vsel %vm370, %v3517, 0
    %3570 = vmatpush.msra.mxu0 0.0
    %3571 = vmatpush.msra.mxu0 0.0
    %3572 = vmatpush.msra.mxu0 0.0
    %3573 = vmatpush.msra.mxu0 0.0
    %3574 = vmatpush.msra.mxu0 0.0
    %3575 = vmatpush.msra.mxu0 0.0
    %3576 = vmatpush.msra.mxu0 0.0
    %3577 = vmatpush.msra.mxu0 0.0
    %3578 = vmatpush.msra.mxu0 0.0
    %3579 = vmatpush.msra.mxu0 0.0
    %3580 = vmatpush.msra.mxu0 0.0
    %3581 = vmatpush.msra.mxu0 0.0
    %3582 = vmatpush.msra.mxu0 %v3521
    %3583 = vmatpush.msra.mxu0 %v3520
    %3584 = vmatpush.msra.mxu0 %v3519
    %3585 = vmatpush.msra.mxu0 %v3518
    %3586 = vmatmul.f32.gmra.mxu0 %v3523
    %v3587 = vpop.f32.mrf.mxu0
    %v3588 = vadd.f32 0.0, %v3587
    %3589 = vmatmul.f32.gmra.mxu0 %v3526
    %v3590 = vpop.f32.mrf.mxu0
    %v3591 = vadd.f32 0.0, %v3590
    %3592 = vmatmul.f32.gmra.mxu0 %v3529
    %v3593 = vpop.f32.mrf.mxu0
    %v3594 = vadd.f32 0.0, %v3593
    %3595 = vmatmul.f32.gmra.mxu0 %v3532
    %v3596 = vpop.f32.mrf.mxu0
    %v3597 = vadd.f32 0.0, %v3596
    %3598 = vmatmul.f32.gmra.mxu0 %v3535
    %v3599 = vpop.f32.mrf.mxu0
    %v3600 = vadd.f32 0.0, %v3599
    %3601 = vmatmul.f32.gmra.mxu0 %v3538
    %v3602 = vpop.f32.mrf.mxu0
    %v3603 = vadd.f32 0.0, %v3602
    %3604 = vmatmul.f32.gmra.mxu0 %v3541
    %v3605 = vpop.f32.mrf.mxu0
    %v3606 = vadd.f32 0.0, %v3605
    %3607 = vmatmul.f32.gmra.mxu0 %v3544
    %v3608 = vpop.f32.mrf.mxu0
    %v3609 = vadd.f32 0.0, %v3608
    %3610 = vmatmul.f32.gmra.mxu0 %v3547
    %v3611 = vpop.f32.mrf.mxu0
    %v3612 = vadd.f32 0.0, %v3611
    %3613 = vmatmul.f32.gmra.mxu0 %v3550
    %v3614 = vpop.f32.mrf.mxu0
    %v3615 = vadd.f32 0.0, %v3614
    %3616 = vmatmul.f32.gmra.mxu0 %v3553
    %v3617 = vpop.f32.mrf.mxu0
    %v3618 = vadd.f32 0.0, %v3617
    %3619 = vmatmul.f32.gmra.mxu0 %v3556
    %v3620 = vpop.f32.mrf.mxu0
    %v3621 = vadd.f32 0.0, %v3620
    %3622 = vmatmul.f32.gmra.mxu0 %v3559
    %v3623 = vpop.f32.mrf.mxu0
    %v3624 = vadd.f32 0.0, %v3623
    %3625 = vmatmul.f32.gmra.mxu0 %v3562
    %v3626 = vpop.f32.mrf.mxu0
    %v3627 = vadd.f32 0.0, %v3626
    %3628 = vmatmul.f32.gmra.mxu0 %v3565
    %v3629 = vpop.f32.mrf.mxu0
    %v3630 = vadd.f32 0.0, %v3629
    %3631 = vmatmul.f32.gmra.mxu0 %v3568
    %v3632 = vpop.f32.mrf.mxu0
    %v3633 = vadd.f32 0.0, %v3632
    %3634 = vdwg.mxu0
    %v3635 = vadd.f32 %v2479, %v3588
    %v3636 = vadd.f32 %v2482, %v3591
    %v3637 = vadd.f32 %v2485, %v3594
    %v3638 = vadd.f32 %v2488, %v3597
    %v3639 = vadd.f32 %v2491, %v3600
    %v3640 = vadd.f32 %v2494, %v3603
    %v3641 = vadd.f32 %v2497, %v3606
    %v3642 = vadd.f32 %v2500, %v3609
    %v3643 = vadd.f32 %v2503, %v3612
    %v3644 = vadd.f32 %v2506, %v3615
    %v3645 = vadd.f32 %v2509, %v3618
    %v3646 = vadd.f32 %v2512, %v3621
    %v3647 = vadd.f32 %v2515, %v3624
    %v3648 = vadd.f32 %v2518, %v3627
    %v3649 = vadd.f32 %v2521, %v3630
    %v3650 = vadd.f32 %v2524, %v3633
    %3651 = vrot.lane.b32.xlu0 %v193, 32
    %v3652 = vpop.permute.xlu0 %3651
    %3653 = vrot.lane.b32.xlu0 %v196, 32
    %v3654 = vpop.permute.xlu0 %3653
    %3655 = vrot.lane.b32.xlu0 %v258, 32
    %v3656 = vpop.permute.xlu0 %3655
    %3657 = vrot.lane.b32.xlu0 %v261, 32
    %v3658 = vpop.permute.xlu0 %3657
    %v3659 = vsel %vm370, %v3652, 0
    %v3661 = vsel %vm370, %v3654, 0
    %v3663 = vsel %vm370, %v3656, 0
    %v3665 = vsel %vm370, %v3658, 0
    %3667 = vmatpush.xpose.msra.mxu0 0.0
    %3668 = vmatpush.xpose.msra.mxu0 0.0
    %3669 = vmatpush.xpose.msra.mxu0 0.0
    %3670 = vmatpush.xpose.msra.mxu0 0.0
    %3671 = vmatpush.xpose.msra.mxu0 0.0
    %3672 = vmatpush.xpose.msra.mxu0 0.0
    %3673 = vmatpush.xpose.msra.mxu0 0.0
    %3674 = vmatpush.xpose.msra.mxu0 0.0
    %3675 = vmatpush.xpose.msra.mxu0 0.0
    %3676 = vmatpush.xpose.msra.mxu0 0.0
    %3677 = vmatpush.xpose.msra.mxu0 0.0
    %3678 = vmatpush.xpose.msra.mxu0 0.0
    %3679 = vmatpush.xpose.msra.mxu0 0.0
    %3680 = vmatpush.xpose.msra.mxu0 0.0
    %3681 = vmatpush.xpose.msra.mxu0 %v3665
    %3682 = vmatpush.xpose.msra.mxu0 %v3663
    %3683 = vmatmul.f32.gmra.mxu0 %v3659
    %v3684 = vpop.f32.mrf.mxu0
    %v3685 = vadd.f32 0.0, %v3684
    %3686 = vmatmul.f32.gmra.mxu0 %v3661
    %v3687 = vpop.f32.mrf.mxu0
    %v3688 = vadd.f32 0.0, %v3687
    %3689 = vdwg.mxu0
    %3690 = vrot.lane.b32.xlu0 %v199, 32
    %v3691 = vpop.permute.xlu0 %3690
    %3692 = vrot.lane.b32.xlu0 %v202, 32
    %v3693 = vpop.permute.xlu0 %3692
    %3694 = vrot.lane.b32.xlu0 %v264, 32
    %v3695 = vpop.permute.xlu0 %3694
    %3696 = vrot.lane.b32.xlu0 %v267, 32
    %v3697 = vpop.permute.xlu0 %3696
    %v3698 = vsel %vm370, %v3691, 0
    %v3700 = vsel %vm370, %v3693, 0
    %v3702 = vsel %vm370, %v3695, 0
    %v3704 = vsel %vm370, %v3697, 0
    %3706 = vmatpush.xpose.msra.mxu0 0.0
    %3707 = vmatpush.xpose.msra.mxu0 0.0
    %3708 = vmatpush.xpose.msra.mxu0 0.0
    %3709 = vmatpush.xpose.msra.mxu0 0.0
    %3710 = vmatpush.xpose.msra.mxu0 0.0
    %3711 = vmatpush.xpose.msra.mxu0 0.0
    %3712 = vmatpush.xpose.msra.mxu0 0.0
    %3713 = vmatpush.xpose.msra.mxu0 0.0
    %3714 = vmatpush.xpose.msra.mxu0 0.0
    %3715 = vmatpush.xpose.msra.mxu0 0.0
    %3716 = vmatpush.xpose.msra.mxu0 0.0
    %3717 = vmatpush.xpose.msra.mxu0 0.0
    %3718 = vmatpush.xpose.msra.mxu0 0.0
    %3719 = vmatpush.xpose.msra.mxu0 0.0
    %3720 = vmatpush.xpose.msra.mxu0 %v3704
    %3721 = vmatpush.xpose.msra.mxu0 %v3702
    %3722 = vmatmul.f32.gmra.mxu0 %v3698
    %v3723 = vpop.f32.mrf.mxu0
    %v3724 = vadd.f32 0.0, %v3723
    %3725 = vmatmul.f32.gmra.mxu0 %v3700
    %v3726 = vpop.f32.mrf.mxu0
    %v3727 = vadd.f32 0.0, %v3726
    %3728 = vdwg.mxu0
    %3729 = vrot.lane.b32.xlu0 %v205, 32
    %v3730 = vpop.permute.xlu0 %3729
    %3731 = vrot.lane.b32.xlu0 %v208, 32
    %v3732 = vpop.permute.xlu0 %3731
    %3733 = vrot.lane.b32.xlu0 %v270, 32
    %v3734 = vpop.permute.xlu0 %3733
    %3735 = vrot.lane.b32.xlu0 %v273, 32
    %v3736 = vpop.permute.xlu0 %3735
    %v3737 = vsel %vm370, %v3730, 0
    %v3739 = vsel %vm370, %v3732, 0
    %v3741 = vsel %vm370, %v3734, 0
    %v3743 = vsel %vm370, %v3736, 0
    %3745 = vmatpush.xpose.msra.mxu0 0.0
    %3746 = vmatpush.xpose.msra.mxu0 0.0
    %3747 = vmatpush.xpose.msra.mxu0 0.0
    %3748 = vmatpush.xpose.msra.mxu0 0.0
    %3749 = vmatpush.xpose.msra.mxu0 0.0
    %3750 = vmatpush.xpose.msra.mxu0 0.0
    %3751 = vmatpush.xpose.msra.mxu0 0.0
    %3752 = vmatpush.xpose.msra.mxu0 0.0
    %3753 = vmatpush.xpose.msra.mxu0 0.0
    %3754 = vmatpush.xpose.msra.mxu0 0.0
    %3755 = vmatpush.xpose.msra.mxu0 0.0
    %3756 = vmatpush.xpose.msra.mxu0 0.0
    %3757 = vmatpush.xpose.msra.mxu0 0.0
    %3758 = vmatpush.xpose.msra.mxu0 0.0
    %3759 = vmatpush.xpose.msra.mxu0 %v3743
    %3760 = vmatpush.xpose.msra.mxu0 %v3741
    %3761 = vmatmul.f32.gmra.mxu0 %v3737
    %v3762 = vpop.f32.mrf.mxu0
    %v3763 = vadd.f32 0.0, %v3762
    %3764 = vmatmul.f32.gmra.mxu0 %v3739
    %v3765 = vpop.f32.mrf.mxu0
    %v3766 = vadd.f32 0.0, %v3765
    %3767 = vdwg.mxu0
    %3768 = vrot.lane.b32.xlu0 %v211, 32
    %v3769 = vpop.permute.xlu0 %3768
    %3770 = vrot.lane.b32.xlu0 %v214, 32
    %v3771 = vpop.permute.xlu0 %3770
    %3772 = vrot.lane.b32.xlu0 %v276, 32
    %v3773 = vpop.permute.xlu0 %3772
    %3774 = vrot.lane.b32.xlu0 %v279, 32
    %v3775 = vpop.permute.xlu0 %3774
    %v3776 = vsel %vm370, %v3769, 0
    %v3778 = vsel %vm370, %v3771, 0
    %v3780 = vsel %vm370, %v3773, 0
    %v3782 = vsel %vm370, %v3775, 0
    %3784 = vmatpush.xpose.msra.mxu0 0.0
    %3785 = vmatpush.xpose.msra.mxu0 0.0
    %3786 = vmatpush.xpose.msra.mxu0 0.0
    %3787 = vmatpush.xpose.msra.mxu0 0.0
    %3788 = vmatpush.xpose.msra.mxu0 0.0
    %3789 = vmatpush.xpose.msra.mxu0 0.0
    %3790 = vmatpush.xpose.msra.mxu0 0.0
    %3791 = vmatpush.xpose.msra.mxu0 0.0
    %3792 = vmatpush.xpose.msra.mxu0 0.0
    %3793 = vmatpush.xpose.msra.mxu0 0.0
    %3794 = vmatpush.xpose.msra.mxu0 0.0
    %3795 = vmatpush.xpose.msra.mxu0 0.0
    %3796 = vmatpush.xpose.msra.mxu0 0.0
    %3797 = vmatpush.xpose.msra.mxu0 0.0
    %3798 = vmatpush.xpose.msra.mxu0 %v3782
    %3799 = vmatpush.xpose.msra.mxu0 %v3780
    %3800 = vmatmul.f32.gmra.mxu0 %v3776
    %v3801 = vpop.f32.mrf.mxu0
    %v3802 = vadd.f32 0.0, %v3801
    %3803 = vmatmul.f32.gmra.mxu0 %v3778
    %v3804 = vpop.f32.mrf.mxu0
    %v3805 = vadd.f32 0.0, %v3804
    %3806 = vdwg.mxu0
    %3807 = vrot.lane.b32.xlu0 %v217, 32
    %v3808 = vpop.permute.xlu0 %3807
    %3809 = vrot.lane.b32.xlu0 %v220, 32
    %v3810 = vpop.permute.xlu0 %3809
    %3811 = vrot.lane.b32.xlu0 %v282, 32
    %v3812 = vpop.permute.xlu0 %3811
    %3813 = vrot.lane.b32.xlu0 %v285, 32
    %v3814 = vpop.permute.xlu0 %3813
    %v3815 = vsel %vm370, %v3808, 0
    %v3817 = vsel %vm370, %v3810, 0
    %v3819 = vsel %vm370, %v3812, 0
    %v3821 = vsel %vm370, %v3814, 0
    %3823 = vmatpush.xpose.msra.mxu0 0.0
    %3824 = vmatpush.xpose.msra.mxu0 0.0
    %3825 = vmatpush.xpose.msra.mxu0 0.0
    %3826 = vmatpush.xpose.msra.mxu0 0.0
    %3827 = vmatpush.xpose.msra.mxu0 0.0
    %3828 = vmatpush.xpose.msra.mxu0 0.0
    %3829 = vmatpush.xpose.msra.mxu0 0.0
    %3830 = vmatpush.xpose.msra.mxu0 0.0
    %3831 = vmatpush.xpose.msra.mxu0 0.0
    %3832 = vmatpush.xpose.msra.mxu0 0.0
    %3833 = vmatpush.xpose.msra.mxu0 0.0
    %3834 = vmatpush.xpose.msra.mxu0 0.0
    %3835 = vmatpush.xpose.msra.mxu0 0.0
    %3836 = vmatpush.xpose.msra.mxu0 0.0
    %3837 = vmatpush.xpose.msra.mxu0 %v3821
    %3838 = vmatpush.xpose.msra.mxu0 %v3819
    %3839 = vmatmul.f32.gmra.mxu0 %v3815
    %v3840 = vpop.f32.mrf.mxu0
    %v3841 = vadd.f32 0.0, %v3840
    %3842 = vmatmul.f32.gmra.mxu0 %v3817
    %v3843 = vpop.f32.mrf.mxu0
    %v3844 = vadd.f32 0.0, %v3843
    %3845 = vdwg.mxu0
    %3846 = vrot.lane.b32.xlu0 %v223, 32
    %v3847 = vpop.permute.xlu0 %3846
    %3848 = vrot.lane.b32.xlu0 %v226, 32
    %v3849 = vpop.permute.xlu0 %3848
    %3850 = vrot.lane.b32.xlu0 %v288, 32
    %v3851 = vpop.permute.xlu0 %3850
    %3852 = vrot.lane.b32.xlu0 %v291, 32
    %v3853 = vpop.permute.xlu0 %3852
    %v3854 = vsel %vm370, %v3847, 0
    %v3856 = vsel %vm370, %v3849, 0
    %v3858 = vsel %vm370, %v3851, 0
    %v3860 = vsel %vm370, %v3853, 0
    %3862 = vmatpush.xpose.msra.mxu0 0.0
    %3863 = vmatpush.xpose.msra.mxu0 0.0
    %3864 = vmatpush.xpose.msra.mxu0 0.0
    %3865 = vmatpush.xpose.msra.mxu0 0.0
    %3866 = vmatpush.xpose.msra.mxu0 0.0
    %3867 = vmatpush.xpose.msra.mxu0 0.0
    %3868 = vmatpush.xpose.msra.mxu0 0.0
    %3869 = vmatpush.xpose.msra.mxu0 0.0
    %3870 = vmatpush.xpose.msra.mxu0 0.0
    %3871 = vmatpush.xpose.msra.mxu0 0.0
    %3872 = vmatpush.xpose.msra.mxu0 0.0
    %3873 = vmatpush.xpose.msra.mxu0 0.0
    %3874 = vmatpush.xpose.msra.mxu0 0.0
    %3875 = vmatpush.xpose.msra.mxu0 0.0
    %3876 = vmatpush.xpose.msra.mxu0 %v3860
    %3877 = vmatpush.xpose.msra.mxu0 %v3858
    %3878 = vmatmul.f32.gmra.mxu0 %v3854
    %v3879 = vpop.f32.mrf.mxu0
    %v3880 = vadd.f32 0.0, %v3879
    %3881 = vmatmul.f32.gmra.mxu0 %v3856
    %v3882 = vpop.f32.mrf.mxu0
    %v3883 = vadd.f32 0.0, %v3882
    %3884 = vdwg.mxu0
    %3885 = vrot.lane.b32.xlu0 %v229, 32
    %v3886 = vpop.permute.xlu0 %3885
    %3887 = vrot.lane.b32.xlu0 %v232, 32
    %v3888 = vpop.permute.xlu0 %3887
    %3889 = vrot.lane.b32.xlu0 %v294, 32
    %v3890 = vpop.permute.xlu0 %3889
    %3891 = vrot.lane.b32.xlu0 %v297, 32
    %v3892 = vpop.permute.xlu0 %3891
    %v3893 = vsel %vm370, %v3886, 0
    %v3895 = vsel %vm370, %v3888, 0
    %v3897 = vsel %vm370, %v3890, 0
    %v3899 = vsel %vm370, %v3892, 0
    %3901 = vmatpush.xpose.msra.mxu0 0.0
    %3902 = vmatpush.xpose.msra.mxu0 0.0
    %3903 = vmatpush.xpose.msra.mxu0 0.0
    %3904 = vmatpush.xpose.msra.mxu0 0.0
    %3905 = vmatpush.xpose.msra.mxu0 0.0
    %3906 = vmatpush.xpose.msra.mxu0 0.0
    %3907 = vmatpush.xpose.msra.mxu0 0.0
    %3908 = vmatpush.xpose.msra.mxu0 0.0
    %3909 = vmatpush.xpose.msra.mxu0 0.0
    %3910 = vmatpush.xpose.msra.mxu0 0.0
    %3911 = vmatpush.xpose.msra.mxu0 0.0
    %3912 = vmatpush.xpose.msra.mxu0 0.0
    %3913 = vmatpush.xpose.msra.mxu0 0.0
    %3914 = vmatpush.xpose.msra.mxu0 0.0
    %3915 = vmatpush.xpose.msra.mxu0 %v3899
    %3916 = vmatpush.xpose.msra.mxu0 %v3897
    %3917 = vmatmul.f32.gmra.mxu0 %v3893
    %v3918 = vpop.f32.mrf.mxu0
    %v3919 = vadd.f32 0.0, %v3918
    %3920 = vmatmul.f32.gmra.mxu0 %v3895
    %v3921 = vpop.f32.mrf.mxu0
    %v3922 = vadd.f32 0.0, %v3921
    %3923 = vdwg.mxu0
    %3924 = vrot.lane.b32.xlu0 %v235, 32
    %v3925 = vpop.permute.xlu0 %3924
    %3926 = vrot.lane.b32.xlu0 %v238, 32
    %v3927 = vpop.permute.xlu0 %3926
    %3928 = vrot.lane.b32.xlu0 %v300, 32
    %v3929 = vpop.permute.xlu0 %3928
    %3930 = vrot.lane.b32.xlu0 %v303, 32
    %v3931 = vpop.permute.xlu0 %3930
    %v3932 = vsel %vm370, %v3925, 0
    %v3934 = vsel %vm370, %v3927, 0
    %v3936 = vsel %vm370, %v3929, 0
    %v3938 = vsel %vm370, %v3931, 0
    %3940 = vmatpush.xpose.msra.mxu0 0.0
    %3941 = vmatpush.xpose.msra.mxu0 0.0
    %3942 = vmatpush.xpose.msra.mxu0 0.0
    %3943 = vmatpush.xpose.msra.mxu0 0.0
    %3944 = vmatpush.xpose.msra.mxu0 0.0
    %3945 = vmatpush.xpose.msra.mxu0 0.0
    %3946 = vmatpush.xpose.msra.mxu0 0.0
    %3947 = vmatpush.xpose.msra.mxu0 0.0
    %3948 = vmatpush.xpose.msra.mxu0 0.0
    %3949 = vmatpush.xpose.msra.mxu0 0.0
    %3950 = vmatpush.xpose.msra.mxu0 0.0
    %3951 = vmatpush.xpose.msra.mxu0 0.0
    %3952 = vmatpush.xpose.msra.mxu0 0.0
    %3953 = vmatpush.xpose.msra.mxu0 0.0
    %3954 = vmatpush.xpose.msra.mxu0 %v3938
    %3955 = vmatpush.xpose.msra.mxu0 %v3936
    %3956 = vmatmul.f32.gmra.mxu0 %v3932
    %v3957 = vpop.f32.mrf.mxu0
    %v3958 = vadd.f32 0.0, %v3957
    %3959 = vmatmul.f32.gmra.mxu0 %v3934
    %v3960 = vpop.f32.mrf.mxu0
    %v3961 = vadd.f32 0.0, %v3960
    %3962 = vdwg.mxu0
    %v3963 = vmul.f32 %v3685, 0.088388346
    %v3964 = vmul.f32 %v3688, 0.088388346
    %v3965 = vmul.f32 %v3724, 0.088388346
    %v3966 = vmul.f32 %v3727, 0.088388346
    %v3967 = vmul.f32 %v3763, 0.088388346
    %v3968 = vmul.f32 %v3766, 0.088388346
    %v3969 = vmul.f32 %v3802, 0.088388346
    %v3970 = vmul.f32 %v3805, 0.088388346
    %v3971 = vmul.f32 %v3841, 0.088388346
    %v3972 = vmul.f32 %v3844, 0.088388346
    %v3973 = vmul.f32 %v3880, 0.088388346
    %v3974 = vmul.f32 %v3883, 0.088388346
    %v3975 = vmul.f32 %v3919, 0.088388346
    %v3976 = vmul.f32 %v3922, 0.088388346
    %v3977 = vmul.f32 %v3958, 0.088388346
    %v3978 = vmul.f32 %v3961, 0.088388346
    %v3979 = vsel %vm667, %v3963, -inf
    %3980 = vmax.xlane.f32.xlu0 %v3979
    %v3981 = vpop.xlane.xlu0 %3980
    %v3982 = vsel %vm667, %v3964, -inf
    %3983 = vmax.xlane.f32.xlu0 %v3982
    %v3984 = vpop.xlane.xlu0 %3983
    %v3985 = vsel %vm667, %v3965, -inf
    %3986 = vmax.xlane.f32.xlu0 %v3985
    %v3987 = vpop.xlane.xlu0 %3986
    %v3988 = vsel %vm667, %v3966, -inf
    %3989 = vmax.xlane.f32.xlu0 %v3988
    %v3990 = vpop.xlane.xlu0 %3989
    %v3991 = vsel %vm667, %v3967, -inf
    %3992 = vmax.xlane.f32.xlu0 %v3991
    %v3993 = vpop.xlane.xlu0 %3992
    %v3994 = vsel %vm667, %v3968, -inf
    %3995 = vmax.xlane.f32.xlu0 %v3994
    %v3996 = vpop.xlane.xlu0 %3995
    %v3997 = vsel %vm667, %v3969, -inf
    %3998 = vmax.xlane.f32.xlu0 %v3997
    %v3999 = vpop.xlane.xlu0 %3998
    %v4000 = vsel %vm667, %v3970, -inf
    %4001 = vmax.xlane.f32.xlu0 %v4000
    %v4002 = vpop.xlane.xlu0 %4001
    %v4003 = vsel %vm667, %v3971, -inf
    %4004 = vmax.xlane.f32.xlu0 %v4003
    %v4005 = vpop.xlane.xlu0 %4004
    %v4006 = vsel %vm667, %v3972, -inf
    %4007 = vmax.xlane.f32.xlu0 %v4006
    %v4008 = vpop.xlane.xlu0 %4007
    %v4009 = vsel %vm667, %v3973, -inf
    %4010 = vmax.xlane.f32.xlu0 %v4009
    %v4011 = vpop.xlane.xlu0 %4010
    %v4012 = vsel %vm667, %v3974, -inf
    %4013 = vmax.xlane.f32.xlu0 %v4012
    %v4014 = vpop.xlane.xlu0 %4013
    %v4015 = vsel %vm667, %v3975, -inf
    %4016 = vmax.xlane.f32.xlu0 %v4015
    %v4017 = vpop.xlane.xlu0 %4016
    %v4018 = vsel %vm667, %v3976, -inf
    %4019 = vmax.xlane.f32.xlu0 %v4018
    %v4020 = vpop.xlane.xlu0 %4019
    %v4021 = vsel %vm667, %v3977, -inf
    %4022 = vmax.xlane.f32.xlu0 %v4021
    %v4023 = vpop.xlane.xlu0 %4022
    %v4024 = vsel %vm667, %v3978, -inf
    %4025 = vmax.xlane.f32.xlu0 %v4024
    %v4026 = vpop.xlane.xlu0 %4025
    %v4027 = vsub.f32 %v3963, %v3981
    %v4028 = vsub.f32 %v3964, %v3984
    %v4029 = vsub.f32 %v3965, %v3987
    %v4030 = vsub.f32 %v3966, %v3990
    %v4031 = vsub.f32 %v3967, %v3993
    %v4032 = vsub.f32 %v3968, %v3996
    %v4033 = vsub.f32 %v3969, %v3999
    %v4034 = vsub.f32 %v3970, %v4002
    %v4035 = vsub.f32 %v3971, %v4005
    %v4036 = vsub.f32 %v3972, %v4008
    %v4037 = vsub.f32 %v3973, %v4011
    %v4038 = vsub.f32 %v3974, %v4014
    %v4039 = vsub.f32 %v3975, %v4017
    %v4040 = vsub.f32 %v3976, %v4020
    %v4041 = vsub.f32 %v3977, %v4023
    %v4042 = vsub.f32 %v3978, %v4026
    %v4043 = vmul.f32 %v4027, 1.442695
    %v4044 = vpow.pop %v4043
    %v4045 = vmul.f32 %v4028, 1.442695
    %v4046 = vpow.pop %v4045
    %v4047 = vmul.f32 %v4029, 1.442695
    %v4048 = vpow.pop %v4047
    %v4049 = vmul.f32 %v4030, 1.442695
    %v4050 = vpow.pop %v4049
    %v4051 = vmul.f32 %v4031, 1.442695
    %v4052 = vpow.pop %v4051
    %v4053 = vmul.f32 %v4032, 1.442695
    %v4054 = vpow.pop %v4053
    %v4055 = vmul.f32 %v4033, 1.442695
    %v4056 = vpow.pop %v4055
    %v4057 = vmul.f32 %v4034, 1.442695
    %v4058 = vpow.pop %v4057
    %v4059 = vmul.f32 %v4035, 1.442695
    %v4060 = vpow.pop %v4059
    %v4061 = vmul.f32 %v4036, 1.442695
    %v4062 = vpow.pop %v4061
    %v4063 = vmul.f32 %v4037, 1.442695
    %v4064 = vpow.pop %v4063
    %v4065 = vmul.f32 %v4038, 1.442695
    %v4066 = vpow.pop %v4065
    %v4067 = vmul.f32 %v4039, 1.442695
    %v4068 = vpow.pop %v4067
    %v4069 = vmul.f32 %v4040, 1.442695
    %v4070 = vpow.pop %v4069
    %v4071 = vmul.f32 %v4041, 1.442695
    %v4072 = vpow.pop %v4071
    %v4073 = vmul.f32 %v4042, 1.442695
    %v4074 = vpow.pop %v4073
    %v4075 = vsel %vm667, %v4044, 0.0
    %4076 = vadd.xlane.f32.xlu0 %v4075
    %v4077 = vpop.xlane.xlu0 %4076
    %v4078 = vsel %vm667, %v4046, 0.0
    %4079 = vadd.xlane.f32.xlu0 %v4078
    %v4080 = vpop.xlane.xlu0 %4079
    %v4081 = vsel %vm667, %v4048, 0.0
    %4082 = vadd.xlane.f32.xlu0 %v4081
    %v4083 = vpop.xlane.xlu0 %4082
    %v4084 = vsel %vm667, %v4050, 0.0
    %4085 = vadd.xlane.f32.xlu0 %v4084
    %v4086 = vpop.xlane.xlu0 %4085
    %v4087 = vsel %vm667, %v4052, 0.0
    %4088 = vadd.xlane.f32.xlu0 %v4087
    %v4089 = vpop.xlane.xlu0 %4088
    %v4090 = vsel %vm667, %v4054, 0.0
    %4091 = vadd.xlane.f32.xlu0 %v4090
    %v4092 = vpop.xlane.xlu0 %4091
    %v4093 = vsel %vm667, %v4056, 0.0
    %4094 = vadd.xlane.f32.xlu0 %v4093
    %v4095 = vpop.xlane.xlu0 %4094
    %v4096 = vsel %vm667, %v4058, 0.0
    %4097 = vadd.xlane.f32.xlu0 %v4096
    %v4098 = vpop.xlane.xlu0 %4097
    %v4099 = vsel %vm667, %v4060, 0.0
    %4100 = vadd.xlane.f32.xlu0 %v4099
    %v4101 = vpop.xlane.xlu0 %4100
    %v4102 = vsel %vm667, %v4062, 0.0
    %4103 = vadd.xlane.f32.xlu0 %v4102
    %v4104 = vpop.xlane.xlu0 %4103
    %v4105 = vsel %vm667, %v4064, 0.0
    %4106 = vadd.xlane.f32.xlu0 %v4105
    %v4107 = vpop.xlane.xlu0 %4106
    %v4108 = vsel %vm667, %v4066, 0.0
    %4109 = vadd.xlane.f32.xlu0 %v4108
    %v4110 = vpop.xlane.xlu0 %4109
    %v4111 = vsel %vm667, %v4068, 0.0
    %4112 = vadd.xlane.f32.xlu0 %v4111
    %v4113 = vpop.xlane.xlu0 %4112
    %v4114 = vsel %vm667, %v4070, 0.0
    %4115 = vadd.xlane.f32.xlu0 %v4114
    %v4116 = vpop.xlane.xlu0 %4115
    %v4117 = vsel %vm667, %v4072, 0.0
    %4118 = vadd.xlane.f32.xlu0 %v4117
    %v4119 = vpop.xlane.xlu0 %4118
    %v4120 = vsel %vm667, %v4074, 0.0
    %4121 = vadd.xlane.f32.xlu0 %v4120
    %v4122 = vpop.xlane.xlu0 %4121
    %4123 = vrot.lane.b32.xlu0 %v323, 32
    %v4124 = vpop.permute.xlu0 %4123
    %4125 = vrot.lane.b32.xlu0 %v326, 32
    %v4126 = vpop.permute.xlu0 %4125
    %v4130 = vsel %vm667, %v4044, 0
    %v4133 = vsel %vm667, %v4046, 0
    %4135 = vmatpush.msra.mxu0 0.0
    %4136 = vmatpush.msra.mxu0 0.0
    %4137 = vmatpush.msra.mxu0 0.0
    %4138 = vmatpush.msra.mxu0 0.0
    %4139 = vmatpush.msra.mxu0 0.0
    %4140 = vmatpush.msra.mxu0 0.0
    %4141 = vmatpush.msra.mxu0 0.0
    %4142 = vmatpush.msra.mxu0 0.0
    %4143 = vmatpush.msra.mxu0 0.0
    %4144 = vmatpush.msra.mxu0 0.0
    %4145 = vmatpush.msra.mxu0 0.0
    %4146 = vmatpush.msra.mxu0 0.0
    %4147 = vmatpush.msra.mxu0 0.0
    %4148 = vmatpush.msra.mxu0 0.0
    %4149 = vmatpush.msra.mxu0 %v4126
    %4150 = vmatpush.msra.mxu0 %v4124
    %4151 = vmatmul.f32.gmra.mxu0 %v4130
    %v4152 = vpop.f32.mrf.mxu0
    %v4153 = vadd.f32 0.0, %v4152
    %4154 = vmatmul.f32.gmra.mxu0 %v4133
    %v4155 = vpop.f32.mrf.mxu0
    %v4156 = vadd.f32 0.0, %v4155
    %4157 = vdwg.mxu0
    %4158 = vrot.lane.b32.xlu0 %v329, 32
    %v4159 = vpop.permute.xlu0 %4158
    %4160 = vrot.lane.b32.xlu0 %v332, 32
    %v4161 = vpop.permute.xlu0 %4160
    %v4165 = vsel %vm667, %v4048, 0
    %v4168 = vsel %vm667, %v4050, 0
    %4170 = vmatpush.msra.mxu0 0.0
    %4171 = vmatpush.msra.mxu0 0.0
    %4172 = vmatpush.msra.mxu0 0.0
    %4173 = vmatpush.msra.mxu0 0.0
    %4174 = vmatpush.msra.mxu0 0.0
    %4175 = vmatpush.msra.mxu0 0.0
    %4176 = vmatpush.msra.mxu0 0.0
    %4177 = vmatpush.msra.mxu0 0.0
    %4178 = vmatpush.msra.mxu0 0.0
    %4179 = vmatpush.msra.mxu0 0.0
    %4180 = vmatpush.msra.mxu0 0.0
    %4181 = vmatpush.msra.mxu0 0.0
    %4182 = vmatpush.msra.mxu0 0.0
    %4183 = vmatpush.msra.mxu0 0.0
    %4184 = vmatpush.msra.mxu0 %v4161
    %4185 = vmatpush.msra.mxu0 %v4159
    %4186 = vmatmul.f32.gmra.mxu0 %v4165
    %v4187 = vpop.f32.mrf.mxu0
    %v4188 = vadd.f32 0.0, %v4187
    %4189 = vmatmul.f32.gmra.mxu0 %v4168
    %v4190 = vpop.f32.mrf.mxu0
    %v4191 = vadd.f32 0.0, %v4190
    %4192 = vdwg.mxu0
    %4193 = vrot.lane.b32.xlu0 %v335, 32
    %v4194 = vpop.permute.xlu0 %4193
    %4195 = vrot.lane.b32.xlu0 %v338, 32
    %v4196 = vpop.permute.xlu0 %4195
    %v4200 = vsel %vm667, %v4052, 0
    %v4203 = vsel %vm667, %v4054, 0
    %4205 = vmatpush.msra.mxu0 0.0
    %4206 = vmatpush.msra.mxu0 0.0
    %4207 = vmatpush.msra.mxu0 0.0
    %4208 = vmatpush.msra.mxu0 0.0
    %4209 = vmatpush.msra.mxu0 0.0
    %4210 = vmatpush.msra.mxu0 0.0
    %4211 = vmatpush.msra.mxu0 0.0
    %4212 = vmatpush.msra.mxu0 0.0
    %4213 = vmatpush.msra.mxu0 0.0
    %4214 = vmatpush.msra.mxu0 0.0
    %4215 = vmatpush.msra.mxu0 0.0
    %4216 = vmatpush.msra.mxu0 0.0
    %4217 = vmatpush.msra.mxu0 0.0
    %4218 = vmatpush.msra.mxu0 0.0
    %4219 = vmatpush.msra.mxu0 %v4196
    %4220 = vmatpush.msra.mxu0 %v4194
    %4221 = vmatmul.f32.gmra.mxu0 %v4200
    %v4222 = vpop.f32.mrf.mxu0
    %v4223 = vadd.f32 0.0, %v4222
    %4224 = vmatmul.f32.gmra.mxu0 %v4203
    %v4225 = vpop.f32.mrf.mxu0
    %v4226 = vadd.f32 0.0, %v4225
    %4227 = vdwg.mxu0
    %4228 = vrot.lane.b32.xlu0 %v341, 32
    %v4229 = vpop.permute.xlu0 %4228
    %4230 = vrot.lane.b32.xlu0 %v344, 32
    %v4231 = vpop.permute.xlu0 %4230
    %v4235 = vsel %vm667, %v4056, 0
    %v4238 = vsel %vm667, %v4058, 0
    %4240 = vmatpush.msra.mxu0 0.0
    %4241 = vmatpush.msra.mxu0 0.0
    %4242 = vmatpush.msra.mxu0 0.0
    %4243 = vmatpush.msra.mxu0 0.0
    %4244 = vmatpush.msra.mxu0 0.0
    %4245 = vmatpush.msra.mxu0 0.0
    %4246 = vmatpush.msra.mxu0 0.0
    %4247 = vmatpush.msra.mxu0 0.0
    %4248 = vmatpush.msra.mxu0 0.0
    %4249 = vmatpush.msra.mxu0 0.0
    %4250 = vmatpush.msra.mxu0 0.0
    %4251 = vmatpush.msra.mxu0 0.0
    %4252 = vmatpush.msra.mxu0 0.0
    %4253 = vmatpush.msra.mxu0 0.0
    %4254 = vmatpush.msra.mxu0 %v4231
    %4255 = vmatpush.msra.mxu0 %v4229
    %4256 = vmatmul.f32.gmra.mxu0 %v4235
    %v4257 = vpop.f32.mrf.mxu0
    %v4258 = vadd.f32 0.0, %v4257
    %4259 = vmatmul.f32.gmra.mxu0 %v4238
    %v4260 = vpop.f32.mrf.mxu0
    %v4261 = vadd.f32 0.0, %v4260
    %4262 = vdwg.mxu0
    %4263 = vrot.lane.b32.xlu0 %v347, 32
    %v4264 = vpop.permute.xlu0 %4263
    %4265 = vrot.lane.b32.xlu0 %v350, 32
    %v4266 = vpop.permute.xlu0 %4265
    %v4270 = vsel %vm667, %v4060, 0
    %v4273 = vsel %vm667, %v4062, 0
    %4275 = vmatpush.msra.mxu0 0.0
    %4276 = vmatpush.msra.mxu0 0.0
    %4277 = vmatpush.msra.mxu0 0.0
    %4278 = vmatpush.msra.mxu0 0.0
    %4279 = vmatpush.msra.mxu0 0.0
    %4280 = vmatpush.msra.mxu0 0.0
    %4281 = vmatpush.msra.mxu0 0.0
    %4282 = vmatpush.msra.mxu0 0.0
    %4283 = vmatpush.msra.mxu0 0.0
    %4284 = vmatpush.msra.mxu0 0.0
    %4285 = vmatpush.msra.mxu0 0.0
    %4286 = vmatpush.msra.mxu0 0.0
    %4287 = vmatpush.msra.mxu0 0.0
    %4288 = vmatpush.msra.mxu0 0.0
    %4289 = vmatpush.msra.mxu0 %v4266
    %4290 = vmatpush.msra.mxu0 %v4264
    %4291 = vmatmul.f32.gmra.mxu0 %v4270
    %v4292 = vpop.f32.mrf.mxu0
    %v4293 = vadd.f32 0.0, %v4292
    %4294 = vmatmul.f32.gmra.mxu0 %v4273
    %v4295 = vpop.f32.mrf.mxu0
    %v4296 = vadd.f32 0.0, %v4295
    %4297 = vdwg.mxu0
    %4298 = vrot.lane.b32.xlu0 %v353, 32
    %v4299 = vpop.permute.xlu0 %4298
    %4300 = vrot.lane.b32.xlu0 %v356, 32
    %v4301 = vpop.permute.xlu0 %4300
    %v4305 = vsel %vm667, %v4064, 0
    %v4308 = vsel %vm667, %v4066, 0
    %4310 = vmatpush.msra.mxu0 0.0
    %4311 = vmatpush.msra.mxu0 0.0
    %4312 = vmatpush.msra.mxu0 0.0
    %4313 = vmatpush.msra.mxu0 0.0
    %4314 = vmatpush.msra.mxu0 0.0
    %4315 = vmatpush.msra.mxu0 0.0
    %4316 = vmatpush.msra.mxu0 0.0
    %4317 = vmatpush.msra.mxu0 0.0
    %4318 = vmatpush.msra.mxu0 0.0
    %4319 = vmatpush.msra.mxu0 0.0
    %4320 = vmatpush.msra.mxu0 0.0
    %4321 = vmatpush.msra.mxu0 0.0
    %4322 = vmatpush.msra.mxu0 0.0
    %4323 = vmatpush.msra.mxu0 0.0
    %4324 = vmatpush.msra.mxu0 %v4301
    %4325 = vmatpush.msra.mxu0 %v4299
    %4326 = vmatmul.f32.gmra.mxu0 %v4305
    %v4327 = vpop.f32.mrf.mxu0
    %v4328 = vadd.f32 0.0, %v4327
    %4329 = vmatmul.f32.gmra.mxu0 %v4308
    %v4330 = vpop.f32.mrf.mxu0
    %v4331 = vadd.f32 0.0, %v4330
    %4332 = vdwg.mxu0
    %4333 = vrot.lane.b32.xlu0 %v359, 32
    %v4334 = vpop.permute.xlu0 %4333
    %4335 = vrot.lane.b32.xlu0 %v362, 32
    %v4336 = vpop.permute.xlu0 %4335
    %v4340 = vsel %vm667, %v4068, 0
    %v4343 = vsel %vm667, %v4070, 0
    %4345 = vmatpush.msra.mxu0 0.0
    %4346 = vmatpush.msra.mxu0 0.0
    %4347 = vmatpush.msra.mxu0 0.0
    %4348 = vmatpush.msra.mxu0 0.0
    %4349 = vmatpush.msra.mxu0 0.0
    %4350 = vmatpush.msra.mxu0 0.0
    %4351 = vmatpush.msra.mxu0 0.0
    %4352 = vmatpush.msra.mxu0 0.0
    %4353 = vmatpush.msra.mxu0 0.0
    %4354 = vmatpush.msra.mxu0 0.0
    %4355 = vmatpush.msra.mxu0 0.0
    %4356 = vmatpush.msra.mxu0 0.0
    %4357 = vmatpush.msra.mxu0 0.0
    %4358 = vmatpush.msra.mxu0 0.0
    %4359 = vmatpush.msra.mxu0 %v4336
    %4360 = vmatpush.msra.mxu0 %v4334
    %4361 = vmatmul.f32.gmra.mxu0 %v4340
    %v4362 = vpop.f32.mrf.mxu0
    %v4363 = vadd.f32 0.0, %v4362
    %4364 = vmatmul.f32.gmra.mxu0 %v4343
    %v4365 = vpop.f32.mrf.mxu0
    %v4366 = vadd.f32 0.0, %v4365
    %4367 = vdwg.mxu0
    %4368 = vrot.lane.b32.xlu0 %v365, 32
    %v4369 = vpop.permute.xlu0 %4368
    %4370 = vrot.lane.b32.xlu0 %v368, 32
    %v4371 = vpop.permute.xlu0 %4370
    %v4375 = vsel %vm667, %v4072, 0
    %v4378 = vsel %vm667, %v4074, 0
    %4380 = vmatpush.msra.mxu0 0.0
    %4381 = vmatpush.msra.mxu0 0.0
    %4382 = vmatpush.msra.mxu0 0.0
    %4383 = vmatpush.msra.mxu0 0.0
    %4384 = vmatpush.msra.mxu0 0.0
    %4385 = vmatpush.msra.mxu0 0.0
    %4386 = vmatpush.msra.mxu0 0.0
    %4387 = vmatpush.msra.mxu0 0.0
    %4388 = vmatpush.msra.mxu0 0.0
    %4389 = vmatpush.msra.mxu0 0.0
    %4390 = vmatpush.msra.mxu0 0.0
    %4391 = vmatpush.msra.mxu0 0.0
    %4392 = vmatpush.msra.mxu0 0.0
    %4393 = vmatpush.msra.mxu0 0.0
    %4394 = vmatpush.msra.mxu0 %v4371
    %4395 = vmatpush.msra.mxu0 %v4369
    %4396 = vmatmul.f32.gmra.mxu0 %v4375
    %v4397 = vpop.f32.mrf.mxu0
    %v4398 = vadd.f32 0.0, %v4397
    %4399 = vmatmul.f32.gmra.mxu0 %v4378
    %v4400 = vpop.f32.mrf.mxu0
    %v4401 = vadd.f32 0.0, %v4400
    %4402 = vdwg.mxu0
    %v4403 = vrcp.pop %v4077
    %v4404 = vmul.f32 %v4077, %v4403
    %v4405 = vsub.f32 1.0, %v4404
    %v4406 = vmul.f32 %v4403, %v4405
    %v4407 = vadd.f32 %v4403, %v4406
    %vm4408 = vweird.f32 %v4077
    %vm4409 = vweird.f32 %v4403
    %vm4410 = vmor %vm4408, %vm4409
    %v4411 = vsel %vm4410, %v4403, %v4407
    %v4412 = vand.u32 2147483647, %v4077
    %vm4413 = vcmp.eq.f32.partialorder %v4412, 8.507059e+37
    %v4414 = vand.u32 %v4077, 2147483648
    %v4415 = vor.u32 1.1754944e-38, %v4414
    %v4416 = vsel %vm4413, %v4415, %v4411
    %v4417 = vrcp.pop %v4080
    %v4418 = vmul.f32 %v4080, %v4417
    %v4419 = vsub.f32 1.0, %v4418
    %v4420 = vmul.f32 %v4417, %v4419
    %v4421 = vadd.f32 %v4417, %v4420
    %vm4422 = vweird.f32 %v4080
    %vm4423 = vweird.f32 %v4417
    %vm4424 = vmor %vm4422, %vm4423
    %v4425 = vsel %vm4424, %v4417, %v4421
    %v4426 = vand.u32 2147483647, %v4080
    %vm4427 = vcmp.eq.f32.partialorder %v4426, 8.507059e+37
    %v4428 = vand.u32 %v4080, 2147483648
    %v4429 = vor.u32 1.1754944e-38, %v4428
    %v4430 = vsel %vm4427, %v4429, %v4425
    %v4431 = vrcp.pop %v4083
    %v4432 = vmul.f32 %v4083, %v4431
    %v4433 = vsub.f32 1.0, %v4432
    %v4434 = vmul.f32 %v4431, %v4433
    %v4435 = vadd.f32 %v4431, %v4434
    %vm4436 = vweird.f32 %v4083
    %vm4437 = vweird.f32 %v4431
    %vm4438 = vmor %vm4436, %vm4437
    %v4439 = vsel %vm4438, %v4431, %v4435
    %v4440 = vand.u32 2147483647, %v4083
    %vm4441 = vcmp.eq.f32.partialorder %v4440, 8.507059e+37
    %v4442 = vand.u32 %v4083, 2147483648
    %v4443 = vor.u32 1.1754944e-38, %v4442
    %v4444 = vsel %vm4441, %v4443, %v4439
    %v4445 = vrcp.pop %v4086
    %v4446 = vmul.f32 %v4086, %v4445
    %v4447 = vsub.f32 1.0, %v4446
    %v4448 = vmul.f32 %v4445, %v4447
    %v4449 = vadd.f32 %v4445, %v4448
    %vm4450 = vweird.f32 %v4086
    %vm4451 = vweird.f32 %v4445
    %vm4452 = vmor %vm4450, %vm4451
    %v4453 = vsel %vm4452, %v4445, %v4449
    %v4454 = vand.u32 2147483647, %v4086
    %vm4455 = vcmp.eq.f32.partialorder %v4454, 8.507059e+37
    %v4456 = vand.u32 %v4086, 2147483648
    %v4457 = vor.u32 1.1754944e-38, %v4456
    %v4458 = vsel %vm4455, %v4457, %v4453
    %v4459 = vrcp.pop %v4089
    %v4460 = vmul.f32 %v4089, %v4459
    %v4461 = vsub.f32 1.0, %v4460
    %v4462 = vmul.f32 %v4459, %v4461
    %v4463 = vadd.f32 %v4459, %v4462
    %vm4464 = vweird.f32 %v4089
    %vm4465 = vweird.f32 %v4459
    %vm4466 = vmor %vm4464, %vm4465
    %v4467 = vsel %vm4466, %v4459, %v4463
    %v4468 = vand.u32 2147483647, %v4089
    %vm4469 = vcmp.eq.f32.partialorder %v4468, 8.507059e+37
    %v4470 = vand.u32 %v4089, 2147483648
    %v4471 = vor.u32 1.1754944e-38, %v4470
    %v4472 = vsel %vm4469, %v4471, %v4467
    %v4473 = vrcp.pop %v4092
    %v4474 = vmul.f32 %v4092, %v4473
    %v4475 = vsub.f32 1.0, %v4474
    %v4476 = vmul.f32 %v4473, %v4475
    %v4477 = vadd.f32 %v4473, %v4476
    %vm4478 = vweird.f32 %v4092
    %vm4479 = vweird.f32 %v4473
    %vm4480 = vmor %vm4478, %vm4479
    %v4481 = vsel %vm4480, %v4473, %v4477
    %v4482 = vand.u32 2147483647, %v4092
    %vm4483 = vcmp.eq.f32.partialorder %v4482, 8.507059e+37
    %v4484 = vand.u32 %v4092, 2147483648
    %v4485 = vor.u32 1.1754944e-38, %v4484
    %v4486 = vsel %vm4483, %v4485, %v4481
    %v4487 = vrcp.pop %v4095
    %v4488 = vmul.f32 %v4095, %v4487
    %v4489 = vsub.f32 1.0, %v4488
    %v4490 = vmul.f32 %v4487, %v4489
    %v4491 = vadd.f32 %v4487, %v4490
    %vm4492 = vweird.f32 %v4095
    %vm4493 = vweird.f32 %v4487
    %vm4494 = vmor %vm4492, %vm4493
    %v4495 = vsel %vm4494, %v4487, %v4491
    %v4496 = vand.u32 2147483647, %v4095
    %vm4497 = vcmp.eq.f32.partialorder %v4496, 8.507059e+37
    %v4498 = vand.u32 %v4095, 2147483648
    %v4499 = vor.u32 1.1754944e-38, %v4498
    %v4500 = vsel %vm4497, %v4499, %v4495
    %v4501 = vrcp.pop %v4098
    %v4502 = vmul.f32 %v4098, %v4501
    %v4503 = vsub.f32 1.0, %v4502
    %v4504 = vmul.f32 %v4501, %v4503
    %v4505 = vadd.f32 %v4501, %v4504
    %vm4506 = vweird.f32 %v4098
    %vm4507 = vweird.f32 %v4501
    %vm4508 = vmor %vm4506, %vm4507
    %v4509 = vsel %vm4508, %v4501, %v4505
    %v4510 = vand.u32 2147483647, %v4098
    %vm4511 = vcmp.eq.f32.partialorder %v4510, 8.507059e+37
    %v4512 = vand.u32 %v4098, 2147483648
    %v4513 = vor.u32 1.1754944e-38, %v4512
    %v4514 = vsel %vm4511, %v4513, %v4509
    %v4515 = vrcp.pop %v4101
    %v4516 = vmul.f32 %v4101, %v4515
    %v4517 = vsub.f32 1.0, %v4516
    %v4518 = vmul.f32 %v4515, %v4517
    %v4519 = vadd.f32 %v4515, %v4518
    %vm4520 = vweird.f32 %v4101
    %vm4521 = vweird.f32 %v4515
    %vm4522 = vmor %vm4520, %vm4521
    %v4523 = vsel %vm4522, %v4515, %v4519
    %v4524 = vand.u32 2147483647, %v4101
    %vm4525 = vcmp.eq.f32.partialorder %v4524, 8.507059e+37
    %v4526 = vand.u32 %v4101, 2147483648
    %v4527 = vor.u32 1.1754944e-38, %v4526
    %v4528 = vsel %vm4525, %v4527, %v4523
    %v4529 = vrcp.pop %v4104
    %v4530 = vmul.f32 %v4104, %v4529
    %v4531 = vsub.f32 1.0, %v4530
    %v4532 = vmul.f32 %v4529, %v4531
    %v4533 = vadd.f32 %v4529, %v4532
    %vm4534 = vweird.f32 %v4104
    %vm4535 = vweird.f32 %v4529
    %vm4536 = vmor %vm4534, %vm4535
    %v4537 = vsel %vm4536, %v4529, %v4533
    %v4538 = vand.u32 2147483647, %v4104
    %vm4539 = vcmp.eq.f32.partialorder %v4538, 8.507059e+37
    %v4540 = vand.u32 %v4104, 2147483648
    %v4541 = vor.u32 1.1754944e-38, %v4540
    %v4542 = vsel %vm4539, %v4541, %v4537
    %v4543 = vrcp.pop %v4107
    %v4544 = vmul.f32 %v4107, %v4543
    %v4545 = vsub.f32 1.0, %v4544
    %v4546 = vmul.f32 %v4543, %v4545
    %v4547 = vadd.f32 %v4543, %v4546
    %vm4548 = vweird.f32 %v4107
    %vm4549 = vweird.f32 %v4543
    %vm4550 = vmor %vm4548, %vm4549
    %v4551 = vsel %vm4550, %v4543, %v4547
    %v4552 = vand.u32 2147483647, %v4107
    %vm4553 = vcmp.eq.f32.partialorder %v4552, 8.507059e+37
    %v4554 = vand.u32 %v4107, 2147483648
    %v4555 = vor.u32 1.1754944e-38, %v4554
    %v4556 = vsel %vm4553, %v4555, %v4551
    %v4557 = vrcp.pop %v4110
    %v4558 = vmul.f32 %v4110, %v4557
    %v4559 = vsub.f32 1.0, %v4558
    %v4560 = vmul.f32 %v4557, %v4559
    %v4561 = vadd.f32 %v4557, %v4560
    %vm4562 = vweird.f32 %v4110
    %vm4563 = vweird.f32 %v4557
    %vm4564 = vmor %vm4562, %vm4563
    %v4565 = vsel %vm4564, %v4557, %v4561
    %v4566 = vand.u32 2147483647, %v4110
    %vm4567 = vcmp.eq.f32.partialorder %v4566, 8.507059e+37
    %v4568 = vand.u32 %v4110, 2147483648
    %v4569 = vor.u32 1.1754944e-38, %v4568
    %v4570 = vsel %vm4567, %v4569, %v4565
    %v4571 = vrcp.pop %v4113
    %v4572 = vmul.f32 %v4113, %v4571
    %v4573 = vsub.f32 1.0, %v4572
    %v4574 = vmul.f32 %v4571, %v4573
    %v4575 = vadd.f32 %v4571, %v4574
    %vm4576 = vweird.f32 %v4113
    %vm4577 = vweird.f32 %v4571
    %vm4578 = vmor %vm4576, %vm4577
    %v4579 = vsel %vm4578, %v4571, %v4575
    %v4580 = vand.u32 2147483647, %v4113
    %vm4581 = vcmp.eq.f32.partialorder %v4580, 8.507059e+37
    %v4582 = vand.u32 %v4113, 2147483648
    %v4583 = vor.u32 1.1754944e-38, %v4582
    %v4584 = vsel %vm4581, %v4583, %v4579
    %v4585 = vrcp.pop %v4116
    %v4586 = vmul.f32 %v4116, %v4585
    %v4587 = vsub.f32 1.0, %v4586
    %v4588 = vmul.f32 %v4585, %v4587
    %v4589 = vadd.f32 %v4585, %v4588
    %vm4590 = vweird.f32 %v4116
    %vm4591 = vweird.f32 %v4585
    %vm4592 = vmor %vm4590, %vm4591
    %v4593 = vsel %vm4592, %v4585, %v4589
    %v4594 = vand.u32 2147483647, %v4116
    %vm4595 = vcmp.eq.f32.partialorder %v4594, 8.507059e+37
    %v4596 = vand.u32 %v4116, 2147483648
    %v4597 = vor.u32 1.1754944e-38, %v4596
    %v4598 = vsel %vm4595, %v4597, %v4593
    %v4599 = vrcp.pop %v4119
    %v4600 = vmul.f32 %v4119, %v4599
    %v4601 = vsub.f32 1.0, %v4600
    %v4602 = vmul.f32 %v4599, %v4601
    %v4603 = vadd.f32 %v4599, %v4602
    %vm4604 = vweird.f32 %v4119
    %vm4605 = vweird.f32 %v4599
    %vm4606 = vmor %vm4604, %vm4605
    %v4607 = vsel %vm4606, %v4599, %v4603
    %v4608 = vand.u32 2147483647, %v4119
    %vm4609 = vcmp.eq.f32.partialorder %v4608, 8.507059e+37
    %v4610 = vand.u32 %v4119, 2147483648
    %v4611 = vor.u32 1.1754944e-38, %v4610
    %v4612 = vsel %vm4609, %v4611, %v4607
    %v4613 = vrcp.pop %v4122
    %v4614 = vmul.f32 %v4122, %v4613
    %v4615 = vsub.f32 1.0, %v4614
    %v4616 = vmul.f32 %v4613, %v4615
    %v4617 = vadd.f32 %v4613, %v4616
    %vm4618 = vweird.f32 %v4122
    %vm4619 = vweird.f32 %v4613
    %vm4620 = vmor %vm4618, %vm4619
    %v4621 = vsel %vm4620, %v4613, %v4617
    %v4622 = vand.u32 2147483647, %v4122
    %vm4623 = vcmp.eq.f32.partialorder %v4622, 8.507059e+37
    %v4624 = vand.u32 %v4122, 2147483648
    %v4625 = vor.u32 1.1754944e-38, %v4624
    %v4626 = vsel %vm4623, %v4625, %v4621
    %v4627 = vmul.f32 %v4153, %v4416
    %v4628 = vmul.f32 %v4156, %v4430
    %v4629 = vmul.f32 %v4188, %v4444
    %v4630 = vmul.f32 %v4191, %v4458
    %v4631 = vmul.f32 %v4223, %v4472
    %v4632 = vmul.f32 %v4226, %v4486
    %v4633 = vmul.f32 %v4258, %v4500
    %v4634 = vmul.f32 %v4261, %v4514
    %v4635 = vmul.f32 %v4293, %v4528
    %v4636 = vmul.f32 %v4296, %v4542
    %v4637 = vmul.f32 %v4328, %v4556
    %v4638 = vmul.f32 %v4331, %v4570
    %v4639 = vmul.f32 %v4363, %v4584
    %v4640 = vmul.f32 %v4366, %v4598
    %v4641 = vmul.f32 %v4398, %v4612
    %v4642 = vmul.f32 %v4401, %v4626
    %v4643 = vld [vmem:[#allocation8 + $0x60] sm:$0xff]
    %v4644 = vld [vmem:[#allocation8 + $0x68] sm:$0xff]
    %v4645 = vld [vmem:[#allocation8 + $0x70] sm:$0xff]
    %v4646 = vld [vmem:[#allocation8 + $0x78] sm:$0xff]
    %v4648 = vsel %vm370, %v4627, 0
    %v4651 = vsel %vm370, %v4628, 0
    %v4654 = vsel %vm370, %v4629, 0
    %v4657 = vsel %vm370, %v4630, 0
    %v4660 = vsel %vm370, %v4631, 0
    %v4663 = vsel %vm370, %v4632, 0
    %v4666 = vsel %vm370, %v4633, 0
    %v4669 = vsel %vm370, %v4634, 0
    %v4672 = vsel %vm370, %v4635, 0
    %v4675 = vsel %vm370, %v4636, 0
    %v4678 = vsel %vm370, %v4637, 0
    %v4681 = vsel %vm370, %v4638, 0
    %v4684 = vsel %vm370, %v4639, 0
    %v4687 = vsel %vm370, %v4640, 0
    %v4690 = vsel %vm370, %v4641, 0
    %v4693 = vsel %vm370, %v4642, 0
    %4695 = vmatpush.msra.mxu0 0.0
    %4696 = vmatpush.msra.mxu0 0.0
    %4697 = vmatpush.msra.mxu0 0.0
    %4698 = vmatpush.msra.mxu0 0.0
    %4699 = vmatpush.msra.mxu0 0.0
    %4700 = vmatpush.msra.mxu0 0.0
    %4701 = vmatpush.msra.mxu0 0.0
    %4702 = vmatpush.msra.mxu0 0.0
    %4703 = vmatpush.msra.mxu0 0.0
    %4704 = vmatpush.msra.mxu0 0.0
    %4705 = vmatpush.msra.mxu0 0.0
    %4706 = vmatpush.msra.mxu0 0.0
    %4707 = vmatpush.msra.mxu0 %v4646
    %4708 = vmatpush.msra.mxu0 %v4645
    %4709 = vmatpush.msra.mxu0 %v4644
    %4710 = vmatpush.msra.mxu0 %v4643
    %4711 = vmatmul.f32.gmra.mxu0 %v4648
    %v4712 = vpop.f32.mrf.mxu0
    %v4713 = vadd.f32 0.0, %v4712
    %4714 = vmatmul.f32.gmra.mxu0 %v4651
    %v4715 = vpop.f32.mrf.mxu0
    %v4716 = vadd.f32 0.0, %v4715
    %4717 = vmatmul.f32.gmra.mxu0 %v4654
    %v4718 = vpop.f32.mrf.mxu0
    %v4719 = vadd.f32 0.0, %v4718
    %4720 = vmatmul.f32.gmra.mxu0 %v4657
    %v4721 = vpop.f32.mrf.mxu0
    %v4722 = vadd.f32 0.0, %v4721
    %4723 = vmatmul.f32.gmra.mxu0 %v4660
    %v4724 = vpop.f32.mrf.mxu0
    %v4725 = vadd.f32 0.0, %v4724
    %4726 = vmatmul.f32.gmra.mxu0 %v4663
    %v4727 = vpop.f32.mrf.mxu0
    %v4728 = vadd.f32 0.0, %v4727
    %4729 = vmatmul.f32.gmra.mxu0 %v4666
    %v4730 = vpop.f32.mrf.mxu0
    %v4731 = vadd.f32 0.0, %v4730
    %4732 = vmatmul.f32.gmra.mxu0 %v4669
    %v4733 = vpop.f32.mrf.mxu0
    %v4734 = vadd.f32 0.0, %v4733
    %4735 = vmatmul.f32.gmra.mxu0 %v4672
    %v4736 = vpop.f32.mrf.mxu0
    %v4737 = vadd.f32 0.0, %v4736
    %4738 = vmatmul.f32.gmra.mxu0 %v4675
    %v4739 = vpop.f32.mrf.mxu0
    %v4740 = vadd.f32 0.0, %v4739
    %4741 = vmatmul.f32.gmra.mxu0 %v4678
    %v4742 = vpop.f32.mrf.mxu0
    %v4743 = vadd.f32 0.0, %v4742
    %4744 = vmatmul.f32.gmra.mxu0 %v4681
    %v4745 = vpop.f32.mrf.mxu0
    %v4746 = vadd.f32 0.0, %v4745
    %4747 = vmatmul.f32.gmra.mxu0 %v4684
    %v4748 = vpop.f32.mrf.mxu0
    %v4749 = vadd.f32 0.0, %v4748
    %4750 = vmatmul.f32.gmra.mxu0 %v4687
    %v4751 = vpop.f32.mrf.mxu0
    %v4752 = vadd.f32 0.0, %v4751
    %4753 = vmatmul.f32.gmra.mxu0 %v4690
    %v4754 = vpop.f32.mrf.mxu0
    %v4755 = vadd.f32 0.0, %v4754
    %4756 = vmatmul.f32.gmra.mxu0 %v4693
    %v4757 = vpop.f32.mrf.mxu0
    %v4758 = vadd.f32 0.0, %v4757
    %4759 = vdwg.mxu0
    %v4760 = vadd.f32 %v3635, %v4713
    %v4761 = vadd.f32 %v3636, %v4716
    %v4762 = vadd.f32 %v3637, %v4719
    %v4763 = vadd.f32 %v3638, %v4722
    %v4764 = vadd.f32 %v3639, %v4725
    %v4765 = vadd.f32 %v3640, %v4728
    %v4766 = vadd.f32 %v3641, %v4731
    %v4767 = vadd.f32 %v3642, %v4734
    %v4768 = vadd.f32 %v3643, %v4737
    %v4769 = vadd.f32 %v3644, %v4740
    %v4770 = vadd.f32 %v3645, %v4743
    %v4771 = vadd.f32 %v3646, %v4746
    %v4772 = vadd.f32 %v3647, %v4749
    %v4773 = vadd.f32 %v3648, %v4752
    %v4774 = vadd.f32 %v3649, %v4755
    %v4775 = vadd.f32 %v3650, %v4758
    %v4776 = vld [vmem:[%s4] sm:$0x1]
    %v4778 = vperm.slane %v4776, 0
    %v4780 = vadd.f32 %v4760, %v4778
    %v4781 = vadd.f32 %v4761, %v4778
    %v4782 = vadd.f32 %v4762, %v4778
    %v4783 = vadd.f32 %v4763, %v4778
    %v4784 = vadd.f32 %v4764, %v4778
    %v4785 = vadd.f32 %v4765, %v4778
    %v4786 = vadd.f32 %v4766, %v4778
    %v4787 = vadd.f32 %v4767, %v4778
    %v4788 = vadd.f32 %v4768, %v4778
    %v4789 = vadd.f32 %v4769, %v4778
    %v4790 = vadd.f32 %v4770, %v4778
    %v4791 = vadd.f32 %v4771, %v4778
    %v4792 = vadd.f32 %v4772, %v4778
    %v4793 = vadd.f32 %v4773, %v4778
    %v4794 = vadd.f32 %v4774, %v4778
    %v4795 = vadd.f32 %v4775, %v4778
    %v4796 = vadd.f32 %v103, %v4780
    %v4797 = vadd.f32 %v104, %v4781
    %v4798 = vadd.f32 %v105, %v4782
    %v4799 = vadd.f32 %v106, %v4783
    %v4800 = vadd.f32 %v107, %v4784
    %v4801 = vadd.f32 %v108, %v4785
    %v4802 = vadd.f32 %v109, %v4786
    %v4803 = vadd.f32 %v110, %v4787
    %v4804 = vadd.f32 %v111, %v4788
    %v4805 = vadd.f32 %v112, %v4789
    %v4806 = vadd.f32 %v113, %v4790
    %v4807 = vadd.f32 %v114, %v4791
    %v4808 = vadd.f32 %v115, %v4792
    %v4809 = vadd.f32 %v116, %v4793
    %v4810 = vadd.f32 %v117, %v4794
    %v4811 = vadd.f32 %v118, %v4795
    %v4812 = vld [vmem:[#allocation10] sm:$0xff]
    %v4813 = vld [vmem:[#allocation10 + $0x8] sm:$0xff]
    %v4814 = vld [vmem:[#allocation10 + $0x10] sm:$0xff]
    %v4815 = vld [vmem:[#allocation10 + $0x18] sm:$0xff]
    %v4816 = vld [vmem:[#allocation10 + $0x20] sm:$0xff]
    %v4817 = vld [vmem:[#allocation10 + $0x28] sm:$0xff]
    %v4818 = vld [vmem:[#allocation10 + $0x30] sm:$0xff]
    %v4819 = vld [vmem:[#allocation10 + $0x38] sm:$0xff]
    %v4820 = vld [vmem:[#allocation10 + $0x40] sm:$0xff]
    %v4821 = vld [vmem:[#allocation10 + $0x48] sm:$0xff]
    %v4822 = vld [vmem:[#allocation10 + $0x50] sm:$0xff]
    %v4823 = vld [vmem:[#allocation10 + $0x58] sm:$0xff]
    %v4824 = vld [vmem:[#allocation10 + $0x60] sm:$0xff]
    %v4825 = vld [vmem:[#allocation10 + $0x68] sm:$0xff]
    %v4826 = vld [vmem:[#allocation10 + $0x70] sm:$0xff]
    %v4827 = vld [vmem:[#allocation10 + $0x78] sm:$0xff]
    %v4828 = vld [vmem:[%s6] sm:$0x1]
    %v4830 = vperm.slane %v4828, 0
    %4832 = vmatpush.msra.mxu0 %v4827
    %4833 = vmatpush.msra.mxu0 %v4826
    %4834 = vmatpush.msra.mxu0 %v4825
    %4835 = vmatpush.msra.mxu0 %v4824
    %4836 = vmatpush.msra.mxu0 %v4823
    %4837 = vmatpush.msra.mxu0 %v4822
    %4838 = vmatpush.msra.mxu0 %v4821
    %4839 = vmatpush.msra.mxu0 %v4820
    %4840 = vmatpush.msra.mxu0 %v4819
    %4841 = vmatpush.msra.mxu0 %v4818
    %4842 = vmatpush.msra.mxu0 %v4817
    %4843 = vmatpush.msra.mxu0 %v4816
    %4844 = vmatpush.msra.mxu0 %v4815
    %4845 = vmatpush.msra.mxu0 %v4814
    %4846 = vmatpush.msra.mxu0 %v4813
    %4847 = vmatpush.msra.mxu0 %v4812
    %4848 = vmatmul.f32.gmra.mxu0 %v4796
    %v4849 = vpop.f32.mrf.mxu0
    %v4850 = vadd.f32 %v4830, %v4849
    %4851 = vmatmul.f32.gmra.mxu0 %v4797
    %v4852 = vpop.f32.mrf.mxu0
    %v4853 = vadd.f32 %v4830, %v4852
    %4854 = vmatmul.f32.gmra.mxu0 %v4798
    %v4855 = vpop.f32.mrf.mxu0
    %v4856 = vadd.f32 %v4830, %v4855
    %4857 = vmatmul.f32.gmra.mxu0 %v4799
    %v4858 = vpop.f32.mrf.mxu0
    %v4859 = vadd.f32 %v4830, %v4858
    %4860 = vmatmul.f32.gmra.mxu0 %v4800
    %v4861 = vpop.f32.mrf.mxu0
    %v4862 = vadd.f32 %v4830, %v4861
    %4863 = vmatmul.f32.gmra.mxu0 %v4801
    %v4864 = vpop.f32.mrf.mxu0
    %v4865 = vadd.f32 %v4830, %v4864
    %4866 = vmatmul.f32.gmra.mxu0 %v4802
    %v4867 = vpop.f32.mrf.mxu0
    %v4868 = vadd.f32 %v4830, %v4867
    %4869 = vmatmul.f32.gmra.mxu0 %v4803
    %v4870 = vpop.f32.mrf.mxu0
    %v4871 = vadd.f32 %v4830, %v4870
    %4872 = vmatmul.f32.gmra.mxu0 %v4804
    %v4873 = vpop.f32.mrf.mxu0
    %v4874 = vadd.f32 %v4830, %v4873
    %4875 = vmatmul.f32.gmra.mxu0 %v4805
    %v4876 = vpop.f32.mrf.mxu0
    %v4877 = vadd.f32 %v4830, %v4876
    %4878 = vmatmul.f32.gmra.mxu0 %v4806
    %v4879 = vpop.f32.mrf.mxu0
    %v4880 = vadd.f32 %v4830, %v4879
    %4881 = vmatmul.f32.gmra.mxu0 %v4807
    %v4882 = vpop.f32.mrf.mxu0
    %v4883 = vadd.f32 %v4830, %v4882
    %4884 = vmatmul.f32.gmra.mxu0 %v4808
    %v4885 = vpop.f32.mrf.mxu0
    %v4886 = vadd.f32 %v4830, %v4885
    %4887 = vmatmul.f32.gmra.mxu0 %v4809
    %v4888 = vpop.f32.mrf.mxu0
    %v4889 = vadd.f32 %v4830, %v4888
    %4890 = vmatmul.f32.gmra.mxu0 %v4810
    %v4891 = vpop.f32.mrf.mxu0
    %v4892 = vadd.f32 %v4830, %v4891
    %4893 = vmatmul.f32.gmra.mxu0 %v4811
    %v4894 = vpop.f32.mrf.mxu0
    %v4895 = vadd.f32 %v4830, %v4894
    %4896 = vdwg.mxu0
    %v4897 = vadd.f32 %v4796, %v4850
    %v4898 = vadd.f32 %v4797, %v4853
    %v4899 = vadd.f32 %v4798, %v4856
    %v4900 = vadd.f32 %v4799, %v4859
    %v4901 = vadd.f32 %v4800, %v4862
    %v4902 = vadd.f32 %v4801, %v4865
    %v4903 = vadd.f32 %v4802, %v4868
    %v4904 = vadd.f32 %v4803, %v4871
    %v4905 = vadd.f32 %v4804, %v4874
    %v4906 = vadd.f32 %v4805, %v4877
    %v4907 = vadd.f32 %v4806, %v4880
    %v4908 = vadd.f32 %v4807, %v4883
    %v4909 = vadd.f32 %v4808, %v4886
    %v4910 = vadd.f32 %v4809, %v4889
    %v4911 = vadd.f32 %v4810, %v4892
    %v4912 = vadd.f32 %v4811, %v4895
    %4913 = vst [vmem:[#allocation11] sm:$0xff] %v4897
    %4914 = vst [vmem:[#allocation11 + $0x8] sm:$0xff] %v4898
    %4915 = vst [vmem:[#allocation11 + $0x10] sm:$0xff] %v4899
    %4916 = vst [vmem:[#allocation11 + $0x18] sm:$0xff] %v4900
    %4917 = vst [vmem:[#allocation11 + $0x20] sm:$0xff] %v4901
    %4918 = vst [vmem:[#allocation11 + $0x28] sm:$0xff] %v4902
    %4919 = vst [vmem:[#allocation11 + $0x30] sm:$0xff] %v4903
    %4920 = vst [vmem:[#allocation11 + $0x38] sm:$0xff] %v4904
    %4921 = vst [vmem:[#allocation11 + $0x40] sm:$0xff] %v4905
    %4922 = vst [vmem:[#allocation11 + $0x48] sm:$0xff] %v4906
    %4923 = vst [vmem:[#allocation11 + $0x50] sm:$0xff] %v4907
    %4924 = vst [vmem:[#allocation11 + $0x58] sm:$0xff] %v4908
    %4925 = vst [vmem:[#allocation11 + $0x60] sm:$0xff] %v4909
    %4926 = vst [vmem:[#allocation11 + $0x68] sm:$0xff] %v4910
    %4927 = vst [vmem:[#allocation11 + $0x70] sm:$0xff] %v4911
    %4928 = vst [vmem:[#allocation11 + $0x78] sm:$0xff] %v4912
    // Predicated region
    $region50: #{tpu_custom_call.1} parent=1 // pred_check
      _
    $region51: #{tpu_custom_call.1} parent=1 // pred_check_branch
      %4930 = sbr.rel (0) target = $region53
    $region52: #{tpu_custom_call.1} parent=1 // pred_region
      %4932 = vsyncadd [#allocation4], 0
      %s4933 = sshll.u32 [#allocation11], 4
      %s4934 = int_to_ptr.vmem [resolvable:$true] %s4933
      %s4935 = sshll.u32 %s7, 4
      %s4936 = int_to_ptr.hbm [resolvable:$true] %s4935
      %4941 = dma.vmem_to_hbm [thread:$0]  %s4934, 2048, %s4936, [#allocation4], 128, 128, 8
    $region53: #{tpu_custom_call.1} parent=1 // pred_fallthru
      _
    // Predicated region
    $region54: #{tpu_custom_call.1} parent=1 // pred_check
      _
    $region55: #{tpu_custom_call.1} parent=1 // pred_check_branch
      %4943 = sbr.rel (0) target = $region57
    $region56: #{tpu_custom_call.1} parent=1 // pred_region
      %4945 = dma.done [#allocation4], 2048
    $region57: #{tpu_custom_call.1} parent=1 // pred_fallthru
      _
    %4946 = vsyncpa [#allocation3], 1
    %4947 = vsyncpa [#allocation6], 1
    %4948 = vsyncpa [#allocation9], 1
    %4949 = vsyncpa [#allocation4], 1

// kernel: tpu_custom_call.1
$region0: #{tpu_custom_call.1}
  #allocation0 [shape = 'u32[]', space=smem, size = 0x4, offset = 0x4, fixed_abs, tag = 'smem constant byte address 0x4 - core index']
  #allocation1 [shape = 'u32[72,128]{1,0:T(1,128)}', space=vmem, size = 0x9000, scoped, tag = 'internal scratch']
  %s0 = inlined_call_operand.hbm [shape: f32[128,128], index: 0, kind: input, shape index: {}]
  %s1 = inlined_call_operand.hbm [shape: f32[128,384], index: 1, kind: input, shape index: {}]
  %s2 = inlined_call_operand.hbm [shape: f32[1,384], index: 2, kind: input, shape index: {}]
  %s3 = inlined_call_operand.hbm [shape: f32[128,128], index: 3, kind: input, shape index: {}]
  %s4 = inlined_call_operand.vmem [shape: f32[1,128], index: 4, kind: input, shape index: {}]
  %s5 = inlined_call_operand.hbm [shape: f32[128,128], index: 5, kind: input, shape index: {}]
  %s6 = inlined_call_operand.vmem [shape: f32[1,128], index: 6, kind: input, shape index: {}]
  %s7 = inlined_call_operand.hbm [shape: f32[128,128], index: 7, kind: output, shape index: {}]
  %s8 = sld [smem:[#allocation0]]
  $region58: #{tpu_custom_call.1} parent=0
    _
  %s10 = ssub.s32 1, %s8
  %s11 = scalar_select 0, %s10, %s8
  $region1: #{tpu_custom_call.1} parent=0
    #allocation2 [shape = 'u8[65536]{0}', space=vmem, size = 0x10000, scoped, tag = 'input window, operand 0, single buffered']
    #allocation3 [shape = 's32[1]{0}', space=sflag, size = 0x4, scoped, tag = 'scoped memory for tpu_custom_call.1']
    #allocation4 [shape = 's32[1]{0}', space=sflag, size = 0x4, scoped, tag = 'scoped memory for tpu_custom_call.1']
    #allocation5 [shape = 'u8[196608]{0}', space=vmem, size = 0x30000, scoped, tag = 'input window, operand 1, single buffered']
    #allocation6 [shape = 's32[1]{0}', space=sflag, size = 0x4, scoped, tag = 'scoped memory for tpu_custom_call.1']
    #allocation7 [shape = 'u8[1536]{0}', space=vmem, size = 0x800, scoped, tag = 'input window, operand 2, single buffered']
    #allocation8 [shape = 'u8[65536]{0}', space=vmem, size = 0x10000, scoped, tag = 'input window, operand 3, single buffered']
    #allocation9 [shape = 's32[1]{0}', space=sflag, size = 0x4, scoped, tag = 'scoped memory for tpu_custom_call.1']
    #allocation10 [shape = 'u8[65536]{0}', space=vmem, size = 0x10000, scoped, tag = 'input window, operand 5, single buffered']
    #allocation11 [shape = 'u8[65536]{0}', space=vmem, size = 0x10000, scoped, tag = 'output window, operand 0, single buffered']
    %12 = vsyncpa [#allocation3], 0
    %13 = vsyncpa [#allocation6], 0
    %14 = vsyncpa [#allocation9], 0
    %15 = vsyncpa [#allocation4], 0
    // Predicated region
    $region2: #{tpu_custom_call.1} parent=1 // pred_check
      _
    $region3: #{tpu_custom_call.1} parent=1 // pred_check_branch
      %17 = sbr.rel (0) target = $region5
    $region4: #{tpu_custom_call.1} parent=1 // pred_region
      %19 = vsyncadd [#allocation3], 0
      %s20 = sshll.u32 %s0, 4
      %s21 = int_to_ptr.hbm [resolvable:$true] %s20
      %s22 = sshll.u32 [#allocation2], 4
      %s23 = int_to_ptr.vmem [resolvable:$true] %s22
      %28 = dma.hbm_to_vmem [thread:$0]  %s21, 2048, %s23, [#allocation3], 128, 128, 8
    $region5: #{tpu_custom_call.1} parent=1 // pred_fallthru
      _
    // Predicated region
    $region6: #{tpu_custom_call.1} parent=1 // pred_check
      _
    $region7: #{tpu_custom_call.1} parent=1 // pred_check_branch
      %30 = sbr.rel (0) target = $region9
    $region8: #{tpu_custom_call.1} parent=1 // pred_region
      %32 = vsyncadd [#allocation6], 0
      %s33 = sshll.u32 %s1, 4
      %s34 = int_to_ptr.hbm [resolvable:$true] %s33
      %s35 = sshll.u32 [#allocation5], 4
      %s36 = int_to_ptr.vmem [resolvable:$true] %s35
      %41 = dma.hbm_to_vmem [thread:$0]  %s34, 6144, %s36, [#allocation6], 384, 384, 24
    $region9: #{tpu_custom_call.1} parent=1 // pred_fallthru
      _
    // Predicated region
    $region10: #{tpu_custom_call.1} parent=1 // pred_check
      _
    $region11: #{tpu_custom_call.1} parent=1 // pred_check_branch
      %43 = sbr.rel (0) target = $region13
    $region12: #{tpu_custom_call.1} parent=1 // pred_region
      %45 = vsyncadd [#allocation6], 0
      %s47 = sshll.u32 %s2, 4
      %s48 = int_to_ptr.hbm [resolvable:$true] %s47
      %s49 = sshll.u32 [#allocation7], 4
      %s50 = int_to_ptr.vmem [resolvable:$true] %s49
      %52 = dma.hbm_to_vmem [thread:$0]  %s48, 48, %s50, [#allocation6]
    $region13: #{tpu_custom_call.1} parent=1 // pred_fallthru
      _
    // Predicated region
    $region14: #{tpu_custom_call.1} parent=1 // pred_check
      _
    $region15: #{tpu_custom_call.1} parent=1 // pred_check_branch
      %54 = sbr.rel (0) target = $region17
    $region16: #{tpu_custom_call.1} parent=1 // pred_region
      %56 = vsyncadd [#allocation9], 0
      %s57 = sshll.u32 %s3, 4
      %s58 = int_to_ptr.hbm [resolvable:$true] %s57
      %s59 = sshll.u32 [#allocation8], 4
      %s60 = int_to_ptr.vmem [resolvable:$true] %s59
      %65 = dma.hbm_to_vmem [thread:$0]  %s58, 2048, %s60, [#allocation9], 128, 128, 8
    $region17: #{tpu_custom_call.1} parent=1 // pred_fallthru
      _
    // Predicated region
    $region18: #{tpu_custom_call.1} parent=1 // pred_check
      _
    $region19: #{tpu_custom_call.1} parent=1 // pred_check_branch
      %67 = sbr.rel (0) target = $region21
    $region20: #{tpu_custom_call.1} parent=1 // pred_region
      _
    $region21: #{tpu_custom_call.1} parent=1 // pred_fallthru
      _
    // Predicated region
    $region22: #{tpu_custom_call.1} parent=1 // pred_check
      _
    $region23: #{tpu_custom_call.1} parent=1 // pred_check_branch
      %69 = sbr.rel (0) target = $region25
    $region24: #{tpu_custom_call.1} parent=1 // pred_region
      %71 = vsyncadd [#allocation9], 0
      %s72 = sshll.u32 %s5, 4
      %s73 = int_to_ptr.hbm [resolvable:$true] %s72
      %s74 = sshll.u32 [#allocation10], 4
      %s75 = int_to_ptr.vmem [resolvable:$true] %s74
      %80 = dma.hbm_to_vmem [thread:$0]  %s73, 2048, %s75, [#allocation9], 128, 128, 8
    $region25: #{tpu_custom_call.1} parent=1 // pred_fallthru
      _
    // Predicated region
    $region26: #{tpu_custom_call.1} parent=1 // pred_check
      _
    $region27: #{tpu_custom_call.1} parent=1 // pred_check_branch
      %82 = sbr.rel (0) target = $region29
    $region28: #{tpu_custom_call.1} parent=1 // pred_region
      _
    $region29: #{tpu_custom_call.1} parent=1 // pred_fallthru
      _
    // Predicated region
    $region30: #{tpu_custom_call.1} parent=1 // pred_check
      _
    $region31: #{tpu_custom_call.1} parent=1 // pred_check_branch
      %84 = sbr.rel (0) target = $region33
    $region32: #{tpu_custom_call.1} parent=1 // pred_region
      %86 = dma.done [#allocation3], 2048
    $region33: #{tpu_custom_call.1} parent=1 // pred_fallthru
      _
    // Predicated region
    $region34: #{tpu_custom_call.1} parent=1 // pred_check
      _
    $region35: #{tpu_custom_call.1} parent=1 // pred_check_branch
      %88 = sbr.rel (0) target = $region37
    $region36: #{tpu_custom_call.1} parent=1 // pred_region
      %90 = dma.done [#allocation6], 6144
    $region37: #{tpu_custom_call.1} parent=1 // pred_fallthru
      _
    // Predicated region
    $region38: #{tpu_custom_call.1} parent=1 // pred_check
      _
    $region39: #{tpu_custom_call.1} parent=1 // pred_check_branch
      %92 = sbr.rel (0) target = $region41
    $region40: #{tpu_custom_call.1} parent=1 // pred_region
      %94 = dma.done [#allocation6], 48
    $region41: #{tpu_custom_call.1} parent=1 // pred_fallthru
      _
    // Predicated region
    $region42: #{tpu_custom_call.1} parent=1 // pred_check
      _
    $region43: #{tpu_custom_call.1} parent=1 // pred_check_branch
      %96 = sbr.rel (0) target = $region45
    $region44: #{tpu_custom_call.1} parent=1 // pred_region
      %98 = dma.done [#allocation9], 2048
    $region45: #{tpu_custom_call.1} parent=1 // pred_fallthru
      _
    // Predicated region
    $region46: #{tpu_custom_call.1} parent=1 // pred_check
      _
    $region47: #{tpu_custom_call.1} parent=1 // pred_check_branch
      %100 = sbr.rel (0) target = $region49
    $region48: #{tpu_custom_call.1} parent=1 // pred_region
      %102 = dma.done [#allocation9], 2048
    $region49: #{tpu_custom_call.1} parent=1 // pred_fallthru
      _
    %v103 = vld [vmem:[#allocation2] sm:$0xff]
    %v104 = vld [vmem:[#allocation2 + $0x8] sm:$0xff]
    %v105 = vld [vmem:[#allocation2 + $0x10] sm:$0xff]
    %v106 = vld [vmem:[#allocation2 + $0x18] sm:$0xff]
    %v107 = vld [vmem:[#allocation2 + $0x20] sm:$0xff]
    %v108 = vld [vmem:[#allocation2 + $0x28] sm:$0xff]
    %v109 = vld [vmem:[#allocation2 + $0x30] sm:$0xff]
    %v110 = vld [vmem:[#allocation2 + $0x38] sm:$0xff]
    %v111 = vld [vmem:[#allocation2 + $0x40] sm:$0xff]
    %v112 = vld [vmem:[#allocation2 + $0x48] sm:$0xff]
    %v113 = vld [vmem:[#allocation2 + $0x50] sm:$0xff]
    %v114 = vld [vmem:[#allocation2 + $0x58] sm:$0xff]
    %v115 = vld [vmem:[#allocation2 + $0x60] sm:$0xff]
    %v116 = vld [vmem:[#allocation2 + $0x68] sm:$0xff]
    %v117 = vld [vmem:[#allocation2 + $0x70] sm:$0xff]
    %v118 = vld [vmem:[#allocation2 + $0x78] sm:$0xff]
    %v119 = vld [vmem:[#allocation5] sm:$0xff]
    %v120 = vld [vmem:[#allocation5 + $0x8] sm:$0xff]
    %v121 = vld [vmem:[#allocation5 + $0x10] sm:$0xff]
    %v122 = vld [vmem:[#allocation5 + $0x18] sm:$0xff]
    %v123 = vld [vmem:[#allocation5 + $0x20] sm:$0xff]
    %v124 = vld [vmem:[#allocation5 + $0x28] sm:$0xff]
    %v125 = vld [vmem:[#allocation5 + $0x30] sm:$0xff]
    %v126 = vld [vmem:[#allocation5 + $0x38] sm:$0xff]
    %v127 = vld [vmem:[#allocation5 + $0x40] sm:$0xff]
    %v128 = vld [vmem:[#allocation5 + $0x48] sm:$0xff]
    %v129 = vld [vmem:[#allocation5 + $0x50] sm:$0xff]
    %v130 = vld [vmem:[#allocation5 + $0x58] sm:$0xff]
    %v131 = vld [vmem:[#allocation5 + $0x60] sm:$0xff]
    %v132 = vld [vmem:[#allocation5 + $0x68] sm:$0xff]
    %v133 = vld [vmem:[#allocation5 + $0x70] sm:$0xff]
    %v134 = vld [vmem:[#allocation5 + $0x78] sm:$0xff]
    %v135 = vld [vmem:[#allocation5 + $0x80] sm:$0xff]
    %v136 = vld [vmem:[#allocation5 + $0x88] sm:$0xff]
    %v137 = vld [vmem:[#allocation5 + $0x90] sm:$0xff]
    %v138 = vld [vmem:[#allocation5 + $0x98] sm:$0xff]
    %v139 = vld [vmem:[#allocation5 + $0xa0] sm:$0xff]
    %v140 = vld [vmem:[#allocation5 + $0xa8] sm:$0xff]
    %v141 = vld [vmem:[#allocation5 + $0xb0] sm:$0xff]
    %v142 = vld [vmem:[#allocation5 + $0xb8] sm:$0xff]
    %v143 = vld [vmem:[#allocation5 + $0xc0] sm:$0xff]
    %v144 = vld [vmem:[#allocation5 + $0xc8] sm:$0xff]
    %v145 = vld [vmem:[#allocation5 + $0xd0] sm:$0xff]
    %v146 = vld [vmem:[#allocation5 + $0xd8] sm:$0xff]
    %v147 = vld [vmem:[#allocation5 + $0xe0] sm:$0xff]
    %v148 = vld [vmem:[#allocation5 + $0xe8] sm:$0xff]
    %v149 = vld [vmem:[#allocation5 + $0xf0] sm:$0xff]
    %v150 = vld [vmem:[#allocation5 + $0xf8] sm:$0xff]
    %v151 = vld [vmem:[#allocation5 + $0x100] sm:$0xff]
    %v152 = vld [vmem:[#allocation5 + $0x108] sm:$0xff]
    %v153 = vld [vmem:[#allocation5 + $0x110] sm:$0xff]
    %v154 = vld [vmem:[#allocation5 + $0x118] sm:$0xff]
    %v155 = vld [vmem:[#allocation5 + $0x120] sm:$0xff]
    %v156 = vld [vmem:[#allocation5 + $0x128] sm:$0xff]
    %v157 = vld [vmem:[#allocation5 + $0x130] sm:$0xff]
    %v158 = vld [vmem:[#allocation5 + $0x138] sm:$0xff]
    %v159 = vld [vmem:[#allocation5 + $0x140] sm:$0xff]
    %v160 = vld [vmem:[#allocation5 + $0x148] sm:$0xff]
    %v161 = vld [vmem:[#allocation5 + $0x150] sm:$0xff]
    %v162 = vld [vmem:[#allocation5 + $0x158] sm:$0xff]
    %v163 = vld [vmem:[#allocation5 + $0x160] sm:$0xff]
    %v164 = vld [vmem:[#allocation5 + $0x168] sm:$0xff]
    %v165 = vld [vmem:[#allocation5 + $0x170] sm:$0xff]
    %v166 = vld [vmem:[#allocation5 + $0x178] sm:$0xff]
    %v167 = vld [vmem:[#allocation7] sm:$0x7]
    %v169 = vperm.slane %v167, 0
    %v170 = vperm.slane %v167, 1
    %v171 = vperm.slane %v167, 2
    %175 = vmatpush.msra.mxu0 %v164
    %176 = vmatpush.msra.mxu0 %v161
    %177 = vmatpush.msra.mxu0 %v158
    %178 = vmatpush.msra.mxu0 %v155
    %179 = vmatpush.msra.mxu0 %v152
    %180 = vmatpush.msra.mxu0 %v149
    %181 = vmatpush.msra.mxu0 %v146
    %182 = vmatpush.msra.mxu0 %v143
    %183 = vmatpush.msra.mxu0 %v140
    %184 = vmatpush.msra.mxu0 %v137
    %185 = vmatpush.msra.mxu0 %v134
    %186 = vmatpush.msra.mxu0 %v131
    %187 = vmatpush.msra.mxu0 %v128
    %188 = vmatpush.msra.mxu0 %v125
    %189 = vmatpush.msra.mxu0 %v122
    %190 = vmatpush.msra.mxu0 %v119
    %191 = vmatmul.f32.gmra.mxu0 %v103
    %v192 = vpop.f32.mrf.mxu0
    %v193 = vadd.f32 %v169, %v192
    %194 = vmatmul.f32.gmra.mxu0 %v104
    %v195 = vpop.f32.mrf.mxu0
    %v196 = vadd.f32 %v169, %v195
    %197 = vmatmul.f32.gmra.mxu0 %v105
    %v198 = vpop.f32.mrf.mxu0
    %v199 = vadd.f32 %v169, %v198
    %200 = vmatmul.f32.gmra.mxu0 %v106
    %v201 = vpop.f32.mrf.mxu0
    %v202 = vadd.f32 %v169, %v201
    %203 = vmatmul.f32.gmra.mxu0 %v107
    %v204 = vpop.f32.mrf.mxu0
    %v205 = vadd.f32 %v169, %v204
    %206 = vmatmul.f32.gmra.mxu0 %v108
    %v207 = vpop.f32.mrf.mxu0
    %v208 = vadd.f32 %v169, %v207
    %209 = vmatmul.f32.gmra.mxu0 %v109
    %v210 = vpop.f32.mrf.mxu0
    %v211 = vadd.f32 %v169, %v210
    %212 = vmatmul.f32.gmra.mxu0 %v110
    %v213 = vpop.f32.mrf.mxu0
    %v214 = vadd.f32 %v169, %v213
    %215 = vmatmul.f32.gmra.mxu0 %v111
    %v216 = vpop.f32.mrf.mxu0
    %v217 = vadd.f32 %v169, %v216
    %218 = vmatmul.f32.gmra.mxu0 %v112
    %v219 = vpop.f32.mrf.mxu0
    %v220 = vadd.f32 %v169, %v219
    %221 = vmatmul.f32.gmra.mxu0 %v113
    %v222 = vpop.f32.mrf.mxu0
    %v223 = vadd.f32 %v169, %v222
    %224 = vmatmul.f32.gmra.mxu0 %v114
    %v225 = vpop.f32.mrf.mxu0
    %v226 = vadd.f32 %v169, %v225
    %227 = vmatmul.f32.gmra.mxu0 %v115
    %v228 = vpop.f32.mrf.mxu0
    %v229 = vadd.f32 %v169, %v228
    %230 = vmatmul.f32.gmra.mxu0 %v116
    %v231 = vpop.f32.mrf.mxu0
    %v232 = vadd.f32 %v169, %v231
    %233 = vmatmul.f32.gmra.mxu0 %v117
    %v234 = vpop.f32.mrf.mxu0
    %v235 = vadd.f32 %v169, %v234
    %236 = vmatmul.f32.gmra.mxu0 %v118
    %v237 = vpop.f32.mrf.mxu0
    %v238 = vadd.f32 %v169, %v237
    %239 = vdwg.mxu0
    %240 = vmatpush.msra.mxu0 %v165
    %241 = vmatpush.msra.mxu0 %v162
    %242 = vmatpush.msra.mxu0 %v159
    %243 = vmatpush.msra.mxu0 %v156
    %244 = vmatpush.msra.mxu0 %v153
    %245 = vmatpush.msra.mxu0 %v150
    %246 = vmatpush.msra.mxu0 %v147
    %247 = vmatpush.msra.mxu0 %v144
    %248 = vmatpush.msra.mxu0 %v141
    %249 = vmatpush.msra.mxu0 %v138
    %250 = vmatpush.msra.mxu0 %v135
    %251 = vmatpush.msra.mxu0 %v132
    %252 = vmatpush.msra.mxu0 %v129
    %253 = vmatpush.msra.mxu0 %v126
    %254 = vmatpush.msra.mxu0 %v123
    %255 = vmatpush.msra.mxu0 %v120
    %256 = vmatmul.f32.gmra.mxu0 %v103
    %v257 = vpop.f32.mrf.mxu0
    %v258 = vadd.f32 %v170, %v257
    %259 = vmatmul.f32.gmra.mxu0 %v104
    %v260 = vpop.f32.mrf.mxu0
    %v261 = vadd.f32 %v170, %v260
    %262 = vmatmul.f32.gmra.mxu0 %v105
    %v263 = vpop.f32.mrf.mxu0
    %v264 = vadd.f32 %v170, %v263
    %265 = vmatmul.f32.gmra.mxu0 %v106
    %v266 = vpop.f32.mrf.mxu0
    %v267 = vadd.f32 %v170, %v266
    %268 = vmatmul.f32.gmra.mxu0 %v107
    %v269 = vpop.f32.mrf.mxu0
    %v270 = vadd.f32 %v170, %v269
    %271 = vmatmul.f32.gmra.mxu0 %v108
    %v272 = vpop.f32.mrf.mxu0
    %v273 = vadd.f32 %v170, %v272
    %274 = vmatmul.f32.gmra.mxu0 %v109
    %v275 = vpop.f32.mrf.mxu0
    %v276 = vadd.f32 %v170, %v275
    %277 = vmatmul.f32.gmra.mxu0 %v110
    %v278 = vpop.f32.mrf.mxu0
    %v279 = vadd.f32 %v170, %v278
    %280 = vmatmul.f32.gmra.mxu0 %v111
    %v281 = vpop.f32.mrf.mxu0
    %v282 = vadd.f32 %v170, %v281
    %283 = vmatmul.f32.gmra.mxu0 %v112
    %v284 = vpop.f32.mrf.mxu0
    %v285 = vadd.f32 %v170, %v284
    %286 = vmatmul.f32.gmra.mxu0 %v113
    %v287 = vpop.f32.mrf.mxu0
    %v288 = vadd.f32 %v170, %v287
    %289 = vmatmul.f32.gmra.mxu0 %v114
    %v290 = vpop.f32.mrf.mxu0
    %v291 = vadd.f32 %v170, %v290
    %292 = vmatmul.f32.gmra.mxu0 %v115
    %v293 = vpop.f32.mrf.mxu0
    %v294 = vadd.f32 %v170, %v293
    %295 = vmatmul.f32.gmra.mxu0 %v116
    %v296 = vpop.f32.mrf.mxu0
    %v297 = vadd.f32 %v170, %v296
    %298 = vmatmul.f32.gmra.mxu0 %v117
    %v299 = vpop.f32.mrf.mxu0
    %v300 = vadd.f32 %v170, %v299
    %301 = vmatmul.f32.gmra.mxu0 %v118
    %v302 = vpop.f32.mrf.mxu0
    %v303 = vadd.f32 %v170, %v302
    %304 = vdwg.mxu0
    %305 = vmatpush.msra.mxu0 %v166
    %306 = vmatpush.msra.mxu0 %v163
    %307 = vmatpush.msra.mxu0 %v160
    %308 = vmatpush.msra.mxu0 %v157
    %309 = vmatpush.msra.mxu0 %v154
    %310 = vmatpush.msra.mxu0 %v151
    %311 = vmatpush.msra.mxu0 %v148
    %312 = vmatpush.msra.mxu0 %v145
    %313 = vmatpush.msra.mxu0 %v142
    %314 = vmatpush.msra.mxu0 %v139
    %315 = vmatpush.msra.mxu0 %v136
    %316 = vmatpush.msra.mxu0 %v133
    %317 = vmatpush.msra.mxu0 %v130
    %318 = vmatpush.msra.mxu0 %v127
    %319 = vmatpush.msra.mxu0 %v124
    %320 = vmatpush.msra.mxu0 %v121
    %321 = vmatmul.f32.gmra.mxu0 %v103
    %v322 = vpop.f32.mrf.mxu0
    %v323 = vadd.f32 %v171, %v322
    %324 = vmatmul.f32.gmra.mxu0 %v104
    %v325 = vpop.f32.mrf.mxu0
    %v326 = vadd.f32 %v171, %v325
    %327 = vmatmul.f32.gmra.mxu0 %v105
    %v328 = vpop.f32.mrf.mxu0
    %v329 = vadd.f32 %v171, %v328
    %330 = vmatmul.f32.gmra.mxu0 %v106
    %v331 = vpop.f32.mrf.mxu0
    %v332 = vadd.f32 %v171, %v331
    %333 = vmatmul.f32.gmra.mxu0 %v107
    %v334 = vpop.f32.mrf.mxu0
    %v335 = vadd.f32 %v171, %v334
    %336 = vmatmul.f32.gmra.mxu0 %v108
    %v337 = vpop.f32.mrf.mxu0
    %v338 = vadd.f32 %v171, %v337
    %339 = vmatmul.f32.gmra.mxu0 %v109
    %v340 = vpop.f32.mrf.mxu0
    %v341 = vadd.f32 %v171, %v340
    %342 = vmatmul.f32.gmra.mxu0 %v110
    %v343 = vpop.f32.mrf.mxu0
    %v344 = vadd.f32 %v171, %v343
    %345 = vmatmul.f32.gmra.mxu0 %v111
    %v346 = vpop.f32.mrf.mxu0
    %v347 = vadd.f32 %v171, %v346
    %348 = vmatmul.f32.gmra.mxu0 %v112
    %v349 = vpop.f32.mrf.mxu0
    %v350 = vadd.f32 %v171, %v349
    %351 = vmatmul.f32.gmra.mxu0 %v113
    %v352 = vpop.f32.mrf.mxu0
    %v353 = vadd.f32 %v171, %v352
    %354 = vmatmul.f32.gmra.mxu0 %v114
    %v355 = vpop.f32.mrf.mxu0
    %v356 = vadd.f32 %v171, %v355
    %357 = vmatmul.f32.gmra.mxu0 %v115
    %v358 = vpop.f32.mrf.mxu0
    %v359 = vadd.f32 %v171, %v358
    %360 = vmatmul.f32.gmra.mxu0 %v116
    %v361 = vpop.f32.mrf.mxu0
    %v362 = vadd.f32 %v171, %v361
    %363 = vmatmul.f32.gmra.mxu0 %v117
    %v364 = vpop.f32.mrf.mxu0
    %v365 = vadd.f32 %v171, %v364
    %366 = vmatmul.f32.gmra.mxu0 %v118
    %v367 = vpop.f32.mrf.mxu0
    %v368 = vadd.f32 %v171, %v367
    %369 = vdwg.mxu0
    %vm370 = vcmask 261120
    %v372 = vsel %vm370, %v193, 0
    %v375 = vsel %vm370, %v196, 0
    %v378 = vsel %vm370, %v258, 0
    %v381 = vsel %vm370, %v261, 0
    %383 = vmatpush.xpose.msra.mxu0 0.0
    %384 = vmatpush.xpose.msra.mxu0 0.0
    %385 = vmatpush.xpose.msra.mxu0 0.0
    %386 = vmatpush.xpose.msra.mxu0 0.0
    %387 = vmatpush.xpose.msra.mxu0 0.0
    %388 = vmatpush.xpose.msra.mxu0 0.0
    %389 = vmatpush.xpose.msra.mxu0 0.0
    %390 = vmatpush.xpose.msra.mxu0 0.0
    %391 = vmatpush.xpose.msra.mxu0 0.0
    %392 = vmatpush.xpose.msra.mxu0 0.0
    %393 = vmatpush.xpose.msra.mxu0 0.0
    %394 = vmatpush.xpose.msra.mxu0 0.0
    %395 = vmatpush.xpose.msra.mxu0 0.0
    %396 = vmatpush.xpose.msra.mxu0 0.0
    %397 = vmatpush.xpose.msra.mxu0 %v381
    %398 = vmatpush.xpose.msra.mxu0 %v378
    %399 = vmatmul.f32.gmra.mxu0 %v372
    %v400 = vpop.f32.mrf.mxu0
    %v401 = vadd.f32 0.0, %v400
    %402 = vmatmul.f32.gmra.mxu0 %v375
    %v403 = vpop.f32.mrf.mxu0
    %v404 = vadd.f32 0.0, %v403
    %405 = vdwg.mxu0
    %v407 = vsel %vm370, %v199, 0
    %v410 = vsel %vm370, %v202, 0
    %v413 = vsel %vm370, %v264, 0
    %v416 = vsel %vm370, %v267, 0
    %418 = vmatpush.xpose.msra.mxu0 0.0
    %419 = vmatpush.xpose.msra.mxu0 0.0
    %420 = vmatpush.xpose.msra.mxu0 0.0
    %421 = vmatpush.xpose.msra.mxu0 0.0
    %422 = vmatpush.xpose.msra.mxu0 0.0
    %423 = vmatpush.xpose.msra.mxu0 0.0
    %424 = vmatpush.xpose.msra.mxu0 0.0
    %425 = vmatpush.xpose.msra.mxu0 0.0
    %426 = vmatpush.xpose.msra.mxu0 0.0
    %427 = vmatpush.xpose.msra.mxu0 0.0
    %428 = vmatpush.xpose.msra.mxu0 0.0
    %429 = vmatpush.xpose.msra.mxu0 0.0
    %430 = vmatpush.xpose.msra.mxu0 0.0
    %431 = vmatpush.xpose.msra.mxu0 0.0
    %432 = vmatpush.xpose.msra.mxu0 %v416
    %433 = vmatpush.xpose.msra.mxu0 %v413
    %434 = vmatmul.f32.gmra.mxu0 %v407
    %v435 = vpop.f32.mrf.mxu0
    %v436 = vadd.f32 0.0, %v435
    %437 = vmatmul.f32.gmra.mxu0 %v410
    %v438 = vpop.f32.mrf.mxu0
    %v439 = vadd.f32 0.0, %v438
    %440 = vdwg.mxu0
    %v442 = vsel %vm370, %v205, 0
    %v445 = vsel %vm370, %v208, 0
    %v448 = vsel %vm370, %v270, 0
    %v451 = vsel %vm370, %v273, 0
    %453 = vmatpush.xpose.msra.mxu0 0.0
    %454 = vmatpush.xpose.msra.mxu0 0.0
    %455 = vmatpush.xpose.msra.mxu0 0.0
    %456 = vmatpush.xpose.msra.mxu0 0.0
    %457 = vmatpush.xpose.msra.mxu0 0.0
    %458 = vmatpush.xpose.msra.mxu0 0.0
    %459 = vmatpush.xpose.msra.mxu0 0.0
    %460 = vmatpush.xpose.msra.mxu0 0.0
    %461 = vmatpush.xpose.msra.mxu0 0.0
    %462 = vmatpush.xpose.msra.mxu0 0.0
    %463 = vmatpush.xpose.msra.mxu0 0.0
    %464 = vmatpush.xpose.msra.mxu0 0.0
    %465 = vmatpush.xpose.msra.mxu0 0.0
    %466 = vmatpush.xpose.msra.mxu0 0.0
    %467 = vmatpush.xpose.msra.mxu0 %v451
    %468 = vmatpush.xpose.msra.mxu0 %v448
    %469 = vmatmul.f32.gmra.mxu0 %v442
    %v470 = vpop.f32.mrf.mxu0
    %v471 = vadd.f32 0.0, %v470
    %472 = vmatmul.f32.gmra.mxu0 %v445
    %v473 = vpop.f32.mrf.mxu0
    %v474 = vadd.f32 0.0, %v473
    %475 = vdwg.mxu0
    %v477 = vsel %vm370, %v211, 0
    %v480 = vsel %vm370, %v214, 0
    %v483 = vsel %vm370, %v276, 0
    %v486 = vsel %vm370, %v279, 0
    %488 = vmatpush.xpose.msra.mxu0 0.0
    %489 = vmatpush.xpose.msra.mxu0 0.0
    %490 = vmatpush.xpose.msra.mxu0 0.0
    %491 = vmatpush.xpose.msra.mxu0 0.0
    %492 = vmatpush.xpose.msra.mxu0 0.0
    %493 = vmatpush.xpose.msra.mxu0 0.0
    %494 = vmatpush.xpose.msra.mxu0 0.0
    %495 = vmatpush.xpose.msra.mxu0 0.0
    %496 = vmatpush.xpose.msra.mxu0 0.0
    %497 = vmatpush.xpose.msra.mxu0 0.0
    %498 = vmatpush.xpose.msra.mxu0 0.0
    %499 = vmatpush.xpose.msra.mxu0 0.0
    %500 = vmatpush.xpose.msra.mxu0 0.0
    %501 = vmatpush.xpose.msra.mxu0 0.0
    %502 = vmatpush.xpose.msra.mxu0 %v486
    %503 = vmatpush.xpose.msra.mxu0 %v483
    %504 = vmatmul.f32.gmra.mxu0 %v477
    %v505 = vpop.f32.mrf.mxu0
    %v506 = vadd.f32 0.0, %v505
    %507 = vmatmul.f32.gmra.mxu0 %v480
    %v508 = vpop.f32.mrf.mxu0
    %v509 = vadd.f32 0.0, %v508
    %510 = vdwg.mxu0
    %v512 = vsel %vm370, %v217, 0
    %v515 = vsel %vm370, %v220, 0
    %v518 = vsel %vm370, %v282, 0
    %v521 = vsel %vm370, %v285, 0
    %523 = vmatpush.xpose.msra.mxu0 0.0
    %524 = vmatpush.xpose.msra.mxu0 0.0
    %525 = vmatpush.xpose.msra.mxu0 0.0
    %526 = vmatpush.xpose.msra.mxu0 0.0
    %527 = vmatpush.xpose.msra.mxu0 0.0
    %528 = vmatpush.xpose.msra.mxu0 0.0
    %529 = vmatpush.xpose.msra.mxu0 0.0
    %530 = vmatpush.xpose.msra.mxu0 0.0
    %531 = vmatpush.xpose.msra.mxu0 0.0
    %532 = vmatpush.xpose.msra.mxu0 0.0
    %533 = vmatpush.xpose.msra.mxu0 0.0
    %534 = vmatpush.xpose.msra.mxu0 0.0
    %535 = vmatpush.xpose.msra.mxu0 0.0
    %536 = vmatpush.xpose.msra.mxu0 0.0
    %537 = vmatpush.xpose.msra.mxu0 %v521
    %538 = vmatpush.xpose.msra.mxu0 %v518
    %539 = vmatmul.f32.gmra.mxu0 %v512
    %v540 = vpop.f32.mrf.mxu0
    %v541 = vadd.f32 0.0, %v540
    %542 = vmatmul.f32.gmra.mxu0 %v515
    %v543 = vpop.f32.mrf.mxu0
    %v544 = vadd.f32 0.0, %v543
    %545 = vdwg.mxu0
    %v547 = vsel %vm370, %v223, 0
    %v550 = vsel %vm370, %v226, 0
    %v553 = vsel %vm370, %v288, 0
    %v556 = vsel %vm370, %v291, 0
    %558 = vmatpush.xpose.msra.mxu0 0.0
    %559 = vmatpush.xpose.msra.mxu0 0.0
    %560 = vmatpush.xpose.msra.mxu0 0.0
    %561 = vmatpush.xpose.msra.mxu0 0.0
    %562 = vmatpush.xpose.msra.mxu0 0.0
    %563 = vmatpush.xpose.msra.mxu0 0.0
    %564 = vmatpush.xpose.msra.mxu0 0.0
    %565 = vmatpush.xpose.msra.mxu0 0.0
    %566 = vmatpush.xpose.msra.mxu0 0.0
    %567 = vmatpush.xpose.msra.mxu0 0.0
    %568 = vmatpush.xpose.msra.mxu0 0.0
    %569 = vmatpush.xpose.msra.mxu0 0.0
    %570 = vmatpush.xpose.msra.mxu0 0.0
    %571 = vmatpush.xpose.msra.mxu0 0.0
    %572 = vmatpush.xpose.msra.mxu0 %v556
    %573 = vmatpush.xpose.msra.mxu0 %v553
    %574 = vmatmul.f32.gmra.mxu0 %v547
    %v575 = vpop.f32.mrf.mxu0
    %v576 = vadd.f32 0.0, %v575
    %577 = vmatmul.f32.gmra.mxu0 %v550
    %v578 = vpop.f32.mrf.mxu0
    %v579 = vadd.f32 0.0, %v578
    %580 = vdwg.mxu0
    %v582 = vsel %vm370, %v229, 0
    %v585 = vsel %vm370, %v232, 0
    %v588 = vsel %vm370, %v294, 0
    %v591 = vsel %vm370, %v297, 0
    %593 = vmatpush.xpose.msra.mxu0 0.0
    %594 = vmatpush.xpose.msra.mxu0 0.0
    %595 = vmatpush.xpose.msra.mxu0 0.0
    %596 = vmatpush.xpose.msra.mxu0 0.0
    %597 = vmatpush.xpose.msra.mxu0 0.0
    %598 = vmatpush.xpose.msra.mxu0 0.0
    %599 = vmatpush.xpose.msra.mxu0 0.0
    %600 = vmatpush.xpose.msra.mxu0 0.0
    %601 = vmatpush.xpose.msra.mxu0 0.0
    %602 = vmatpush.xpose.msra.mxu0 0.0
    %603 = vmatpush.xpose.msra.mxu0 0.0
    %604 = vmatpush.xpose.msra.mxu0 0.0
    %605 = vmatpush.xpose.msra.mxu0 0.0
    %606 = vmatpush.xpose.msra.mxu0 0.0
    %607 = vmatpush.xpose.msra.mxu0 %v591
    %608 = vmatpush.xpose.msra.mxu0 %v588
    %609 = vmatmul.f32.gmra.mxu0 %v582
    %v610 = vpop.f32.mrf.mxu0
    %v611 = vadd.f32 0.0, %v610
    %612 = vmatmul.f32.gmra.mxu0 %v585
    %v613 = vpop.f32.mrf.mxu0
    %v614 = vadd.f32 0.0, %v613
    %615 = vdwg.mxu0
    %v617 = vsel %vm370, %v235, 0
    %v620 = vsel %vm370, %v238, 0
    %v623 = vsel %vm370, %v300, 0
    %v626 = vsel %vm370, %v303, 0
    %628 = vmatpush.xpose.msra.mxu0 0.0
    %629 = vmatpush.xpose.msra.mxu0 0.0
    %630 = vmatpush.xpose.msra.mxu0 0.0
    %631 = vmatpush.xpose.msra.mxu0 0.0
    %632 = vmatpush.xpose.msra.mxu0 0.0
    %633 = vmatpush.xpose.msra.mxu0 0.0
    %634 = vmatpush.xpose.msra.mxu0 0.0
    %635 = vmatpush.xpose.msra.mxu0 0.0
    %636 = vmatpush.xpose.msra.mxu0 0.0
    %637 = vmatpush.xpose.msra.mxu0 0.0
    %638 = vmatpush.xpose.msra.mxu0 0.0
    %639 = vmatpush.xpose.msra.mxu0 0.0
    %640 = vmatpush.xpose.msra.mxu0 0.0
    %641 = vmatpush.xpose.msra.mxu0 0.0
    %642 = vmatpush.xpose.msra.mxu0 %v626
    %643 = vmatpush.xpose.msra.mxu0 %v623
    %644 = vmatmul.f32.gmra.mxu0 %v617
    %v645 = vpop.f32.mrf.mxu0
    %v646 = vadd.f32 0.0, %v645
    %647 = vmatmul.f32.gmra.mxu0 %v620
    %v648 = vpop.f32.mrf.mxu0
    %v649 = vadd.f32 0.0, %v648
    %650 = vdwg.mxu0
    %v651 = vmul.f32 %v401, 0.088388346
    %v652 = vmul.f32 %v404, 0.088388346
    %v653 = vmul.f32 %v436, 0.088388346
    %v654 = vmul.f32 %v439, 0.088388346
    %v655 = vmul.f32 %v471, 0.088388346
    %v656 = vmul.f32 %v474, 0.088388346
    %v657 = vmul.f32 %v506, 0.088388346
    %v658 = vmul.f32 %v509, 0.088388346
    %v659 = vmul.f32 %v541, 0.088388346
    %v660 = vmul.f32 %v544, 0.088388346
    %v661 = vmul.f32 %v576, 0.088388346
    %v662 = vmul.f32 %v579, 0.088388346
    %v663 = vmul.f32 %v611, 0.088388346
    %v664 = vmul.f32 %v614, 0.088388346
    %v665 = vmul.f32 %v646, 0.088388346
    %v666 = vmul.f32 %v649, 0.088388346
    %vm667 = vcmask 130048
    %v668 = vsel %vm667, %v651, -inf
    %669 = vmax.xlane.f32.xlu0 %v668
    %v670 = vpop.xlane.xlu0 %669
    %v671 = vsel %vm667, %v652, -inf
    %672 = vmax.xlane.f32.xlu0 %v671
    %v673 = vpop.xlane.xlu0 %672
    %v674 = vsel %vm667, %v653, -inf
    %675 = vmax.xlane.f32.xlu0 %v674
    %v676 = vpop.xlane.xlu0 %675
    %v677 = vsel %vm667, %v654, -inf
    %678 = vmax.xlane.f32.xlu0 %v677
    %v679 = vpop.xlane.xlu0 %678
    %v680 = vsel %vm667, %v655, -inf
    %681 = vmax.xlane.f32.xlu0 %v680
    %v682 = vpop.xlane.xlu0 %681
    %v683 = vsel %vm667, %v656, -inf
    %684 = vmax.xlane.f32.xlu0 %v683
    %v685 = vpop.xlane.xlu0 %684
    %v686 = vsel %vm667, %v657, -inf
    %687 = vmax.xlane.f32.xlu0 %v686
    %v688 = vpop.xlane.xlu0 %687
    %v689 = vsel %vm667, %v658, -inf
    %690 = vmax.xlane.f32.xlu0 %v689
    %v691 = vpop.xlane.xlu0 %690
    %v692 = vsel %vm667, %v659, -inf
    %693 = vmax.xlane.f32.xlu0 %v692
    %v694 = vpop.xlane.xlu0 %693
    %v695 = vsel %vm667, %v660, -inf
    %696 = vmax.xlane.f32.xlu0 %v695
    %v697 = vpop.xlane.xlu0 %696
    %v698 = vsel %vm667, %v661, -inf
    %699 = vmax.xlane.f32.xlu0 %v698
    %v700 = vpop.xlane.xlu0 %699
    %v701 = vsel %vm667, %v662, -inf
    %702 = vmax.xlane.f32.xlu0 %v701
    %v703 = vpop.xlane.xlu0 %702
    %v704 = vsel %vm667, %v663, -inf
    %705 = vmax.xlane.f32.xlu0 %v704
    %v706 = vpop.xlane.xlu0 %705
    %v707 = vsel %vm667, %v664, -inf
    %708 = vmax.xlane.f32.xlu0 %v707
    %v709 = vpop.xlane.xlu0 %708
    %v710 = vsel %vm667, %v665, -inf
    %711 = vmax.xlane.f32.xlu0 %v710
    %v712 = vpop.xlane.xlu0 %711
    %v713 = vsel %vm667, %v666, -inf
    %714 = vmax.xlane.f32.xlu0 %v713
    %v715 = vpop.xlane.xlu0 %714
    %v716 = vsub.f32 %v651, %v670
    %v717 = vsub.f32 %v652, %v673
    %v718 = vsub.f32 %v653, %v676
    %v719 = vsub.f32 %v654, %v679
    %v720 = vsub.f32 %v655, %v682
    %v721 = vsub.f32 %v656, %v685
    %v722 = vsub.f32 %v657, %v688
    %v723 = vsub.f32 %v658, %v691
    %v724 = vsub.f32 %v659, %v694
    %v725 = vsub.f32 %v660, %v697
    %v726 = vsub.f32 %v661, %v700
    %v727 = vsub.f32 %v662, %v703
    %v728 = vsub.f32 %v663, %v706
    %v729 = vsub.f32 %v664, %v709
    %v730 = vsub.f32 %v665, %v712
    %v731 = vsub.f32 %v666, %v715
    %v732 = vmul.f32 %v716, 1.442695
    %v733 = vpow.pop %v732
    %v734 = vmul.f32 %v717, 1.442695
    %v735 = vpow.pop %v734
    %v736 = vmul.f32 %v718, 1.442695
    %v737 = vpow.pop %v736
    %v738 = vmul.f32 %v719, 1.442695
    %v739 = vpow.pop %v738
    %v740 = vmul.f32 %v720, 1.442695
    %v741 = vpow.pop %v740
    %v742 = vmul.f32 %v721, 1.442695
    %v743 = vpow.pop %v742
    %v744 = vmul.f32 %v722, 1.442695
    %v745 = vpow.pop %v744
    %v746 = vmul.f32 %v723, 1.442695
    %v747 = vpow.pop %v746
    %v748 = vmul.f32 %v724, 1.442695
    %v749 = vpow.pop %v748
    %v750 = vmul.f32 %v725, 1.442695
    %v751 = vpow.pop %v750
    %v752 = vmul.f32 %v726, 1.442695
    %v753 = vpow.pop %v752
    %v754 = vmul.f32 %v727, 1.442695
    %v755 = vpow.pop %v754
    %v756 = vmul.f32 %v728, 1.442695
    %v757 = vpow.pop %v756
    %v758 = vmul.f32 %v729, 1.442695
    %v759 = vpow.pop %v758
    %v760 = vmul.f32 %v730, 1.442695
    %v761 = vpow.pop %v760
    %v762 = vmul.f32 %v731, 1.442695
    %v763 = vpow.pop %v762
    %v764 = vsel %vm667, %v733, 0.0
    %765 = vadd.xlane.f32.xlu0 %v764
    %v766 = vpop.xlane.xlu0 %765
    %v767 = vsel %vm667, %v735, 0.0
    %768 = vadd.xlane.f32.xlu0 %v767
    %v769 = vpop.xlane.xlu0 %768
    %v770 = vsel %vm667, %v737, 0.0
    %771 = vadd.xlane.f32.xlu0 %v770
    %v772 = vpop.xlane.xlu0 %771
    %v773 = vsel %vm667, %v739, 0.0
    %774 = vadd.xlane.f32.xlu0 %v773
    %v775 = vpop.xlane.xlu0 %774
    %v776 = vsel %vm667, %v741, 0.0
    %777 = vadd.xlane.f32.xlu0 %v776
    %v778 = vpop.xlane.xlu0 %777
    %v779 = vsel %vm667, %v743, 0.0
    %780 = vadd.xlane.f32.xlu0 %v779
    %v781 = vpop.xlane.xlu0 %780
    %v782 = vsel %vm667, %v745, 0.0
    %783 = vadd.xlane.f32.xlu0 %v782
    %v784 = vpop.xlane.xlu0 %783
    %v785 = vsel %vm667, %v747, 0.0
    %786 = vadd.xlane.f32.xlu0 %v785
    %v787 = vpop.xlane.xlu0 %786
    %v788 = vsel %vm667, %v749, 0.0
    %789 = vadd.xlane.f32.xlu0 %v788
    %v790 = vpop.xlane.xlu0 %789
    %v791 = vsel %vm667, %v751, 0.0
    %792 = vadd.xlane.f32.xlu0 %v791
    %v793 = vpop.xlane.xlu0 %792
    %v794 = vsel %vm667, %v753, 0.0
    %795 = vadd.xlane.f32.xlu0 %v794
    %v796 = vpop.xlane.xlu0 %795
    %v797 = vsel %vm667, %v755, 0.0
    %798 = vadd.xlane.f32.xlu0 %v797
    %v799 = vpop.xlane.xlu0 %798
    %v800 = vsel %vm667, %v757, 0.0
    %801 = vadd.xlane.f32.xlu0 %v800
    %v802 = vpop.xlane.xlu0 %801
    %v803 = vsel %vm667, %v759, 0.0
    %804 = vadd.xlane.f32.xlu0 %v803
    %v805 = vpop.xlane.xlu0 %804
    %v806 = vsel %vm667, %v761, 0.0
    %807 = vadd.xlane.f32.xlu0 %v806
    %v808 = vpop.xlane.xlu0 %807
    %v809 = vsel %vm667, %v763, 0.0
    %810 = vadd.xlane.f32.xlu0 %v809
    %v811 = vpop.xlane.xlu0 %810
    %v813 = vsel %vm667, %v733, 0
    %v816 = vsel %vm667, %v735, 0
    %818 = vmatpush.msra.mxu0 0.0
    %819 = vmatpush.msra.mxu0 0.0
    %820 = vmatpush.msra.mxu0 0.0
    %821 = vmatpush.msra.mxu0 0.0
    %822 = vmatpush.msra.mxu0 0.0
    %823 = vmatpush.msra.mxu0 0.0
    %824 = vmatpush.msra.mxu0 0.0
    %825 = vmatpush.msra.mxu0 0.0
    %826 = vmatpush.msra.mxu0 0.0
    %827 = vmatpush.msra.mxu0 0.0
    %828 = vmatpush.msra.mxu0 0.0
    %829 = vmatpush.msra.mxu0 0.0
    %830 = vmatpush.msra.mxu0 0.0
    %831 = vmatpush.msra.mxu0 0.0
    %832 = vmatpush.msra.mxu0 %v326
    %833 = vmatpush.msra.mxu0 %v323
    %834 = vmatmul.f32.gmra.mxu0 %v813
    %v835 = vpop.f32.mrf.mxu0
    %v836 = vadd.f32 0.0, %v835
    %837 = vmatmul.f32.gmra.mxu0 %v816
    %v838 = vpop.f32.mrf.mxu0
    %v839 = vadd.f32 0.0, %v838
    %840 = vdwg.mxu0
    %v842 = vsel %vm667, %v737, 0
    %v845 = vsel %vm667, %v739, 0
    %847 = vmatpush.msra.mxu0 0.0
    %848 = vmatpush.msra.mxu0 0.0
    %849 = vmatpush.msra.mxu0 0.0
    %850 = vmatpush.msra.mxu0 0.0
    %851 = vmatpush.msra.mxu0 0.0
    %852 = vmatpush.msra.mxu0 0.0
    %853 = vmatpush.msra.mxu0 0.0
    %854 = vmatpush.msra.mxu0 0.0
    %855 = vmatpush.msra.mxu0 0.0
    %856 = vmatpush.msra.mxu0 0.0
    %857 = vmatpush.msra.mxu0 0.0
    %858 = vmatpush.msra.mxu0 0.0
    %859 = vmatpush.msra.mxu0 0.0
    %860 = vmatpush.msra.mxu0 0.0
    %861 = vmatpush.msra.mxu0 %v332
    %862 = vmatpush.msra.mxu0 %v329
    %863 = vmatmul.f32.gmra.mxu0 %v842
    %v864 = vpop.f32.mrf.mxu0
    %v865 = vadd.f32 0.0, %v864
    %866 = vmatmul.f32.gmra.mxu0 %v845
    %v867 = vpop.f32.mrf.mxu0
    %v868 = vadd.f32 0.0, %v867
    %869 = vdwg.mxu0
    %v871 = vsel %vm667, %v741, 0
    %v874 = vsel %vm667, %v743, 0
    %876 = vmatpush.msra.mxu0 0.0
    %877 = vmatpush.msra.mxu0 0.0
    %878 = vmatpush.msra.mxu0 0.0
    %879 = vmatpush.msra.mxu0 0.0
    %880 = vmatpush.msra.mxu0 0.0
    %881 = vmatpush.msra.mxu0 0.0
    %882 = vmatpush.msra.mxu0 0.0
    %883 = vmatpush.msra.mxu0 0.0
    %884 = vmatpush.msra.mxu0 0.0
    %885 = vmatpush.msra.mxu0 0.0
    %886 = vmatpush.msra.mxu0 0.0
    %887 = vmatpush.msra.mxu0 0.0
    %888 = vmatpush.msra.mxu0 0.0
    %889 = vmatpush.msra.mxu0 0.0
    %890 = vmatpush.msra.mxu0 %v338
    %891 = vmatpush.msra.mxu0 %v335
    %892 = vmatmul.f32.gmra.mxu0 %v871
    %v893 = vpop.f32.mrf.mxu0
    %v894 = vadd.f32 0.0, %v893
    %895 = vmatmul.f32.gmra.mxu0 %v874
    %v896 = vpop.f32.mrf.mxu0
    %v897 = vadd.f32 0.0, %v896
    %898 = vdwg.mxu0
    %v900 = vsel %vm667, %v745, 0
    %v903 = vsel %vm667, %v747, 0
    %905 = vmatpush.msra.mxu0 0.0
    %906 = vmatpush.msra.mxu0 0.0
    %907 = vmatpush.msra.mxu0 0.0
    %908 = vmatpush.msra.mxu0 0.0
    %909 = vmatpush.msra.mxu0 0.0
    %910 = vmatpush.msra.mxu0 0.0
    %911 = vmatpush.msra.mxu0 0.0
    %912 = vmatpush.msra.mxu0 0.0
    %913 = vmatpush.msra.mxu0 0.0
    %914 = vmatpush.msra.mxu0 0.0
    %915 = vmatpush.msra.mxu0 0.0
    %916 = vmatpush.msra.mxu0 0.0
    %917 = vmatpush.msra.mxu0 0.0
    %918 = vmatpush.msra.mxu0 0.0
    %919 = vmatpush.msra.mxu0 %v344
    %920 = vmatpush.msra.mxu0 %v341
    %921 = vmatmul.f32.gmra.mxu0 %v900
    %v922 = vpop.f32.mrf.mxu0
    %v923 = vadd.f32 0.0, %v922
    %924 = vmatmul.f32.gmra.mxu0 %v903
    %v925 = vpop.f32.mrf.mxu0
    %v926 = vadd.f32 0.0, %v925
    %927 = vdwg.mxu0
    %v929 = vsel %vm667, %v749, 0
    %v932 = vsel %vm667, %v751, 0
    %934 = vmatpush.msra.mxu0 0.0
    %935 = vmatpush.msra.mxu0 0.0
    %936 = vmatpush.msra.mxu0 0.0
    %937 = vmatpush.msra.mxu0 0.0
    %938 = vmatpush.msra.mxu0 0.0
    %939 = vmatpush.msra.mxu0 0.0
    %940 = vmatpush.msra.mxu0 0.0
    %941 = vmatpush.msra.mxu0 0.0
    %942 = vmatpush.msra.mxu0 0.0
    %943 = vmatpush.msra.mxu0 0.0
    %944 = vmatpush.msra.mxu0 0.0
    %945 = vmatpush.msra.mxu0 0.0
    %946 = vmatpush.msra.mxu0 0.0
    %947 = vmatpush.msra.mxu0 0.0
    %948 = vmatpush.msra.mxu0 %v350
    %949 = vmatpush.msra.mxu0 %v347
    %950 = vmatmul.f32.gmra.mxu0 %v929
    %v951 = vpop.f32.mrf.mxu0
    %v952 = vadd.f32 0.0, %v951
    %953 = vmatmul.f32.gmra.mxu0 %v932
    %v954 = vpop.f32.mrf.mxu0
    %v955 = vadd.f32 0.0, %v954
    %956 = vdwg.mxu0
    %v958 = vsel %vm667, %v753, 0
    %v961 = vsel %vm667, %v755, 0
    %963 = vmatpush.msra.mxu0 0.0
    %964 = vmatpush.msra.mxu0 0.0
    %965 = vmatpush.msra.mxu0 0.0
    %966 = vmatpush.msra.mxu0 0.0
    %967 = vmatpush.msra.mxu0 0.0
    %968 = vmatpush.msra.mxu0 0.0
    %969 = vmatpush.msra.mxu0 0.0
    %970 = vmatpush.msra.mxu0 0.0
    %971 = vmatpush.msra.mxu0 0.0
    %972 = vmatpush.msra.mxu0 0.0
    %973 = vmatpush.msra.mxu0 0.0
    %974 = vmatpush.msra.mxu0 0.0
    %975 = vmatpush.msra.mxu0 0.0
    %976 = vmatpush.msra.mxu0 0.0
    %977 = vmatpush.msra.mxu0 %v356
    %978 = vmatpush.msra.mxu0 %v353
    %979 = vmatmul.f32.gmra.mxu0 %v958
    %v980 = vpop.f32.mrf.mxu0
    %v981 = vadd.f32 0.0, %v980
    %982 = vmatmul.f32.gmra.mxu0 %v961
    %v983 = vpop.f32.mrf.mxu0
    %v984 = vadd.f32 0.0, %v983
    %985 = vdwg.mxu0
    %v987 = vsel %vm667, %v757, 0
    %v990 = vsel %vm667, %v759, 0
    %992 = vmatpush.msra.mxu0 0.0
    %993 = vmatpush.msra.mxu0 0.0
    %994 = vmatpush.msra.mxu0 0.0
    %995 = vmatpush.msra.mxu0 0.0
    %996 = vmatpush.msra.mxu0 0.0
    %997 = vmatpush.msra.mxu0 0.0
    %998 = vmatpush.msra.mxu0 0.0
    %999 = vmatpush.msra.mxu0 0.0
    %1000 = vmatpush.msra.mxu0 0.0
    %1001 = vmatpush.msra.mxu0 0.0
    %1002 = vmatpush.msra.mxu0 0.0
    %1003 = vmatpush.msra.mxu0 0.0
    %1004 = vmatpush.msra.mxu0 0.0
    %1005 = vmatpush.msra.mxu0 0.0
    %1006 = vmatpush.msra.mxu0 %v362
    %1007 = vmatpush.msra.mxu0 %v359
    %1008 = vmatmul.f32.gmra.mxu0 %v987
    %v1009 = vpop.f32.mrf.mxu0
    %v1010 = vadd.f32 0.0, %v1009
    %1011 = vmatmul.f32.gmra.mxu0 %v990
    %v1012 = vpop.f32.mrf.mxu0
    %v1013 = vadd.f32 0.0, %v1012
    %1014 = vdwg.mxu0
    %v1016 = vsel %vm667, %v761, 0
    %v1019 = vsel %vm667, %v763, 0
    %1021 = vmatpush.msra.mxu0 0.0
    %1022 = vmatpush.msra.mxu0 0.0
    %1023 = vmatpush.msra.mxu0 0.0
    %1024 = vmatpush.msra.mxu0 0.0
    %1025 = vmatpush.msra.mxu0 0.0
    %1026 = vmatpush.msra.mxu0 0.0
    %1027 = vmatpush.msra.mxu0 0.0
    %1028 = vmatpush.msra.mxu0 0.0
    %1029 = vmatpush.msra.mxu0 0.0
    %1030 = vmatpush.msra.mxu0 0.0
    %1031 = vmatpush.msra.mxu0 0.0
    %1032 = vmatpush.msra.mxu0 0.0
    %1033 = vmatpush.msra.mxu0 0.0
    %1034 = vmatpush.msra.mxu0 0.0
    %1035 = vmatpush.msra.mxu0 %v368
    %1036 = vmatpush.msra.mxu0 %v365
    %1037 = vmatmul.f32.gmra.mxu0 %v1016
    %v1038 = vpop.f32.mrf.mxu0
    %v1039 = vadd.f32 0.0, %v1038
    %1040 = vmatmul.f32.gmra.mxu0 %v1019
    %v1041 = vpop.f32.mrf.mxu0
    %v1042 = vadd.f32 0.0, %v1041
    %1043 = vdwg.mxu0
    %v1044 = vrcp.pop %v766
    %v1045 = vmul.f32 %v766, %v1044
    %v1046 = vsub.f32 1.0, %v1045
    %v1047 = vmul.f32 %v1044, %v1046
    %v1048 = vadd.f32 %v1044, %v1047
    %vm1049 = vweird.f32 %v766
    %vm1050 = vweird.f32 %v1044
    %vm1051 = vmor %vm1049, %vm1050
    %v1052 = vsel %vm1051, %v1044, %v1048
    %v1053 = vand.u32 2147483647, %v766
    %vm1054 = vcmp.eq.f32.partialorder %v1053, 8.507059e+37
    %v1055 = vand.u32 %v766, 2147483648
    %v1056 = vor.u32 1.1754944e-38, %v1055
    %v1057 = vsel %vm1054, %v1056, %v1052
    %v1058 = vrcp.pop %v769
    %v1059 = vmul.f32 %v769, %v1058
    %v1060 = vsub.f32 1.0, %v1059
    %v1061 = vmul.f32 %v1058, %v1060
    %v1062 = vadd.f32 %v1058, %v1061
    %vm1063 = vweird.f32 %v769
    %vm1064 = vweird.f32 %v1058
    %vm1065 = vmor %vm1063, %vm1064
    %v1066 = vsel %vm1065, %v1058, %v1062
    %v1067 = vand.u32 2147483647, %v769
    %vm1068 = vcmp.eq.f32.partialorder %v1067, 8.507059e+37
    %v1069 = vand.u32 %v769, 2147483648
    %v1070 = vor.u32 1.1754944e-38, %v1069
    %v1071 = vsel %vm1068, %v1070, %v1066
    %v1072 = vrcp.pop %v772
    %v1073 = vmul.f32 %v772, %v1072
    %v1074 = vsub.f32 1.0, %v1073
    %v1075 = vmul.f32 %v1072, %v1074
    %v1076 = vadd.f32 %v1072, %v1075
    %vm1077 = vweird.f32 %v772
    %vm1078 = vweird.f32 %v1072
    %vm1079 = vmor %vm1077, %vm1078
    %v1080 = vsel %vm1079, %v1072, %v1076
    %v1081 = vand.u32 2147483647, %v772
    %vm1082 = vcmp.eq.f32.partialorder %v1081, 8.507059e+37
    %v1083 = vand.u32 %v772, 2147483648
    %v1084 = vor.u32 1.1754944e-38, %v1083
    %v1085 = vsel %vm1082, %v1084, %v1080
    %v1086 = vrcp.pop %v775
    %v1087 = vmul.f32 %v775, %v1086
    %v1088 = vsub.f32 1.0, %v1087
    %v1089 = vmul.f32 %v1086, %v1088
    %v1090 = vadd.f32 %v1086, %v1089
    %vm1091 = vweird.f32 %v775
    %vm1092 = vweird.f32 %v1086
    %vm1093 = vmor %vm1091, %vm1092
    %v1094 = vsel %vm1093, %v1086, %v1090
    %v1095 = vand.u32 2147483647, %v775
    %vm1096 = vcmp.eq.f32.partialorder %v1095, 8.507059e+37
    %v1097 = vand.u32 %v775, 2147483648
    %v1098 = vor.u32 1.1754944e-38, %v1097
    %v1099 = vsel %vm1096, %v1098, %v1094
    %v1100 = vrcp.pop %v778
    %v1101 = vmul.f32 %v778, %v1100
    %v1102 = vsub.f32 1.0, %v1101
    %v1103 = vmul.f32 %v1100, %v1102
    %v1104 = vadd.f32 %v1100, %v1103
    %vm1105 = vweird.f32 %v778
    %vm1106 = vweird.f32 %v1100
    %vm1107 = vmor %vm1105, %vm1106
    %v1108 = vsel %vm1107, %v1100, %v1104
    %v1109 = vand.u32 2147483647, %v778
    %vm1110 = vcmp.eq.f32.partialorder %v1109, 8.507059e+37
    %v1111 = vand.u32 %v778, 2147483648
    %v1112 = vor.u32 1.1754944e-38, %v1111
    %v1113 = vsel %vm1110, %v1112, %v1108
    %v1114 = vrcp.pop %v781
    %v1115 = vmul.f32 %v781, %v1114
    %v1116 = vsub.f32 1.0, %v1115
    %v1117 = vmul.f32 %v1114, %v1116
    %v1118 = vadd.f32 %v1114, %v1117
    %vm1119 = vweird.f32 %v781
    %vm1120 = vweird.f32 %v1114
    %vm1121 = vmor %vm1119, %vm1120
    %v1122 = vsel %vm1121, %v1114, %v1118
    %v1123 = vand.u32 2147483647, %v781
    %vm1124 = vcmp.eq.f32.partialorder %v1123, 8.507059e+37
    %v1125 = vand.u32 %v781, 2147483648
    %v1126 = vor.u32 1.1754944e-38, %v1125
    %v1127 = vsel %vm1124, %v1126, %v1122
    %v1128 = vrcp.pop %v784
    %v1129 = vmul.f32 %v784, %v1128
    %v1130 = vsub.f32 1.0, %v1129
    %v1131 = vmul.f32 %v1128, %v1130
    %v1132 = vadd.f32 %v1128, %v1131
    %vm1133 = vweird.f32 %v784
    %vm1134 = vweird.f32 %v1128
    %vm1135 = vmor %vm1133, %vm1134
    %v1136 = vsel %vm1135, %v1128, %v1132
    %v1137 = vand.u32 2147483647, %v784
    %vm1138 = vcmp.eq.f32.partialorder %v1137, 8.507059e+37
    %v1139 = vand.u32 %v784, 2147483648
    %v1140 = vor.u32 1.1754944e-38, %v1139
    %v1141 = vsel %vm1138, %v1140, %v1136
    %v1142 = vrcp.pop %v787
    %v1143 = vmul.f32 %v787, %v1142
    %v1144 = vsub.f32 1.0, %v1143
    %v1145 = vmul.f32 %v1142, %v1144
    %v1146 = vadd.f32 %v1142, %v1145
    %vm1147 = vweird.f32 %v787
    %vm1148 = vweird.f32 %v1142
    %vm1149 = vmor %vm1147, %vm1148
    %v1150 = vsel %vm1149, %v1142, %v1146
    %v1151 = vand.u32 2147483647, %v787
    %vm1152 = vcmp.eq.f32.partialorder %v1151, 8.507059e+37
    %v1153 = vand.u32 %v787, 2147483648
    %v1154 = vor.u32 1.1754944e-38, %v1153
    %v1155 = vsel %vm1152, %v1154, %v1150
    %v1156 = vrcp.pop %v790
    %v1157 = vmul.f32 %v790, %v1156
    %v1158 = vsub.f32 1.0, %v1157
    %v1159 = vmul.f32 %v1156, %v1158
    %v1160 = vadd.f32 %v1156, %v1159
    %vm1161 = vweird.f32 %v790
    %vm1162 = vweird.f32 %v1156
    %vm1163 = vmor %vm1161, %vm1162
    %v1164 = vsel %vm1163, %v1156, %v1160
    %v1165 = vand.u32 2147483647, %v790
    %vm1166 = vcmp.eq.f32.partialorder %v1165, 8.507059e+37
    %v1167 = vand.u32 %v790, 2147483648
    %v1168 = vor.u32 1.1754944e-38, %v1167
    %v1169 = vsel %vm1166, %v1168, %v1164
    %v1170 = vrcp.pop %v793
    %v1171 = vmul.f32 %v793, %v1170
    %v1172 = vsub.f32 1.0, %v1171
    %v1173 = vmul.f32 %v1170, %v1172
    %v1174 = vadd.f32 %v1170, %v1173
    %vm1175 = vweird.f32 %v793
    %vm1176 = vweird.f32 %v1170
    %vm1177 = vmor %vm1175, %vm1176
    %v1178 = vsel %vm1177, %v1170, %v1174
    %v1179 = vand.u32 2147483647, %v793
    %vm1180 = vcmp.eq.f32.partialorder %v1179, 8.507059e+37
    %v1181 = vand.u32 %v793, 2147483648
    %v1182 = vor.u32 1.1754944e-38, %v1181
    %v1183 = vsel %vm1180, %v1182, %v1178
    %v1184 = vrcp.pop %v796
    %v1185 = vmul.f32 %v796, %v1184
    %v1186 = vsub.f32 1.0, %v1185
    %v1187 = vmul.f32 %v1184, %v1186
    %v1188 = vadd.f32 %v1184, %v1187
    %vm1189 = vweird.f32 %v796
    %vm1190 = vweird.f32 %v1184
    %vm1191 = vmor %vm1189, %vm1190
    %v1192 = vsel %vm1191, %v1184, %v1188
    %v1193 = vand.u32 2147483647, %v796
    %vm1194 = vcmp.eq.f32.partialorder %v1193, 8.507059e+37
    %v1195 = vand.u32 %v796, 2147483648
    %v1196 = vor.u32 1.1754944e-38, %v1195
    %v1197 = vsel %vm1194, %v1196, %v1192
    %v1198 = vrcp.pop %v799
    %v1199 = vmul.f32 %v799, %v1198
    %v1200 = vsub.f32 1.0, %v1199
    %v1201 = vmul.f32 %v1198, %v1200
    %v1202 = vadd.f32 %v1198, %v1201
    %vm1203 = vweird.f32 %v799
    %vm1204 = vweird.f32 %v1198
    %vm1205 = vmor %vm1203, %vm1204
    %v1206 = vsel %vm1205, %v1198, %v1202
    %v1207 = vand.u32 2147483647, %v799
    %vm1208 = vcmp.eq.f32.partialorder %v1207, 8.507059e+37
    %v1209 = vand.u32 %v799, 2147483648
    %v1210 = vor.u32 1.1754944e-38, %v1209
    %v1211 = vsel %vm1208, %v1210, %v1206
    %v1212 = vrcp.pop %v802
    %v1213 = vmul.f32 %v802, %v1212
    %v1214 = vsub.f32 1.0, %v1213
    %v1215 = vmul.f32 %v1212, %v1214
    %v1216 = vadd.f32 %v1212, %v1215
    %vm1217 = vweird.f32 %v802
    %vm1218 = vweird.f32 %v1212
    %vm1219 = vmor %vm1217, %vm1218
    %v1220 = vsel %vm1219, %v1212, %v1216
    %v1221 = vand.u32 2147483647, %v802
    %vm1222 = vcmp.eq.f32.partialorder %v1221, 8.507059e+37
    %v1223 = vand.u32 %v802, 2147483648
    %v1224 = vor.u32 1.1754944e-38, %v1223
    %v1225 = vsel %vm1222, %v1224, %v1220
    %v1226 = vrcp.pop %v805
    %v1227 = vmul.f32 %v805, %v1226
    %v1228 = vsub.f32 1.0, %v1227
    %v1229 = vmul.f32 %v1226, %v1228
    %v1230 = vadd.f32 %v1226, %v1229
    %vm1231 = vweird.f32 %v805
    %vm1232 = vweird.f32 %v1226
    %vm1233 = vmor %vm1231, %vm1232
    %v1234 = vsel %vm1233, %v1226, %v1230
    %v1235 = vand.u32 2147483647, %v805
    %vm1236 = vcmp.eq.f32.partialorder %v1235, 8.507059e+37
    %v1237 = vand.u32 %v805, 2147483648
    %v1238 = vor.u32 1.1754944e-38, %v1237
    %v1239 = vsel %vm1236, %v1238, %v1234
    %v1240 = vrcp.pop %v808
    %v1241 = vmul.f32 %v808, %v1240
    %v1242 = vsub.f32 1.0, %v1241
    %v1243 = vmul.f32 %v1240, %v1242
    %v1244 = vadd.f32 %v1240, %v1243
    %vm1245 = vweird.f32 %v808
    %vm1246 = vweird.f32 %v1240
    %vm1247 = vmor %vm1245, %vm1246
    %v1248 = vsel %vm1247, %v1240, %v1244
    %v1249 = vand.u32 2147483647, %v808
    %vm1250 = vcmp.eq.f32.partialorder %v1249, 8.507059e+37
    %v1251 = vand.u32 %v808, 2147483648
    %v1252 = vor.u32 1.1754944e-38, %v1251
    %v1253 = vsel %vm1250, %v1252, %v1248
    %v1254 = vrcp.pop %v811
    %v1255 = vmul.f32 %v811, %v1254
    %v1256 = vsub.f32 1.0, %v1255
    %v1257 = vmul.f32 %v1254, %v1256
    %v1258 = vadd.f32 %v1254, %v1257
    %vm1259 = vweird.f32 %v811
    %vm1260 = vweird.f32 %v1254
    %vm1261 = vmor %vm1259, %vm1260
    %v1262 = vsel %vm1261, %v1254, %v1258
    %v1263 = vand.u32 2147483647, %v811
    %vm1264 = vcmp.eq.f32.partialorder %v1263, 8.507059e+37
    %v1265 = vand.u32 %v811, 2147483648
    %v1266 = vor.u32 1.1754944e-38, %v1265
    %v1267 = vsel %vm1264, %v1266, %v1262
    %v1268 = vmul.f32 %v836, %v1057
    %v1269 = vmul.f32 %v839, %v1071
    %v1270 = vmul.f32 %v865, %v1085
    %v1271 = vmul.f32 %v868, %v1099
    %v1272 = vmul.f32 %v894, %v1113
    %v1273 = vmul.f32 %v897, %v1127
    %v1274 = vmul.f32 %v923, %v1141
    %v1275 = vmul.f32 %v926, %v1155
    %v1276 = vmul.f32 %v952, %v1169
    %v1277 = vmul.f32 %v955, %v1183
    %v1278 = vmul.f32 %v981, %v1197
    %v1279 = vmul.f32 %v984, %v1211
    %v1280 = vmul.f32 %v1010, %v1225
    %v1281 = vmul.f32 %v1013, %v1239
    %v1282 = vmul.f32 %v1039, %v1253
    %v1283 = vmul.f32 %v1042, %v1267
    %v1284 = vld [vmem:[#allocation8] sm:$0xff]
    %v1285 = vld [vmem:[#allocation8 + $0x8] sm:$0xff]
    %v1286 = vld [vmem:[#allocation8 + $0x10] sm:$0xff]
    %v1287 = vld [vmem:[#allocation8 + $0x18] sm:$0xff]
    %1288 = vrot.lane.b32.xlu0 %v193, 96
    %v1289 = vpop.permute.xlu0 %1288
    %1290 = vrot.lane.b32.xlu0 %v196, 96
    %v1291 = vpop.permute.xlu0 %1290
    %1292 = vrot.lane.b32.xlu0 %v258, 96
    %v1293 = vpop.permute.xlu0 %1292
    %1294 = vrot.lane.b32.xlu0 %v261, 96
    %v1295 = vpop.permute.xlu0 %1294
    %v1296 = vsel %vm370, %v1289, 0
    %v1298 = vsel %vm370, %v1291, 0
    %v1300 = vsel %vm370, %v1293, 0
    %v1302 = vsel %vm370, %v1295, 0
    %1304 = vmatpush.xpose.msra.mxu0 0.0
    %1305 = vmatpush.xpose.msra.mxu0 0.0
    %1306 = vmatpush.xpose.msra.mxu0 0.0
    %1307 = vmatpush.xpose.msra.mxu0 0.0
    %1308 = vmatpush.xpose.msra.mxu0 0.0
    %1309 = vmatpush.xpose.msra.mxu0 0.0
    %1310 = vmatpush.xpose.msra.mxu0 0.0
    %1311 = vmatpush.xpose.msra.mxu0 0.0
    %1312 = vmatpush.xpose.msra.mxu0 0.0
    %1313 = vmatpush.xpose.msra.mxu0 0.0
    %1314 = vmatpush.xpose.msra.mxu0 0.0
    %1315 = vmatpush.xpose.msra.mxu0 0.0
    %1316 = vmatpush.xpose.msra.mxu0 0.0
    %1317 = vmatpush.xpose.msra.mxu0 0.0
    %1318 = vmatpush.xpose.msra.mxu0 %v1302
    %1319 = vmatpush.xpose.msra.mxu0 %v1300
    %1320 = vmatmul.f32.gmra.mxu0 %v1296
    %v1321 = vpop.f32.mrf.mxu0
    %v1322 = vadd.f32 0.0, %v1321
    %1323 = vmatmul.f32.gmra.mxu0 %v1298
    %v1324 = vpop.f32.mrf.mxu0
    %v1325 = vadd.f32 0.0, %v1324
    %1326 = vdwg.mxu0
    %1327 = vrot.lane.b32.xlu0 %v199, 96
    %v1328 = vpop.permute.xlu0 %1327
    %1329 = vrot.lane.b32.xlu0 %v202, 96
    %v1330 = vpop.permute.xlu0 %1329
    %1331 = vrot.lane.b32.xlu0 %v264, 96
    %v1332 = vpop.permute.xlu0 %1331
    %1333 = vrot.lane.b32.xlu0 %v267, 96
    %v1334 = vpop.permute.xlu0 %1333
    %v1335 = vsel %vm370, %v1328, 0
    %v1337 = vsel %vm370, %v1330, 0
    %v1339 = vsel %vm370, %v1332, 0
    %v1341 = vsel %vm370, %v1334, 0
    %1343 = vmatpush.xpose.msra.mxu0 0.0
    %1344 = vmatpush.xpose.msra.mxu0 0.0
    %1345 = vmatpush.xpose.msra.mxu0 0.0
    %1346 = vmatpush.xpose.msra.mxu0 0.0
    %1347 = vmatpush.xpose.msra.mxu0 0.0
    %1348 = vmatpush.xpose.msra.mxu0 0.0
    %1349 = vmatpush.xpose.msra.mxu0 0.0
    %1350 = vmatpush.xpose.msra.mxu0 0.0
    %1351 = vmatpush.xpose.msra.mxu0 0.0
    %1352 = vmatpush.xpose.msra.mxu0 0.0
    %1353 = vmatpush.xpose.msra.mxu0 0.0
    %1354 = vmatpush.xpose.msra.mxu0 0.0
    %1355 = vmatpush.xpose.msra.mxu0 0.0
    %1356 = vmatpush.xpose.msra.mxu0 0.0
    %1357 = vmatpush.xpose.msra.mxu0 %v1341
    %1358 = vmatpush.xpose.msra.mxu0 %v1339
    %1359 = vmatmul.f32.gmra.mxu0 %v1335
    %v1360 = vpop.f32.mrf.mxu0
    %v1361 = vadd.f32 0.0, %v1360
    %1362 = vmatmul.f32.gmra.mxu0 %v1337
    %v1363 = vpop.f32.mrf.mxu0
    %v1364 = vadd.f32 0.0, %v1363
    %1365 = vdwg.mxu0
    %1366 = vrot.lane.b32.xlu0 %v205, 96
    %v1367 = vpop.permute.xlu0 %1366
    %1368 = vrot.lane.b32.xlu0 %v208, 96
    %v1369 = vpop.permute.xlu0 %1368
    %1370 = vrot.lane.b32.xlu0 %v270, 96
    %v1371 = vpop.permute.xlu0 %1370
    %1372 = vrot.lane.b32.xlu0 %v273, 96
    %v1373 = vpop.permute.xlu0 %1372
    %v1374 = vsel %vm370, %v1367, 0
    %v1376 = vsel %vm370, %v1369, 0
    %v1378 = vsel %vm370, %v1371, 0
    %v1380 = vsel %vm370, %v1373, 0
    %1382 = vmatpush.xpose.msra.mxu0 0.0
    %1383 = vmatpush.xpose.msra.mxu0 0.0
    %1384 = vmatpush.xpose.msra.mxu0 0.0
    %1385 = vmatpush.xpose.msra.mxu0 0.0
    %1386 = vmatpush.xpose.msra.mxu0 0.0
    %1387 = vmatpush.xpose.msra.mxu0 0.0
    %1388 = vmatpush.xpose.msra.mxu0 0.0
    %1389 = vmatpush.xpose.msra.mxu0 0.0
    %1390 = vmatpush.xpose.msra.mxu0 0.0
    %1391 = vmatpush.xpose.msra.mxu0 0.0
    %1392 = vmatpush.xpose.msra.mxu0 0.0
    %1393 = vmatpush.xpose.msra.mxu0 0.0
    %1394 = vmatpush.xpose.msra.mxu0 0.0
    %1395 = vmatpush.xpose.msra.mxu0 0.0
    %1396 = vmatpush.xpose.msra.mxu0 %v1380
    %1397 = vmatpush.xpose.msra.mxu0 %v1378
    %1398 = vmatmul.f32.gmra.mxu0 %v1374
    %v1399 = vpop.f32.mrf.mxu0
    %v1400 = vadd.f32 0.0, %v1399
    %1401 = vmatmul.f32.gmra.mxu0 %v1376
    %v1402 = vpop.f32.mrf.mxu0
    %v1403 = vadd.f32 0.0, %v1402
    %1404 = vdwg.mxu0
    %1405 = vrot.lane.b32.xlu0 %v211, 96
    %v1406 = vpop.permute.xlu0 %1405
    %1407 = vrot.lane.b32.xlu0 %v214, 96
    %v1408 = vpop.permute.xlu0 %1407
    %1409 = vrot.lane.b32.xlu0 %v276, 96
    %v1410 = vpop.permute.xlu0 %1409
    %1411 = vrot.lane.b32.xlu0 %v279, 96
    %v1412 = vpop.permute.xlu0 %1411
    %v1413 = vsel %vm370, %v1406, 0
    %v1415 = vsel %vm370, %v1408, 0
    %v1417 = vsel %vm370, %v1410, 0
    %v1419 = vsel %vm370, %v1412, 0
    %1421 = vmatpush.xpose.msra.mxu0 0.0
    %1422 = vmatpush.xpose.msra.mxu0 0.0
    %1423 = vmatpush.xpose.msra.mxu0 0.0
    %1424 = vmatpush.xpose.msra.mxu0 0.0
    %1425 = vmatpush.xpose.msra.mxu0 0.0
    %1426 = vmatpush.xpose.msra.mxu0 0.0
    %1427 = vmatpush.xpose.msra.mxu0 0.0
    %1428 = vmatpush.xpose.msra.mxu0 0.0
    %1429 = vmatpush.xpose.msra.mxu0 0.0
    %1430 = vmatpush.xpose.msra.mxu0 0.0
    %1431 = vmatpush.xpose.msra.mxu0 0.0
    %1432 = vmatpush.xpose.msra.mxu0 0.0
    %1433 = vmatpush.xpose.msra.mxu0 0.0
    %1434 = vmatpush.xpose.msra.mxu0 0.0
    %1435 = vmatpush.xpose.msra.mxu0 %v1419
    %1436 = vmatpush.xpose.msra.mxu0 %v1417
    %1437 = vmatmul.f32.gmra.mxu0 %v1413
    %v1438 = vpop.f32.mrf.mxu0
    %v1439 = vadd.f32 0.0, %v1438
    %1440 = vmatmul.f32.gmra.mxu0 %v1415
    %v1441 = vpop.f32.mrf.mxu0
    %v1442 = vadd.f32 0.0, %v1441
    %1443 = vdwg.mxu0
    %1444 = vrot.lane.b32.xlu0 %v217, 96
    %v1445 = vpop.permute.xlu0 %1444
    %1446 = vrot.lane.b32.xlu0 %v220, 96
    %v1447 = vpop.permute.xlu0 %1446
    %1448 = vrot.lane.b32.xlu0 %v282, 96
    %v1449 = vpop.permute.xlu0 %1448
    %1450 = vrot.lane.b32.xlu0 %v285, 96
    %v1451 = vpop.permute.xlu0 %1450
    %v1452 = vsel %vm370, %v1445, 0
    %v1454 = vsel %vm370, %v1447, 0
    %v1456 = vsel %vm370, %v1449, 0
    %v1458 = vsel %vm370, %v1451, 0
    %1460 = vmatpush.xpose.msra.mxu0 0.0
    %1461 = vmatpush.xpose.msra.mxu0 0.0
    %1462 = vmatpush.xpose.msra.mxu0 0.0
    %1463 = vmatpush.xpose.msra.mxu0 0.0
    %1464 = vmatpush.xpose.msra.mxu0 0.0
    %1465 = vmatpush.xpose.msra.mxu0 0.0
    %1466 = vmatpush.xpose.msra.mxu0 0.0
    %1467 = vmatpush.xpose.msra.mxu0 0.0
    %1468 = vmatpush.xpose.msra.mxu0 0.0
    %1469 = vmatpush.xpose.msra.mxu0 0.0
    %1470 = vmatpush.xpose.msra.mxu0 0.0
    %1471 = vmatpush.xpose.msra.mxu0 0.0
    %1472 = vmatpush.xpose.msra.mxu0 0.0
    %1473 = vmatpush.xpose.msra.mxu0 0.0
    %1474 = vmatpush.xpose.msra.mxu0 %v1458
    %1475 = vmatpush.xpose.msra.mxu0 %v1456
    %1476 = vmatmul.f32.gmra.mxu0 %v1452
    %v1477 = vpop.f32.mrf.mxu0
    %v1478 = vadd.f32 0.0, %v1477
    %1479 = vmatmul.f32.gmra.mxu0 %v1454
    %v1480 = vpop.f32.mrf.mxu0
    %v1481 = vadd.f32 0.0, %v1480
    %1482 = vdwg.mxu0
    %1483 = vrot.lane.b32.xlu0 %v223, 96
    %v1484 = vpop.permute.xlu0 %1483
    %1485 = vrot.lane.b32.xlu0 %v226, 96
    %v1486 = vpop.permute.xlu0 %1485
    %1487 = vrot.lane.b32.xlu0 %v288, 96
    %v1488 = vpop.permute.xlu0 %1487
    %1489 = vrot.lane.b32.xlu0 %v291, 96
    %v1490 = vpop.permute.xlu0 %1489
    %v1491 = vsel %vm370, %v1484, 0
    %v1493 = vsel %vm370, %v1486, 0
    %v1495 = vsel %vm370, %v1488, 0
    %v1497 = vsel %vm370, %v1490, 0
    %1499 = vmatpush.xpose.msra.mxu0 0.0
    %1500 = vmatpush.xpose.msra.mxu0 0.0
    %1501 = vmatpush.xpose.msra.mxu0 0.0
    %1502 = vmatpush.xpose.msra.mxu0 0.0
    %1503 = vmatpush.xpose.msra.mxu0 0.0
    %1504 = vmatpush.xpose.msra.mxu0 0.0
    %1505 = vmatpush.xpose.msra.mxu0 0.0
    %1506 = vmatpush.xpose.msra.mxu0 0.0
    %1507 = vmatpush.xpose.msra.mxu0 0.0
    %1508 = vmatpush.xpose.msra.mxu0 0.0
    %1509 = vmatpush.xpose.msra.mxu0 0.0
    %1510 = vmatpush.xpose.msra.mxu0 0.0
    %1511 = vmatpush.xpose.msra.mxu0 0.0
    %1512 = vmatpush.xpose.msra.mxu0 0.0
    %1513 = vmatpush.xpose.msra.mxu0 %v1497
    %1514 = vmatpush.xpose.msra.mxu0 %v1495
    %1515 = vmatmul.f32.gmra.mxu0 %v1491
    %v1516 = vpop.f32.mrf.mxu0
    %v1517 = vadd.f32 0.0, %v1516
    %1518 = vmatmul.f32.gmra.mxu0 %v1493
    %v1519 = vpop.f32.mrf.mxu0
    %v1520 = vadd.f32 0.0, %v1519
    %1521 = vdwg.mxu0
    %1522 = vrot.lane.b32.xlu0 %v229, 96
    %v1523 = vpop.permute.xlu0 %1522
    %1524 = vrot.lane.b32.xlu0 %v232, 96
    %v1525 = vpop.permute.xlu0 %1524
    %1526 = vrot.lane.b32.xlu0 %v294, 96
    %v1527 = vpop.permute.xlu0 %1526
    %1528 = vrot.lane.b32.xlu0 %v297, 96
    %v1529 = vpop.permute.xlu0 %1528
    %v1530 = vsel %vm370, %v1523, 0
    %v1532 = vsel %vm370, %v1525, 0
    %v1534 = vsel %vm370, %v1527, 0
    %v1536 = vsel %vm370, %v1529, 0
    %1538 = vmatpush.xpose.msra.mxu0 0.0
    %1539 = vmatpush.xpose.msra.mxu0 0.0
    %1540 = vmatpush.xpose.msra.mxu0 0.0
    %1541 = vmatpush.xpose.msra.mxu0 0.0
    %1542 = vmatpush.xpose.msra.mxu0 0.0
    %1543 = vmatpush.xpose.msra.mxu0 0.0
    %1544 = vmatpush.xpose.msra.mxu0 0.0
    %1545 = vmatpush.xpose.msra.mxu0 0.0
    %1546 = vmatpush.xpose.msra.mxu0 0.0
    %1547 = vmatpush.xpose.msra.mxu0 0.0
    %1548 = vmatpush.xpose.msra.mxu0 0.0
    %1549 = vmatpush.xpose.msra.mxu0 0.0
    %1550 = vmatpush.xpose.msra.mxu0 0.0
    %1551 = vmatpush.xpose.msra.mxu0 0.0
    %1552 = vmatpush.xpose.msra.mxu0 %v1536
    %1553 = vmatpush.xpose.msra.mxu0 %v1534
    %1554 = vmatmul.f32.gmra.mxu0 %v1530
    %v1555 = vpop.f32.mrf.mxu0
    %v1556 = vadd.f32 0.0, %v1555
    %1557 = vmatmul.f32.gmra.mxu0 %v1532
    %v1558 = vpop.f32.mrf.mxu0
    %v1559 = vadd.f32 0.0, %v1558
    %1560 = vdwg.mxu0
    %1561 = vrot.lane.b32.xlu0 %v235, 96
    %v1562 = vpop.permute.xlu0 %1561
    %1563 = vrot.lane.b32.xlu0 %v238, 96
    %v1564 = vpop.permute.xlu0 %1563
    %1565 = vrot.lane.b32.xlu0 %v300, 96
    %v1566 = vpop.permute.xlu0 %1565
    %1567 = vrot.lane.b32.xlu0 %v303, 96
    %v1568 = vpop.permute.xlu0 %1567
    %v1569 = vsel %vm370, %v1562, 0
    %v1571 = vsel %vm370, %v1564, 0
    %v1573 = vsel %vm370, %v1566, 0
    %v1575 = vsel %vm370, %v1568, 0
    %1577 = vmatpush.xpose.msra.mxu0 0.0
    %1578 = vmatpush.xpose.msra.mxu0 0.0
    %1579 = vmatpush.xpose.msra.mxu0 0.0
    %1580 = vmatpush.xpose.msra.mxu0 0.0
    %1581 = vmatpush.xpose.msra.mxu0 0.0
    %1582 = vmatpush.xpose.msra.mxu0 0.0
    %1583 = vmatpush.xpose.msra.mxu0 0.0
    %1584 = vmatpush.xpose.msra.mxu0 0.0
    %1585 = vmatpush.xpose.msra.mxu0 0.0
    %1586 = vmatpush.xpose.msra.mxu0 0.0
    %1587 = vmatpush.xpose.msra.mxu0 0.0
    %1588 = vmatpush.xpose.msra.mxu0 0.0
    %1589 = vmatpush.xpose.msra.mxu0 0.0
    %1590 = vmatpush.xpose.msra.mxu0 0.0
    %1591 = vmatpush.xpose.msra.mxu0 %v1575
    %1592 = vmatpush.xpose.msra.mxu0 %v1573
    %1593 = vmatmul.f32.gmra.mxu0 %v1569
    %v1594 = vpop.f32.mrf.mxu0
    %v1595 = vadd.f32 0.0, %v1594
    %1596 = vmatmul.f32.gmra.mxu0 %v1571
    %v1597 = vpop.f32.mrf.mxu0
    %v1598 = vadd.f32 0.0, %v1597
    %1599 = vdwg.mxu0
    %v1600 = vmul.f32 %v1322, 0.088388346
    %v1601 = vmul.f32 %v1325, 0.088388346
    %v1602 = vmul.f32 %v1361, 0.088388346
    %v1603 = vmul.f32 %v1364, 0.088388346
    %v1604 = vmul.f32 %v1400, 0.088388346
    %v1605 = vmul.f32 %v1403, 0.088388346
    %v1606 = vmul.f32 %v1439, 0.088388346
    %v1607 = vmul.f32 %v1442, 0.088388346
    %v1608 = vmul.f32 %v1478, 0.088388346
    %v1609 = vmul.f32 %v1481, 0.088388346
    %v1610 = vmul.f32 %v1517, 0.088388346
    %v1611 = vmul.f32 %v1520, 0.088388346
    %v1612 = vmul.f32 %v1556, 0.088388346
    %v1613 = vmul.f32 %v1559, 0.088388346
    %v1614 = vmul.f32 %v1595, 0.088388346
    %v1615 = vmul.f32 %v1598, 0.088388346
    %v1616 = vsel %vm667, %v1600, -inf
    %1617 = vmax.xlane.f32.xlu0 %v1616
    %v1618 = vpop.xlane.xlu0 %1617
    %v1619 = vsel %vm667, %v1601, -inf
    %1620 = vmax.xlane.f32.xlu0 %v1619
    %v1621 = vpop.xlane.xlu0 %1620
    %v1622 = vsel %vm667, %v1602, -inf
    %1623 = vmax.xlane.f32.xlu0 %v1622
    %v1624 = vpop.xlane.xlu0 %1623
    %v1625 = vsel %vm667, %v1603, -inf
    %1626 = vmax.xlane.f32.xlu0 %v1625
    %v1627 = vpop.xlane.xlu0 %1626
    %v1628 = vsel %vm667, %v1604, -inf
    %1629 = vmax.xlane.f32.xlu0 %v1628
    %v1630 = vpop.xlane.xlu0 %1629
    %v1631 = vsel %vm667, %v1605, -inf
    %1632 = vmax.xlane.f32.xlu0 %v1631
    %v1633 = vpop.xlane.xlu0 %1632
    %v1634 = vsel %vm667, %v1606, -inf
    %1635 = vmax.xlane.f32.xlu0 %v1634
    %v1636 = vpop.xlane.xlu0 %1635
    %v1637 = vsel %vm667, %v1607, -inf
    %1638 = vmax.xlane.f32.xlu0 %v1637
    %v1639 = vpop.xlane.xlu0 %1638
    %v1640 = vsel %vm667, %v1608, -inf
    %1641 = vmax.xlane.f32.xlu0 %v1640
    %v1642 = vpop.xlane.xlu0 %1641
    %v1643 = vsel %vm667, %v1609, -inf
    %1644 = vmax.xlane.f32.xlu0 %v1643
    %v1645 = vpop.xlane.xlu0 %1644
    %v1646 = vsel %vm667, %v1610, -inf
    %1647 = vmax.xlane.f32.xlu0 %v1646
    %v1648 = vpop.xlane.xlu0 %1647
    %v1649 = vsel %vm667, %v1611, -inf
    %1650 = vmax.xlane.f32.xlu0 %v1649
    %v1651 = vpop.xlane.xlu0 %1650
    %v1652 = vsel %vm667, %v1612, -inf
    %1653 = vmax.xlane.f32.xlu0 %v1652
    %v1654 = vpop.xlane.xlu0 %1653
    %v1655 = vsel %vm667, %v1613, -inf
    %1656 = vmax.xlane.f32.xlu0 %v1655
    %v1657 = vpop.xlane.xlu0 %1656
    %v1658 = vsel %vm667, %v1614, -inf
    %1659 = vmax.xlane.f32.xlu0 %v1658
    %v1660 = vpop.xlane.xlu0 %1659
    %v1661 = vsel %vm667, %v1615, -inf
    %1662 = vmax.xlane.f32.xlu0 %v1661
    %v1663 = vpop.xlane.xlu0 %1662
    %v1664 = vsub.f32 %v1600, %v1618
    %v1665 = vsub.f32 %v1601, %v1621
    %v1666 = vsub.f32 %v1602, %v1624
    %v1667 = vsub.f32 %v1603, %v1627
    %v1668 = vsub.f32 %v1604, %v1630
    %v1669 = vsub.f32 %v1605, %v1633
    %v1670 = vsub.f32 %v1606, %v1636
    %v1671 = vsub.f32 %v1607, %v1639
    %v1672 = vsub.f32 %v1608, %v1642
    %v1673 = vsub.f32 %v1609, %v1645
    %v1674 = vsub.f32 %v1610, %v1648
    %v1675 = vsub.f32 %v1611, %v1651
    %v1676 = vsub.f32 %v1612, %v1654
    %v1677 = vsub.f32 %v1613, %v1657
    %v1678 = vsub.f32 %v1614, %v1660
    %v1679 = vsub.f32 %v1615, %v1663
    %v1680 = vmul.f32 %v1664, 1.442695
    %v1681 = vpow.pop %v1680
    %v1682 = vmul.f32 %v1665, 1.442695
    %v1683 = vpow.pop %v1682
    %v1684 = vmul.f32 %v1666, 1.442695
    %v1685 = vpow.pop %v1684
    %v1686 = vmul.f32 %v1667, 1.442695
    %v1687 = vpow.pop %v1686
    %v1688 = vmul.f32 %v1668, 1.442695
    %v1689 = vpow.pop %v1688
    %v1690 = vmul.f32 %v1669, 1.442695
    %v1691 = vpow.pop %v1690
    %v1692 = vmul.f32 %v1670, 1.442695
    %v1693 = vpow.pop %v1692
    %v1694 = vmul.f32 %v1671, 1.442695
    %v1695 = vpow.pop %v1694
    %v1696 = vmul.f32 %v1672, 1.442695
    %v1697 = vpow.pop %v1696
    %v1698 = vmul.f32 %v1673, 1.442695
    %v1699 = vpow.pop %v1698
    %v1700 = vmul.f32 %v1674, 1.442695
    %v1701 = vpow.pop %v1700
    %v1702 = vmul.f32 %v1675, 1.442695
    %v1703 = vpow.pop %v1702
    %v1704 = vmul.f32 %v1676, 1.442695
    %v1705 = vpow.pop %v1704
    %v1706 = vmul.f32 %v1677, 1.442695
    %v1707 = vpow.pop %v1706
    %v1708 = vmul.f32 %v1678, 1.442695
    %v1709 = vpow.pop %v1708
    %v1710 = vmul.f32 %v1679, 1.442695
    %v1711 = vpow.pop %v1710
    %v1712 = vsel %vm667, %v1681, 0.0
    %1713 = vadd.xlane.f32.xlu0 %v1712
    %v1714 = vpop.xlane.xlu0 %1713
    %v1715 = vsel %vm667, %v1683, 0.0
    %1716 = vadd.xlane.f32.xlu0 %v1715
    %v1717 = vpop.xlane.xlu0 %1716
    %v1718 = vsel %vm667, %v1685, 0.0
    %1719 = vadd.xlane.f32.xlu0 %v1718
    %v1720 = vpop.xlane.xlu0 %1719
    %v1721 = vsel %vm667, %v1687, 0.0
    %1722 = vadd.xlane.f32.xlu0 %v1721
    %v1723 = vpop.xlane.xlu0 %1722
    %v1724 = vsel %vm667, %v1689, 0.0
    %1725 = vadd.xlane.f32.xlu0 %v1724
    %v1726 = vpop.xlane.xlu0 %1725
    %v1727 = vsel %vm667, %v1691, 0.0
    %1728 = vadd.xlane.f32.xlu0 %v1727
    %v1729 = vpop.xlane.xlu0 %1728
    %v1730 = vsel %vm667, %v1693, 0.0
    %1731 = vadd.xlane.f32.xlu0 %v1730
    %v1732 = vpop.xlane.xlu0 %1731
    %v1733 = vsel %vm667, %v1695, 0.0
    %1734 = vadd.xlane.f32.xlu0 %v1733
    %v1735 = vpop.xlane.xlu0 %1734
    %v1736 = vsel %vm667, %v1697, 0.0
    %1737 = vadd.xlane.f32.xlu0 %v1736
    %v1738 = vpop.xlane.xlu0 %1737
    %v1739 = vsel %vm667, %v1699, 0.0
    %1740 = vadd.xlane.f32.xlu0 %v1739
    %v1741 = vpop.xlane.xlu0 %1740
    %v1742 = vsel %vm667, %v1701, 0.0
    %1743 = vadd.xlane.f32.xlu0 %v1742
    %v1744 = vpop.xlane.xlu0 %1743
    %v1745 = vsel %vm667, %v1703, 0.0
    %1746 = vadd.xlane.f32.xlu0 %v1745
    %v1747 = vpop.xlane.xlu0 %1746
    %v1748 = vsel %vm667, %v1705, 0.0
    %1749 = vadd.xlane.f32.xlu0 %v1748
    %v1750 = vpop.xlane.xlu0 %1749
    %v1751 = vsel %vm667, %v1707, 0.0
    %1752 = vadd.xlane.f32.xlu0 %v1751
    %v1753 = vpop.xlane.xlu0 %1752
    %v1754 = vsel %vm667, %v1709, 0.0
    %1755 = vadd.xlane.f32.xlu0 %v1754
    %v1756 = vpop.xlane.xlu0 %1755
    %v1757 = vsel %vm667, %v1711, 0.0
    %1758 = vadd.xlane.f32.xlu0 %v1757
    %v1759 = vpop.xlane.xlu0 %1758
    %1762 = vrot.lane.b32.xlu0 %v323, 96
    %v1763 = vpop.permute.xlu0 %1762
    %1764 = vrot.lane.b32.xlu0 %v326, 96
    %v1765 = vpop.permute.xlu0 %1764
    %v1769 = vsel %vm667, %v1681, 0
    %v1772 = vsel %vm667, %v1683, 0
    %1774 = vmatpush.msra.mxu0 0.0
    %1775 = vmatpush.msra.mxu0 0.0
    %1776 = vmatpush.msra.mxu0 0.0
    %1777 = vmatpush.msra.mxu0 0.0
    %1778 = vmatpush.msra.mxu0 0.0
    %1779 = vmatpush.msra.mxu0 0.0
    %1780 = vmatpush.msra.mxu0 0.0
    %1781 = vmatpush.msra.mxu0 0.0
    %1782 = vmatpush.msra.mxu0 0.0
    %1783 = vmatpush.msra.mxu0 0.0
    %1784 = vmatpush.msra.mxu0 0.0
    %1785 = vmatpush.msra.mxu0 0.0
    %1786 = vmatpush.msra.mxu0 0.0
    %1787 = vmatpush.msra.mxu0 0.0
    %1788 = vmatpush.msra.mxu0 %v1765
    %1789 = vmatpush.msra.mxu0 %v1763
    %1790 = vmatmul.f32.gmra.mxu0 %v1769
    %v1791 = vpop.f32.mrf.mxu0
    %v1792 = vadd.f32 0.0, %v1791
    %1793 = vmatmul.f32.gmra.mxu0 %v1772
    %v1794 = vpop.f32.mrf.mxu0
    %v1795 = vadd.f32 0.0, %v1794
    %1796 = vdwg.mxu0
    %1799 = vrot.lane.b32.xlu0 %v329, 96
    %v1800 = vpop.permute.xlu0 %1799
    %1801 = vrot.lane.b32.xlu0 %v332, 96
    %v1802 = vpop.permute.xlu0 %1801
    %v1806 = vsel %vm667, %v1685, 0
    %v1809 = vsel %vm667, %v1687, 0
    %1811 = vmatpush.msra.mxu0 0.0
    %1812 = vmatpush.msra.mxu0 0.0
    %1813 = vmatpush.msra.mxu0 0.0
    %1814 = vmatpush.msra.mxu0 0.0
    %1815 = vmatpush.msra.mxu0 0.0
    %1816 = vmatpush.msra.mxu0 0.0
    %1817 = vmatpush.msra.mxu0 0.0
    %1818 = vmatpush.msra.mxu0 0.0
    %1819 = vmatpush.msra.mxu0 0.0
    %1820 = vmatpush.msra.mxu0 0.0
    %1821 = vmatpush.msra.mxu0 0.0
    %1822 = vmatpush.msra.mxu0 0.0
    %1823 = vmatpush.msra.mxu0 0.0
    %1824 = vmatpush.msra.mxu0 0.0
    %1825 = vmatpush.msra.mxu0 %v1802
    %1826 = vmatpush.msra.mxu0 %v1800
    %1827 = vmatmul.f32.gmra.mxu0 %v1806
    %v1828 = vpop.f32.mrf.mxu0
    %v1829 = vadd.f32 0.0, %v1828
    %1830 = vmatmul.f32.gmra.mxu0 %v1809
    %v1831 = vpop.f32.mrf.mxu0
    %v1832 = vadd.f32 0.0, %v1831
    %1833 = vdwg.mxu0
    %1836 = vrot.lane.b32.xlu0 %v335, 96
    %v1837 = vpop.permute.xlu0 %1836
    %1838 = vrot.lane.b32.xlu0 %v338, 96
    %v1839 = vpop.permute.xlu0 %1838
    %v1843 = vsel %vm667, %v1689, 0
    %v1846 = vsel %vm667, %v1691, 0
    %1848 = vmatpush.msra.mxu0 0.0
    %1849 = vmatpush.msra.mxu0 0.0
    %1850 = vmatpush.msra.mxu0 0.0
    %1851 = vmatpush.msra.mxu0 0.0
    %1852 = vmatpush.msra.mxu0 0.0
    %1853 = vmatpush.msra.mxu0 0.0
    %1854 = vmatpush.msra.mxu0 0.0
    %1855 = vmatpush.msra.mxu0 0.0
    %1856 = vmatpush.msra.mxu0 0.0
    %1857 = vmatpush.msra.mxu0 0.0
    %1858 = vmatpush.msra.mxu0 0.0
    %1859 = vmatpush.msra.mxu0 0.0
    %1860 = vmatpush.msra.mxu0 0.0
    %1861 = vmatpush.msra.mxu0 0.0
    %1862 = vmatpush.msra.mxu0 %v1839
    %1863 = vmatpush.msra.mxu0 %v1837
    %1864 = vmatmul.f32.gmra.mxu0 %v1843
    %v1865 = vpop.f32.mrf.mxu0
    %v1866 = vadd.f32 0.0, %v1865
    %1867 = vmatmul.f32.gmra.mxu0 %v1846
    %v1868 = vpop.f32.mrf.mxu0
    %v1869 = vadd.f32 0.0, %v1868
    %1870 = vdwg.mxu0
    %1873 = vrot.lane.b32.xlu0 %v341, 96
    %v1874 = vpop.permute.xlu0 %1873
    %1875 = vrot.lane.b32.xlu0 %v344, 96
    %v1876 = vpop.permute.xlu0 %1875
    %v1880 = vsel %vm667, %v1693, 0
    %v1883 = vsel %vm667, %v1695, 0
    %1885 = vmatpush.msra.mxu0 0.0
    %1886 = vmatpush.msra.mxu0 0.0
    %1887 = vmatpush.msra.mxu0 0.0
    %1888 = vmatpush.msra.mxu0 0.0
    %1889 = vmatpush.msra.mxu0 0.0
    %1890 = vmatpush.msra.mxu0 0.0
    %1891 = vmatpush.msra.mxu0 0.0
    %1892 = vmatpush.msra.mxu0 0.0
    %1893 = vmatpush.msra.mxu0 0.0
    %1894 = vmatpush.msra.mxu0 0.0
    %1895 = vmatpush.msra.mxu0 0.0
    %1896 = vmatpush.msra.mxu0 0.0
    %1897 = vmatpush.msra.mxu0 0.0
    %1898 = vmatpush.msra.mxu0 0.0
    %1899 = vmatpush.msra.mxu0 %v1876
    %1900 = vmatpush.msra.mxu0 %v1874
    %1901 = vmatmul.f32.gmra.mxu0 %v1880
    %v1902 = vpop.f32.mrf.mxu0
    %v1903 = vadd.f32 0.0, %v1902
    %1904 = vmatmul.f32.gmra.mxu0 %v1883
    %v1905 = vpop.f32.mrf.mxu0
    %v1906 = vadd.f32 0.0, %v1905
    %1907 = vdwg.mxu0
    %1910 = vrot.lane.b32.xlu0 %v347, 96
    %v1911 = vpop.permute.xlu0 %1910
    %1912 = vrot.lane.b32.xlu0 %v350, 96
    %v1913 = vpop.permute.xlu0 %1912
    %v1917 = vsel %vm667, %v1697, 0
    %v1920 = vsel %vm667, %v1699, 0
    %1922 = vmatpush.msra.mxu0 0.0
    %1923 = vmatpush.msra.mxu0 0.0
    %1924 = vmatpush.msra.mxu0 0.0
    %1925 = vmatpush.msra.mxu0 0.0
    %1926 = vmatpush.msra.mxu0 0.0
    %1927 = vmatpush.msra.mxu0 0.0
    %1928 = vmatpush.msra.mxu0 0.0
    %1929 = vmatpush.msra.mxu0 0.0
    %1930 = vmatpush.msra.mxu0 0.0
    %1931 = vmatpush.msra.mxu0 0.0
    %1932 = vmatpush.msra.mxu0 0.0
    %1933 = vmatpush.msra.mxu0 0.0
    %1934 = vmatpush.msra.mxu0 0.0
    %1935 = vmatpush.msra.mxu0 0.0
    %1936 = vmatpush.msra.mxu0 %v1913
    %1937 = vmatpush.msra.mxu0 %v1911
    %1938 = vmatmul.f32.gmra.mxu0 %v1917
    %v1939 = vpop.f32.mrf.mxu0
    %v1940 = vadd.f32 0.0, %v1939
    %1941 = vmatmul.f32.gmra.mxu0 %v1920
    %v1942 = vpop.f32.mrf.mxu0
    %v1943 = vadd.f32 0.0, %v1942
    %1944 = vdwg.mxu0
    %1947 = vrot.lane.b32.xlu0 %v353, 96
    %v1948 = vpop.permute.xlu0 %1947
    %1949 = vrot.lane.b32.xlu0 %v356, 96
    %v1950 = vpop.permute.xlu0 %1949
    %v1954 = vsel %vm667, %v1701, 0
    %v1957 = vsel %vm667, %v1703, 0
    %1959 = vmatpush.msra.mxu0 0.0
    %1960 = vmatpush.msra.mxu0 0.0
    %1961 = vmatpush.msra.mxu0 0.0
    %1962 = vmatpush.msra.mxu0 0.0
    %1963 = vmatpush.msra.mxu0 0.0
    %1964 = vmatpush.msra.mxu0 0.0
    %1965 = vmatpush.msra.mxu0 0.0
    %1966 = vmatpush.msra.mxu0 0.0
    %1967 = vmatpush.msra.mxu0 0.0
    %1968 = vmatpush.msra.mxu0 0.0
    %1969 = vmatpush.msra.mxu0 0.0
    %1970 = vmatpush.msra.mxu0 0.0
    %1971 = vmatpush.msra.mxu0 0.0
    %1972 = vmatpush.msra.mxu0 0.0
    %1973 = vmatpush.msra.mxu0 %v1950
    %1974 = vmatpush.msra.mxu0 %v1948
    %1975 = vmatmul.f32.gmra.mxu0 %v1954
    %v1976 = vpop.f32.mrf.mxu0
    %v1977 = vadd.f32 0.0, %v1976
    %1978 = vmatmul.f32.gmra.mxu0 %v1957
    %v1979 = vpop.f32.mrf.mxu0
    %v1980 = vadd.f32 0.0, %v1979
    %1981 = vdwg.mxu0
    %1984 = vrot.lane.b32.xlu0 %v359, 96
    %v1985 = vpop.permute.xlu0 %1984
    %1986 = vrot.lane.b32.xlu0 %v362, 96
    %v1987 = vpop.permute.xlu0 %1986
    %v1991 = vsel %vm667, %v1705, 0
    %v1994 = vsel %vm667, %v1707, 0
    %1996 = vmatpush.msra.mxu0 0.0
    %1997 = vmatpush.msra.mxu0 0.0
    %1998 = vmatpush.msra.mxu0 0.0
    %1999 = vmatpush.msra.mxu0 0.0
    %2000 = vmatpush.msra.mxu0 0.0
    %2001 = vmatpush.msra.mxu0 0.0
    %2002 = vmatpush.msra.mxu0 0.0
    %2003 = vmatpush.msra.mxu0 0.0
    %2004 = vmatpush.msra.mxu0 0.0
    %2005 = vmatpush.msra.mxu0 0.0
    %2006 = vmatpush.msra.mxu0 0.0
    %2007 = vmatpush.msra.mxu0 0.0
    %2008 = vmatpush.msra.mxu0 0.0
    %2009 = vmatpush.msra.mxu0 0.0
    %2010 = vmatpush.msra.mxu0 %v1987
    %2011 = vmatpush.msra.mxu0 %v1985
    %2012 = vmatmul.f32.gmra.mxu0 %v1991
    %v2013 = vpop.f32.mrf.mxu0
    %v2014 = vadd.f32 0.0, %v2013
    %2015 = vmatmul.f32.gmra.mxu0 %v1994
    %v2016 = vpop.f32.mrf.mxu0
    %v2017 = vadd.f32 0.0, %v2016
    %2018 = vdwg.mxu0
    %2021 = vrot.lane.b32.xlu0 %v365, 96
    %v2022 = vpop.permute.xlu0 %2021
    %2023 = vrot.lane.b32.xlu0 %v368, 96
    %v2024 = vpop.permute.xlu0 %2023
    %v2028 = vsel %vm667, %v1709, 0
    %v2031 = vsel %vm667, %v1711, 0
    %2033 = vmatpush.msra.mxu0 0.0
    %2034 = vmatpush.msra.mxu0 0.0
    %2035 = vmatpush.msra.mxu0 0.0
    %2036 = vmatpush.msra.mxu0 0.0
    %2037 = vmatpush.msra.mxu0 0.0
    %2038 = vmatpush.msra.mxu0 0.0
    %2039 = vmatpush.msra.mxu0 0.0
    %2040 = vmatpush.msra.mxu0 0.0
    %2041 = vmatpush.msra.mxu0 0.0
    %2042 = vmatpush.msra.mxu0 0.0
    %2043 = vmatpush.msra.mxu0 0.0
    %2044 = vmatpush.msra.mxu0 0.0
    %2045 = vmatpush.msra.mxu0 0.0
    %2046 = vmatpush.msra.mxu0 0.0
    %2047 = vmatpush.msra.mxu0 %v2024
    %2048 = vmatpush.msra.mxu0 %v2022
    %2049 = vmatmul.f32.gmra.mxu0 %v2028
    %v2050 = vpop.f32.mrf.mxu0
    %v2051 = vadd.f32 0.0, %v2050
    %2052 = vmatmul.f32.gmra.mxu0 %v2031
    %v2053 = vpop.f32.mrf.mxu0
    %v2054 = vadd.f32 0.0, %v2053
    %2055 = vdwg.mxu0
    %v2056 = vrcp.pop %v1714
    %v2057 = vmul.f32 %v1714, %v2056
    %v2058 = vsub.f32 1.0, %v2057
    %v2059 = vmul.f32 %v2056, %v2058
    %v2060 = vadd.f32 %v2056, %v2059
    %vm2061 = vweird.f32 %v1714
    %vm2062 = vweird.f32 %v2056
    %vm2063 = vmor %vm2061, %vm2062
    %v2064 = vsel %vm2063, %v2056, %v2060
    %v2065 = vand.u32 2147483647, %v1714
    %vm2066 = vcmp.eq.f32.partialorder %v2065, 8.507059e+37
    %v2067 = vand.u32 %v1714, 2147483648
    %v2068 = vor.u32 1.1754944e-38, %v2067
    %v2069 = vsel %vm2066, %v2068, %v2064
    %v2070 = vrcp.pop %v1717
    %v2071 = vmul.f32 %v1717, %v2070
    %v2072 = vsub.f32 1.0, %v2071
    %v2073 = vmul.f32 %v2070, %v2072
    %v2074 = vadd.f32 %v2070, %v2073
    %vm2075 = vweird.f32 %v1717
    %vm2076 = vweird.f32 %v2070
    %vm2077 = vmor %vm2075, %vm2076
    %v2078 = vsel %vm2077, %v2070, %v2074
    %v2079 = vand.u32 2147483647, %v1717
    %vm2080 = vcmp.eq.f32.partialorder %v2079, 8.507059e+37
    %v2081 = vand.u32 %v1717, 2147483648
    %v2082 = vor.u32 1.1754944e-38, %v2081
    %v2083 = vsel %vm2080, %v2082, %v2078
    %v2084 = vrcp.pop %v1720
    %v2085 = vmul.f32 %v1720, %v2084
    %v2086 = vsub.f32 1.0, %v2085
    %v2087 = vmul.f32 %v2084, %v2086
    %v2088 = vadd.f32 %v2084, %v2087
    %vm2089 = vweird.f32 %v1720
    %vm2090 = vweird.f32 %v2084
    %vm2091 = vmor %vm2089, %vm2090
    %v2092 = vsel %vm2091, %v2084, %v2088
    %v2093 = vand.u32 2147483647, %v1720
    %vm2094 = vcmp.eq.f32.partialorder %v2093, 8.507059e+37
    %v2095 = vand.u32 %v1720, 2147483648
    %v2096 = vor.u32 1.1754944e-38, %v2095
    %v2097 = vsel %vm2094, %v2096, %v2092
    %v2098 = vrcp.pop %v1723
    %v2099 = vmul.f32 %v1723, %v2098
    %v2100 = vsub.f32 1.0, %v2099
    %v2101 = vmul.f32 %v2098, %v2100
    %v2102 = vadd.f32 %v2098, %v2101
    %vm2103 = vweird.f32 %v1723
    %vm2104 = vweird.f32 %v2098
    %vm2105 = vmor %vm2103, %vm2104
    %v2106 = vsel %vm2105, %v2098, %v2102
    %v2107 = vand.u32 2147483647, %v1723
    %vm2108 = vcmp.eq.f32.partialorder %v2107, 8.507059e+37
    %v2109 = vand.u32 %v1723, 2147483648
    %v2110 = vor.u32 1.1754944e-38, %v2109
    %v2111 = vsel %vm2108, %v2110, %v2106
    %v2112 = vrcp.pop %v1726
    %v2113 = vmul.f32 %v1726, %v2112
    %v2114 = vsub.f32 1.0, %v2113
    %v2115 = vmul.f32 %v2112, %v2114
    %v2116 = vadd.f32 %v2112, %v2115
    %vm2117 = vweird.f32 %v1726
    %vm2118 = vweird.f32 %v2112
    %vm2119 = vmor %vm2117, %vm2118
    %v2120 = vsel %vm2119, %v2112, %v2116
    %v2121 = vand.u32 2147483647, %v1726
    %vm2122 = vcmp.eq.f32.partialorder %v2121, 8.507059e+37
    %v2123 = vand.u32 %v1726, 2147483648
    %v2124 = vor.u32 1.1754944e-38, %v2123
    %v2125 = vsel %vm2122, %v2124, %v2120
    %v2126 = vrcp.pop %v1729
    %v2127 = vmul.f32 %v1729, %v2126
    %v2128 = vsub.f32 1.0, %v2127
    %v2129 = vmul.f32 %v2126, %v2128
    %v2130 = vadd.f32 %v2126, %v2129
    %vm2131 = vweird.f32 %v1729
    %vm2132 = vweird.f32 %v2126
    %vm2133 = vmor %vm2131, %vm2132
    %v2134 = vsel %vm2133, %v2126, %v2130
    %v2135 = vand.u32 2147483647, %v1729
    %vm2136 = vcmp.eq.f32.partialorder %v2135, 8.507059e+37
    %v2137 = vand.u32 %v1729, 2147483648
    %v2138 = vor.u32 1.1754944e-38, %v2137
    %v2139 = vsel %vm2136, %v2138, %v2134
    %v2140 = vrcp.pop %v1732
    %v2141 = vmul.f32 %v1732, %v2140
    %v2142 = vsub.f32 1.0, %v2141
    %v2143 = vmul.f32 %v2140, %v2142
    %v2144 = vadd.f32 %v2140, %v2143
    %vm2145 = vweird.f32 %v1732
    %vm2146 = vweird.f32 %v2140
    %vm2147 = vmor %vm2145, %vm2146
    %v2148 = vsel %vm2147, %v2140, %v2144
    %v2149 = vand.u32 2147483647, %v1732
    %vm2150 = vcmp.eq.f32.partialorder %v2149, 8.507059e+37
    %v2151 = vand.u32 %v1732, 2147483648
    %v2152 = vor.u32 1.1754944e-38, %v2151
    %v2153 = vsel %vm2150, %v2152, %v2148
    %v2154 = vrcp.pop %v1735
    %v2155 = vmul.f32 %v1735, %v2154
    %v2156 = vsub.f32 1.0, %v2155
    %v2157 = vmul.f32 %v2154, %v2156
    %v2158 = vadd.f32 %v2154, %v2157
    %vm2159 = vweird.f32 %v1735
    %vm2160 = vweird.f32 %v2154
    %vm2161 = vmor %vm2159, %vm2160
    %v2162 = vsel %vm2161, %v2154, %v2158
    %v2163 = vand.u32 2147483647, %v1735
    %vm2164 = vcmp.eq.f32.partialorder %v2163, 8.507059e+37
    %v2165 = vand.u32 %v1735, 2147483648
    %v2166 = vor.u32 1.1754944e-38, %v2165
    %v2167 = vsel %vm2164, %v2166, %v2162
    %v2168 = vrcp.pop %v1738
    %v2169 = vmul.f32 %v1738, %v2168
    %v2170 = vsub.f32 1.0, %v2169
    %v2171 = vmul.f32 %v2168, %v2170
    %v2172 = vadd.f32 %v2168, %v2171
    %vm2173 = vweird.f32 %v1738
    %vm2174 = vweird.f32 %v2168
    %vm2175 = vmor %vm2173, %vm2174
    %v2176 = vsel %vm2175, %v2168, %v2172
    %v2177 = vand.u32 2147483647, %v1738
    %vm2178 = vcmp.eq.f32.partialorder %v2177, 8.507059e+37
    %v2179 = vand.u32 %v1738, 2147483648
    %v2180 = vor.u32 1.1754944e-38, %v2179
    %v2181 = vsel %vm2178, %v2180, %v2176
    %v2182 = vrcp.pop %v1741
    %v2183 = vmul.f32 %v1741, %v2182
    %v2184 = vsub.f32 1.0, %v2183
    %v2185 = vmul.f32 %v2182, %v2184
    %v2186 = vadd.f32 %v2182, %v2185
    %vm2187 = vweird.f32 %v1741
    %vm2188 = vweird.f32 %v2182
    %vm2189 = vmor %vm2187, %vm2188
    %v2190 = vsel %vm2189, %v2182, %v2186
    %v2191 = vand.u32 2147483647, %v1741
    %vm2192 = vcmp.eq.f32.partialorder %v2191, 8.507059e+37
    %v2193 = vand.u32 %v1741, 2147483648
    %v2194 = vor.u32 1.1754944e-38, %v2193
    %v2195 = vsel %vm2192, %v2194, %v2190
    %v2196 = vrcp.pop %v1744
    %v2197 = vmul.f32 %v1744, %v2196
    %v2198 = vsub.f32 1.0, %v2197
    %v2199 = vmul.f32 %v2196, %v2198
    %v2200 = vadd.f32 %v2196, %v2199
    %vm2201 = vweird.f32 %v1744
    %vm2202 = vweird.f32 %v2196
    %vm2203 = vmor %vm2201, %vm2202
    %v2204 = vsel %vm2203, %v2196, %v2200
    %v2205 = vand.u32 2147483647, %v1744
    %vm2206 = vcmp.eq.f32.partialorder %v2205, 8.507059e+37
    %v2207 = vand.u32 %v1744, 2147483648
    %v2208 = vor.u32 1.1754944e-38, %v2207
    %v2209 = vsel %vm2206, %v2208, %v2204
    %v2210 = vrcp.pop %v1747
    %v2211 = vmul.f32 %v1747, %v2210
    %v2212 = vsub.f32 1.0, %v2211
    %v2213 = vmul.f32 %v2210, %v2212
    %v2214 = vadd.f32 %v2210, %v2213
    %vm2215 = vweird.f32 %v1747
    %vm2216 = vweird.f32 %v2210
    %vm2217 = vmor %vm2215, %vm2216
    %v2218 = vsel %vm2217, %v2210, %v2214
    %v2219 = vand.u32 2147483647, %v1747
    %vm2220 = vcmp.eq.f32.partialorder %v2219, 8.507059e+37
    %v2221 = vand.u32 %v1747, 2147483648
    %v2222 = vor.u32 1.1754944e-38, %v2221
    %v2223 = vsel %vm2220, %v2222, %v2218
    %v2224 = vrcp.pop %v1750
    %v2225 = vmul.f32 %v1750, %v2224
    %v2226 = vsub.f32 1.0, %v2225
    %v2227 = vmul.f32 %v2224, %v2226
    %v2228 = vadd.f32 %v2224, %v2227
    %vm2229 = vweird.f32 %v1750
    %vm2230 = vweird.f32 %v2224
    %vm2231 = vmor %vm2229, %vm2230
    %v2232 = vsel %vm2231, %v2224, %v2228
    %v2233 = vand.u32 2147483647, %v1750
    %vm2234 = vcmp.eq.f32.partialorder %v2233, 8.507059e+37
    %v2235 = vand.u32 %v1750, 2147483648
    %v2236 = vor.u32 1.1754944e-38, %v2235
    %v2237 = vsel %vm2234, %v2236, %v2232
    %v2238 = vrcp.pop %v1753
    %v2239 = vmul.f32 %v1753, %v2238
    %v2240 = vsub.f32 1.0, %v2239
    %v2241 = vmul.f32 %v2238, %v2240
    %v2242 = vadd.f32 %v2238, %v2241
    %vm2243 = vweird.f32 %v1753
    %vm2244 = vweird.f32 %v2238
    %vm2245 = vmor %vm2243, %vm2244
    %v2246 = vsel %vm2245, %v2238, %v2242
    %v2247 = vand.u32 2147483647, %v1753
    %vm2248 = vcmp.eq.f32.partialorder %v2247, 8.507059e+37
    %v2249 = vand.u32 %v1753, 2147483648
    %v2250 = vor.u32 1.1754944e-38, %v2249
    %v2251 = vsel %vm2248, %v2250, %v2246
    %v2252 = vrcp.pop %v1756
    %v2253 = vmul.f32 %v1756, %v2252
    %v2254 = vsub.f32 1.0, %v2253
    %v2255 = vmul.f32 %v2252, %v2254
    %v2256 = vadd.f32 %v2252, %v2255
    %vm2257 = vweird.f32 %v1756
    %vm2258 = vweird.f32 %v2252
    %vm2259 = vmor %vm2257, %vm2258
    %v2260 = vsel %vm2259, %v2252, %v2256
    %v2261 = vand.u32 2147483647, %v1756
    %vm2262 = vcmp.eq.f32.partialorder %v2261, 8.507059e+37
    %v2263 = vand.u32 %v1756, 2147483648
    %v2264 = vor.u32 1.1754944e-38, %v2263
    %v2265 = vsel %vm2262, %v2264, %v2260
    %v2266 = vrcp.pop %v1759
    %v2267 = vmul.f32 %v1759, %v2266
    %v2268 = vsub.f32 1.0, %v2267
    %v2269 = vmul.f32 %v2266, %v2268
    %v2270 = vadd.f32 %v2266, %v2269
    %vm2271 = vweird.f32 %v1759
    %vm2272 = vweird.f32 %v2266
    %vm2273 = vmor %vm2271, %vm2272
    %v2274 = vsel %vm2273, %v2266, %v2270
    %v2275 = vand.u32 2147483647, %v1759
    %vm2276 = vcmp.eq.f32.partialorder %v2275, 8.507059e+37
    %v2277 = vand.u32 %v1759, 2147483648
    %v2278 = vor.u32 1.1754944e-38, %v2277
    %v2279 = vsel %vm2276, %v2278, %v2274
    %v2280 = vmul.f32 %v1792, %v2069
    %v2281 = vmul.f32 %v1795, %v2083
    %v2282 = vmul.f32 %v1829, %v2097
    %v2283 = vmul.f32 %v1832, %v2111
    %v2284 = vmul.f32 %v1866, %v2125
    %v2285 = vmul.f32 %v1869, %v2139
    %v2286 = vmul.f32 %v1903, %v2153
    %v2287 = vmul.f32 %v1906, %v2167
    %v2288 = vmul.f32 %v1940, %v2181
    %v2289 = vmul.f32 %v1943, %v2195
    %v2290 = vmul.f32 %v1977, %v2209
    %v2291 = vmul.f32 %v1980, %v2223
    %v2292 = vmul.f32 %v2014, %v2237
    %v2293 = vmul.f32 %v2017, %v2251
    %v2294 = vmul.f32 %v2051, %v2265
    %v2295 = vmul.f32 %v2054, %v2279
    %v2296 = vld [vmem:[#allocation8 + $0x20] sm:$0xff]
    %v2297 = vld [vmem:[#allocation8 + $0x28] sm:$0xff]
    %v2298 = vld [vmem:[#allocation8 + $0x30] sm:$0xff]
    %v2299 = vld [vmem:[#allocation8 + $0x38] sm:$0xff]
    %v2301 = vsel %vm370, %v2280, 0
    %v2304 = vsel %vm370, %v2281, 0
    %v2307 = vsel %vm370, %v2282, 0
    %v2310 = vsel %vm370, %v2283, 0
    %v2313 = vsel %vm370, %v2284, 0
    %v2316 = vsel %vm370, %v2285, 0
    %v2319 = vsel %vm370, %v2286, 0
    %v2322 = vsel %vm370, %v2287, 0
    %v2325 = vsel %vm370, %v2288, 0
    %v2328 = vsel %vm370, %v2289, 0
    %v2331 = vsel %vm370, %v2290, 0
    %v2334 = vsel %vm370, %v2291, 0
    %v2337 = vsel %vm370, %v2292, 0
    %v2340 = vsel %vm370, %v2293, 0
    %v2343 = vsel %vm370, %v2294, 0
    %v2346 = vsel %vm370, %v2295, 0
    %2348 = vmatpush.msra.mxu0 0.0
    %2349 = vmatpush.msra.mxu0 0.0
    %2350 = vmatpush.msra.mxu0 0.0
    %2351 = vmatpush.msra.mxu0 0.0
    %2352 = vmatpush.msra.mxu0 0.0
    %2353 = vmatpush.msra.mxu0 0.0
    %2354 = vmatpush.msra.mxu0 0.0
    %2355 = vmatpush.msra.mxu0 0.0
    %2356 = vmatpush.msra.mxu0 0.0
    %2357 = vmatpush.msra.mxu0 0.0
    %2358 = vmatpush.msra.mxu0 0.0
    %2359 = vmatpush.msra.mxu0 0.0
    %2360 = vmatpush.msra.mxu0 %v2299
    %2361 = vmatpush.msra.mxu0 %v2298
    %2362 = vmatpush.msra.mxu0 %v2297
    %2363 = vmatpush.msra.mxu0 %v2296
    %2364 = vmatmul.f32.gmra.mxu0 %v2301
    %v2365 = vpop.f32.mrf.mxu0
    %v2366 = vadd.f32 0.0, %v2365
    %2367 = vmatmul.f32.gmra.mxu0 %v2304
    %v2368 = vpop.f32.mrf.mxu0
    %v2369 = vadd.f32 0.0, %v2368
    %2370 = vmatmul.f32.gmra.mxu0 %v2307
    %v2371 = vpop.f32.mrf.mxu0
    %v2372 = vadd.f32 0.0, %v2371
    %2373 = vmatmul.f32.gmra.mxu0 %v2310
    %v2374 = vpop.f32.mrf.mxu0
    %v2375 = vadd.f32 0.0, %v2374
    %2376 = vmatmul.f32.gmra.mxu0 %v2313
    %v2377 = vpop.f32.mrf.mxu0
    %v2378 = vadd.f32 0.0, %v2377
    %2379 = vmatmul.f32.gmra.mxu0 %v2316
    %v2380 = vpop.f32.mrf.mxu0
    %v2381 = vadd.f32 0.0, %v2380
    %2382 = vmatmul.f32.gmra.mxu0 %v2319
    %v2383 = vpop.f32.mrf.mxu0
    %v2384 = vadd.f32 0.0, %v2383
    %2385 = vmatmul.f32.gmra.mxu0 %v2322
    %v2386 = vpop.f32.mrf.mxu0
    %v2387 = vadd.f32 0.0, %v2386
    %2388 = vmatmul.f32.gmra.mxu0 %v2325
    %v2389 = vpop.f32.mrf.mxu0
    %v2390 = vadd.f32 0.0, %v2389
    %2391 = vmatmul.f32.gmra.mxu0 %v2328
    %v2392 = vpop.f32.mrf.mxu0
    %v2393 = vadd.f32 0.0, %v2392
    %2394 = vmatmul.f32.gmra.mxu0 %v2331
    %v2395 = vpop.f32.mrf.mxu0
    %v2396 = vadd.f32 0.0, %v2395
    %2397 = vmatmul.f32.gmra.mxu0 %v2334
    %v2398 = vpop.f32.mrf.mxu0
    %v2399 = vadd.f32 0.0, %v2398
    %2400 = vmatmul.f32.gmra.mxu0 %v2337
    %v2401 = vpop.f32.mrf.mxu0
    %v2402 = vadd.f32 0.0, %v2401
    %2403 = vmatmul.f32.gmra.mxu0 %v2340
    %v2404 = vpop.f32.mrf.mxu0
    %v2405 = vadd.f32 0.0, %v2404
    %2406 = vmatmul.f32.gmra.mxu0 %v2343
    %v2407 = vpop.f32.mrf.mxu0
    %v2408 = vadd.f32 0.0, %v2407
    %2409 = vmatmul.f32.gmra.mxu0 %v2346
    %v2410 = vpop.f32.mrf.mxu0
    %v2411 = vadd.f32 0.0, %v2410
    %2412 = vdwg.mxu0
    %v2414 = vsel %vm370, %v1268, 0
    %v2417 = vsel %vm370, %v1269, 0
    %v2420 = vsel %vm370, %v1270, 0
    %v2423 = vsel %vm370, %v1271, 0
    %v2426 = vsel %vm370, %v1272, 0
    %v2429 = vsel %vm370, %v1273, 0
    %v2432 = vsel %vm370, %v1274, 0
    %v2435 = vsel %vm370, %v1275, 0
    %v2438 = vsel %vm370, %v1276, 0
    %v2441 = vsel %vm370, %v1277, 0
    %v2444 = vsel %vm370, %v1278, 0
    %v2447 = vsel %vm370, %v1279, 0
    %v2450 = vsel %vm370, %v1280, 0
    %v2453 = vsel %vm370, %v1281, 0
    %v2456 = vsel %vm370, %v1282, 0
    %v2459 = vsel %vm370, %v1283, 0
    %2461 = vmatpush.msra.mxu0 0.0
    %2462 = vmatpush.msra.mxu0 0.0
    %2463 = vmatpush.msra.mxu0 0.0
    %2464 = vmatpush.msra.mxu0 0.0
    %2465 = vmatpush.msra.mxu0 0.0
    %2466 = vmatpush.msra.mxu0 0.0
    %2467 = vmatpush.msra.mxu0 0.0
    %2468 = vmatpush.msra.mxu0 0.0
    %2469 = vmatpush.msra.mxu0 0.0
    %2470 = vmatpush.msra.mxu0 0.0
    %2471 = vmatpush.msra.mxu0 0.0
    %2472 = vmatpush.msra.mxu0 0.0
    %2473 = vmatpush.msra.mxu0 %v1287
    %2474 = vmatpush.msra.mxu0 %v1286
    %2475 = vmatpush.msra.mxu0 %v1285
    %2476 = vmatpush.msra.mxu0 %v1284
    %2477 = vmatmul.f32.gmra.mxu0 %v2414
    %v2478 = vpop.f32.mrf.mxu0
    %v2479 = vadd.f32 %v2366, %v2478
    %2480 = vmatmul.f32.gmra.mxu0 %v2417
    %v2481 = vpop.f32.mrf.mxu0
    %v2482 = vadd.f32 %v2369, %v2481
    %2483 = vmatmul.f32.gmra.mxu0 %v2420
    %v2484 = vpop.f32.mrf.mxu0
    %v2485 = vadd.f32 %v2372, %v2484
    %2486 = vmatmul.f32.gmra.mxu0 %v2423
    %v2487 = vpop.f32.mrf.mxu0
    %v2488 = vadd.f32 %v2375, %v2487
    %2489 = vmatmul.f32.gmra.mxu0 %v2426
    %v2490 = vpop.f32.mrf.mxu0
    %v2491 = vadd.f32 %v2378, %v2490
    %2492 = vmatmul.f32.gmra.mxu0 %v2429
    %v2493 = vpop.f32.mrf.mxu0
    %v2494 = vadd.f32 %v2381, %v2493
    %2495 = vmatmul.f32.gmra.mxu0 %v2432
    %v2496 = vpop.f32.mrf.mxu0
    %v2497 = vadd.f32 %v2384, %v2496
    %2498 = vmatmul.f32.gmra.mxu0 %v2435
    %v2499 = vpop.f32.mrf.mxu0
    %v2500 = vadd.f32 %v2387, %v2499
    %2501 = vmatmul.f32.gmra.mxu0 %v2438
    %v2502 = vpop.f32.mrf.mxu0
    %v2503 = vadd.f32 %v2390, %v2502
    %2504 = vmatmul.f32.gmra.mxu0 %v2441
    %v2505 = vpop.f32.mrf.mxu0
    %v2506 = vadd.f32 %v2393, %v2505
    %2507 = vmatmul.f32.gmra.mxu0 %v2444
    %v2508 = vpop.f32.mrf.mxu0
    %v2509 = vadd.f32 %v2396, %v2508
    %2510 = vmatmul.f32.gmra.mxu0 %v2447
    %v2511 = vpop.f32.mrf.mxu0
    %v2512 = vadd.f32 %v2399, %v2511
    %2513 = vmatmul.f32.gmra.mxu0 %v2450
    %v2514 = vpop.f32.mrf.mxu0
    %v2515 = vadd.f32 %v2402, %v2514
    %2516 = vmatmul.f32.gmra.mxu0 %v2453
    %v2517 = vpop.f32.mrf.mxu0
    %v2518 = vadd.f32 %v2405, %v2517
    %2519 = vmatmul.f32.gmra.mxu0 %v2456
    %v2520 = vpop.f32.mrf.mxu0
    %v2521 = vadd.f32 %v2408, %v2520
    %2522 = vmatmul.f32.gmra.mxu0 %v2459
    %v2523 = vpop.f32.mrf.mxu0
    %v2524 = vadd.f32 %v2411, %v2523
    %2525 = vdwg.mxu0
    %2526 = vrot.lane.b32.xlu0 %v193, 64
    %v2527 = vpop.permute.xlu0 %2526
    %2528 = vrot.lane.b32.xlu0 %v196, 64
    %v2529 = vpop.permute.xlu0 %2528
    %2530 = vrot.lane.b32.xlu0 %v258, 64
    %v2531 = vpop.permute.xlu0 %2530
    %2532 = vrot.lane.b32.xlu0 %v261, 64
    %v2533 = vpop.permute.xlu0 %2532
    %v2534 = vsel %vm370, %v2527, 0
    %v2536 = vsel %vm370, %v2529, 0
    %v2538 = vsel %vm370, %v2531, 0
    %v2540 = vsel %vm370, %v2533, 0
    %2542 = vmatpush.xpose.msra.mxu0 0.0
    %2543 = vmatpush.xpose.msra.mxu0 0.0
    %2544 = vmatpush.xpose.msra.mxu0 0.0
    %2545 = vmatpush.xpose.msra.mxu0 0.0
    %2546 = vmatpush.xpose.msra.mxu0 0.0
    %2547 = vmatpush.xpose.msra.mxu0 0.0
    %2548 = vmatpush.xpose.msra.mxu0 0.0
    %2549 = vmatpush.xpose.msra.mxu0 0.0
    %2550 = vmatpush.xpose.msra.mxu0 0.0
    %2551 = vmatpush.xpose.msra.mxu0 0.0
    %2552 = vmatpush.xpose.msra.mxu0 0.0
    %2553 = vmatpush.xpose.msra.mxu0 0.0
    %2554 = vmatpush.xpose.msra.mxu0 0.0
    %2555 = vmatpush.xpose.msra.mxu0 0.0
    %2556 = vmatpush.xpose.msra.mxu0 %v2540
    %2557 = vmatpush.xpose.msra.mxu0 %v2538
    %2558 = vmatmul.f32.gmra.mxu0 %v2534
    %v2559 = vpop.f32.mrf.mxu0
    %v2560 = vadd.f32 0.0, %v2559
    %2561 = vmatmul.f32.gmra.mxu0 %v2536
    %v2562 = vpop.f32.mrf.mxu0
    %v2563 = vadd.f32 0.0, %v2562
    %2564 = vdwg.mxu0
    %2565 = vrot.lane.b32.xlu0 %v199, 64
    %v2566 = vpop.permute.xlu0 %2565
    %2567 = vrot.lane.b32.xlu0 %v202, 64
    %v2568 = vpop.permute.xlu0 %2567
    %2569 = vrot.lane.b32.xlu0 %v264, 64
    %v2570 = vpop.permute.xlu0 %2569
    %2571 = vrot.lane.b32.xlu0 %v267, 64
    %v2572 = vpop.permute.xlu0 %2571
    %v2573 = vsel %vm370, %v2566, 0
    %v2575 = vsel %vm370, %v2568, 0
    %v2577 = vsel %vm370, %v2570, 0
    %v2579 = vsel %vm370, %v2572, 0
    %2581 = vmatpush.xpose.msra.mxu0 0.0
    %2582 = vmatpush.xpose.msra.mxu0 0.0
    %2583 = vmatpush.xpose.msra.mxu0 0.0
    %2584 = vmatpush.xpose.msra.mxu0 0.0
    %2585 = vmatpush.xpose.msra.mxu0 0.0
    %2586 = vmatpush.xpose.msra.mxu0 0.0
    %2587 = vmatpush.xpose.msra.mxu0 0.0
    %2588 = vmatpush.xpose.msra.mxu0 0.0
    %2589 = vmatpush.xpose.msra.mxu0 0.0
    %2590 = vmatpush.xpose.msra.mxu0 0.0
    %2591 = vmatpush.xpose.msra.mxu0 0.0
    %2592 = vmatpush.xpose.msra.mxu0 0.0
    %2593 = vmatpush.xpose.msra.mxu0 0.0
    %2594 = vmatpush.xpose.msra.mxu0 0.0
    %2595 = vmatpush.xpose.msra.mxu0 %v2579
    %2596 = vmatpush.xpose.msra.mxu0 %v2577
    %2597 = vmatmul.f32.gmra.mxu0 %v2573
    %v2598 = vpop.f32.mrf.mxu0
    %v2599 = vadd.f32 0.0, %v2598
    %2600 = vmatmul.f32.gmra.mxu0 %v2575
    %v2601 = vpop.f32.mrf.mxu0
    %v2602 = vadd.f32 0.0, %v2601
    %2603 = vdwg.mxu0
    %2604 = vrot.lane.b32.xlu0 %v205, 64
    %v2605 = vpop.permute.xlu0 %2604
    %2606 = vrot.lane.b32.xlu0 %v208, 64
    %v2607 = vpop.permute.xlu0 %2606
    %2608 = vrot.lane.b32.xlu0 %v270, 64
    %v2609 = vpop.permute.xlu0 %2608
    %2610 = vrot.lane.b32.xlu0 %v273, 64
    %v2611 = vpop.permute.xlu0 %2610
    %v2612 = vsel %vm370, %v2605, 0
    %v2614 = vsel %vm370, %v2607, 0
    %v2616 = vsel %vm370, %v2609, 0
    %v2618 = vsel %vm370, %v2611, 0
    %2620 = vmatpush.xpose.msra.mxu0 0.0
    %2621 = vmatpush.xpose.msra.mxu0 0.0
    %2622 = vmatpush.xpose.msra.mxu0 0.0
    %2623 = vmatpush.xpose.msra.mxu0 0.0
    %2624 = vmatpush.xpose.msra.mxu0 0.0
    %2625 = vmatpush.xpose.msra.mxu0 0.0
    %2626 = vmatpush.xpose.msra.mxu0 0.0
    %2627 = vmatpush.xpose.msra.mxu0 0.0
    %2628 = vmatpush.xpose.msra.mxu0 0.0
    %2629 = vmatpush.xpose.msra.mxu0 0.0
    %2630 = vmatpush.xpose.msra.mxu0 0.0
    %2631 = vmatpush.xpose.msra.mxu0 0.0
    %2632 = vmatpush.xpose.msra.mxu0 0.0
    %2633 = vmatpush.xpose.msra.mxu0 0.0
    %2634 = vmatpush.xpose.msra.mxu0 %v2618
    %2635 = vmatpush.xpose.msra.mxu0 %v2616
    %2636 = vmatmul.f32.gmra.mxu0 %v2612
    %v2637 = vpop.f32.mrf.mxu0
    %v2638 = vadd.f32 0.0, %v2637
    %2639 = vmatmul.f32.gmra.mxu0 %v2614
    %v2640 = vpop.f32.mrf.mxu0
    %v2641 = vadd.f32 0.0, %v2640
    %2642 = vdwg.mxu0
    %2643 = vrot.lane.b32.xlu0 %v211, 64
    %v2644 = vpop.permute.xlu0 %2643
    %2645 = vrot.lane.b32.xlu0 %v214, 64
    %v2646 = vpop.permute.xlu0 %2645
    %2647 = vrot.lane.b32.xlu0 %v276, 64
    %v2648 = vpop.permute.xlu0 %2647
    %2649 = vrot.lane.b32.xlu0 %v279, 64
    %v2650 = vpop.permute.xlu0 %2649
    %v2651 = vsel %vm370, %v2644, 0
    %v2653 = vsel %vm370, %v2646, 0
    %v2655 = vsel %vm370, %v2648, 0
    %v2657 = vsel %vm370, %v2650, 0
    %2659 = vmatpush.xpose.msra.mxu0 0.0
    %2660 = vmatpush.xpose.msra.mxu0 0.0
    %2661 = vmatpush.xpose.msra.mxu0 0.0
    %2662 = vmatpush.xpose.msra.mxu0 0.0
    %2663 = vmatpush.xpose.msra.mxu0 0.0
    %2664 = vmatpush.xpose.msra.mxu0 0.0
    %2665 = vmatpush.xpose.msra.mxu0 0.0
    %2666 = vmatpush.xpose.msra.mxu0 0.0
    %2667 = vmatpush.xpose.msra.mxu0 0.0
    %2668 = vmatpush.xpose.msra.mxu0 0.0
    %2669 = vmatpush.xpose.msra.mxu0 0.0
    %2670 = vmatpush.xpose.msra.mxu0 0.0
    %2671 = vmatpush.xpose.msra.mxu0 0.0
    %2672 = vmatpush.xpose.msra.mxu0 0.0
    %2673 = vmatpush.xpose.msra.mxu0 %v2657
    %2674 = vmatpush.xpose.msra.mxu0 %v2655
    %2675 = vmatmul.f32.gmra.mxu0 %v2651
    %v2676 = vpop.f32.mrf.mxu0
    %v2677 = vadd.f32 0.0, %v2676
    %2678 = vmatmul.f32.gmra.mxu0 %v2653
    %v2679 = vpop.f32.mrf.mxu0
    %v2680 = vadd.f32 0.0, %v2679
    %2681 = vdwg.mxu0
    %2682 = vrot.lane.b32.xlu0 %v217, 64
    %v2683 = vpop.permute.xlu0 %2682
    %2684 = vrot.lane.b32.xlu0 %v220, 64
    %v2685 = vpop.permute.xlu0 %2684
    %2686 = vrot.lane.b32.xlu0 %v282, 64
    %v2687 = vpop.permute.xlu0 %2686
    %2688 = vrot.lane.b32.xlu0 %v285, 64
    %v2689 = vpop.permute.xlu0 %2688
    %v2690 = vsel %vm370, %v2683, 0
    %v2692 = vsel %vm370, %v2685, 0
    %v2694 = vsel %vm370, %v2687, 0
    %v2696 = vsel %vm370, %v2689, 0
    %2698 = vmatpush.xpose.msra.mxu0 0.0
    %2699 = vmatpush.xpose.msra.mxu0 0.0
    %2700 = vmatpush.xpose.msra.mxu0 0.0
    %2701 = vmatpush.xpose.msra.mxu0 0.0
    %2702 = vmatpush.xpose.msra.mxu0 0.0
    %2703 = vmatpush.xpose.msra.mxu0 0.0
    %2704 = vmatpush.xpose.msra.mxu0 0.0
    %2705 = vmatpush.xpose.msra.mxu0 0.0
    %2706 = vmatpush.xpose.msra.mxu0 0.0
    %2707 = vmatpush.xpose.msra.mxu0 0.0
    %2708 = vmatpush.xpose.msra.mxu0 0.0
    %2709 = vmatpush.xpose.msra.mxu0 0.0
    %2710 = vmatpush.xpose.msra.mxu0 0.0
    %2711 = vmatpush.xpose.msra.mxu0 0.0
    %2712 = vmatpush.xpose.msra.mxu0 %v2696
    %2713 = vmatpush.xpose.msra.mxu0 %v2694
    %2714 = vmatmul.f32.gmra.mxu0 %v2690
    %v2715 = vpop.f32.mrf.mxu0
    %v2716 = vadd.f32 0.0, %v2715
    %2717 = vmatmul.f32.gmra.mxu0 %v2692
    %v2718 = vpop.f32.mrf.mxu0
    %v2719 = vadd.f32 0.0, %v2718
    %2720 = vdwg.mxu0
    %2721 = vrot.lane.b32.xlu0 %v223, 64
    %v2722 = vpop.permute.xlu0 %2721
    %2723 = vrot.lane.b32.xlu0 %v226, 64
    %v2724 = vpop.permute.xlu0 %2723
    %2725 = vrot.lane.b32.xlu0 %v288, 64
    %v2726 = vpop.permute.xlu0 %2725
    %2727 = vrot.lane.b32.xlu0 %v291, 64
    %v2728 = vpop.permute.xlu0 %2727
    %v2729 = vsel %vm370, %v2722, 0
    %v2731 = vsel %vm370, %v2724, 0
    %v2733 = vsel %vm370, %v2726, 0
    %v2735 = vsel %vm370, %v2728, 0
    %2737 = vmatpush.xpose.msra.mxu0 0.0
    %2738 = vmatpush.xpose.msra.mxu0 0.0
    %2739 = vmatpush.xpose.msra.mxu0 0.0
    %2740 = vmatpush.xpose.msra.mxu0 0.0
    %2741 = vmatpush.xpose.msra.mxu0 0.0
    %2742 = vmatpush.xpose.msra.mxu0 0.0
    %2743 = vmatpush.xpose.msra.mxu0 0.0
    %2744 = vmatpush.xpose.msra.mxu0 0.0
    %2745 = vmatpush.xpose.msra.mxu0 0.0
    %2746 = vmatpush.xpose.msra.mxu0 0.0
    %2747 = vmatpush.xpose.msra.mxu0 0.0
    %2748 = vmatpush.xpose.msra.mxu0 0.0
    %2749 = vmatpush.xpose.msra.mxu0 0.0
    %2750 = vmatpush.xpose.msra.mxu0 0.0
    %2751 = vmatpush.xpose.msra.mxu0 %v2735
    %2752 = vmatpush.xpose.msra.mxu0 %v2733
    %2753 = vmatmul.f32.gmra.mxu0 %v2729
    %v2754 = vpop.f32.mrf.mxu0
    %v2755 = vadd.f32 0.0, %v2754
    %2756 = vmatmul.f32.gmra.mxu0 %v2731
    %v2757 = vpop.f32.mrf.mxu0
    %v2758 = vadd.f32 0.0, %v2757
    %2759 = vdwg.mxu0
    %2760 = vrot.lane.b32.xlu0 %v229, 64
    %v2761 = vpop.permute.xlu0 %2760
    %2762 = vrot.lane.b32.xlu0 %v232, 64
    %v2763 = vpop.permute.xlu0 %2762
    %2764 = vrot.lane.b32.xlu0 %v294, 64
    %v2765 = vpop.permute.xlu0 %2764
    %2766 = vrot.lane.b32.xlu0 %v297, 64
    %v2767 = vpop.permute.xlu0 %2766
    %v2768 = vsel %vm370, %v2761, 0
    %v2770 = vsel %vm370, %v2763, 0
    %v2772 = vsel %vm370, %v2765, 0
    %v2774 = vsel %vm370, %v2767, 0
    %2776 = vmatpush.xpose.msra.mxu0 0.0
    %2777 = vmatpush.xpose.msra.mxu0 0.0
    %2778 = vmatpush.xpose.msra.mxu0 0.0
    %2779 = vmatpush.xpose.msra.mxu0 0.0
    %2780 = vmatpush.xpose.msra.mxu0 0.0
    %2781 = vmatpush.xpose.msra.mxu0 0.0
    %2782 = vmatpush.xpose.msra.mxu0 0.0
    %2783 = vmatpush.xpose.msra.mxu0 0.0
    %2784 = vmatpush.xpose.msra.mxu0 0.0
    %2785 = vmatpush.xpose.msra.mxu0 0.0
    %2786 = vmatpush.xpose.msra.mxu0 0.0
    %2787 = vmatpush.xpose.msra.mxu0 0.0
    %2788 = vmatpush.xpose.msra.mxu0 0.0
    %2789 = vmatpush.xpose.msra.mxu0 0.0
    %2790 = vmatpush.xpose.msra.mxu0 %v2774
    %2791 = vmatpush.xpose.msra.mxu0 %v2772
    %2792 = vmatmul.f32.gmra.mxu0 %v2768
    %v2793 = vpop.f32.mrf.mxu0
    %v2794 = vadd.f32 0.0, %v2793
    %2795 = vmatmul.f32.gmra.mxu0 %v2770
    %v2796 = vpop.f32.mrf.mxu0
    %v2797 = vadd.f32 0.0, %v2796
    %2798 = vdwg.mxu0
    %2799 = vrot.lane.b32.xlu0 %v235, 64
    %v2800 = vpop.permute.xlu0 %2799
    %2801 = vrot.lane.b32.xlu0 %v238, 64
    %v2802 = vpop.permute.xlu0 %2801
    %2803 = vrot.lane.b32.xlu0 %v300, 64
    %v2804 = vpop.permute.xlu0 %2803
    %2805 = vrot.lane.b32.xlu0 %v303, 64
    %v2806 = vpop.permute.xlu0 %2805
    %v2807 = vsel %vm370, %v2800, 0
    %v2809 = vsel %vm370, %v2802, 0
    %v2811 = vsel %vm370, %v2804, 0
    %v2813 = vsel %vm370, %v2806, 0
    %2815 = vmatpush.xpose.msra.mxu0 0.0
    %2816 = vmatpush.xpose.msra.mxu0 0.0
    %2817 = vmatpush.xpose.msra.mxu0 0.0
    %2818 = vmatpush.xpose.msra.mxu0 0.0
    %2819 = vmatpush.xpose.msra.mxu0 0.0
    %2820 = vmatpush.xpose.msra.mxu0 0.0
    %2821 = vmatpush.xpose.msra.mxu0 0.0
    %2822 = vmatpush.xpose.msra.mxu0 0.0
    %2823 = vmatpush.xpose.msra.mxu0 0.0
    %2824 = vmatpush.xpose.msra.mxu0 0.0
    %2825 = vmatpush.xpose.msra.mxu0 0.0
    %2826 = vmatpush.xpose.msra.mxu0 0.0
    %2827 = vmatpush.xpose.msra.mxu0 0.0
    %2828 = vmatpush.xpose.msra.mxu0 0.0
    %2829 = vmatpush.xpose.msra.mxu0 %v2813
    %2830 = vmatpush.xpose.msra.mxu0 %v2811
    %2831 = vmatmul.f32.gmra.mxu0 %v2807
    %v2832 = vpop.f32.mrf.mxu0
    %v2833 = vadd.f32 0.0, %v2832
    %2834 = vmatmul.f32.gmra.mxu0 %v2809
    %v2835 = vpop.f32.mrf.mxu0
    %v2836 = vadd.f32 0.0, %v2835
    %2837 = vdwg.mxu0
    %v2838 = vmul.f32 %v2560, 0.088388346
    %v2839 = vmul.f32 %v2563, 0.088388346
    %v2840 = vmul.f32 %v2599, 0.088388346
    %v2841 = vmul.f32 %v2602, 0.088388346
    %v2842 = vmul.f32 %v2638, 0.088388346
    %v2843 = vmul.f32 %v2641, 0.088388346
    %v2844 = vmul.f32 %v2677, 0.088388346
    %v2845 = vmul.f32 %v2680, 0.088388346
    %v2846 = vmul.f32 %v2716, 0.088388346
    %v2847 = vmul.f32 %v2719, 0.088388346
    %v2848 = vmul.f32 %v2755, 0.088388346
    %v2849 = vmul.f32 %v2758, 0.088388346
    %v2850 = vmul.f32 %v2794, 0.088388346
    %v2851 = vmul.f32 %v2797, 0.088388346
    %v2852 = vmul.f32 %v2833, 0.088388346
    %v2853 = vmul.f32 %v2836, 0.088388346
    %v2854 = vsel %vm667, %v2838, -inf
    %2855 = vmax.xlane.f32.xlu0 %v2854
    %v2856 = vpop.xlane.xlu0 %2855
    %v2857 = vsel %vm667, %v2839, -inf
    %2858 = vmax.xlane.f32.xlu0 %v2857
    %v2859 = vpop.xlane.xlu0 %2858
    %v2860 = vsel %vm667, %v2840, -inf
    %2861 = vmax.xlane.f32.xlu0 %v2860
    %v2862 = vpop.xlane.xlu0 %2861
    %v2863 = vsel %vm667, %v2841, -inf
    %2864 = vmax.xlane.f32.xlu0 %v2863
    %v2865 = vpop.xlane.xlu0 %2864
    %v2866 = vsel %vm667, %v2842, -inf
    %2867 = vmax.xlane.f32.xlu0 %v2866
    %v2868 = vpop.xlane.xlu0 %2867
    %v2869 = vsel %vm667, %v2843, -inf
    %2870 = vmax.xlane.f32.xlu0 %v2869
    %v2871 = vpop.xlane.xlu0 %2870
    %v2872 = vsel %vm667, %v2844, -inf
    %2873 = vmax.xlane.f32.xlu0 %v2872
    %v2874 = vpop.xlane.xlu0 %2873
    %v2875 = vsel %vm667, %v2845, -inf
    %2876 = vmax.xlane.f32.xlu0 %v2875
    %v2877 = vpop.xlane.xlu0 %2876
    %v2878 = vsel %vm667, %v2846, -inf
    %2879 = vmax.xlane.f32.xlu0 %v2878
    %v2880 = vpop.xlane.xlu0 %2879
    %v2881 = vsel %vm667, %v2847, -inf
    %2882 = vmax.xlane.f32.xlu0 %v2881
    %v2883 = vpop.xlane.xlu0 %2882
    %v2884 = vsel %vm667, %v2848, -inf
    %2885 = vmax.xlane.f32.xlu0 %v2884
    %v2886 = vpop.xlane.xlu0 %2885
    %v2887 = vsel %vm667, %v2849, -inf
    %2888 = vmax.xlane.f32.xlu0 %v2887
    %v2889 = vpop.xlane.xlu0 %2888
    %v2890 = vsel %vm667, %v2850, -inf
    %2891 = vmax.xlane.f32.xlu0 %v2890
    %v2892 = vpop.xlane.xlu0 %2891
    %v2893 = vsel %vm667, %v2851, -inf
    %2894 = vmax.xlane.f32.xlu0 %v2893
    %v2895 = vpop.xlane.xlu0 %2894
    %v2896 = vsel %vm667, %v2852, -inf
    %2897 = vmax.xlane.f32.xlu0 %v2896
    %v2898 = vpop.xlane.xlu0 %2897
    %v2899 = vsel %vm667, %v2853, -inf
    %2900 = vmax.xlane.f32.xlu0 %v2899
    %v2901 = vpop.xlane.xlu0 %2900
    %v2902 = vsub.f32 %v2838, %v2856
    %v2903 = vsub.f32 %v2839, %v2859
    %v2904 = vsub.f32 %v2840, %v2862
    %v2905 = vsub.f32 %v2841, %v2865
    %v2906 = vsub.f32 %v2842, %v2868
    %v2907 = vsub.f32 %v2843, %v2871
    %v2908 = vsub.f32 %v2844, %v2874
    %v2909 = vsub.f32 %v2845, %v2877
    %v2910 = vsub.f32 %v2846, %v2880
    %v2911 = vsub.f32 %v2847, %v2883
    %v2912 = vsub.f32 %v2848, %v2886
    %v2913 = vsub.f32 %v2849, %v2889
    %v2914 = vsub.f32 %v2850, %v2892
    %v2915 = vsub.f32 %v2851, %v2895
    %v2916 = vsub.f32 %v2852, %v2898
    %v2917 = vsub.f32 %v2853, %v2901
    %v2918 = vmul.f32 %v2902, 1.442695
    %v2919 = vpow.pop %v2918
    %v2920 = vmul.f32 %v2903, 1.442695
    %v2921 = vpow.pop %v2920
    %v2922 = vmul.f32 %v2904, 1.442695
    %v2923 = vpow.pop %v2922
    %v2924 = vmul.f32 %v2905, 1.442695
    %v2925 = vpow.pop %v2924
    %v2926 = vmul.f32 %v2906, 1.442695
    %v2927 = vpow.pop %v2926
    %v2928 = vmul.f32 %v2907, 1.442695
    %v2929 = vpow.pop %v2928
    %v2930 = vmul.f32 %v2908, 1.442695
    %v2931 = vpow.pop %v2930
    %v2932 = vmul.f32 %v2909, 1.442695
    %v2933 = vpow.pop %v2932
    %v2934 = vmul.f32 %v2910, 1.442695
    %v2935 = vpow.pop %v2934
    %v2936 = vmul.f32 %v2911, 1.442695
    %v2937 = vpow.pop %v2936
    %v2938 = vmul.f32 %v2912, 1.442695
    %v2939 = vpow.pop %v2938
    %v2940 = vmul.f32 %v2913, 1.442695
    %v2941 = vpow.pop %v2940
    %v2942 = vmul.f32 %v2914, 1.442695
    %v2943 = vpow.pop %v2942
    %v2944 = vmul.f32 %v2915, 1.442695
    %v2945 = vpow.pop %v2944
    %v2946 = vmul.f32 %v2916, 1.442695
    %v2947 = vpow.pop %v2946
    %v2948 = vmul.f32 %v2917, 1.442695
    %v2949 = vpow.pop %v2948
    %v2950 = vsel %vm667, %v2919, 0.0
    %2951 = vadd.xlane.f32.xlu0 %v2950
    %v2952 = vpop.xlane.xlu0 %2951
    %v2953 = vsel %vm667, %v2921, 0.0
    %2954 = vadd.xlane.f32.xlu0 %v2953
    %v2955 = vpop.xlane.xlu0 %2954
    %v2956 = vsel %vm667, %v2923, 0.0
    %2957 = vadd.xlane.f32.xlu0 %v2956
    %v2958 = vpop.xlane.xlu0 %2957
    %v2959 = vsel %vm667, %v2925, 0.0
    %2960 = vadd.xlane.f32.xlu0 %v2959
    %v2961 = vpop.xlane.xlu0 %2960
    %v2962 = vsel %vm667, %v2927, 0.0
    %2963 = vadd.xlane.f32.xlu0 %v2962
    %v2964 = vpop.xlane.xlu0 %2963
    %v2965 = vsel %vm667, %v2929, 0.0
    %2966 = vadd.xlane.f32.xlu0 %v2965
    %v2967 = vpop.xlane.xlu0 %2966
    %v2968 = vsel %vm667, %v2931, 0.0
    %2969 = vadd.xlane.f32.xlu0 %v2968
    %v2970 = vpop.xlane.xlu0 %2969
    %v2971 = vsel %vm667, %v2933, 0.0
    %2972 = vadd.xlane.f32.xlu0 %v2971
    %v2973 = vpop.xlane.xlu0 %2972
    %v2974 = vsel %vm667, %v2935, 0.0
    %2975 = vadd.xlane.f32.xlu0 %v2974
    %v2976 = vpop.xlane.xlu0 %2975
    %v2977 = vsel %vm667, %v2937, 0.0
    %2978 = vadd.xlane.f32.xlu0 %v2977
    %v2979 = vpop.xlane.xlu0 %2978
    %v2980 = vsel %vm667, %v2939, 0.0
    %2981 = vadd.xlane.f32.xlu0 %v2980
    %v2982 = vpop.xlane.xlu0 %2981
    %v2983 = vsel %vm667, %v2941, 0.0
    %2984 = vadd.xlane.f32.xlu0 %v2983
    %v2985 = vpop.xlane.xlu0 %2984
    %v2986 = vsel %vm667, %v2943, 0.0
    %2987 = vadd.xlane.f32.xlu0 %v2986
    %v2988 = vpop.xlane.xlu0 %2987
    %v2989 = vsel %vm667, %v2945, 0.0
    %2990 = vadd.xlane.f32.xlu0 %v2989
    %v2991 = vpop.xlane.xlu0 %2990
    %v2992 = vsel %vm667, %v2947, 0.0
    %2993 = vadd.xlane.f32.xlu0 %v2992
    %v2994 = vpop.xlane.xlu0 %2993
    %v2995 = vsel %vm667, %v2949, 0.0
    %2996 = vadd.xlane.f32.xlu0 %v2995
    %v2997 = vpop.xlane.xlu0 %2996
    %2998 = vrot.lane.b32.xlu0 %v323, 64
    %v2999 = vpop.permute.xlu0 %2998
    %3000 = vrot.lane.b32.xlu0 %v326, 64
    %v3001 = vpop.permute.xlu0 %3000
    %v3005 = vsel %vm667, %v2919, 0
    %v3008 = vsel %vm667, %v2921, 0
    %3010 = vmatpush.msra.mxu0 0.0
    %3011 = vmatpush.msra.mxu0 0.0
    %3012 = vmatpush.msra.mxu0 0.0
    %3013 = vmatpush.msra.mxu0 0.0
    %3014 = vmatpush.msra.mxu0 0.0
    %3015 = vmatpush.msra.mxu0 0.0
    %3016 = vmatpush.msra.mxu0 0.0
    %3017 = vmatpush.msra.mxu0 0.0
    %3018 = vmatpush.msra.mxu0 0.0
    %3019 = vmatpush.msra.mxu0 0.0
    %3020 = vmatpush.msra.mxu0 0.0
    %3021 = vmatpush.msra.mxu0 0.0
    %3022 = vmatpush.msra.mxu0 0.0
    %3023 = vmatpush.msra.mxu0 0.0
    %3024 = vmatpush.msra.mxu0 %v3001
    %3025 = vmatpush.msra.mxu0 %v2999
    %3026 = vmatmul.f32.gmra.mxu0 %v3005
    %v3027 = vpop.f32.mrf.mxu0
    %v3028 = vadd.f32 0.0, %v3027
    %3029 = vmatmul.f32.gmra.mxu0 %v3008
    %v3030 = vpop.f32.mrf.mxu0
    %v3031 = vadd.f32 0.0, %v3030
    %3032 = vdwg.mxu0
    %3033 = vrot.lane.b32.xlu0 %v329, 64
    %v3034 = vpop.permute.xlu0 %3033
    %3035 = vrot.lane.b32.xlu0 %v332, 64
    %v3036 = vpop.permute.xlu0 %3035
    %v3040 = vsel %vm667, %v2923, 0
    %v3043 = vsel %vm667, %v2925, 0
    %3045 = vmatpush.msra.mxu0 0.0
    %3046 = vmatpush.msra.mxu0 0.0
    %3047 = vmatpush.msra.mxu0 0.0
    %3048 = vmatpush.msra.mxu0 0.0
    %3049 = vmatpush.msra.mxu0 0.0
    %3050 = vmatpush.msra.mxu0 0.0
    %3051 = vmatpush.msra.mxu0 0.0
    %3052 = vmatpush.msra.mxu0 0.0
    %3053 = vmatpush.msra.mxu0 0.0
    %3054 = vmatpush.msra.mxu0 0.0
    %3055 = vmatpush.msra.mxu0 0.0
    %3056 = vmatpush.msra.mxu0 0.0
    %3057 = vmatpush.msra.mxu0 0.0
    %3058 = vmatpush.msra.mxu0 0.0
    %3059 = vmatpush.msra.mxu0 %v3036
    %3060 = vmatpush.msra.mxu0 %v3034
    %3061 = vmatmul.f32.gmra.mxu0 %v3040
    %v3062 = vpop.f32.mrf.mxu0
    %v3063 = vadd.f32 0.0, %v3062
    %3064 = vmatmul.f32.gmra.mxu0 %v3043
    %v3065 = vpop.f32.mrf.mxu0
    %v3066 = vadd.f32 0.0, %v3065
    %3067 = vdwg.mxu0
    %3068 = vrot.lane.b32.xlu0 %v335, 64
    %v3069 = vpop.permute.xlu0 %3068
    %3070 = vrot.lane.b32.xlu0 %v338, 64
    %v3071 = vpop.permute.xlu0 %3070
    %v3075 = vsel %vm667, %v2927, 0
    %v3078 = vsel %vm667, %v2929, 0
    %3080 = vmatpush.msra.mxu0 0.0
    %3081 = vmatpush.msra.mxu0 0.0
    %3082 = vmatpush.msra.mxu0 0.0
    %3083 = vmatpush.msra.mxu0 0.0
    %3084 = vmatpush.msra.mxu0 0.0
    %3085 = vmatpush.msra.mxu0 0.0
    %3086 = vmatpush.msra.mxu0 0.0
    %3087 = vmatpush.msra.mxu0 0.0
    %3088 = vmatpush.msra.mxu0 0.0
    %3089 = vmatpush.msra.mxu0 0.0
    %3090 = vmatpush.msra.mxu0 0.0
    %3091 = vmatpush.msra.mxu0 0.0
    %3092 = vmatpush.msra.mxu0 0.0
    %3093 = vmatpush.msra.mxu0 0.0
    %3094 = vmatpush.msra.mxu0 %v3071
    %3095 = vmatpush.msra.mxu0 %v3069
    %3096 = vmatmul.f32.gmra.mxu0 %v3075
    %v3097 = vpop.f32.mrf.mxu0
    %v3098 = vadd.f32 0.0, %v3097
    %3099 = vmatmul.f32.gmra.mxu0 %v3078
    %v3100 = vpop.f32.mrf.mxu0
    %v3101 = vadd.f32 0.0, %v3100
    %3102 = vdwg.mxu0
    %3103 = vrot.lane.b32.xlu0 %v341, 64
    %v3104 = vpop.permute.xlu0 %3103
    %3105 = vrot.lane.b32.xlu0 %v344, 64
    %v3106 = vpop.permute.xlu0 %3105
    %v3110 = vsel %vm667, %v2931, 0
    %v3113 = vsel %vm667, %v2933, 0
    %3115 = vmatpush.msra.mxu0 0.0
    %3116 = vmatpush.msra.mxu0 0.0
    %3117 = vmatpush.msra.mxu0 0.0
    %3118 = vmatpush.msra.mxu0 0.0
    %3119 = vmatpush.msra.mxu0 0.0
    %3120 = vmatpush.msra.mxu0 0.0
    %3121 = vmatpush.msra.mxu0 0.0
    %3122 = vmatpush.msra.mxu0 0.0
    %3123 = vmatpush.msra.mxu0 0.0
    %3124 = vmatpush.msra.mxu0 0.0
    %3125 = vmatpush.msra.mxu0 0.0
    %3126 = vmatpush.msra.mxu0 0.0
    %3127 = vmatpush.msra.mxu0 0.0
    %3128 = vmatpush.msra.mxu0 0.0
    %3129 = vmatpush.msra.mxu0 %v3106
    %3130 = vmatpush.msra.mxu0 %v3104
    %3131 = vmatmul.f32.gmra.mxu0 %v3110
    %v3132 = vpop.f32.mrf.mxu0
    %v3133 = vadd.f32 0.0, %v3132
    %3134 = vmatmul.f32.gmra.mxu0 %v3113
    %v3135 = vpop.f32.mrf.mxu0
    %v3136 = vadd.f32 0.0, %v3135
    %3137 = vdwg.mxu0
    %3138 = vrot.lane.b32.xlu0 %v347, 64
    %v3139 = vpop.permute.xlu0 %3138
    %3140 = vrot.lane.b32.xlu0 %v350, 64
    %v3141 = vpop.permute.xlu0 %3140
    %v3145 = vsel %vm667, %v2935, 0
    %v3148 = vsel %vm667, %v2937, 0
    %3150 = vmatpush.msra.mxu0 0.0
    %3151 = vmatpush.msra.mxu0 0.0
    %3152 = vmatpush.msra.mxu0 0.0
    %3153 = vmatpush.msra.mxu0 0.0
    %3154 = vmatpush.msra.mxu0 0.0
    %3155 = vmatpush.msra.mxu0 0.0
    %3156 = vmatpush.msra.mxu0 0.0
    %3157 = vmatpush.msra.mxu0 0.0
    %3158 = vmatpush.msra.mxu0 0.0
    %3159 = vmatpush.msra.mxu0 0.0
    %3160 = vmatpush.msra.mxu0 0.0
    %3161 = vmatpush.msra.mxu0 0.0
    %3162 = vmatpush.msra.mxu0 0.0
    %3163 = vmatpush.msra.mxu0 0.0
    %3164 = vmatpush.msra.mxu0 %v3141
    %3165 = vmatpush.msra.mxu0 %v3139
    %3166 = vmatmul.f32.gmra.mxu0 %v3145
    %v3167 = vpop.f32.mrf.mxu0
    %v3168 = vadd.f32 0.0, %v3167
    %3169 = vmatmul.f32.gmra.mxu0 %v3148
    %v3170 = vpop.f32.mrf.mxu0
    %v3171 = vadd.f32 0.0, %v3170
    %3172 = vdwg.mxu0
    %3173 = vrot.lane.b32.xlu0 %v353, 64
    %v3174 = vpop.permute.xlu0 %3173
    %3175 = vrot.lane.b32.xlu0 %v356, 64
    %v3176 = vpop.permute.xlu0 %3175
    %v3180 = vsel %vm667, %v2939, 0
    %v3183 = vsel %vm667, %v2941, 0
    %3185 = vmatpush.msra.mxu0 0.0
    %3186 = vmatpush.msra.mxu0 0.0
    %3187 = vmatpush.msra.mxu0 0.0
    %3188 = vmatpush.msra.mxu0 0.0
    %3189 = vmatpush.msra.mxu0 0.0
    %3190 = vmatpush.msra.mxu0 0.0
    %3191 = vmatpush.msra.mxu0 0.0
    %3192 = vmatpush.msra.mxu0 0.0
    %3193 = vmatpush.msra.mxu0 0.0
    %3194 = vmatpush.msra.mxu0 0.0
    %3195 = vmatpush.msra.mxu0 0.0
    %3196 = vmatpush.msra.mxu0 0.0
    %3197 = vmatpush.msra.mxu0 0.0
    %3198 = vmatpush.msra.mxu0 0.0
    %3199 = vmatpush.msra.mxu0 %v3176
    %3200 = vmatpush.msra.mxu0 %v3174
    %3201 = vmatmul.f32.gmra.mxu0 %v3180
    %v3202 = vpop.f32.mrf.mxu0
    %v3203 = vadd.f32 0.0, %v3202
    %3204 = vmatmul.f32.gmra.mxu0 %v3183
    %v3205 = vpop.f32.mrf.mxu0
    %v3206 = vadd.f32 0.0, %v3205
    %3207 = vdwg.mxu0
    %3208 = vrot.lane.b32.xlu0 %v359, 64
    %v3209 = vpop.permute.xlu0 %3208
    %3210 = vrot.lane.b32.xlu0 %v362, 64
    %v3211 = vpop.permute.xlu0 %3210
    %v3215 = vsel %vm667, %v2943, 0
    %v3218 = vsel %vm667, %v2945, 0
    %3220 = vmatpush.msra.mxu0 0.0
    %3221 = vmatpush.msra.mxu0 0.0
    %3222 = vmatpush.msra.mxu0 0.0
    %3223 = vmatpush.msra.mxu0 0.0
    %3224 = vmatpush.msra.mxu0 0.0
    %3225 = vmatpush.msra.mxu0 0.0
    %3226 = vmatpush.msra.mxu0 0.0
    %3227 = vmatpush.msra.mxu0 0.0
    %3228 = vmatpush.msra.mxu0 0.0
    %3229 = vmatpush.msra.mxu0 0.0
    %3230 = vmatpush.msra.mxu0 0.0
    %3231 = vmatpush.msra.mxu0 0.0
    %3232 = vmatpush.msra.mxu0 0.0
    %3233 = vmatpush.msra.mxu0 0.0
    %3234 = vmatpush.msra.mxu0 %v3211
    %3235 = vmatpush.msra.mxu0 %v3209
    %3236 = vmatmul.f32.gmra.mxu0 %v3215
    %v3237 = vpop.f32.mrf.mxu0
    %v3238 = vadd.f32 0.0, %v3237
    %3239 = vmatmul.f32.gmra.mxu0 %v3218
    %v3240 = vpop.f32.mrf.mxu0
    %v3241 = vadd.f32 0.0, %v3240
    %3242 = vdwg.mxu0
    %3243 = vrot.lane.b32.xlu0 %v365, 64
    %v3244 = vpop.permute.xlu0 %3243
    %3245 = vrot.lane.b32.xlu0 %v368, 64
    %v3246 = vpop.permute.xlu0 %3245
    %v3250 = vsel %vm667, %v2947, 0
    %v3253 = vsel %vm667, %v2949, 0
    %3255 = vmatpush.msra.mxu0 0.0
    %3256 = vmatpush.msra.mxu0 0.0
    %3257 = vmatpush.msra.mxu0 0.0
    %3258 = vmatpush.msra.mxu0 0.0
    %3259 = vmatpush.msra.mxu0 0.0
    %3260 = vmatpush.msra.mxu0 0.0
    %3261 = vmatpush.msra.mxu0 0.0
    %3262 = vmatpush.msra.mxu0 0.0
    %3263 = vmatpush.msra.mxu0 0.0
    %3264 = vmatpush.msra.mxu0 0.0
    %3265 = vmatpush.msra.mxu0 0.0
    %3266 = vmatpush.msra.mxu0 0.0
    %3267 = vmatpush.msra.mxu0 0.0
    %3268 = vmatpush.msra.mxu0 0.0
    %3269 = vmatpush.msra.mxu0 %v3246
    %3270 = vmatpush.msra.mxu0 %v3244
    %3271 = vmatmul.f32.gmra.mxu0 %v3250
    %v3272 = vpop.f32.mrf.mxu0
    %v3273 = vadd.f32 0.0, %v3272
    %3274 = vmatmul.f32.gmra.mxu0 %v3253
    %v3275 = vpop.f32.mrf.mxu0
    %v3276 = vadd.f32 0.0, %v3275
    %3277 = vdwg.mxu0
    %v3278 = vrcp.pop %v2952
    %v3279 = vmul.f32 %v2952, %v3278
    %v3280 = vsub.f32 1.0, %v3279
    %v3281 = vmul.f32 %v3278, %v3280
    %v3282 = vadd.f32 %v3278, %v3281
    %vm3283 = vweird.f32 %v2952
    %vm3284 = vweird.f32 %v3278
    %vm3285 = vmor %vm3283, %vm3284
    %v3286 = vsel %vm3285, %v3278, %v3282
    %v3287 = vand.u32 2147483647, %v2952
    %vm3288 = vcmp.eq.f32.partialorder %v3287, 8.507059e+37
    %v3289 = vand.u32 %v2952, 2147483648
    %v3290 = vor.u32 1.1754944e-38, %v3289
    %v3291 = vsel %vm3288, %v3290, %v3286
    %v3292 = vrcp.pop %v2955
    %v3293 = vmul.f32 %v2955, %v3292
    %v3294 = vsub.f32 1.0, %v3293
    %v3295 = vmul.f32 %v3292, %v3294
    %v3296 = vadd.f32 %v3292, %v3295
    %vm3297 = vweird.f32 %v2955
    %vm3298 = vweird.f32 %v3292
    %vm3299 = vmor %vm3297, %vm3298
    %v3300 = vsel %vm3299, %v3292, %v3296
    %v3301 = vand.u32 2147483647, %v2955
    %vm3302 = vcmp.eq.f32.partialorder %v3301, 8.507059e+37
    %v3303 = vand.u32 %v2955, 2147483648
    %v3304 = vor.u32 1.1754944e-38, %v3303
    %v3305 = vsel %vm3302, %v3304, %v3300
    %v3306 = vrcp.pop %v2958
    %v3307 = vmul.f32 %v2958, %v3306
    %v3308 = vsub.f32 1.0, %v3307
    %v3309 = vmul.f32 %v3306, %v3308
    %v3310 = vadd.f32 %v3306, %v3309
    %vm3311 = vweird.f32 %v2958
    %vm3312 = vweird.f32 %v3306
    %vm3313 = vmor %vm3311, %vm3312
    %v3314 = vsel %vm3313, %v3306, %v3310
    %v3315 = vand.u32 2147483647, %v2958
    %vm3316 = vcmp.eq.f32.partialorder %v3315, 8.507059e+37
    %v3317 = vand.u32 %v2958, 2147483648
    %v3318 = vor.u32 1.1754944e-38, %v3317
    %v3319 = vsel %vm3316, %v3318, %v3314
    %v3320 = vrcp.pop %v2961
    %v3321 = vmul.f32 %v2961, %v3320
    %v3322 = vsub.f32 1.0, %v3321
    %v3323 = vmul.f32 %v3320, %v3322
    %v3324 = vadd.f32 %v3320, %v3323
    %vm3325 = vweird.f32 %v2961
    %vm3326 = vweird.f32 %v3320
    %vm3327 = vmor %vm3325, %vm3326
    %v3328 = vsel %vm3327, %v3320, %v3324
    %v3329 = vand.u32 2147483647, %v2961
    %vm3330 = vcmp.eq.f32.partialorder %v3329, 8.507059e+37
    %v3331 = vand.u32 %v2961, 2147483648
    %v3332 = vor.u32 1.1754944e-38, %v3331
    %v3333 = vsel %vm3330, %v3332, %v3328
    %v3334 = vrcp.pop %v2964
    %v3335 = vmul.f32 %v2964, %v3334
    %v3336 = vsub.f32 1.0, %v3335
    %v3337 = vmul.f32 %v3334, %v3336
    %v3338 = vadd.f32 %v3334, %v3337
    %vm3339 = vweird.f32 %v2964
    %vm3340 = vweird.f32 %v3334
    %vm3341 = vmor %vm3339, %vm3340
    %v3342 = vsel %vm3341, %v3334, %v3338
    %v3343 = vand.u32 2147483647, %v2964
    %vm3344 = vcmp.eq.f32.partialorder %v3343, 8.507059e+37
    %v3345 = vand.u32 %v2964, 2147483648
    %v3346 = vor.u32 1.1754944e-38, %v3345
    %v3347 = vsel %vm3344, %v3346, %v3342
    %v3348 = vrcp.pop %v2967
    %v3349 = vmul.f32 %v2967, %v3348
    %v3350 = vsub.f32 1.0, %v3349
    %v3351 = vmul.f32 %v3348, %v3350
    %v3352 = vadd.f32 %v3348, %v3351
    %vm3353 = vweird.f32 %v2967
    %vm3354 = vweird.f32 %v3348
    %vm3355 = vmor %vm3353, %vm3354
    %v3356 = vsel %vm3355, %v3348, %v3352
    %v3357 = vand.u32 2147483647, %v2967
    %vm3358 = vcmp.eq.f32.partialorder %v3357, 8.507059e+37
    %v3359 = vand.u32 %v2967, 2147483648
    %v3360 = vor.u32 1.1754944e-38, %v3359
    %v3361 = vsel %vm3358, %v3360, %v3356
    %v3362 = vrcp.pop %v2970
    %v3363 = vmul.f32 %v2970, %v3362
    %v3364 = vsub.f32 1.0, %v3363
    %v3365 = vmul.f32 %v3362, %v3364
    %v3366 = vadd.f32 %v3362, %v3365
    %vm3367 = vweird.f32 %v2970
    %vm3368 = vweird.f32 %v3362
    %vm3369 = vmor %vm3367, %vm3368
    %v3370 = vsel %vm3369, %v3362, %v3366
    %v3371 = vand.u32 2147483647, %v2970
    %vm3372 = vcmp.eq.f32.partialorder %v3371, 8.507059e+37
    %v3373 = vand.u32 %v2970, 2147483648
    %v3374 = vor.u32 1.1754944e-38, %v3373
    %v3375 = vsel %vm3372, %v3374, %v3370
    %v3376 = vrcp.pop %v2973
    %v3377 = vmul.f32 %v2973, %v3376
    %v3378 = vsub.f32 1.0, %v3377
    %v3379 = vmul.f32 %v3376, %v3378
    %v3380 = vadd.f32 %v3376, %v3379
    %vm3381 = vweird.f32 %v2973
    %vm3382 = vweird.f32 %v3376
    %vm3383 = vmor %vm3381, %vm3382
    %v3384 = vsel %vm3383, %v3376, %v3380
    %v3385 = vand.u32 2147483647, %v2973
    %vm3386 = vcmp.eq.f32.partialorder %v3385, 8.507059e+37
    %v3387 = vand.u32 %v2973, 2147483648
    %v3388 = vor.u32 1.1754944e-38, %v3387
    %v3389 = vsel %vm3386, %v3388, %v3384
    %v3390 = vrcp.pop %v2976
    %v3391 = vmul.f32 %v2976, %v3390
    %v3392 = vsub.f32 1.0, %v3391
    %v3393 = vmul.f32 %v3390, %v3392
    %v3394 = vadd.f32 %v3390, %v3393
    %vm3395 = vweird.f32 %v2976
    %vm3396 = vweird.f32 %v3390
    %vm3397 = vmor %vm3395, %vm3396
    %v3398 = vsel %vm3397, %v3390, %v3394
    %v3399 = vand.u32 2147483647, %v2976
    %vm3400 = vcmp.eq.f32.partialorder %v3399, 8.507059e+37
    %v3401 = vand.u32 %v2976, 2147483648
    %v3402 = vor.u32 1.1754944e-38, %v3401
    %v3403 = vsel %vm3400, %v3402, %v3398
    %v3404 = vrcp.pop %v2979
    %v3405 = vmul.f32 %v2979, %v3404
    %v3406 = vsub.f32 1.0, %v3405
    %v3407 = vmul.f32 %v3404, %v3406
    %v3408 = vadd.f32 %v3404, %v3407
    %vm3409 = vweird.f32 %v2979
    %vm3410 = vweird.f32 %v3404
    %vm3411 = vmor %vm3409, %vm3410
    %v3412 = vsel %vm3411, %v3404, %v3408
    %v3413 = vand.u32 2147483647, %v2979
    %vm3414 = vcmp.eq.f32.partialorder %v3413, 8.507059e+37
    %v3415 = vand.u32 %v2979, 2147483648
    %v3416 = vor.u32 1.1754944e-38, %v3415
    %v3417 = vsel %vm3414, %v3416, %v3412
    %v3418 = vrcp.pop %v2982
    %v3419 = vmul.f32 %v2982, %v3418
    %v3420 = vsub.f32 1.0, %v3419
    %v3421 = vmul.f32 %v3418, %v3420
    %v3422 = vadd.f32 %v3418, %v3421
    %vm3423 = vweird.f32 %v2982
    %vm3424 = vweird.f32 %v3418
    %vm3425 = vmor %vm3423, %vm3424
    %v3426 = vsel %vm3425, %v3418, %v3422
    %v3427 = vand.u32 2147483647, %v2982
    %vm3428 = vcmp.eq.f32.partialorder %v3427, 8.507059e+37
    %v3429 = vand.u32 %v2982, 2147483648
    %v3430 = vor.u32 1.1754944e-38, %v3429
    %v3431 = vsel %vm3428, %v3430, %v3426
    %v3432 = vrcp.pop %v2985
    %v3433 = vmul.f32 %v2985, %v3432
    %v3434 = vsub.f32 1.0, %v3433
    %v3435 = vmul.f32 %v3432, %v3434
    %v3436 = vadd.f32 %v3432, %v3435
    %vm3437 = vweird.f32 %v2985
    %vm3438 = vweird.f32 %v3432
    %vm3439 = vmor %vm3437, %vm3438
    %v3440 = vsel %vm3439, %v3432, %v3436
    %v3441 = vand.u32 2147483647, %v2985
    %vm3442 = vcmp.eq.f32.partialorder %v3441, 8.507059e+37
    %v3443 = vand.u32 %v2985, 2147483648
    %v3444 = vor.u32 1.1754944e-38, %v3443
    %v3445 = vsel %vm3442, %v3444, %v3440
    %v3446 = vrcp.pop %v2988
    %v3447 = vmul.f32 %v2988, %v3446
    %v3448 = vsub.f32 1.0, %v3447
    %v3449 = vmul.f32 %v3446, %v3448
    %v3450 = vadd.f32 %v3446, %v3449
    %vm3451 = vweird.f32 %v2988
    %vm3452 = vweird.f32 %v3446
    %vm3453 = vmor %vm3451, %vm3452
    %v3454 = vsel %vm3453, %v3446, %v3450
    %v3455 = vand.u32 2147483647, %v2988
    %vm3456 = vcmp.eq.f32.partialorder %v3455, 8.507059e+37
    %v3457 = vand.u32 %v2988, 2147483648
    %v3458 = vor.u32 1.1754944e-38, %v3457
    %v3459 = vsel %vm3456, %v3458, %v3454
    %v3460 = vrcp.pop %v2991
    %v3461 = vmul.f32 %v2991, %v3460
    %v3462 = vsub.f32 1.0, %v3461
    %v3463 = vmul.f32 %v3460, %v3462
    %v3464 = vadd.f32 %v3460, %v3463
    %vm3465 = vweird.f32 %v2991
    %vm3466 = vweird.f32 %v3460
    %vm3467 = vmor %vm3465, %vm3466
    %v3468 = vsel %vm3467, %v3460, %v3464
    %v3469 = vand.u32 2147483647, %v2991
    %vm3470 = vcmp.eq.f32.partialorder %v3469, 8.507059e+37
    %v3471 = vand.u32 %v2991, 2147483648
    %v3472 = vor.u32 1.1754944e-38, %v3471
    %v3473 = vsel %vm3470, %v3472, %v3468
    %v3474 = vrcp.pop %v2994
    %v3475 = vmul.f32 %v2994, %v3474
    %v3476 = vsub.f32 1.0, %v3475
    %v3477 = vmul.f32 %v3474, %v3476
    %v3478 = vadd.f32 %v3474, %v3477
    %vm3479 = vweird.f32 %v2994
    %vm3480 = vweird.f32 %v3474
    %vm3481 = vmor %vm3479, %vm3480
    %v3482 = vsel %vm3481, %v3474, %v3478
    %v3483 = vand.u32 2147483647, %v2994
    %vm3484 = vcmp.eq.f32.partialorder %v3483, 8.507059e+37
    %v3485 = vand.u32 %v2994, 2147483648
    %v3486 = vor.u32 1.1754944e-38, %v3485
    %v3487 = vsel %vm3484, %v3486, %v3482
    %v3488 = vrcp.pop %v2997
    %v3489 = vmul.f32 %v2997, %v3488
    %v3490 = vsub.f32 1.0, %v3489
    %v3491 = vmul.f32 %v3488, %v3490
    %v3492 = vadd.f32 %v3488, %v3491
    %vm3493 = vweird.f32 %v2997
    %vm3494 = vweird.f32 %v3488
    %vm3495 = vmor %vm3493, %vm3494
    %v3496 = vsel %vm3495, %v3488, %v3492
    %v3497 = vand.u32 2147483647, %v2997
    %vm3498 = vcmp.eq.f32.partialorder %v3497, 8.507059e+37
    %v3499 = vand.u32 %v2997, 2147483648
    %v3500 = vor.u32 1.1754944e-38, %v3499
    %v3501 = vsel %vm3498, %v3500, %v3496
    %v3502 = vmul.f32 %v3028, %v3291
    %v3503 = vmul.f32 %v3031, %v3305
    %v3504 = vmul.f32 %v3063, %v3319
    %v3505 = vmul.f32 %v3066, %v3333
    %v3506 = vmul.f32 %v3098, %v3347
    %v3507 = vmul.f32 %v3101, %v3361
    %v3508 = vmul.f32 %v3133, %v3375
    %v3509 = vmul.f32 %v3136, %v3389
    %v3510 = vmul.f32 %v3168, %v3403
    %v3511 = vmul.f32 %v3171, %v3417
    %v3512 = vmul.f32 %v3203, %v3431
    %v3513 = vmul.f32 %v3206, %v3445
    %v3514 = vmul.f32 %v3238, %v3459
    %v3515 = vmul.f32 %v3241, %v3473
    %v3516 = vmul.f32 %v3273, %v3487
    %v3517 = vmul.f32 %v3276, %v3501
    %v3518 = vld [vmem:[#allocation8 + $0x40] sm:$0xff]
    %v3519 = vld [vmem:[#allocation8 + $0x48] sm:$0xff]
    %v3520 = vld [vmem:[#allocation8 + $0x50] sm:$0xff]
    %v3521 = vld [vmem:[#allocation8 + $0x58] sm:$0xff]
    %v3523 = vsel %vm370, %v3502, 0
    %v3526 = vsel %vm370, %v3503, 0
    %v3529 = vsel %vm370, %v3504, 0
    %v3532 = vsel %vm370, %v3505, 0
    %v3535 = vsel %vm370, %v3506, 0
    %v3538 = vsel %vm370, %v3507, 0
    %v3541 = vsel %vm370, %v3508, 0
    %v3544 = vsel %vm370, %v3509, 0
    %v3547 = vsel %vm370, %v3510, 0
    %v3550 = vsel %vm370, %v3511, 0
    %v3553 = vsel %vm370, %v3512, 0
    %v3556 = vsel %vm370, %v3513, 0
    %v3559 = vsel %vm370, %v3514, 0
    %v3562 = vsel %vm370, %v3515, 0
    %v3565 = vsel %vm370, %v3516, 0
    %v3568 = vsel %vm370, %v3517, 0
    %3570 = vmatpush.msra.mxu0 0.0
    %3571 = vmatpush.msra.mxu0 0.0
    %3572 = vmatpush.msra.mxu0 0.0
    %3573 = vmatpush.msra.mxu0 0.0
    %3574 = vmatpush.msra.mxu0 0.0
    %3575 = vmatpush.msra.mxu0 0.0
    %3576 = vmatpush.msra.mxu0 0.0
    %3577 = vmatpush.msra.mxu0 0.0
    %3578 = vmatpush.msra.mxu0 0.0
    %3579 = vmatpush.msra.mxu0 0.0
    %3580 = vmatpush.msra.mxu0 0.0
    %3581 = vmatpush.msra.mxu0 0.0
    %3582 = vmatpush.msra.mxu0 %v3521
    %3583 = vmatpush.msra.mxu0 %v3520
    %3584 = vmatpush.msra.mxu0 %v3519
    %3585 = vmatpush.msra.mxu0 %v3518
    %3586 = vmatmul.f32.gmra.mxu0 %v3523
    %v3587 = vpop.f32.mrf.mxu0
    %v3588 = vadd.f32 0.0, %v3587
    %3589 = vmatmul.f32.gmra.mxu0 %v3526
    %v3590 = vpop.f32.mrf.mxu0
    %v3591 = vadd.f32 0.0, %v3590
    %3592 = vmatmul.f32.gmra.mxu0 %v3529
    %v3593 = vpop.f32.mrf.mxu0
    %v3594 = vadd.f32 0.0, %v3593
    %3595 = vmatmul.f32.gmra.mxu0 %v3532
    %v3596 = vpop.f32.mrf.mxu0
    %v3597 = vadd.f32 0.0, %v3596
    %3598 = vmatmul.f32.gmra.mxu0 %v3535
    %v3599 = vpop.f32.mrf.mxu0
    %v3600 = vadd.f32 0.0, %v3599
    %3601 = vmatmul.f32.gmra.mxu0 %v3538
    %v3602 = vpop.f32.mrf.mxu0
    %v3603 = vadd.f32 0.0, %v3602
    %3604 = vmatmul.f32.gmra.mxu0 %v3541
    %v3605 = vpop.f32.mrf.mxu0
    %v3606 = vadd.f32 0.0, %v3605
    %3607 = vmatmul.f32.gmra.mxu0 %v3544
    %v3608 = vpop.f32.mrf.mxu0
    %v3609 = vadd.f32 0.0, %v3608
    %3610 = vmatmul.f32.gmra.mxu0 %v3547
    %v3611 = vpop.f32.mrf.mxu0
    %v3612 = vadd.f32 0.0, %v3611
    %3613 = vmatmul.f32.gmra.mxu0 %v3550
    %v3614 = vpop.f32.mrf.mxu0
    %v3615 = vadd.f32 0.0, %v3614
    %3616 = vmatmul.f32.gmra.mxu0 %v3553
    %v3617 = vpop.f32.mrf.mxu0
    %v3618 = vadd.f32 0.0, %v3617
    %3619 = vmatmul.f32.gmra.mxu0 %v3556
    %v3620 = vpop.f32.mrf.mxu0
    %v3621 = vadd.f32 0.0, %v3620
    %3622 = vmatmul.f32.gmra.mxu0 %v3559
    %v3623 = vpop.f32.mrf.mxu0
    %v3624 = vadd.f32 0.0, %v3623
    %3625 = vmatmul.f32.gmra.mxu0 %v3562
    %v3626 = vpop.f32.mrf.mxu0
    %v3627 = vadd.f32 0.0, %v3626
    %3628 = vmatmul.f32.gmra.mxu0 %v3565
    %v3629 = vpop.f32.mrf.mxu0
    %v3630 = vadd.f32 0.0, %v3629
    %3631 = vmatmul.f32.gmra.mxu0 %v3568
    %v3632 = vpop.f32.mrf.mxu0
    %v3633 = vadd.f32 0.0, %v3632
    %3634 = vdwg.mxu0
    %v3635 = vadd.f32 %v2479, %v3588
    %v3636 = vadd.f32 %v2482, %v3591
    %v3637 = vadd.f32 %v2485, %v3594
    %v3638 = vadd.f32 %v2488, %v3597
    %v3639 = vadd.f32 %v2491, %v3600
    %v3640 = vadd.f32 %v2494, %v3603
    %v3641 = vadd.f32 %v2497, %v3606
    %v3642 = vadd.f32 %v2500, %v3609
    %v3643 = vadd.f32 %v2503, %v3612
    %v3644 = vadd.f32 %v2506, %v3615
    %v3645 = vadd.f32 %v2509, %v3618
    %v3646 = vadd.f32 %v2512, %v3621
    %v3647 = vadd.f32 %v2515, %v3624
    %v3648 = vadd.f32 %v2518, %v3627
    %v3649 = vadd.f32 %v2521, %v3630
    %v3650 = vadd.f32 %v2524, %v3633
    %3651 = vrot.lane.b32.xlu0 %v193, 32
    %v3652 = vpop.permute.xlu0 %3651
    %3653 = vrot.lane.b32.xlu0 %v196, 32
    %v3654 = vpop.permute.xlu0 %3653
    %3655 = vrot.lane.b32.xlu0 %v258, 32
    %v3656 = vpop.permute.xlu0 %3655
    %3657 = vrot.lane.b32.xlu0 %v261, 32
    %v3658 = vpop.permute.xlu0 %3657
    %v3659 = vsel %vm370, %v3652, 0
    %v3661 = vsel %vm370, %v3654, 0
    %v3663 = vsel %vm370, %v3656, 0
    %v3665 = vsel %vm370, %v3658, 0
    %3667 = vmatpush.xpose.msra.mxu0 0.0
    %3668 = vmatpush.xpose.msra.mxu0 0.0
    %3669 = vmatpush.xpose.msra.mxu0 0.0
    %3670 = vmatpush.xpose.msra.mxu0 0.0
    %3671 = vmatpush.xpose.msra.mxu0 0.0
    %3672 = vmatpush.xpose.msra.mxu0 0.0
    %3673 = vmatpush.xpose.msra.mxu0 0.0
    %3674 = vmatpush.xpose.msra.mxu0 0.0
    %3675 = vmatpush.xpose.msra.mxu0 0.0
    %3676 = vmatpush.xpose.msra.mxu0 0.0
    %3677 = vmatpush.xpose.msra.mxu0 0.0
    %3678 = vmatpush.xpose.msra.mxu0 0.0
    %3679 = vmatpush.xpose.msra.mxu0 0.0
    %3680 = vmatpush.xpose.msra.mxu0 0.0
    %3681 = vmatpush.xpose.msra.mxu0 %v3665
    %3682 = vmatpush.xpose.msra.mxu0 %v3663
    %3683 = vmatmul.f32.gmra.mxu0 %v3659
    %v3684 = vpop.f32.mrf.mxu0
    %v3685 = vadd.f32 0.0, %v3684
    %3686 = vmatmul.f32.gmra.mxu0 %v3661
    %v3687 = vpop.f32.mrf.mxu0
    %v3688 = vadd.f32 0.0, %v3687
    %3689 = vdwg.mxu0
    %3690 = vrot.lane.b32.xlu0 %v199, 32
    %v3691 = vpop.permute.xlu0 %3690
    %3692 = vrot.lane.b32.xlu0 %v202, 32
    %v3693 = vpop.permute.xlu0 %3692
    %3694 = vrot.lane.b32.xlu0 %v264, 32
    %v3695 = vpop.permute.xlu0 %3694
    %3696 = vrot.lane.b32.xlu0 %v267, 32
    %v3697 = vpop.permute.xlu0 %3696
    %v3698 = vsel %vm370, %v3691, 0
    %v3700 = vsel %vm370, %v3693, 0
    %v3702 = vsel %vm370, %v3695, 0
    %v3704 = vsel %vm370, %v3697, 0
    %3706 = vmatpush.xpose.msra.mxu0 0.0
    %3707 = vmatpush.xpose.msra.mxu0 0.0
    %3708 = vmatpush.xpose.msra.mxu0 0.0
    %3709 = vmatpush.xpose.msra.mxu0 0.0
    %3710 = vmatpush.xpose.msra.mxu0 0.0
    %3711 = vmatpush.xpose.msra.mxu0 0.0
    %3712 = vmatpush.xpose.msra.mxu0 0.0
    %3713 = vmatpush.xpose.msra.mxu0 0.0
    %3714 = vmatpush.xpose.msra.mxu0 0.0
    %3715 = vmatpush.xpose.msra.mxu0 0.0
    %3716 = vmatpush.xpose.msra.mxu0 0.0
    %3717 = vmatpush.xpose.msra.mxu0 0.0
    %3718 = vmatpush.xpose.msra.mxu0 0.0
    %3719 = vmatpush.xpose.msra.mxu0 0.0
    %3720 = vmatpush.xpose.msra.mxu0 %v3704
    %3721 = vmatpush.xpose.msra.mxu0 %v3702
    %3722 = vmatmul.f32.gmra.mxu0 %v3698
    %v3723 = vpop.f32.mrf.mxu0
    %v3724 = vadd.f32 0.0, %v3723
    %3725 = vmatmul.f32.gmra.mxu0 %v3700
    %v3726 = vpop.f32.mrf.mxu0
    %v3727 = vadd.f32 0.0, %v3726
    %3728 = vdwg.mxu0
    %3729 = vrot.lane.b32.xlu0 %v205, 32
    %v3730 = vpop.permute.xlu0 %3729
    %3731 = vrot.lane.b32.xlu0 %v208, 32
    %v3732 = vpop.permute.xlu0 %3731
    %3733 = vrot.lane.b32.xlu0 %v270, 32
    %v3734 = vpop.permute.xlu0 %3733
    %3735 = vrot.lane.b32.xlu0 %v273, 32
    %v3736 = vpop.permute.xlu0 %3735
    %v3737 = vsel %vm370, %v3730, 0
    %v3739 = vsel %vm370, %v3732, 0
    %v3741 = vsel %vm370, %v3734, 0
    %v3743 = vsel %vm370, %v3736, 0
    %3745 = vmatpush.xpose.msra.mxu0 0.0
    %3746 = vmatpush.xpose.msra.mxu0 0.0
    %3747 = vmatpush.xpose.msra.mxu0 0.0
    %3748 = vmatpush.xpose.msra.mxu0 0.0
    %3749 = vmatpush.xpose.msra.mxu0 0.0
    %3750 = vmatpush.xpose.msra.mxu0 0.0
    %3751 = vmatpush.xpose.msra.mxu0 0.0
    %3752 = vmatpush.xpose.msra.mxu0 0.0
    %3753 = vmatpush.xpose.msra.mxu0 0.0
    %3754 = vmatpush.xpose.msra.mxu0 0.0
    %3755 = vmatpush.xpose.msra.mxu0 0.0
    %3756 = vmatpush.xpose.msra.mxu0 0.0
    %3757 = vmatpush.xpose.msra.mxu0 0.0
    %3758 = vmatpush.xpose.msra.mxu0 0.0
    %3759 = vmatpush.xpose.msra.mxu0 %v3743
    %3760 = vmatpush.xpose.msra.mxu0 %v3741
    %3761 = vmatmul.f32.gmra.mxu0 %v3737
    %v3762 = vpop.f32.mrf.mxu0
    %v3763 = vadd.f32 0.0, %v3762
    %3764 = vmatmul.f32.gmra.mxu0 %v3739
    %v3765 = vpop.f32.mrf.mxu0
    %v3766 = vadd.f32 0.0, %v3765
    %3767 = vdwg.mxu0
    %3768 = vrot.lane.b32.xlu0 %v211, 32
    %v3769 = vpop.permute.xlu0 %3768
    %3770 = vrot.lane.b32.xlu0 %v214, 32
    %v3771 = vpop.permute.xlu0 %3770
    %3772 = vrot.lane.b32.xlu0 %v276, 32
    %v3773 = vpop.permute.xlu0 %3772
    %3774 = vrot.lane.b32.xlu0 %v279, 32
    %v3775 = vpop.permute.xlu0 %3774
    %v3776 = vsel %vm370, %v3769, 0
    %v3778 = vsel %vm370, %v3771, 0
    %v3780 = vsel %vm370, %v3773, 0
    %v3782 = vsel %vm370, %v3775, 0
    %3784 = vmatpush.xpose.msra.mxu0 0.0
    %3785 = vmatpush.xpose.msra.mxu0 0.0
    %3786 = vmatpush.xpose.msra.mxu0 0.0
    %3787 = vmatpush.xpose.msra.mxu0 0.0
    %3788 = vmatpush.xpose.msra.mxu0 0.0
    %3789 = vmatpush.xpose.msra.mxu0 0.0
    %3790 = vmatpush.xpose.msra.mxu0 0.0
    %3791 = vmatpush.xpose.msra.mxu0 0.0
    %3792 = vmatpush.xpose.msra.mxu0 0.0
    %3793 = vmatpush.xpose.msra.mxu0 0.0
    %3794 = vmatpush.xpose.msra.mxu0 0.0
    %3795 = vmatpush.xpose.msra.mxu0 0.0
    %3796 = vmatpush.xpose.msra.mxu0 0.0
    %3797 = vmatpush.xpose.msra.mxu0 0.0
    %3798 = vmatpush.xpose.msra.mxu0 %v3782
    %3799 = vmatpush.xpose.msra.mxu0 %v3780
    %3800 = vmatmul.f32.gmra.mxu0 %v3776
    %v3801 = vpop.f32.mrf.mxu0
    %v3802 = vadd.f32 0.0, %v3801
    %3803 = vmatmul.f32.gmra.mxu0 %v3778
    %v3804 = vpop.f32.mrf.mxu0
    %v3805 = vadd.f32 0.0, %v3804
    %3806 = vdwg.mxu0
    %3807 = vrot.lane.b32.xlu0 %v217, 32
    %v3808 = vpop.permute.xlu0 %3807
    %3809 = vrot.lane.b32.xlu0 %v220, 32
    %v3810 = vpop.permute.xlu0 %3809
    %3811 = vrot.lane.b32.xlu0 %v282, 32
    %v3812 = vpop.permute.xlu0 %3811
    %3813 = vrot.lane.b32.xlu0 %v285, 32
    %v3814 = vpop.permute.xlu0 %3813
    %v3815 = vsel %vm370, %v3808, 0
    %v3817 = vsel %vm370, %v3810, 0
    %v3819 = vsel %vm370, %v3812, 0
    %v3821 = vsel %vm370, %v3814, 0
    %3823 = vmatpush.xpose.msra.mxu0 0.0
    %3824 = vmatpush.xpose.msra.mxu0 0.0
    %3825 = vmatpush.xpose.msra.mxu0 0.0
    %3826 = vmatpush.xpose.msra.mxu0 0.0
    %3827 = vmatpush.xpose.msra.mxu0 0.0
    %3828 = vmatpush.xpose.msra.mxu0 0.0
    %3829 = vmatpush.xpose.msra.mxu0 0.0
    %3830 = vmatpush.xpose.msra.mxu0 0.0
    %3831 = vmatpush.xpose.msra.mxu0 0.0
    %3832 = vmatpush.xpose.msra.mxu0 0.0
    %3833 = vmatpush.xpose.msra.mxu0 0.0
    %3834 = vmatpush.xpose.msra.mxu0 0.0
    %3835 = vmatpush.xpose.msra.mxu0 0.0
    %3836 = vmatpush.xpose.msra.mxu0 0.0
    %3837 = vmatpush.xpose.msra.mxu0 %v3821
    %3838 = vmatpush.xpose.msra.mxu0 %v3819
    %3839 = vmatmul.f32.gmra.mxu0 %v3815
    %v3840 = vpop.f32.mrf.mxu0
    %v3841 = vadd.f32 0.0, %v3840
    %3842 = vmatmul.f32.gmra.mxu0 %v3817
    %v3843 = vpop.f32.mrf.mxu0
    %v3844 = vadd.f32 0.0, %v3843
    %3845 = vdwg.mxu0
    %3846 = vrot.lane.b32.xlu0 %v223, 32
    %v3847 = vpop.permute.xlu0 %3846
    %3848 = vrot.lane.b32.xlu0 %v226, 32
    %v3849 = vpop.permute.xlu0 %3848
    %3850 = vrot.lane.b32.xlu0 %v288, 32
    %v3851 = vpop.permute.xlu0 %3850
    %3852 = vrot.lane.b32.xlu0 %v291, 32
    %v3853 = vpop.permute.xlu0 %3852
    %v3854 = vsel %vm370, %v3847, 0
    %v3856 = vsel %vm370, %v3849, 0
    %v3858 = vsel %vm370, %v3851, 0
    %v3860 = vsel %vm370, %v3853, 0
    %3862 = vmatpush.xpose.msra.mxu0 0.0
    %3863 = vmatpush.xpose.msra.mxu0 0.0
    %3864 = vmatpush.xpose.msra.mxu0 0.0
    %3865 = vmatpush.xpose.msra.mxu0 0.0
    %3866 = vmatpush.xpose.msra.mxu0 0.0
    %3867 = vmatpush.xpose.msra.mxu0 0.0
    %3868 = vmatpush.xpose.msra.mxu0 0.0
    %3869 = vmatpush.xpose.msra.mxu0 0.0
    %3870 = vmatpush.xpose.msra.mxu0 0.0
    %3871 = vmatpush.xpose.msra.mxu0 0.0
    %3872 = vmatpush.xpose.msra.mxu0 0.0
    %3873 = vmatpush.xpose.msra.mxu0 0.0
    %3874 = vmatpush.xpose.msra.mxu0 0.0
    %3875 = vmatpush.xpose.msra.mxu0 0.0
    %3876 = vmatpush.xpose.msra.mxu0 %v3860
    %3877 = vmatpush.xpose.msra.mxu0 %v3858
    %3878 = vmatmul.f32.gmra.mxu0 %v3854
    %v3879 = vpop.f32.mrf.mxu0
    %v3880 = vadd.f32 0.0, %v3879
    %3881 = vmatmul.f32.gmra.mxu0 %v3856
    %v3882 = vpop.f32.mrf.mxu0
    %v3883 = vadd.f32 0.0, %v3882
    %3884 = vdwg.mxu0
    %3885 = vrot.lane.b32.xlu0 %v229, 32
    %v3886 = vpop.permute.xlu0 %3885
    %3887 = vrot.lane.b32.xlu0 %v232, 32
    %v3888 = vpop.permute.xlu0 %3887
    %3889 = vrot.lane.b32.xlu0 %v294, 32
    %v3890 = vpop.permute.xlu0 %3889
    %3891 = vrot.lane.b32.xlu0 %v297, 32
    %v3892 = vpop.permute.xlu0 %3891
    %v3893 = vsel %vm370, %v3886, 0
    %v3895 = vsel %vm370, %v3888, 0
    %v3897 = vsel %vm370, %v3890, 0
    %v3899 = vsel %vm370, %v3892, 0
    %3901 = vmatpush.xpose.msra.mxu0 0.0
    %3902 = vmatpush.xpose.msra.mxu0 0.0
    %3903 = vmatpush.xpose.msra.mxu0 0.0
    %3904 = vmatpush.xpose.msra.mxu0 0.0
    %3905 = vmatpush.xpose.msra.mxu0 0.0
    %3906 = vmatpush.xpose.msra.mxu0 0.0
    %3907 = vmatpush.xpose.msra.mxu0 0.0
    %3908 = vmatpush.xpose.msra.mxu0 0.0
    %3909 = vmatpush.xpose.msra.mxu0 0.0
    %3910 = vmatpush.xpose.msra.mxu0 0.0
    %3911 = vmatpush.xpose.msra.mxu0 0.0
    %3912 = vmatpush.xpose.msra.mxu0 0.0
    %3913 = vmatpush.xpose.msra.mxu0 0.0
    %3914 = vmatpush.xpose.msra.mxu0 0.0
    %3915 = vmatpush.xpose.msra.mxu0 %v3899
    %3916 = vmatpush.xpose.msra.mxu0 %v3897
    %3917 = vmatmul.f32.gmra.mxu0 %v3893
    %v3918 = vpop.f32.mrf.mxu0
    %v3919 = vadd.f32 0.0, %v3918
    %3920 = vmatmul.f32.gmra.mxu0 %v3895
    %v3921 = vpop.f32.mrf.mxu0
    %v3922 = vadd.f32 0.0, %v3921
    %3923 = vdwg.mxu0
    %3924 = vrot.lane.b32.xlu0 %v235, 32
    %v3925 = vpop.permute.xlu0 %3924
    %3926 = vrot.lane.b32.xlu0 %v238, 32
    %v3927 = vpop.permute.xlu0 %3926
    %3928 = vrot.lane.b32.xlu0 %v300, 32
    %v3929 = vpop.permute.xlu0 %3928
    %3930 = vrot.lane.b32.xlu0 %v303, 32
    %v3931 = vpop.permute.xlu0 %3930
    %v3932 = vsel %vm370, %v3925, 0
    %v3934 = vsel %vm370, %v3927, 0
    %v3936 = vsel %vm370, %v3929, 0
    %v3938 = vsel %vm370, %v3931, 0
    %3940 = vmatpush.xpose.msra.mxu0 0.0
    %3941 = vmatpush.xpose.msra.mxu0 0.0
    %3942 = vmatpush.xpose.msra.mxu0 0.0
    %3943 = vmatpush.xpose.msra.mxu0 0.0
    %3944 = vmatpush.xpose.msra.mxu0 0.0
    %3945 = vmatpush.xpose.msra.mxu0 0.0
    %3946 = vmatpush.xpose.msra.mxu0 0.0
    %3947 = vmatpush.xpose.msra.mxu0 0.0
    %3948 = vmatpush.xpose.msra.mxu0 0.0
    %3949 = vmatpush.xpose.msra.mxu0 0.0
    %3950 = vmatpush.xpose.msra.mxu0 0.0
    %3951 = vmatpush.xpose.msra.mxu0 0.0
    %3952 = vmatpush.xpose.msra.mxu0 0.0
    %3953 = vmatpush.xpose.msra.mxu0 0.0
    %3954 = vmatpush.xpose.msra.mxu0 %v3938
    %3955 = vmatpush.xpose.msra.mxu0 %v3936
    %3956 = vmatmul.f32.gmra.mxu0 %v3932
    %v3957 = vpop.f32.mrf.mxu0
    %v3958 = vadd.f32 0.0, %v3957
    %3959 = vmatmul.f32.gmra.mxu0 %v3934
    %v3960 = vpop.f32.mrf.mxu0
    %v3961 = vadd.f32 0.0, %v3960
    %3962 = vdwg.mxu0
    %v3963 = vmul.f32 %v3685, 0.088388346
    %v3964 = vmul.f32 %v3688, 0.088388346
    %v3965 = vmul.f32 %v3724, 0.088388346
    %v3966 = vmul.f32 %v3727, 0.088388346
    %v3967 = vmul.f32 %v3763, 0.088388346
    %v3968 = vmul.f32 %v3766, 0.088388346
    %v3969 = vmul.f32 %v3802, 0.088388346
    %v3970 = vmul.f32 %v3805, 0.088388346
    %v3971 = vmul.f32 %v3841, 0.088388346
    %v3972 = vmul.f32 %v3844, 0.088388346
    %v3973 = vmul.f32 %v3880, 0.088388346
    %v3974 = vmul.f32 %v3883, 0.088388346
    %v3975 = vmul.f32 %v3919, 0.088388346
    %v3976 = vmul.f32 %v3922, 0.088388346
    %v3977 = vmul.f32 %v3958, 0.088388346
    %v3978 = vmul.f32 %v3961, 0.088388346
    %v3979 = vsel %vm667, %v3963, -inf
    %3980 = vmax.xlane.f32.xlu0 %v3979
    %v3981 = vpop.xlane.xlu0 %3980
    %v3982 = vsel %vm667, %v3964, -inf
    %3983 = vmax.xlane.f32.xlu0 %v3982
    %v3984 = vpop.xlane.xlu0 %3983
    %v3985 = vsel %vm667, %v3965, -inf
    %3986 = vmax.xlane.f32.xlu0 %v3985
    %v3987 = vpop.xlane.xlu0 %3986
    %v3988 = vsel %vm667, %v3966, -inf
    %3989 = vmax.xlane.f32.xlu0 %v3988
    %v3990 = vpop.xlane.xlu0 %3989
    %v3991 = vsel %vm667, %v3967, -inf
    %3992 = vmax.xlane.f32.xlu0 %v3991
    %v3993 = vpop.xlane.xlu0 %3992
    %v3994 = vsel %vm667, %v3968, -inf
    %3995 = vmax.xlane.f32.xlu0 %v3994
    %v3996 = vpop.xlane.xlu0 %3995
    %v3997 = vsel %vm667, %v3969, -inf
    %3998 = vmax.xlane.f32.xlu0 %v3997
    %v3999 = vpop.xlane.xlu0 %3998
    %v4000 = vsel %vm667, %v3970, -inf
    %4001 = vmax.xlane.f32.xlu0 %v4000
    %v4002 = vpop.xlane.xlu0 %4001
    %v4003 = vsel %vm667, %v3971, -inf
    %4004 = vmax.xlane.f32.xlu0 %v4003
    %v4005 = vpop.xlane.xlu0 %4004
    %v4006 = vsel %vm667, %v3972, -inf
    %4007 = vmax.xlane.f32.xlu0 %v4006
    %v4008 = vpop.xlane.xlu0 %4007
    %v4009 = vsel %vm667, %v3973, -inf
    %4010 = vmax.xlane.f32.xlu0 %v4009
    %v4011 = vpop.xlane.xlu0 %4010
    %v4012 = vsel %vm667, %v3974, -inf
    %4013 = vmax.xlane.f32.xlu0 %v4012
    %v4014 = vpop.xlane.xlu0 %4013
    %v4015 = vsel %vm667, %v3975, -inf
    %4016 = vmax.xlane.f32.xlu0 %v4015
    %v4017 = vpop.xlane.xlu0 %4016
    %v4018 = vsel %vm667, %v3976, -inf
    %4019 = vmax.xlane.f32.xlu0 %v4018
    %v4020 = vpop.xlane.xlu0 %4019
    %v4021 = vsel %vm667, %v3977, -inf
    %4022 = vmax.xlane.f32.xlu0 %v4021
    %v4023 = vpop.xlane.xlu0 %4022
    %v4024 = vsel %vm667, %v3978, -inf
    %4025 = vmax.xlane.f32.xlu0 %v4024
    %v4026 = vpop.xlane.xlu0 %4025
    %v4027 = vsub.f32 %v3963, %v3981
    %v4028 = vsub.f32 %v3964, %v3984
    %v4029 = vsub.f32 %v3965, %v3987
    %v4030 = vsub.f32 %v3966, %v3990
    %v4031 = vsub.f32 %v3967, %v3993
    %v4032 = vsub.f32 %v3968, %v3996
    %v4033 = vsub.f32 %v3969, %v3999
    %v4034 = vsub.f32 %v3970, %v4002
    %v4035 = vsub.f32 %v3971, %v4005
    %v4036 = vsub.f32 %v3972, %v4008
    %v4037 = vsub.f32 %v3973, %v4011
    %v4038 = vsub.f32 %v3974, %v4014
    %v4039 = vsub.f32 %v3975, %v4017
    %v4040 = vsub.f32 %v3976, %v4020
    %v4041 = vsub.f32 %v3977, %v4023
    %v4042 = vsub.f32 %v3978, %v4026
    %v4043 = vmul.f32 %v4027, 1.442695
    %v4044 = vpow.pop %v4043
    %v4045 = vmul.f32 %v4028, 1.442695
    %v4046 = vpow.pop %v4045
    %v4047 = vmul.f32 %v4029, 1.442695
    %v4048 = vpow.pop %v4047
    %v4049 = vmul.f32 %v4030, 1.442695
    %v4050 = vpow.pop %v4049
    %v4051 = vmul.f32 %v4031, 1.442695
    %v4052 = vpow.pop %v4051
    %v4053 = vmul.f32 %v4032, 1.442695
    %v4054 = vpow.pop %v4053
    %v4055 = vmul.f32 %v4033, 1.442695
    %v4056 = vpow.pop %v4055
    %v4057 = vmul.f32 %v4034, 1.442695
    %v4058 = vpow.pop %v4057
    %v4059 = vmul.f32 %v4035, 1.442695
    %v4060 = vpow.pop %v4059
    %v4061 = vmul.f32 %v4036, 1.442695
    %v4062 = vpow.pop %v4061
    %v4063 = vmul.f32 %v4037, 1.442695
    %v4064 = vpow.pop %v4063
    %v4065 = vmul.f32 %v4038, 1.442695
    %v4066 = vpow.pop %v4065
    %v4067 = vmul.f32 %v4039, 1.442695
    %v4068 = vpow.pop %v4067
    %v4069 = vmul.f32 %v4040, 1.442695
    %v4070 = vpow.pop %v4069
    %v4071 = vmul.f32 %v4041, 1.442695
    %v4072 = vpow.pop %v4071
    %v4073 = vmul.f32 %v4042, 1.442695
    %v4074 = vpow.pop %v4073
    %v4075 = vsel %vm667, %v4044, 0.0
    %4076 = vadd.xlane.f32.xlu0 %v4075
    %v4077 = vpop.xlane.xlu0 %4076
    %v4078 = vsel %vm667, %v4046, 0.0
    %4079 = vadd.xlane.f32.xlu0 %v4078
    %v4080 = vpop.xlane.xlu0 %4079
    %v4081 = vsel %vm667, %v4048, 0.0
    %4082 = vadd.xlane.f32.xlu0 %v4081
    %v4083 = vpop.xlane.xlu0 %4082
    %v4084 = vsel %vm667, %v4050, 0.0
    %4085 = vadd.xlane.f32.xlu0 %v4084
    %v4086 = vpop.xlane.xlu0 %4085
    %v4087 = vsel %vm667, %v4052, 0.0
    %4088 = vadd.xlane.f32.xlu0 %v4087
    %v4089 = vpop.xlane.xlu0 %4088
    %v4090 = vsel %vm667, %v4054, 0.0
    %4091 = vadd.xlane.f32.xlu0 %v4090
    %v4092 = vpop.xlane.xlu0 %4091
    %v4093 = vsel %vm667, %v4056, 0.0
    %4094 = vadd.xlane.f32.xlu0 %v4093
    %v4095 = vpop.xlane.xlu0 %4094
    %v4096 = vsel %vm667, %v4058, 0.0
    %4097 = vadd.xlane.f32.xlu0 %v4096
    %v4098 = vpop.xlane.xlu0 %4097
    %v4099 = vsel %vm667, %v4060, 0.0
    %4100 = vadd.xlane.f32.xlu0 %v4099
    %v4101 = vpop.xlane.xlu0 %4100
    %v4102 = vsel %vm667, %v4062, 0.0
    %4103 = vadd.xlane.f32.xlu0 %v4102
    %v4104 = vpop.xlane.xlu0 %4103
    %v4105 = vsel %vm667, %v4064, 0.0
    %4106 = vadd.xlane.f32.xlu0 %v4105
    %v4107 = vpop.xlane.xlu0 %4106
    %v4108 = vsel %vm667, %v4066, 0.0
    %4109 = vadd.xlane.f32.xlu0 %v4108
    %v4110 = vpop.xlane.xlu0 %4109
    %v4111 = vsel %vm667, %v4068, 0.0
    %4112 = vadd.xlane.f32.xlu0 %v4111
    %v4113 = vpop.xlane.xlu0 %4112
    %v4114 = vsel %vm667, %v4070, 0.0
    %4115 = vadd.xlane.f32.xlu0 %v4114
    %v4116 = vpop.xlane.xlu0 %4115
    %v4117 = vsel %vm667, %v4072, 0.0
    %4118 = vadd.xlane.f32.xlu0 %v4117
    %v4119 = vpop.xlane.xlu0 %4118
    %v4120 = vsel %vm667, %v4074, 0.0
    %4121 = vadd.xlane.f32.xlu0 %v4120
    %v4122 = vpop.xlane.xlu0 %4121
    %4123 = vrot.lane.b32.xlu0 %v323, 32
    %v4124 = vpop.permute.xlu0 %4123
    %4125 = vrot.lane.b32.xlu0 %v326, 32
    %v4126 = vpop.permute.xlu0 %4125
    %v4130 = vsel %vm667, %v4044, 0
    %v4133 = vsel %vm667, %v4046, 0
    %4135 = vmatpush.msra.mxu0 0.0
    %4136 = vmatpush.msra.mxu0 0.0
    %4137 = vmatpush.msra.mxu0 0.0
    %4138 = vmatpush.msra.mxu0 0.0
    %4139 = vmatpush.msra.mxu0 0.0
    %4140 = vmatpush.msra.mxu0 0.0
    %4141 = vmatpush.msra.mxu0 0.0
    %4142 = vmatpush.msra.mxu0 0.0
    %4143 = vmatpush.msra.mxu0 0.0
    %4144 = vmatpush.msra.mxu0 0.0
    %4145 = vmatpush.msra.mxu0 0.0
    %4146 = vmatpush.msra.mxu0 0.0
    %4147 = vmatpush.msra.mxu0 0.0
    %4148 = vmatpush.msra.mxu0 0.0
    %4149 = vmatpush.msra.mxu0 %v4126
    %4150 = vmatpush.msra.mxu0 %v4124
    %4151 = vmatmul.f32.gmra.mxu0 %v4130
    %v4152 = vpop.f32.mrf.mxu0
    %v4153 = vadd.f32 0.0, %v4152
    %4154 = vmatmul.f32.gmra.mxu0 %v4133
    %v4155 = vpop.f32.mrf.mxu0
    %v4156 = vadd.f32 0.0, %v4155
    %4157 = vdwg.mxu0
    %4158 = vrot.lane.b32.xlu0 %v329, 32
    %v4159 = vpop.permute.xlu0 %4158
    %4160 = vrot.lane.b32.xlu0 %v332, 32
    %v4161 = vpop.permute.xlu0 %4160
    %v4165 = vsel %vm667, %v4048, 0
    %v4168 = vsel %vm667, %v4050, 0
    %4170 = vmatpush.msra.mxu0 0.0
    %4171 = vmatpush.msra.mxu0 0.0
    %4172 = vmatpush.msra.mxu0 0.0
    %4173 = vmatpush.msra.mxu0 0.0
    %4174 = vmatpush.msra.mxu0 0.0
    %4175 = vmatpush.msra.mxu0 0.0
    %4176 = vmatpush.msra.mxu0 0.0
    %4177 = vmatpush.msra.mxu0 0.0
    %4178 = vmatpush.msra.mxu0 0.0
    %4179 = vmatpush.msra.mxu0 0.0
    %4180 = vmatpush.msra.mxu0 0.0
    %4181 = vmatpush.msra.mxu0 0.0
    %4182 = vmatpush.msra.mxu0 0.0
    %4183 = vmatpush.msra.mxu0 0.0
    %4184 = vmatpush.msra.mxu0 %v4161
    %4185 = vmatpush.msra.mxu0 %v4159
    %4186 = vmatmul.f32.gmra.mxu0 %v4165
    %v4187 = vpop.f32.mrf.mxu0
    %v4188 = vadd.f32 0.0, %v4187
    %4189 = vmatmul.f32.gmra.mxu0 %v4168
    %v4190 = vpop.f32.mrf.mxu0
    %v4191 = vadd.f32 0.0, %v4190
    %4192 = vdwg.mxu0
    %4193 = vrot.lane.b32.xlu0 %v335, 32
    %v4194 = vpop.permute.xlu0 %4193
    %4195 = vrot.lane.b32.xlu0 %v338, 32
    %v4196 = vpop.permute.xlu0 %4195
    %v4200 = vsel %vm667, %v4052, 0
    %v4203 = vsel %vm667, %v4054, 0
    %4205 = vmatpush.msra.mxu0 0.0
    %4206 = vmatpush.msra.mxu0 0.0
    %4207 = vmatpush.msra.mxu0 0.0
    %4208 = vmatpush.msra.mxu0 0.0
    %4209 = vmatpush.msra.mxu0 0.0
    %4210 = vmatpush.msra.mxu0 0.0
    %4211 = vmatpush.msra.mxu0 0.0
    %4212 = vmatpush.msra.mxu0 0.0
    %4213 = vmatpush.msra.mxu0 0.0
    %4214 = vmatpush.msra.mxu0 0.0
    %4215 = vmatpush.msra.mxu0 0.0
    %4216 = vmatpush.msra.mxu0 0.0
    %4217 = vmatpush.msra.mxu0 0.0
    %4218 = vmatpush.msra.mxu0 0.0
    %4219 = vmatpush.msra.mxu0 %v4196
    %4220 = vmatpush.msra.mxu0 %v4194
    %4221 = vmatmul.f32.gmra.mxu0 %v4200
    %v4222 = vpop.f32.mrf.mxu0
    %v4223 = vadd.f32 0.0, %v4222
    %4224 = vmatmul.f32.gmra.mxu0 %v4203
    %v4225 = vpop.f32.mrf.mxu0
    %v4226 = vadd.f32 0.0, %v4225
    %4227 = vdwg.mxu0
    %4228 = vrot.lane.b32.xlu0 %v341, 32
    %v4229 = vpop.permute.xlu0 %4228
    %4230 = vrot.lane.b32.xlu0 %v344, 32
    %v4231 = vpop.permute.xlu0 %4230
    %v4235 = vsel %vm667, %v4056, 0
    %v4238 = vsel %vm667, %v4058, 0
    %4240 = vmatpush.msra.mxu0 0.0
    %4241 = vmatpush.msra.mxu0 0.0
    %4242 = vmatpush.msra.mxu0 0.0
    %4243 = vmatpush.msra.mxu0 0.0
    %4244 = vmatpush.msra.mxu0 0.0
    %4245 = vmatpush.msra.mxu0 0.0
    %4246 = vmatpush.msra.mxu0 0.0
    %4247 = vmatpush.msra.mxu0 0.0
    %4248 = vmatpush.msra.mxu0 0.0
    %4249 = vmatpush.msra.mxu0 0.0
    %4250 = vmatpush.msra.mxu0 0.0
    %4251 = vmatpush.msra.mxu0 0.0
    %4252 = vmatpush.msra.mxu0 0.0
    %4253 = vmatpush.msra.mxu0 0.0
    %4254 = vmatpush.msra.mxu0 %v4231
    %4255 = vmatpush.msra.mxu0 %v4229
    %4256 = vmatmul.f32.gmra.mxu0 %v4235
    %v4257 = vpop.f32.mrf.mxu0
    %v4258 = vadd.f32 0.0, %v4257
    %4259 = vmatmul.f32.gmra.mxu0 %v4238
    %v4260 = vpop.f32.mrf.mxu0
    %v4261 = vadd.f32 0.0, %v4260
    %4262 = vdwg.mxu0
    %4263 = vrot.lane.b32.xlu0 %v347, 32
    %v4264 = vpop.permute.xlu0 %4263
    %4265 = vrot.lane.b32.xlu0 %v350, 32
    %v4266 = vpop.permute.xlu0 %4265
    %v4270 = vsel %vm667, %v4060, 0
    %v4273 = vsel %vm667, %v4062, 0
    %4275 = vmatpush.msra.mxu0 0.0
    %4276 = vmatpush.msra.mxu0 0.0
    %4277 = vmatpush.msra.mxu0 0.0
    %4278 = vmatpush.msra.mxu0 0.0
    %4279 = vmatpush.msra.mxu0 0.0
    %4280 = vmatpush.msra.mxu0 0.0
    %4281 = vmatpush.msra.mxu0 0.0
    %4282 = vmatpush.msra.mxu0 0.0
    %4283 = vmatpush.msra.mxu0 0.0
    %4284 = vmatpush.msra.mxu0 0.0
    %4285 = vmatpush.msra.mxu0 0.0
    %4286 = vmatpush.msra.mxu0 0.0
    %4287 = vmatpush.msra.mxu0 0.0
    %4288 = vmatpush.msra.mxu0 0.0
    %4289 = vmatpush.msra.mxu0 %v4266
    %4290 = vmatpush.msra.mxu0 %v4264
    %4291 = vmatmul.f32.gmra.mxu0 %v4270
    %v4292 = vpop.f32.mrf.mxu0
    %v4293 = vadd.f32 0.0, %v4292
    %4294 = vmatmul.f32.gmra.mxu0 %v4273
    %v4295 = vpop.f32.mrf.mxu0
    %v4296 = vadd.f32 0.0, %v4295
    %4297 = vdwg.mxu0
    %4298 = vrot.lane.b32.xlu0 %v353, 32
    %v4299 = vpop.permute.xlu0 %4298
    %4300 = vrot.lane.b32.xlu0 %v356, 32
    %v4301 = vpop.permute.xlu0 %4300
    %v4305 = vsel %vm667, %v4064, 0
    %v4308 = vsel %vm667, %v4066, 0
    %4310 = vmatpush.msra.mxu0 0.0
    %4311 = vmatpush.msra.mxu0 0.0
    %4312 = vmatpush.msra.mxu0 0.0
    %4313 = vmatpush.msra.mxu0 0.0
    %4314 = vmatpush.msra.mxu0 0.0
    %4315 = vmatpush.msra.mxu0 0.0
    %4316 = vmatpush.msra.mxu0 0.0
    %4317 = vmatpush.msra.mxu0 0.0
    %4318 = vmatpush.msra.mxu0 0.0
    %4319 = vmatpush.msra.mxu0 0.0
    %4320 = vmatpush.msra.mxu0 0.0
    %4321 = vmatpush.msra.mxu0 0.0
    %4322 = vmatpush.msra.mxu0 0.0
    %4323 = vmatpush.msra.mxu0 0.0
    %4324 = vmatpush.msra.mxu0 %v4301
    %4325 = vmatpush.msra.mxu0 %v4299
    %4326 = vmatmul.f32.gmra.mxu0 %v4305
    %v4327 = vpop.f32.mrf.mxu0
    %v4328 = vadd.f32 0.0, %v4327
    %4329 = vmatmul.f32.gmra.mxu0 %v4308
    %v4330 = vpop.f32.mrf.mxu0
    %v4331 = vadd.f32 0.0, %v4330
    %4332 = vdwg.mxu0
    %4333 = vrot.lane.b32.xlu0 %v359, 32
    %v4334 = vpop.permute.xlu0 %4333
    %4335 = vrot.lane.b32.xlu0 %v362, 32
    %v4336 = vpop.permute.xlu0 %4335
    %v4340 = vsel %vm667, %v4068, 0
    %v4343 = vsel %vm667, %v4070, 0
    %4345 = vmatpush.msra.mxu0 0.0
    %4346 = vmatpush.msra.mxu0 0.0
    %4347 = vmatpush.msra.mxu0 0.0
    %4348 = vmatpush.msra.mxu0 0.0
    %4349 = vmatpush.msra.mxu0 0.0
    %4350 = vmatpush.msra.mxu0 0.0
    %4351 = vmatpush.msra.mxu0 0.0
    %4352 = vmatpush.msra.mxu0 0.0
    %4353 = vmatpush.msra.mxu0 0.0
    %4354 = vmatpush.msra.mxu0 0.0
    %4355 = vmatpush.msra.mxu0 0.0
    %4356 = vmatpush.msra.mxu0 0.0
    %4357 = vmatpush.msra.mxu0 0.0
    %4358 = vmatpush.msra.mxu0 0.0
    %4359 = vmatpush.msra.mxu0 %v4336
    %4360 = vmatpush.msra.mxu0 %v4334
    %4361 = vmatmul.f32.gmra.mxu0 %v4340
    %v4362 = vpop.f32.mrf.mxu0
    %v4363 = vadd.f32 0.0, %v4362
    %4364 = vmatmul.f32.gmra.mxu0 %v4343
    %v4365 = vpop.f32.mrf.mxu0
    %v4366 = vadd.f32 0.0, %v4365
    %4367 = vdwg.mxu0
    %4368 = vrot.lane.b32.xlu0 %v365, 32
    %v4369 = vpop.permute.xlu0 %4368
    %4370 = vrot.lane.b32.xlu0 %v368, 32
    %v4371 = vpop.permute.xlu0 %4370
    %v4375 = vsel %vm667, %v4072, 0
    %v4378 = vsel %vm667, %v4074, 0
    %4380 = vmatpush.msra.mxu0 0.0
    %4381 = vmatpush.msra.mxu0 0.0
    %4382 = vmatpush.msra.mxu0 0.0
    %4383 = vmatpush.msra.mxu0 0.0
    %4384 = vmatpush.msra.mxu0 0.0
    %4385 = vmatpush.msra.mxu0 0.0
    %4386 = vmatpush.msra.mxu0 0.0
    %4387 = vmatpush.msra.mxu0 0.0
    %4388 = vmatpush.msra.mxu0 0.0
    %4389 = vmatpush.msra.mxu0 0.0
    %4390 = vmatpush.msra.mxu0 0.0
    %4391 = vmatpush.msra.mxu0 0.0
    %4392 = vmatpush.msra.mxu0 0.0
    %4393 = vmatpush.msra.mxu0 0.0
    %4394 = vmatpush.msra.mxu0 %v4371
    %4395 = vmatpush.msra.mxu0 %v4369
    %4396 = vmatmul.f32.gmra.mxu0 %v4375
    %v4397 = vpop.f32.mrf.mxu0
    %v4398 = vadd.f32 0.0, %v4397
    %4399 = vmatmul.f32.gmra.mxu0 %v4378
    %v4400 = vpop.f32.mrf.mxu0
    %v4401 = vadd.f32 0.0, %v4400
    %4402 = vdwg.mxu0
    %v4403 = vrcp.pop %v4077
    %v4404 = vmul.f32 %v4077, %v4403
    %v4405 = vsub.f32 1.0, %v4404
    %v4406 = vmul.f32 %v4403, %v4405
    %v4407 = vadd.f32 %v4403, %v4406
    %vm4408 = vweird.f32 %v4077
    %vm4409 = vweird.f32 %v4403
    %vm4410 = vmor %vm4408, %vm4409
    %v4411 = vsel %vm4410, %v4403, %v4407
    %v4412 = vand.u32 2147483647, %v4077
    %vm4413 = vcmp.eq.f32.partialorder %v4412, 8.507059e+37
    %v4414 = vand.u32 %v4077, 2147483648
    %v4415 = vor.u32 1.1754944e-38, %v4414
    %v4416 = vsel %vm4413, %v4415, %v4411
    %v4417 = vrcp.pop %v4080
    %v4418 = vmul.f32 %v4080, %v4417
    %v4419 = vsub.f32 1.0, %v4418
    %v4420 = vmul.f32 %v4417, %v4419
    %v4421 = vadd.f32 %v4417, %v4420
    %vm4422 = vweird.f32 %v4080
    %vm4423 = vweird.f32 %v4417
    %vm4424 = vmor %vm4422, %vm4423
    %v4425 = vsel %vm4424, %v4417, %v4421
    %v4426 = vand.u32 2147483647, %v4080
    %vm4427 = vcmp.eq.f32.partialorder %v4426, 8.507059e+37
    %v4428 = vand.u32 %v4080, 2147483648
    %v4429 = vor.u32 1.1754944e-38, %v4428
    %v4430 = vsel %vm4427, %v4429, %v4425
    %v4431 = vrcp.pop %v4083
    %v4432 = vmul.f32 %v4083, %v4431
    %v4433 = vsub.f32 1.0, %v4432
    %v4434 = vmul.f32 %v4431, %v4433
    %v4435 = vadd.f32 %v4431, %v4434
    %vm4436 = vweird.f32 %v4083
    %vm4437 = vweird.f32 %v4431
    %vm4438 = vmor %vm4436, %vm4437
    %v4439 = vsel %vm4438, %v4431, %v4435
    %v4440 = vand.u32 2147483647, %v4083
    %vm4441 = vcmp.eq.f32.partialorder %v4440, 8.507059e+37
    %v4442 = vand.u32 %v4083, 2147483648
    %v4443 = vor.u32 1.1754944e-38, %v4442
    %v4444 = vsel %vm4441, %v4443, %v4439
    %v4445 = vrcp.pop %v4086
    %v4446 = vmul.f32 %v4086, %v4445
    %v4447 = vsub.f32 1.0, %v4446
    %v4448 = vmul.f32 %v4445, %v4447
    %v4449 = vadd.f32 %v4445, %v4448
    %vm4450 = vweird.f32 %v4086
    %vm4451 = vweird.f32 %v4445
    %vm4452 = vmor %vm4450, %vm4451
    %v4453 = vsel %vm4452, %v4445, %v4449
    %v4454 = vand.u32 2147483647, %v4086
    %vm4455 = vcmp.eq.f32.partialorder %v4454, 8.507059e+37
    %v4456 = vand.u32 %v4086, 2147483648
    %v4457 = vor.u32 1.1754944e-38, %v4456
    %v4458 = vsel %vm4455, %v4457, %v4453
    %v4459 = vrcp.pop %v4089
    %v4460 = vmul.f32 %v4089, %v4459
    %v4461 = vsub.f32 1.0, %v4460
    %v4462 = vmul.f32 %v4459, %v4461
    %v4463 = vadd.f32 %v4459, %v4462
    %vm4464 = vweird.f32 %v4089
    %vm4465 = vweird.f32 %v4459
    %vm4466 = vmor %vm4464, %vm4465
    %v4467 = vsel %vm4466, %v4459, %v4463
    %v4468 = vand.u32 2147483647, %v4089
    %vm4469 = vcmp.eq.f32.partialorder %v4468, 8.507059e+37
    %v4470 = vand.u32 %v4089, 2147483648
    %v4471 = vor.u32 1.1754944e-38, %v4470
    %v4472 = vsel %vm4469, %v4471, %v4467
    %v4473 = vrcp.pop %v4092
    %v4474 = vmul.f32 %v4092, %v4473
    %v4475 = vsub.f32 1.0, %v4474
    %v4476 = vmul.f32 %v4473, %v4475
    %v4477 = vadd.f32 %v4473, %v4476
    %vm4478 = vweird.f32 %v4092
    %vm4479 = vweird.f32 %v4473
    %vm4480 = vmor %vm4478, %vm4479
    %v4481 = vsel %vm4480, %v4473, %v4477
    %v4482 = vand.u32 2147483647, %v4092
    %vm4483 = vcmp.eq.f32.partialorder %v4482, 8.507059e+37
    %v4484 = vand.u32 %v4092, 2147483648
    %v4485 = vor.u32 1.1754944e-38, %v4484
    %v4486 = vsel %vm4483, %v4485, %v4481
    %v4487 = vrcp.pop %v4095
    %v4488 = vmul.f32 %v4095, %v4487
    %v4489 = vsub.f32 1.0, %v4488
    %v4490 = vmul.f32 %v4487, %v4489
    %v4491 = vadd.f32 %v4487, %v4490
    %vm4492 = vweird.f32 %v4095
    %vm4493 = vweird.f32 %v4487
    %vm4494 = vmor %vm4492, %vm4493
    %v4495 = vsel %vm4494, %v4487, %v4491
    %v4496 = vand.u32 2147483647, %v4095
    %vm4497 = vcmp.eq.f32.partialorder %v4496, 8.507059e+37
    %v4498 = vand.u32 %v4095, 2147483648
    %v4499 = vor.u32 1.1754944e-38, %v4498
    %v4500 = vsel %vm4497, %v4499, %v4495
    %v4501 = vrcp.pop %v4098
    %v4502 = vmul.f32 %v4098, %v4501
    %v4503 = vsub.f32 1.0, %v4502
    %v4504 = vmul.f32 %v4501, %v4503
    %v4505 = vadd.f32 %v4501, %v4504
    %vm4506 = vweird.f32 %v4098
    %vm4507 = vweird.f32 %v4501
    %vm4508 = vmor %vm4506, %vm4507
    %v4509 = vsel %vm4508, %v4501, %v4505
    %v4510 = vand.u32 2147483647, %v4098
    %vm4511 = vcmp.eq.f32.partialorder %v4510, 8.507059e+37
    %v4512 = vand.u32 %v4098, 2147483648
    %v4513 = vor.u32 1.1754944e-38, %v4512
    %v4514 = vsel %vm4511, %v4513, %v4509
    %v4515 = vrcp.pop %v4101
    %v4516 = vmul.f32 %v4101, %v4515
    %v4517 = vsub.f32 1.0, %v4516
    %v4518 = vmul.f32 %v4515, %v4517
    %v4519 = vadd.f32 %v4515, %v4518
    %vm4520 = vweird.f32 %v4101
    %vm4521 = vweird.f32 %v4515
    %vm4522 = vmor %vm4520, %vm4521
    %v4523 = vsel %vm4522, %v4515, %v4519
    %v4524 = vand.u32 2147483647, %v4101
    %vm4525 = vcmp.eq.f32.partialorder %v4524, 8.507059e+37
    %v4526 = vand.u32 %v4101, 2147483648
    %v4527 = vor.u32 1.1754944e-38, %v4526
    %v4528 = vsel %vm4525, %v4527, %v4523
    %v4529 = vrcp.pop %v4104
    %v4530 = vmul.f32 %v4104, %v4529
    %v4531 = vsub.f32 1.0, %v4530
    %v4532 = vmul.f32 %v4529, %v4531
    %v4533 = vadd.f32 %v4529, %v4532
    %vm4534 = vweird.f32 %v4104
    %vm4535 = vweird.f32 %v4529
    %vm4536 = vmor %vm4534, %vm4535
    %v4537 = vsel %vm4536, %v4529, %v4533
    %v4538 = vand.u32 2147483647, %v4104
    %vm4539 = vcmp.eq.f32.partialorder %v4538, 8.507059e+37
    %v4540 = vand.u32 %v4104, 2147483648
    %v4541 = vor.u32 1.1754944e-38, %v4540
    %v4542 = vsel %vm4539, %v4541, %v4537
    %v4543 = vrcp.pop %v4107
    %v4544 = vmul.f32 %v4107, %v4543
    %v4545 = vsub.f32 1.0, %v4544
    %v4546 = vmul.f32 %v4543, %v4545
    %v4547 = vadd.f32 %v4543, %v4546
    %vm4548 = vweird.f32 %v4107
    %vm4549 = vweird.f32 %v4543
    %vm4550 = vmor %vm4548, %vm4549
    %v4551 = vsel %vm4550, %v4543, %v4547
    %v4552 = vand.u32 2147483647, %v4107
    %vm4553 = vcmp.eq.f32.partialorder %v4552, 8.507059e+37
    %v4554 = vand.u32 %v4107, 2147483648
    %v4555 = vor.u32 1.1754944e-38, %v4554
    %v4556 = vsel %vm4553, %v4555, %v4551
    %v4557 = vrcp.pop %v4110
    %v4558 = vmul.f32 %v4110, %v4557
    %v4559 = vsub.f32 1.0, %v4558
    %v4560 = vmul.f32 %v4557, %v4559
    %v4561 = vadd.f32 %v4557, %v4560
    %vm4562 = vweird.f32 %v4110
    %vm4563 = vweird.f32 %v4557
    %vm4564 = vmor %vm4562, %vm4563
    %v4565 = vsel %vm4564, %v4557, %v4561
    %v4566 = vand.u32 2147483647, %v4110
    %vm4567 = vcmp.eq.f32.partialorder %v4566, 8.507059e+37
    %v4568 = vand.u32 %v4110, 2147483648
    %v4569 = vor.u32 1.1754944e-38, %v4568
    %v4570 = vsel %vm4567, %v4569, %v4565
    %v4571 = vrcp.pop %v4113
    %v4572 = vmul.f32 %v4113, %v4571
    %v4573 = vsub.f32 1.0, %v4572
    %v4574 = vmul.f32 %v4571, %v4573
    %v4575 = vadd.f32 %v4571, %v4574
    %vm4576 = vweird.f32 %v4113
    %vm4577 = vweird.f32 %v4571
    %vm4578 = vmor %vm4576, %vm4577
    %v4579 = vsel %vm4578, %v4571, %v4575
    %v4580 = vand.u32 2147483647, %v4113
    %vm4581 = vcmp.eq.f32.partialorder %v4580, 8.507059e+37
    %v4582 = vand.u32 %v4113, 2147483648
    %v4583 = vor.u32 1.1754944e-38, %v4582
    %v4584 = vsel %vm4581, %v4583, %v4579
    %v4585 = vrcp.pop %v4116
    %v4586 = vmul.f32 %v4116, %v4585
    %v4587 = vsub.f32 1.0, %v4586
    %v4588 = vmul.f32 %v4585, %v4587
    %v4589 = vadd.f32 %v4585, %v4588
    %vm4590 = vweird.f32 %v4116
    %vm4591 = vweird.f32 %v4585
    %vm4592 = vmor %vm4590, %vm4591
    %v4593 = vsel %vm4592, %v4585, %v4589
    %v4594 = vand.u32 2147483647, %v4116
    %vm4595 = vcmp.eq.f32.partialorder %v4594, 8.507059e+37
    %v4596 = vand.u32 %v4116, 2147483648
    %v4597 = vor.u32 1.1754944e-38, %v4596
    %v4598 = vsel %vm4595, %v4597, %v4593
    %v4599 = vrcp.pop %v4119
    %v4600 = vmul.f32 %v4119, %v4599
    %v4601 = vsub.f32 1.0, %v4600
    %v4602 = vmul.f32 %v4599, %v4601
    %v4603 = vadd.f32 %v4599, %v4602
    %vm4604 = vweird.f32 %v4119
    %vm4605 = vweird.f32 %v4599
    %vm4606 = vmor %vm4604, %vm4605
    %v4607 = vsel %vm4606, %v4599, %v4603
    %v4608 = vand.u32 2147483647, %v4119
    %vm4609 = vcmp.eq.f32.partialorder %v4608, 8.507059e+37
    %v4610 = vand.u32 %v4119, 2147483648
    %v4611 = vor.u32 1.1754944e-38, %v4610
    %v4612 = vsel %vm4609, %v4611, %v4607
    %v4613 = vrcp.pop %v4122
    %v4614 = vmul.f32 %v4122, %v4613
    %v4615 = vsub.f32 1.0, %v4614
    %v4616 = vmul.f32 %v4613, %v4615
    %v4617 = vadd.f32 %v4613, %v4616
    %vm4618 = vweird.f32 %v4122
    %vm4619 = vweird.f32 %v4613
    %vm4620 = vmor %vm4618, %vm4619
    %v4621 = vsel %vm4620, %v4613, %v4617
    %v4622 = vand.u32 2147483647, %v4122
    %vm4623 = vcmp.eq.f32.partialorder %v4622, 8.507059e+37
    %v4624 = vand.u32 %v4122, 2147483648
    %v4625 = vor.u32 1.1754944e-38, %v4624
    %v4626 = vsel %vm4623, %v4625, %v4621
    %v4627 = vmul.f32 %v4153, %v4416
    %v4628 = vmul.f32 %v4156, %v4430
    %v4629 = vmul.f32 %v4188, %v4444
    %v4630 = vmul.f32 %v4191, %v4458
    %v4631 = vmul.f32 %v4223, %v4472
    %v4632 = vmul.f32 %v4226, %v4486
    %v4633 = vmul.f32 %v4258, %v4500
    %v4634 = vmul.f32 %v4261, %v4514
    %v4635 = vmul.f32 %v4293, %v4528
    %v4636 = vmul.f32 %v4296, %v4542
    %v4637 = vmul.f32 %v4328, %v4556
    %v4638 = vmul.f32 %v4331, %v4570
    %v4639 = vmul.f32 %v4363, %v4584
    %v4640 = vmul.f32 %v4366, %v4598
    %v4641 = vmul.f32 %v4398, %v4612
    %v4642 = vmul.f32 %v4401, %v4626
    %v4643 = vld [vmem:[#allocation8 + $0x60] sm:$0xff]
    %v4644 = vld [vmem:[#allocation8 + $0x68] sm:$0xff]
    %v4645 = vld [vmem:[#allocation8 + $0x70] sm:$0xff]
    %v4646 = vld [vmem:[#allocation8 + $0x78] sm:$0xff]
    %v4648 = vsel %vm370, %v4627, 0
    %v4651 = vsel %vm370, %v4628, 0
    %v4654 = vsel %vm370, %v4629, 0
    %v4657 = vsel %vm370, %v4630, 0
    %v4660 = vsel %vm370, %v4631, 0
    %v4663 = vsel %vm370, %v4632, 0
    %v4666 = vsel %vm370, %v4633, 0
    %v4669 = vsel %vm370, %v4634, 0
    %v4672 = vsel %vm370, %v4635, 0
    %v4675 = vsel %vm370, %v4636, 0
    %v4678 = vsel %vm370, %v4637, 0
    %v4681 = vsel %vm370, %v4638, 0
    %v4684 = vsel %vm370, %v4639, 0
    %v4687 = vsel %vm370, %v4640, 0
    %v4690 = vsel %vm370, %v4641, 0
    %v4693 = vsel %vm370, %v4642, 0
    %4695 = vmatpush.msra.mxu0 0.0
    %4696 = vmatpush.msra.mxu0 0.0
    %4697 = vmatpush.msra.mxu0 0.0
    %4698 = vmatpush.msra.mxu0 0.0
    %4699 = vmatpush.msra.mxu0 0.0
    %4700 = vmatpush.msra.mxu0 0.0
    %4701 = vmatpush.msra.mxu0 0.0
    %4702 = vmatpush.msra.mxu0 0.0
    %4703 = vmatpush.msra.mxu0 0.0
    %4704 = vmatpush.msra.mxu0 0.0
    %4705 = vmatpush.msra.mxu0 0.0
    %4706 = vmatpush.msra.mxu0 0.0
    %4707 = vmatpush.msra.mxu0 %v4646
    %4708 = vmatpush.msra.mxu0 %v4645
    %4709 = vmatpush.msra.mxu0 %v4644
    %4710 = vmatpush.msra.mxu0 %v4643
    %4711 = vmatmul.f32.gmra.mxu0 %v4648
    %v4712 = vpop.f32.mrf.mxu0
    %v4713 = vadd.f32 0.0, %v4712
    %4714 = vmatmul.f32.gmra.mxu0 %v4651
    %v4715 = vpop.f32.mrf.mxu0
    %v4716 = vadd.f32 0.0, %v4715
    %4717 = vmatmul.f32.gmra.mxu0 %v4654
    %v4718 = vpop.f32.mrf.mxu0
    %v4719 = vadd.f32 0.0, %v4718
    %4720 = vmatmul.f32.gmra.mxu0 %v4657
    %v4721 = vpop.f32.mrf.mxu0
    %v4722 = vadd.f32 0.0, %v4721
    %4723 = vmatmul.f32.gmra.mxu0 %v4660
    %v4724 = vpop.f32.mrf.mxu0
    %v4725 = vadd.f32 0.0, %v4724
    %4726 = vmatmul.f32.gmra.mxu0 %v4663
    %v4727 = vpop.f32.mrf.mxu0
    %v4728 = vadd.f32 0.0, %v4727
    %4729 = vmatmul.f32.gmra.mxu0 %v4666
    %v4730 = vpop.f32.mrf.mxu0
    %v4731 = vadd.f32 0.0, %v4730
    %4732 = vmatmul.f32.gmra.mxu0 %v4669
    %v4733 = vpop.f32.mrf.mxu0
    %v4734 = vadd.f32 0.0, %v4733
    %4735 = vmatmul.f32.gmra.mxu0 %v4672
    %v4736 = vpop.f32.mrf.mxu0
    %v4737 = vadd.f32 0.0, %v4736
    %4738 = vmatmul.f32.gmra.mxu0 %v4675
    %v4739 = vpop.f32.mrf.mxu0
    %v4740 = vadd.f32 0.0, %v4739
    %4741 = vmatmul.f32.gmra.mxu0 %v4678
    %v4742 = vpop.f32.mrf.mxu0
    %v4743 = vadd.f32 0.0, %v4742
    %4744 = vmatmul.f32.gmra.mxu0 %v4681
    %v4745 = vpop.f32.mrf.mxu0
    %v4746 = vadd.f32 0.0, %v4745
    %4747 = vmatmul.f32.gmra.mxu0 %v4684
    %v4748 = vpop.f32.mrf.mxu0
    %v4749 = vadd.f32 0.0, %v4748
    %4750 = vmatmul.f32.gmra.mxu0 %v4687
    %v4751 = vpop.f32.mrf.mxu0
    %v4752 = vadd.f32 0.0, %v4751
    %4753 = vmatmul.f32.gmra.mxu0 %v4690
    %v4754 = vpop.f32.mrf.mxu0
    %v4755 = vadd.f32 0.0, %v4754
    %4756 = vmatmul.f32.gmra.mxu0 %v4693
    %v4757 = vpop.f32.mrf.mxu0
    %v4758 = vadd.f32 0.0, %v4757
    %4759 = vdwg.mxu0
    %v4760 = vadd.f32 %v3635, %v4713
    %v4761 = vadd.f32 %v3636, %v4716
    %v4762 = vadd.f32 %v3637, %v4719
    %v4763 = vadd.f32 %v3638, %v4722
    %v4764 = vadd.f32 %v3639, %v4725
    %v4765 = vadd.f32 %v3640, %v4728
    %v4766 = vadd.f32 %v3641, %v4731
    %v4767 = vadd.f32 %v3642, %v4734
    %v4768 = vadd.f32 %v3643, %v4737
    %v4769 = vadd.f32 %v3644, %v4740
    %v4770 = vadd.f32 %v3645, %v4743
    %v4771 = vadd.f32 %v3646, %v4746
    %v4772 = vadd.f32 %v3647, %v4749
    %v4773 = vadd.f32 %v3648, %v4752
    %v4774 = vadd.f32 %v3649, %v4755
    %v4775 = vadd.f32 %v3650, %v4758
    %v4776 = vld [vmem:[%s4] sm:$0x1]
    %v4778 = vperm.slane %v4776, 0
    %v4780 = vadd.f32 %v4760, %v4778
    %v4781 = vadd.f32 %v4761, %v4778
    %v4782 = vadd.f32 %v4762, %v4778
    %v4783 = vadd.f32 %v4763, %v4778
    %v4784 = vadd.f32 %v4764, %v4778
    %v4785 = vadd.f32 %v4765, %v4778
    %v4786 = vadd.f32 %v4766, %v4778
    %v4787 = vadd.f32 %v4767, %v4778
    %v4788 = vadd.f32 %v4768, %v4778
    %v4789 = vadd.f32 %v4769, %v4778
    %v4790 = vadd.f32 %v4770, %v4778
    %v4791 = vadd.f32 %v4771, %v4778
    %v4792 = vadd.f32 %v4772, %v4778
    %v4793 = vadd.f32 %v4773, %v4778
    %v4794 = vadd.f32 %v4774, %v4778
    %v4795 = vadd.f32 %v4775, %v4778
    %v4796 = vadd.f32 %v103, %v4780
    %v4797 = vadd.f32 %v104, %v4781
    %v4798 = vadd.f32 %v105, %v4782
    %v4799 = vadd.f32 %v106, %v4783
    %v4800 = vadd.f32 %v107, %v4784
    %v4801 = vadd.f32 %v108, %v4785
    %v4802 = vadd.f32 %v109, %v4786
    %v4803 = vadd.f32 %v110, %v4787
    %v4804 = vadd.f32 %v111, %v4788
    %v4805 = vadd.f32 %v112, %v4789
    %v4806 = vadd.f32 %v113, %v4790
    %v4807 = vadd.f32 %v114, %v4791
    %v4808 = vadd.f32 %v115, %v4792
    %v4809 = vadd.f32 %v116, %v4793
    %v4810 = vadd.f32 %v117, %v4794
    %v4811 = vadd.f32 %v118, %v4795
    %v4812 = vld [vmem:[#allocation10] sm:$0xff]
    %v4813 = vld [vmem:[#allocation10 + $0x8] sm:$0xff]
    %v4814 = vld [vmem:[#allocation10 + $0x10] sm:$0xff]
    %v4815 = vld [vmem:[#allocation10 + $0x18] sm:$0xff]
    %v4816 = vld [vmem:[#allocation10 + $0x20] sm:$0xff]
    %v4817 = vld [vmem:[#allocation10 + $0x28] sm:$0xff]
    %v4818 = vld [vmem:[#allocation10 + $0x30] sm:$0xff]
    %v4819 = vld [vmem:[#allocation10 + $0x38] sm:$0xff]
    %v4820 = vld [vmem:[#allocation10 + $0x40] sm:$0xff]
    %v4821 = vld [vmem:[#allocation10 + $0x48] sm:$0xff]
    %v4822 = vld [vmem:[#allocation10 + $0x50] sm:$0xff]
    %v4823 = vld [vmem:[#allocation10 + $0x58] sm:$0xff]
    %v4824 = vld [vmem:[#allocation10 + $0x60] sm:$0xff]
    %v4825 = vld [vmem:[#allocation10 + $0x68] sm:$0xff]
    %v4826 = vld [vmem:[#allocation10 + $0x70] sm:$0xff]
    %v4827 = vld [vmem:[#allocation10 + $0x78] sm:$0xff]
    %v4828 = vld [vmem:[%s6] sm:$0x1]
    %v4830 = vperm.slane %v4828, 0
    %4832 = vmatpush.msra.mxu0 %v4827
    %4833 = vmatpush.msra.mxu0 %v4826
    %4834 = vmatpush.msra.mxu0 %v4825
    %4835 = vmatpush.msra.mxu0 %v4824
    %4836 = vmatpush.msra.mxu0 %v4823
    %4837 = vmatpush.msra.mxu0 %v4822
    %4838 = vmatpush.msra.mxu0 %v4821
    %4839 = vmatpush.msra.mxu0 %v4820
    %4840 = vmatpush.msra.mxu0 %v4819
    %4841 = vmatpush.msra.mxu0 %v4818
    %4842 = vmatpush.msra.mxu0 %v4817
    %4843 = vmatpush.msra.mxu0 %v4816
    %4844 = vmatpush.msra.mxu0 %v4815
    %4845 = vmatpush.msra.mxu0 %v4814
    %4846 = vmatpush.msra.mxu0 %v4813
    %4847 = vmatpush.msra.mxu0 %v4812
    %4848 = vmatmul.f32.gmra.mxu0 %v4796
    %v4849 = vpop.f32.mrf.mxu0
    %v4850 = vadd.f32 %v4830, %v4849
    %4851 = vmatmul.f32.gmra.mxu0 %v4797
    %v4852 = vpop.f32.mrf.mxu0
    %v4853 = vadd.f32 %v4830, %v4852
    %4854 = vmatmul.f32.gmra.mxu0 %v4798
    %v4855 = vpop.f32.mrf.mxu0
    %v4856 = vadd.f32 %v4830, %v4855
    %4857 = vmatmul.f32.gmra.mxu0 %v4799
    %v4858 = vpop.f32.mrf.mxu0
    %v4859 = vadd.f32 %v4830, %v4858
    %4860 = vmatmul.f32.gmra.mxu0 %v4800
    %v4861 = vpop.f32.mrf.mxu0
    %v4862 = vadd.f32 %v4830, %v4861
    %4863 = vmatmul.f32.gmra.mxu0 %v4801
    %v4864 = vpop.f32.mrf.mxu0
    %v4865 = vadd.f32 %v4830, %v4864
    %4866 = vmatmul.f32.gmra.mxu0 %v4802
    %v4867 = vpop.f32.mrf.mxu0
    %v4868 = vadd.f32 %v4830, %v4867
    %4869 = vmatmul.f32.gmra.mxu0 %v4803
    %v4870 = vpop.f32.mrf.mxu0
    %v4871 = vadd.f32 %v4830, %v4870
    %4872 = vmatmul.f32.gmra.mxu0 %v4804
    %v4873 = vpop.f32.mrf.mxu0
    %v4874 = vadd.f32 %v4830, %v4873
    %4875 = vmatmul.f32.gmra.mxu0 %v4805
    %v4876 = vpop.f32.mrf.mxu0
    %v4877 = vadd.f32 %v4830, %v4876
    %4878 = vmatmul.f32.gmra.mxu0 %v4806
    %v4879 = vpop.f32.mrf.mxu0
    %v4880 = vadd.f32 %v4830, %v4879
    %4881 = vmatmul.f32.gmra.mxu0 %v4807
    %v4882 = vpop.f32.mrf.mxu0
    %v4883 = vadd.f32 %v4830, %v4882
    %4884 = vmatmul.f32.gmra.mxu0 %v4808
    %v4885 = vpop.f32.mrf.mxu0
    %v4886 = vadd.f32 %v4830, %v4885
    %4887 = vmatmul.f32.gmra.mxu0 %v4809
    %v4888 = vpop.f32.mrf.mxu0
    %v4889 = vadd.f32 %v4830, %v4888
    %4890 = vmatmul.f32.gmra.mxu0 %v4810
    %v4891 = vpop.f32.mrf.mxu0
    %v4892 = vadd.f32 %v4830, %v4891
    %4893 = vmatmul.f32.gmra.mxu0 %v4811
    %v4894 = vpop.f32.mrf.mxu0
    %v4895 = vadd.f32 %v4830, %v4894
    %4896 = vdwg.mxu0
    %v4897 = vadd.f32 %v4796, %v4850
    %v4898 = vadd.f32 %v4797, %v4853
    %v4899 = vadd.f32 %v4798, %v4856
    %v4900 = vadd.f32 %v4799, %v4859
    %v4901 = vadd.f32 %v4800, %v4862
    %v4902 = vadd.f32 %v4801, %v4865
    %v4903 = vadd.f32 %v4802, %v4868
    %v4904 = vadd.f32 %v4803, %v4871
    %v4905 = vadd.f32 %v4804, %v4874
    %v4906 = vadd.f32 %v4805, %v4877
    %v4907 = vadd.f32 %v4806, %v4880
    %v4908 = vadd.f32 %v4807, %v4883
    %v4909 = vadd.f32 %v4808, %v4886
    %v4910 = vadd.f32 %v4809, %v4889
    %v4911 = vadd.f32 %v4810, %v4892
    %v4912 = vadd.f32 %v4811, %v4895
    %4913 = vst [vmem:[#allocation11] sm:$0xff] %v4897
    %4914 = vst [vmem:[#allocation11 + $0x8] sm:$0xff] %v4898
    %4915 = vst [vmem:[#allocation11 + $0x10] sm:$0xff] %v4899
    %4916 = vst [vmem:[#allocation11 + $0x18] sm:$0xff] %v4900
    %4917 = vst [vmem:[#allocation11 + $0x20] sm:$0xff] %v4901
    %4918 = vst [vmem:[#allocation11 + $0x28] sm:$0xff] %v4902
    %4919 = vst [vmem:[#allocation11 + $0x30] sm:$0xff] %v4903
    %4920 = vst [vmem:[#allocation11 + $0x38] sm:$0xff] %v4904
    %4921 = vst [vmem:[#allocation11 + $0x40] sm:$0xff] %v4905
    %4922 = vst [vmem:[#allocation11 + $0x48] sm:$0xff] %v4906
    %4923 = vst [vmem:[#allocation11 + $0x50] sm:$0xff] %v4907
    %4924 = vst [vmem:[#allocation11 + $0x58] sm:$0xff] %v4908
    %4925 = vst [vmem:[#allocation11 + $0x60] sm:$0xff] %v4909
    %4926 = vst [vmem:[#allocation11 + $0x68] sm:$0xff] %v4910
    %4927 = vst [vmem:[#allocation11 + $0x70] sm:$0xff] %v4911
    %4928 = vst [vmem:[#allocation11 + $0x78] sm:$0xff] %v4912
    // Predicated region
    $region50: #{tpu_custom_call.1} parent=1 // pred_check
      _
    $region51: #{tpu_custom_call.1} parent=1 // pred_check_branch
      %4930 = sbr.rel (0) target = $region53
    $region52: #{tpu_custom_call.1} parent=1 // pred_region
      %4932 = vsyncadd [#allocation4], 0
      %s4933 = sshll.u32 [#allocation11], 4
      %s4934 = int_to_ptr.vmem [resolvable:$true] %s4933
      %s4935 = sshll.u32 %s7, 4
      %s4936 = int_to_ptr.hbm [resolvable:$true] %s4935
      %4941 = dma.vmem_to_hbm [thread:$0]  %s4934, 2048, %s4936, [#allocation4], 128, 128, 8
    $region53: #{tpu_custom_call.1} parent=1 // pred_fallthru
      _
    // Predicated region
    $region54: #{tpu_custom_call.1} parent=1 // pred_check
      _
    $region55: #{tpu_custom_call.1} parent=1 // pred_check_branch
      %4943 = sbr.rel (0) target = $region57
    $region56: #{tpu_custom_call.1} parent=1 // pred_region
      %4945 = dma.done [#allocation4], 2048
    $region57: #{tpu_custom_call.1} parent=1 // pred_fallthru
      _
    %4946 = vsyncpa [#allocation3], 1
    %4947 = vsyncpa [#allocation6], 1
    %4948 = vsyncpa [#allocation9], 1
    %4949 = vsyncpa [#allocation4], 1

</llo_original>
